<compile_context>
chip_gen: v7x
topology: tpu7x:2x2x1
jax: 0.10.0
libtpu: 0.0.40
codegen_flags: <defaults>
</compile_context>

<pallas_src>
import functools

import numpy as np
import jax
import jax.numpy as jnp
from jax.experimental import pallas as pl
from jax.experimental.pallas import tpu as pltpu

HG_FEAT_SHAPE = (64, 32, 16, 8, 4)   # default pyramid from the PyTorch module
INPUT_SIZE = 2304                    # hardcoded in LearnLoss_mix.__init__
BN_EPS = 1e-5


# --------------------------- Morton (Z-order) prep ---------------------------

def _morton_perm(s):
    """p[m] = row-major flat index (h*s + w) of the m-th position in Z-order."""
    h, w = np.meshgrid(np.arange(s), np.arange(s), indexing="ij")
    h = h.reshape(-1)
    w = w.reshape(-1)
    code = np.zeros(s * s, dtype=np.int64)
    for b in range(int(np.log2(s))):
        code |= ((h >> b) & 1) << (2 * b + 1)
        code |= ((w >> b) & 1) << (2 * b)
    return np.argsort(code).astype(np.int32)


_LEVEL_SIZES = [s * s for s in HG_FEAT_SHAPE]
_LEVEL_OFFSETS = np.concatenate([[0], np.cumsum(_LEVEL_SIZES)]).astype(np.int64)
# One global permutation: splits levels AND Morton-orders each of them.
_GLOBAL_PERM = np.concatenate(
    [_LEVEL_OFFSETS[j] + _morton_perm(s) for j, s in enumerate(HG_FEAT_SHAPE)]
).astype(np.int32)


# ------------------------------- Pallas kernel -------------------------------

def _fused_forward_kernel(
        p0_ref, r1_ref, r2_ref, r3_ref, r4_ref,
        w0_ref, w1_ref, w2_ref, w3_ref, wf_ref,
        b0_ref, b1_ref, b2_ref, b3_ref, bf_ref,
        x2_ref, w1a_ref, bh1_ref, w2h_ref, bh2_ref,
        w1b_hbm_ref,
        o_ref,
        w1b_vmem, s3_ref, s4_ref, dma_sem):
    """Whole LearnLoss_mix forward; every intermediate stays in VMEM."""
    f32 = jnp.float32
    bf16 = jnp.bfloat16
    B = o_ref.shape[0]

    # Kick off the dominant DMA (head weight, >70% of HBM bytes) so it overlaps
    # with the entire convolution pyramid below.
    w1b_copy = pltpu.make_async_copy(w1b_hbm_ref, w1b_vmem, dma_sem)
    w1b_copy.start()

    # ---- level 0 -> 1: (B*64, 512) @ (512, 128) block-diagonal conv, one dot ----
    z = jnp.dot(p0_ref[...], w0_ref[...], preferred_element_type=f32)
    a = jnp.maximum(z + b0_ref[...], 0.0) + r1_ref[...]              # (B*64, 16C)

    # ---- level 1 -> 2: (B*64, 128) @ (128, 32) block-diagonal conv ----
    z = jnp.dot(a.astype(bf16), w1_ref[...], preferred_element_type=f32)
    a = jnp.maximum(z + b1_ref[...], 0.0) + r2_ref[...]              # (B*64, 4C)

    # ---- level 2 -> 3: rows are exactly level-2 quads -> dense (4C, C) ----
    z = jnp.dot(a.astype(bf16), w2_ref[...], preferred_element_type=f32)
    s3_ref[...] = jnp.maximum(z + b2_ref[...], 0.0) + r3_ref[...]    # (B*64, C)

    # ---- level 3 -> 4: quad-pack via 4 strided row reads, then ONE matmul ----
    n3 = s3_ref.shape[0] // 4
    a3q = jnp.concatenate(
        [s3_ref[pl.ds(q, n3, stride=4), :] for q in range(4)], axis=1)   # (B*16, 4C)
    z = jnp.dot(a3q.astype(bf16), w3_ref[...], preferred_element_type=f32)
    s4_ref[...] = jnp.maximum(z + b3_ref[...], 0.0) + r4_ref[...]    # (B*16, C)

    # ---- final 4x4 conv: pack all 16 level-4 positions per batch, ONE matmul ----
    p4 = s4_ref.shape[0] // B                                        # 16
    fin = jnp.concatenate(
        [s4_ref[pl.ds(k, B, stride=p4), :] for k in range(p4)], axis=1)  # (B, 16C)
    feat = jnp.maximum(
        jnp.dot(fin.astype(bf16), wf_ref[...], preferred_element_type=f32)
        + bf_ref[...], 0.0)                                          # (B, C)

    # ---- MLP head (BN folded into w1/b1; dropout = identity in eval) ----
    zh = jnp.dot(feat.astype(bf16), w1a_ref[...], preferred_element_type=f32)
    w1b_copy.wait()
    zh = zh + jnp.dot(x2_ref[...], w1b_vmem[...], preferred_element_type=f32)
    zh = zh + bh1_ref[...]                                           # (B, L)
    h = jnp.maximum(zh, 0.0)
    logit = jnp.dot(h.astype(bf16), w2h_ref[...],
                    preferred_element_type=f32) + bh2_ref[...]       # (B, 1)
    e = jnp.exp(-jnp.abs(logit))                                     # stable sigmoid
    o_ref[...] = jnp.where(logit >= 0.0, 1.0 / (1.0 + e), e / (1.0 + e))


# --------------------------------- wrapper -----------------------------------

def _zero_idx(i, n):
    return (0,) * n


def learnloss_mix_forward(prepared, x, x2):
    """x: (B, hg_feat, sum(s^2));  x2: (B, 2304 - hg_feat)  ->  (B, 1)."""
    B, C, total = x.shape
    G = HG_FEAT_SHAPE[3] ** 2          # 64 Morton blocks per image (= level-3 pixels)

    # Single gather + single transpose: every level Morton-ordered, then pure
    # reshapes slice out the lane-dense per-level operands.
    xp = jnp.take(x, jnp.asarray(_GLOBAL_PERM), axis=2)              # (B, C, 5456)
    xt = jnp.transpose(xp, (0, 2, 1))                                # (B, 5456, C)
    o0, o1, o2, o3, o4, o5 = (int(v) for v in _LEVEL_OFFSETS)
    p0 = xt[:, o0:o1, :].reshape(B * G, 64 * C).astype(jnp.bfloat16)  # level-0 input
    r1 = xt[:, o1:o2, :].reshape(B * G, 16 * C)                       # residuals
    r2 = xt[:, o2:o3, :].reshape(B * G, 4 * C)
    r3 = xt[:, o3:o4, :].reshape(B * G, C)
    r4 = xt[:, o4:o5, :].reshape(B * HG_FEAT_SHAPE[4] ** 2, C)

    kdim = prepared["w1b"].shape[0]
    x2b = x2.astype(jnp.bfloat16)
    if kdim > x2.shape[1]:
        x2b = jnp.pad(x2b, ((0, 0), (0, kdim - x2.shape[1])))

    inputs = [p0, r1, r2, r3, r4,
              prepared["w0bd"], prepared["w1bd"], prepared["w2c"], prepared["w3c"],
              prepared["wf"],
              prepared["b0t"], prepared["b1t"], prepared["b2c"], prepared["b3c"],
              prepared["bfc"],
              x2b, prepared["w1a"], prepared["b1"], prepared["w2"], prepared["b2"],
              prepared["w1b"]]                       # w1b LAST: stays in HBM

    in_specs = [pl.BlockSpec(a.shape, functools.partial(_zero_idx, n=a.ndim))
                for a in inputs[:-1]]
    in_specs.append(pl.BlockSpec(memory_space=pl.ANY))   # manual DMA in kernel

    L = prepared["b1"].shape[1]
    return pl.pallas_call(
        _fused_forward_kernel,
        grid=(1,),
        in_specs=in_specs,
        out_specs=pl.BlockSpec((B, 1), functools.partial(_zero_idx, n=2)),
        out_shape=jax.ShapeDtypeStruct((B, 1), jnp.float32),
        scratch_shapes=[
            pltpu.VMEM((kdim, L), jnp.bfloat16),                       # w1b landing buf
            pltpu.VMEM((B * G, C), jnp.float32),                       # level-3 acts
            pltpu.VMEM((B * HG_FEAT_SHAPE[4] ** 2, C), jnp.float32),   # level-4 acts
            pltpu.SemaphoreType.DMA,
        ],
        compiler_params=pltpu.CompilerParams(
            dimension_semantics=("arbitrary",),
            vmem_limit_bytes=32 * 1024 * 1024),
    )(*inputs)


# ------------------------------ parameter prep -------------------------------

def init_params(key, hg_feat, linear_size):
    """Raw parameters mirroring the PyTorch module layout (synthetic init)."""
    C = hg_feat
    ks = jax.random.split(key, 14)
    return {
        "conv_ws": [0.1 * jax.random.normal(ks[i], (2, 2, C, C), jnp.float32)
                    for i in range(4)],                        # (kh, kw, cin, cout)
        "conv_bs": [0.01 * jax.random.normal(ks[4 + i], (C,), jnp.float32)
                    for i in range(4)],
        "final_w": 0.1 * jax.random.normal(ks[8], (4, 4, C, C), jnp.float32),
        "final_b": 0.01 * jax.random.normal(ks[9], (C,), jnp.float32),
        "w1": 0.02 * jax.random.normal(ks[10], (INPUT_SIZE, linear_size), jnp.float32),
        "b1": 0.01 * jax.random.normal(ks[11], (linear_size,), jnp.float32),
        "bn_gamma": jnp.ones((linear_size,), jnp.float32),
        "bn_beta": jnp.zeros((linear_size,), jnp.float32),
        "bn_mean": jnp.zeros((linear_size,), jnp.float32),
        "bn_var": jnp.ones((linear_size,), jnp.float32),
        "w2": 0.02 * jax.random.normal(ks[12], (linear_size, 1), jnp.float32),
        "b2": 0.01 * jax.random.normal(ks[13], (1,), jnp.float32),
    }


def prepare_params(p, hg_feat):
    """Fold BN (eval), build block-diagonal conv weights, cast matmul operands to bf16."""
    C = hg_feat
    perm4 = jnp.asarray(_morton_perm(4))

    def taps(w):                       # (2, 2, C, C) -> (4C, C), rows = (kh, kw, cin)
        return w.reshape(4 * C, C)

    # Block-diagonal conv weights: each diagonal block is the (4C, C) tap matrix.
    w0bd = jnp.kron(jnp.eye(16, dtype=jnp.float32), taps(p["conv_ws"][0]))  # (512, 128)
    w1bd = jnp.kron(jnp.eye(4, dtype=jnp.float32), taps(p["conv_ws"][1]))   # (128, 32)
    wf = p["final_w"].reshape(16, C, C)[perm4].reshape(16 * C, C)           # Morton taps

    scale = p["bn_gamma"] * jax.lax.rsqrt(p["bn_var"] + BN_EPS)
    w1f = p["w1"] * scale[None, :]
    b1f = (p["b1"] - p["bn_mean"]) * scale + p["bn_beta"]

    w1b = w1f[C:]                                    # x2 part of cat([feat, x2])
    kpad = (-w1b.shape[0]) % 128                     # pad K to a tile multiple
    w1b = jnp.pad(w1b, ((0, kpad), (0, 0)))

    return {
        "w0bd": w0bd.astype(jnp.bfloat16),
        "w1bd": w1bd.astype(jnp.bfloat16),
        "w2c": taps(p["conv_ws"][2]).astype(jnp.bfloat16),
        "w3c": taps(p["conv_ws"][3]).astype(jnp.bfloat16),
        "wf": wf.astype(jnp.bfloat16),
        "b0t": jnp.tile(p["conv_bs"][0], 16).reshape(1, 16 * C),
        "b1t": jnp.tile(p["conv_bs"][1], 4).reshape(1, 4 * C),
        "b2c": p["conv_bs"][2].reshape(1, C),
        "b3c": p["conv_bs"][3].reshape(1, C),
        "bfc": p["final_b"].reshape(1, C),
        "w1a": w1f[:C].astype(jnp.bfloat16),          # feat part of cat([feat, x2])
        "w1b": w1b.astype(jnp.bfloat16),              # x2 part (kept in HBM)
        "b1": b1f.reshape(1, -1),
        "w2": p["w2"].astype(jnp.bfloat16),
        "b2": p["b2"].reshape(1, 1),
    }


# ----------------------------------- main ------------------------------------

if __name__ == "__main__":
    B = 2          # batch
    C = 8          # hg_feat
    LINEAR = 256   # linear_size (constructor arg; input_size fixed at 2304)
    total = sum(s * s for s in HG_FEAT_SHAPE)        # 5456

    key = jax.random.PRNGKey(0)
    k1, k2, k3 = jax.random.split(key, 3)
    x = jax.random.normal(k1, (B, C, total), jnp.float32)
    x2 = jax.random.normal(k2, (B, INPUT_SIZE - C), jnp.float32)
    params = prepare_params(init_params(k3, C, LINEAR), C)

    fwd = jax.jit(learnloss_mix_forward)
    out = jax.block_until_ready(fwd(params, x, x2))

    assert out.shape == (B, 1)
    assert bool(jnp.all(jnp.isfinite(out)))
    assert bool(jnp.all((out >= 0.0) & (out <= 1.0)))
    print("KERNEL_OK")
</pallas_src>

<mosaic_0001>
module attributes {stable_mosaic.version = 11 : i64} {
  func.func private @main(%arg0: i32) attributes {dimension_semantics = [#tpu.dimension_semantics<core_parallel>], iteration_bounds = array<i64: 2>, tpu.core_type = #tpu.core_type<sc_scalar_subcore>, window_params = []} {
    return
  }
}

module attributes {stable_mosaic.version = 11 : i64} {
  func.func private @main(%arg0: i32) attributes {dimension_semantics = [#tpu.dimension_semantics<core_parallel>], iteration_bounds = array<i64: 2>, tpu.core_type = #tpu.core_type<sc_scalar_subcore>, window_params = []} {
    return
  }
}

module attributes {stable_mosaic.version = 11 : i64} {
  func.func @_fused_forward_kernel(%arg0: i32, %arg1: memref<128x512xbf16, #tpu.memory_space<vmem>>, %arg2: memref<128x128xf32, #tpu.memory_space<vmem>>, %arg3: memref<128x32xf32, #tpu.memory_space<vmem>>, %arg4: memref<128x8xf32, #tpu.memory_space<vmem>>, %arg5: memref<32x8xf32, #tpu.memory_space<vmem>>, %arg6: memref<512x128xbf16, #tpu.memory_space<vmem>>, %arg7: memref<128x32xbf16, #tpu.memory_space<vmem>>, %arg8: memref<32x8xbf16, #tpu.memory_space<vmem>>, %arg9: memref<32x8xbf16, #tpu.memory_space<vmem>>, %arg10: memref<128x8xbf16, #tpu.memory_space<vmem>>, %arg11: memref<1x128xf32, #tpu.memory_space<vmem>>, %arg12: memref<1x32xf32, #tpu.memory_space<vmem>>, %arg13: memref<1x8xf32, #tpu.memory_space<vmem>>, %arg14: memref<1x8xf32, #tpu.memory_space<vmem>>, %arg15: memref<1x8xf32, #tpu.memory_space<vmem>>, %arg16: memref<2x2304xbf16, #tpu.memory_space<vmem>>, %arg17: memref<8x256xbf16, #tpu.memory_space<vmem>>, %arg18: memref<1x256xf32, #tpu.memory_space<vmem>>, %arg19: memref<256x1xbf16, #tpu.memory_space<vmem>>, %arg20: memref<1x1xf32, #tpu.memory_space<vmem>>, %arg21: memref<2304x256xbf16, #tpu.memory_space<any>>, %arg22: memref<2x1xf32, #tpu.memory_space<vmem>>, %arg23: memref<2304x256xbf16, #tpu.memory_space<vmem>>, %arg24: memref<128x8xf32, #tpu.memory_space<vmem>>, %arg25: memref<32x8xf32, #tpu.memory_space<vmem>>, %arg26: memref<!tpu.dma_semaphore, #tpu.memory_space<semaphore_mem>>) attributes {dimension_semantics = [#tpu.dimension_semantics<arbitrary>], iteration_bounds = array<i64: 1>, scalar_prefetch = 0 : i64, scratch_operands = 4 : i64, tpu.core_type = #tpu.core_type<tc>, window_params = [{pipeline_mode = #tpu.pipeline_mode<synchronous>, transform_indices = @transform_0, window_bounds = array<i64: 128, 512>}, {pipeline_mode = #tpu.pipeline_mode<synchronous>, transform_indices = @transform_1, window_bounds = array<i64: 128, 128>}, {pipeline_mode = #tpu.pipeline_mode<synchronous>, transform_indices = @transform_2, window_bounds = array<i64: 128, 32>}, {pipeline_mode = #tpu.pipeline_mode<synchronous>, transform_indices = @transform_3, window_bounds = array<i64: 128, 8>}, {pipeline_mode = #tpu.pipeline_mode<synchronous>, transform_indices = @transform_4, window_bounds = array<i64: 32, 8>}, {pipeline_mode = #tpu.pipeline_mode<synchronous>, transform_indices = @transform_5, window_bounds = array<i64: 512, 128>}, {pipeline_mode = #tpu.pipeline_mode<synchronous>, transform_indices = @transform_6, window_bounds = array<i64: 128, 32>}, {pipeline_mode = #tpu.pipeline_mode<synchronous>, transform_indices = @transform_7, window_bounds = array<i64: 32, 8>}, {pipeline_mode = #tpu.pipeline_mode<synchronous>, transform_indices = @transform_8, window_bounds = array<i64: 32, 8>}, {pipeline_mode = #tpu.pipeline_mode<synchronous>, transform_indices = @transform_9, window_bounds = array<i64: 128, 8>}, {pipeline_mode = #tpu.pipeline_mode<synchronous>, transform_indices = @transform_10, window_bounds = array<i64: 1, 128>}, {pipeline_mode = #tpu.pipeline_mode<synchronous>, transform_indices = @transform_11, window_bounds = array<i64: 1, 32>}, {pipeline_mode = #tpu.pipeline_mode<synchronous>, transform_indices = @transform_12, window_bounds = array<i64: 1, 8>}, {pipeline_mode = #tpu.pipeline_mode<synchronous>, transform_indices = @transform_13, window_bounds = array<i64: 1, 8>}, {pipeline_mode = #tpu.pipeline_mode<synchronous>, transform_indices = @transform_14, window_bounds = array<i64: 1, 8>}, {pipeline_mode = #tpu.pipeline_mode<synchronous>, transform_indices = @transform_15, window_bounds = array<i64: 2, 2304>}, {pipeline_mode = #tpu.pipeline_mode<synchronous>, transform_indices = @transform_16, window_bounds = array<i64: 8, 256>}, {pipeline_mode = #tpu.pipeline_mode<synchronous>, transform_indices = @transform_17, window_bounds = array<i64: 1, 256>}, {pipeline_mode = #tpu.pipeline_mode<synchronous>, transform_indices = @transform_18, window_bounds = array<i64: 256, 1>}, {pipeline_mode = #tpu.pipeline_mode<synchronous>, transform_indices = @transform_19, window_bounds = array<i64: 1, 1>}, {}, {pipeline_mode = #tpu.pipeline_mode<synchronous>, transform_indices = @transform_21, window_bounds = array<i64: 2, 1>}]} {
    tpu.enqueue_dma source(%arg21 : memref<2304x256xbf16, #tpu.memory_space<any>>) target(%arg23 : memref<2304x256xbf16, #tpu.memory_space<vmem>>) target_semaphore(%arg26 : memref<!tpu.dma_semaphore, #tpu.memory_space<semaphore_mem>>)
    %c0 = arith.constant 0 : index
    %c0_0 = arith.constant 0 : index
    %0 = vector.load %arg1[%c0, %c0_0] : memref<128x512xbf16, #tpu.memory_space<vmem>>, vector<128x512xbf16>
    %c0_1 = arith.constant 0 : index
    %c0_2 = arith.constant 0 : index
    %1 = vector.load %arg6[%c0_1, %c0_2] : memref<512x128xbf16, #tpu.memory_space<vmem>>, vector<512x128xbf16>
    %cst = arith.constant dense<0.000000e+00> : vector<128x128xf32>
    %2 = tpu.matmul %0, %1, %cst {dimension_numbers = #tpu.dot_dimension_numbers<[1], [0], [0], [1], [0, 0, 1, 1], [], []>} : vector<128x512xbf16>, vector<512x128xbf16>, vector<128x128xf32> -> vector<128x128xf32>
    %c0_3 = arith.constant 0 : index
    %c0_4 = arith.constant 0 : index
    %3 = vector.load %arg11[%c0_3, %c0_4] : memref<1x128xf32, #tpu.memory_space<vmem>>, vector<1x128xf32>
    %4 = vector.broadcast %3 : vector<1x128xf32> to vector<128x128xf32>
    %5 = arith.addf %2, %4 : vector<128x128xf32>
    %cst_5 = arith.constant 0.000000e+00 : f32
    %6 = vector.broadcast %cst_5 : f32 to vector<128x128xf32>
    %7 = arith.maximumf %5, %6 : vector<128x128xf32>
    %c0_6 = arith.constant 0 : index
    %c0_7 = arith.constant 0 : index
    %8 = vector.load %arg2[%c0_6, %c0_7] : memref<128x128xf32, #tpu.memory_space<vmem>>, vector<128x128xf32>
    %9 = arith.addf %7, %8 : vector<128x128xf32>
    %10 = arith.truncf %9 : vector<128x128xf32> to vector<128x128xbf16>
    %c0_8 = arith.constant 0 : index
    %c0_9 = arith.constant 0 : index
    %11 = vector.load %arg7[%c0_8, %c0_9] : memref<128x32xbf16, #tpu.memory_space<vmem>>, vector<128x32xbf16>
    %cst_10 = arith.constant dense<0.000000e+00> : vector<128x32xf32>
    %12 = tpu.matmul %10, %11, %cst_10 {dimension_numbers = #tpu.dot_dimension_numbers<[1], [0], [0], [1], [0, 0, 1, 1], [], []>} : vector<128x128xbf16>, vector<128x32xbf16>, vector<128x32xf32> -> vector<128x32xf32>
    %c0_11 = arith.constant 0 : index
    %c0_12 = arith.constant 0 : index
    %13 = vector.load %arg12[%c0_11, %c0_12] : memref<1x32xf32, #tpu.memory_space<vmem>>, vector<1x32xf32>
    %14 = vector.broadcast %13 : vector<1x32xf32> to vector<128x32xf32>
    %15 = arith.addf %12, %14 : vector<128x32xf32>
    %cst_13 = arith.constant 0.000000e+00 : f32
    %16 = vector.broadcast %cst_13 : f32 to vector<128x32xf32>
    %17 = arith.maximumf %15, %16 : vector<128x32xf32>
    %c0_14 = arith.constant 0 : index
    %c0_15 = arith.constant 0 : index
    %18 = vector.load %arg3[%c0_14, %c0_15] : memref<128x32xf32, #tpu.memory_space<vmem>>, vector<128x32xf32>
    %19 = arith.addf %17, %18 : vector<128x32xf32>
    %20 = arith.truncf %19 : vector<128x32xf32> to vector<128x32xbf16>
    %c0_16 = arith.constant 0 : index
    %c0_17 = arith.constant 0 : index
    %21 = vector.load %arg8[%c0_16, %c0_17] : memref<32x8xbf16, #tpu.memory_space<vmem>>, vector<32x8xbf16>
    %cst_18 = arith.constant dense<0.000000e+00> : vector<128x8xf32>
    %22 = tpu.matmul %20, %21, %cst_18 {dimension_numbers = #tpu.dot_dimension_numbers<[1], [0], [0], [1], [0, 0, 1, 1], [], []>} : vector<128x32xbf16>, vector<32x8xbf16>, vector<128x8xf32> -> vector<128x8xf32>
    %c0_19 = arith.constant 0 : index
    %c0_20 = arith.constant 0 : index
    %23 = vector.load %arg13[%c0_19, %c0_20] : memref<1x8xf32, #tpu.memory_space<vmem>>, vector<1x8xf32>
    %24 = vector.broadcast %23 : vector<1x8xf32> to vector<128x8xf32>
    %25 = arith.addf %22, %24 : vector<128x8xf32>
    %cst_21 = arith.constant 0.000000e+00 : f32
    %26 = vector.broadcast %cst_21 : f32 to vector<128x8xf32>
    %27 = arith.maximumf %25, %26 : vector<128x8xf32>
    %c0_22 = arith.constant 0 : index
    %c0_23 = arith.constant 0 : index
    %28 = vector.load %arg4[%c0_22, %c0_23] : memref<128x8xf32, #tpu.memory_space<vmem>>, vector<128x8xf32>
    %29 = arith.addf %27, %28 : vector<128x8xf32>
    %c0_24 = arith.constant 0 : index
    %c0_25 = arith.constant 0 : index
    %30 = vector.load %arg24[%c0_24, %c0_25] : memref<128x8xf32, #tpu.memory_space<vmem>>, vector<128x8xf32>
    tpu.vector_store %arg24[%c0_24, %c0_25], %29 {strides = array<i32>} : memref<128x8xf32, #tpu.memory_space<vmem>>, vector<128x8xf32>,
    %c0_26 = arith.constant 0 : index
    %c0_27 = arith.constant 0 : index
    %31 = tpu.strided_load %arg24[%c0_26, %c0_27] {strides = array<i32: 4, 1>} : memref<128x8xf32, #tpu.memory_space<vmem>>, vector<32x8xf32>
    %c1 = arith.constant 1 : index
    %c0_28 = arith.constant 0 : index
    %32 = tpu.strided_load %arg24[%c1, %c0_28] {strides = array<i32: 4, 1>} : memref<128x8xf32, #tpu.memory_space<vmem>>, vector<32x8xf32>
    %c2 = arith.constant 2 : index
    %c0_29 = arith.constant 0 : index
    %33 = tpu.strided_load %arg24[%c2, %c0_29] {strides = array<i32: 4, 1>} : memref<128x8xf32, #tpu.memory_space<vmem>>, vector<32x8xf32>
    %c3 = arith.constant 3 : index
    %c0_30 = arith.constant 0 : index
    %34 = tpu.strided_load %arg24[%c3, %c0_30] {strides = array<i32: 4, 1>} : memref<128x8xf32, #tpu.memory_space<vmem>>, vector<32x8xf32>
    %35 = tpu.concatenate %31, %32, %33, %34 in 1 : vector<32x8xf32>, vector<32x8xf32>, vector<32x8xf32>, vector<32x8xf32> -> vector<32x32xf32>
    %36 = arith.truncf %35 : vector<32x32xf32> to vector<32x32xbf16>
    %c0_31 = arith.constant 0 : index
    %c0_32 = arith.constant 0 : index
    %37 = vector.load %arg9[%c0_31, %c0_32] : memref<32x8xbf16, #tpu.memory_space<vmem>>, vector<32x8xbf16>
    %cst_33 = arith.constant dense<0.000000e+00> : vector<32x8xf32>
    %38 = tpu.matmul %36, %37, %cst_33 {dimension_numbers = #tpu.dot_dimension_numbers<[1], [0], [0], [1], [0, 0, 1, 1], [], []>} : vector<32x32xbf16>, vector<32x8xbf16>, vector<32x8xf32> -> vector<32x8xf32>
    %c0_34 = arith.constant 0 : index
    %c0_35 = arith.constant 0 : index
    %39 = vector.load %arg14[%c0_34, %c0_35] : memref<1x8xf32, #tpu.memory_space<vmem>>, vector<1x8xf32>
    %40 = vector.broadcast %39 : vector<1x8xf32> to vector<32x8xf32>
    %41 = arith.addf %38, %40 : vector<32x8xf32>
    %cst_36 = arith.constant 0.000000e+00 : f32
    %42 = vector.broadcast %cst_36 : f32 to vector<32x8xf32>
    %43 = arith.maximumf %41, %42 : vector<32x8xf32>
    %c0_37 = arith.constant 0 : index
    %c0_38 = arith.constant 0 : index
    %44 = vector.load %arg5[%c0_37, %c0_38] : memref<32x8xf32, #tpu.memory_space<vmem>>, vector<32x8xf32>
    %45 = arith.addf %43, %44 : vector<32x8xf32>
    %c0_39 = arith.constant 0 : index
    %c0_40 = arith.constant 0 : index
    %46 = vector.load %arg25[%c0_39, %c0_40] : memref<32x8xf32, #tpu.memory_space<vmem>>, vector<32x8xf32>
    tpu.vector_store %arg25[%c0_39, %c0_40], %45 {strides = array<i32>} : memref<32x8xf32, #tpu.memory_space<vmem>>, vector<32x8xf32>,
    %c0_41 = arith.constant 0 : index
    %c0_42 = arith.constant 0 : index
    %47 = tpu.strided_load %arg25[%c0_41, %c0_42] {strides = array<i32: 16, 1>} : memref<32x8xf32, #tpu.memory_space<vmem>>, vector<2x8xf32>
    %c1_43 = arith.constant 1 : index
    %c0_44 = arith.constant 0 : index
    %48 = tpu.strided_load %arg25[%c1_43, %c0_44] {strides = array<i32: 16, 1>} : memref<32x8xf32, #tpu.memory_space<vmem>>, vector<2x8xf32>
    %c2_45 = arith.constant 2 : index
    %c0_46 = arith.constant 0 : index
    %49 = tpu.strided_load %arg25[%c2_45, %c0_46] {strides = array<i32: 16, 1>} : memref<32x8xf32, #tpu.memory_space<vmem>>, vector<2x8xf32>
    %c3_47 = arith.constant 3 : index
    %c0_48 = arith.constant 0 : index
    %50 = tpu.strided_load %arg25[%c3_47, %c0_48] {strides = array<i32: 16, 1>} : memref<32x8xf32, #tpu.memory_space<vmem>>, vector<2x8xf32>
    %c4 = arith.constant 4 : index
    %c0_49 = arith.constant 0 : index
    %51 = tpu.strided_load %arg25[%c4, %c0_49] {strides = array<i32: 16, 1>} : memref<32x8xf32, #tpu.memory_space<vmem>>, vector<2x8xf32>
    %c5 = arith.constant 5 : index
    %c0_50 = arith.constant 0 : index
    %52 = tpu.strided_load %arg25[%c5, %c0_50] {strides = array<i32: 16, 1>} : memref<32x8xf32, #tpu.memory_space<vmem>>, vector<2x8xf32>
    %c6 = arith.constant 6 : index
    %c0_51 = arith.constant 0 : index
    %53 = tpu.strided_load %arg25[%c6, %c0_51] {strides = array<i32: 16, 1>} : memref<32x8xf32, #tpu.memory_space<vmem>>, vector<2x8xf32>
    %c7 = arith.constant 7 : index
    %c0_52 = arith.constant 0 : index
    %54 = tpu.strided_load %arg25[%c7, %c0_52] {strides = array<i32: 16, 1>} : memref<32x8xf32, #tpu.memory_space<vmem>>, vector<2x8xf32>
    %c8 = arith.constant 8 : index
    %c0_53 = arith.constant 0 : index
    %55 = tpu.strided_load %arg25[%c8, %c0_53] {strides = array<i32: 16, 1>} : memref<32x8xf32, #tpu.memory_space<vmem>>, vector<2x8xf32>
    %c9 = arith.constant 9 : index
    %c0_54 = arith.constant 0 : index
    %56 = tpu.strided_load %arg25[%c9, %c0_54] {strides = array<i32: 16, 1>} : memref<32x8xf32, #tpu.memory_space<vmem>>, vector<2x8xf32>
    %c10 = arith.constant 10 : index
    %c0_55 = arith.constant 0 : index
    %57 = tpu.strided_load %arg25[%c10, %c0_55] {strides = array<i32: 16, 1>} : memref<32x8xf32, #tpu.memory_space<vmem>>, vector<2x8xf32>
    %c11 = arith.constant 11 : index
    %c0_56 = arith.constant 0 : index
    %58 = tpu.strided_load %arg25[%c11, %c0_56] {strides = array<i32: 16, 1>} : memref<32x8xf32, #tpu.memory_space<vmem>>, vector<2x8xf32>
    %c12 = arith.constant 12 : index
    %c0_57 = arith.constant 0 : index
    %59 = tpu.strided_load %arg25[%c12, %c0_57] {strides = array<i32: 16, 1>} : memref<32x8xf32, #tpu.memory_space<vmem>>, vector<2x8xf32>
    %c13 = arith.constant 13 : index
    %c0_58 = arith.constant 0 : index
    %60 = tpu.strided_load %arg25[%c13, %c0_58] {strides = array<i32: 16, 1>} : memref<32x8xf32, #tpu.memory_space<vmem>>, vector<2x8xf32>
    %c14 = arith.constant 14 : index
    %c0_59 = arith.constant 0 : index
    %61 = tpu.strided_load %arg25[%c14, %c0_59] {strides = array<i32: 16, 1>} : memref<32x8xf32, #tpu.memory_space<vmem>>, vector<2x8xf32>
    %c15 = arith.constant 15 : index
    %c0_60 = arith.constant 0 : index
    %62 = tpu.strided_load %arg25[%c15, %c0_60] {strides = array<i32: 16, 1>} : memref<32x8xf32, #tpu.memory_space<vmem>>, vector<2x8xf32>
    %63 = tpu.concatenate %47, %48, %49, %50, %51, %52, %53, %54, %55, %56, %57, %58, %59, %60, %61, %62 in 1 : vector<2x8xf32>, vector<2x8xf32>, vector<2x8xf32>, vector<2x8xf32>, vector<2x8xf32>, vector<2x8xf32>, vector<2x8xf32>, vector<2x8xf32>, vector<2x8xf32>, vector<2x8xf32>, vector<2x8xf32>, vector<2x8xf32>, vector<2x8xf32>, vector<2x8xf32>, vector<2x8xf32>, vector<2x8xf32> -> vector<2x128xf32>
    %64 = arith.truncf %63 : vector<2x128xf32> to vector<2x128xbf16>
    %c0_61 = arith.constant 0 : index
    %c0_62 = arith.constant 0 : index
    %65 = vector.load %arg10[%c0_61, %c0_62] : memref<128x8xbf16, #tpu.memory_space<vmem>>, vector<128x8xbf16>
    %cst_63 = arith.constant dense<0.000000e+00> : vector<2x8xf32>
    %66 = tpu.matmul %64, %65, %cst_63 {dimension_numbers = #tpu.dot_dimension_numbers<[1], [0], [0], [1], [0, 0, 1, 1], [], []>} : vector<2x128xbf16>, vector<128x8xbf16>, vector<2x8xf32> -> vector<2x8xf32>
    %c0_64 = arith.constant 0 : index
    %c0_65 = arith.constant 0 : index
    %67 = vector.load %arg15[%c0_64, %c0_65] : memref<1x8xf32, #tpu.memory_space<vmem>>, vector<1x8xf32>
    %68 = vector.broadcast %67 : vector<1x8xf32> to vector<2x8xf32>
    %69 = arith.addf %66, %68 : vector<2x8xf32>
    %cst_66 = arith.constant 0.000000e+00 : f32
    %70 = vector.broadcast %cst_66 : f32 to vector<2x8xf32>
    %71 = arith.maximumf %69, %70 : vector<2x8xf32>
    %72 = arith.truncf %71 : vector<2x8xf32> to vector<2x8xbf16>
    %c0_67 = arith.constant 0 : index
    %c0_68 = arith.constant 0 : index
    %73 = vector.load %arg17[%c0_67, %c0_68] : memref<8x256xbf16, #tpu.memory_space<vmem>>, vector<8x256xbf16>
    %cst_69 = arith.constant dense<0.000000e+00> : vector<2x256xf32>
    %74 = tpu.matmul %72, %73, %cst_69 {dimension_numbers = #tpu.dot_dimension_numbers<[1], [0], [0], [1], [0, 0, 1, 1], [], []>} : vector<2x8xbf16>, vector<8x256xbf16>, vector<2x256xf32> -> vector<2x256xf32>
    tpu.wait_dma2 semaphore(%arg26 : memref<!tpu.dma_semaphore, #tpu.memory_space<semaphore_mem>>) src(%arg21 : memref<2304x256xbf16, #tpu.memory_space<any>>) dst(%arg23 : memref<2304x256xbf16, #tpu.memory_space<vmem>>)
    %c0_70 = arith.constant 0 : index
    %c0_71 = arith.constant 0 : index
    %75 = vector.load %arg16[%c0_70, %c0_71] : memref<2x2304xbf16, #tpu.memory_space<vmem>>, vector<2x2304xbf16>
    %c0_72 = arith.constant 0 : index
    %c0_73 = arith.constant 0 : index
    %76 = vector.load %arg23[%c0_72, %c0_73] : memref<2304x256xbf16, #tpu.memory_space<vmem>>, vector<2304x256xbf16>
    %cst_74 = arith.constant dense<0.000000e+00> : vector<2x256xf32>
    %77 = tpu.matmul %75, %76, %cst_74 {dimension_numbers = #tpu.dot_dimension_numbers<[1], [0], [0], [1], [0, 0, 1, 1], [], []>} : vector<2x2304xbf16>, vector<2304x256xbf16>, vector<2x256xf32> -> vector<2x256xf32>
    %78 = arith.addf %74, %77 : vector<2x256xf32>
    %c0_75 = arith.constant 0 : index
    %c0_76 = arith.constant 0 : index
    %79 = vector.load %arg18[%c0_75, %c0_76] : memref<1x256xf32, #tpu.memory_space<vmem>>, vector<1x256xf32>
    %80 = vector.broadcast %79 : vector<1x256xf32> to vector<2x256xf32>
    %81 = arith.addf %78, %80 : vector<2x256xf32>
    %cst_77 = arith.constant 0.000000e+00 : f32
    %82 = vector.broadcast %cst_77 : f32 to vector<2x256xf32>
    %83 = arith.maximumf %81, %82 : vector<2x256xf32>
    %84 = arith.truncf %83 : vector<2x256xf32> to vector<2x256xbf16>
    %c0_78 = arith.constant 0 : index
    %c0_79 = arith.constant 0 : index
    %85 = vector.load %arg19[%c0_78, %c0_79] : memref<256x1xbf16, #tpu.memory_space<vmem>>, vector<256x1xbf16>
    %cst_80 = arith.constant dense<0.000000e+00> : vector<2x1xf32>
    %86 = tpu.matmul %84, %85, %cst_80 {dimension_numbers = #tpu.dot_dimension_numbers<[1], [0], [0], [1], [0, 0, 1, 1], [], []>} : vector<2x256xbf16>, vector<256x1xbf16>, vector<2x1xf32> -> vector<2x1xf32>
    %c0_81 = arith.constant 0 : index
    %c0_82 = arith.constant 0 : index
    %87 = vector.load %arg20[%c0_81, %c0_82] : memref<1x1xf32, #tpu.memory_space<vmem>>, vector<1x1xf32>
    %88 = vector.broadcast %87 : vector<1x1xf32> to vector<2x1xf32>
    %89 = arith.addf %86, %88 : vector<2x1xf32>
    %90 = math.absf %89 : vector<2x1xf32>
    %cst_83 = arith.constant 0.000000e+00 : f32
    %91 = vector.broadcast %cst_83 : f32 to vector<2x1xf32>
    %92 = arith.subf %91, %90 : vector<2x1xf32>
    %93 = math.exp %92 : vector<2x1xf32>
    %cst_84 = arith.constant 0.000000e+00 : f32
    %94 = vector.broadcast %cst_84 : f32 to vector<2x1xf32>
    %95 = arith.cmpf oge, %89, %94 : vector<2x1xf32>
    %cst_85 = arith.constant 1.000000e+00 : f32
    %96 = vector.broadcast %cst_85 : f32 to vector<2x1xf32>
    %97 = arith.addf %96, %93 : vector<2x1xf32>
    %cst_86 = arith.constant 1.000000e+00 : f32
    %98 = vector.broadcast %cst_86 : f32 to vector<2x1xf32>
    %99 = arith.divf %98, %97 : vector<2x1xf32>
    %cst_87 = arith.constant 1.000000e+00 : f32
    %100 = vector.broadcast %cst_87 : f32 to vector<2x1xf32>
    %101 = arith.addf %100, %93 : vector<2x1xf32>
    %102 = arith.divf %93, %101 : vector<2x1xf32>
    %103 = arith.select %95, %99, %102 : vector<2x1xi1>, vector<2x1xf32>
    %c0_88 = arith.constant 0 : index
    %c0_89 = arith.constant 0 : index
    %104 = vector.load %arg22[%c0_88, %c0_89] : memref<2x1xf32, #tpu.memory_space<vmem>>, vector<2x1xf32>
    tpu.vector_store %arg22[%c0_88, %c0_89], %103 {strides = array<i32>} : memref<2x1xf32, #tpu.memory_space<vmem>>, vector<2x1xf32>,
    return
  }
  func.func @transform_0(%arg0: i32) -> (i32, i32) {
    %c0_i32 = arith.constant 0 : i32
    %c0_i32_0 = arith.constant 0 : i32
    %c0_i32_1 = arith.constant 0 : i32
    return %c0_i32, %c0_i32_0 : i32, i32
  }
  func.func @transform_1(%arg0: i32) -> (i32, i32) {
    %c0_i32 = arith.constant 0 : i32
    %c0_i32_0 = arith.constant 0 : i32
    %c0_i32_1 = arith.constant 0 : i32
    return %c0_i32, %c0_i32_0 : i32, i32
  }
  func.func @transform_2(%arg0: i32) -> (i32, i32) {
    %c0_i32 = arith.constant 0 : i32
    %c0_i32_0 = arith.constant 0 : i32
    %c0_i32_1 = arith.constant 0 : i32
    return %c0_i32, %c0_i32_0 : i32, i32
  }
  func.func @transform_3(%arg0: i32) -> (i32, i32) {
    %c0_i32 = arith.constant 0 : i32
    %c0_i32_0 = arith.constant 0 : i32
    %c0_i32_1 = arith.constant 0 : i32
    return %c0_i32, %c0_i32_0 : i32, i32
  }
  func.func @transform_4(%arg0: i32) -> (i32, i32) {
    %c0_i32 = arith.constant 0 : i32
    %c0_i32_0 = arith.constant 0 : i32
    %c0_i32_1 = arith.constant 0 : i32
    return %c0_i32, %c0_i32_0 : i32, i32
  }
  func.func @transform_5(%arg0: i32) -> (i32, i32) {
    %c0_i32 = arith.constant 0 : i32
    %c0_i32_0 = arith.constant 0 : i32
    %c0_i32_1 = arith.constant 0 : i32
    return %c0_i32, %c0_i32_0 : i32, i32
  }
  func.func @transform_6(%arg0: i32) -> (i32, i32) {
    %c0_i32 = arith.constant 0 : i32
    %c0_i32_0 = arith.constant 0 : i32
    %c0_i32_1 = arith.constant 0 : i32
    return %c0_i32, %c0_i32_0 : i32, i32
  }
  func.func @transform_7(%arg0: i32) -> (i32, i32) {
    %c0_i32 = arith.constant 0 : i32
    %c0_i32_0 = arith.constant 0 : i32
    %c0_i32_1 = arith.constant 0 : i32
    return %c0_i32, %c0_i32_0 : i32, i32
  }
  func.func @transform_8(%arg0: i32) -> (i32, i32) {
    %c0_i32 = arith.constant 0 : i32
    %c0_i32_0 = arith.constant 0 : i32
    %c0_i32_1 = arith.constant 0 : i32
    return %c0_i32, %c0_i32_0 : i32, i32
  }
  func.func @transform_9(%arg0: i32) -> (i32, i32) {
    %c0_i32 = arith.constant 0 : i32
    %c0_i32_0 = arith.constant 0 : i32
    %c0_i32_1 = arith.constant 0 : i32
    return %c0_i32, %c0_i32_0 : i32, i32
  }
  func.func @transform_10(%arg0: i32) -> (i32, i32) {
    %c0_i32 = arith.constant 0 : i32
    %c0_i32_0 = arith.constant 0 : i32
    %c0_i32_1 = arith.constant 0 : i32
    return %c0_i32, %c0_i32_0 : i32, i32
  }
  func.func @transform_11(%arg0: i32) -> (i32, i32) {
    %c0_i32 = arith.constant 0 : i32
    %c0_i32_0 = arith.constant 0 : i32
    %c0_i32_1 = arith.constant 0 : i32
    return %c0_i32, %c0_i32_0 : i32, i32
  }
  func.func @transform_12(%arg0: i32) -> (i32, i32) {
    %c0_i32 = arith.constant 0 : i32
    %c0_i32_0 = arith.constant 0 : i32
    %c0_i32_1 = arith.constant 0 : i32
    return %c0_i32, %c0_i32_0 : i32, i32
  }
  func.func @transform_13(%arg0: i32) -> (i32, i32) {
    %c0_i32 = arith.constant 0 : i32
    %c0_i32_0 = arith.constant 0 : i32
    %c0_i32_1 = arith.constant 0 : i32
    return %c0_i32, %c0_i32_0 : i32, i32
  }
  func.func @transform_14(%arg0: i32) -> (i32, i32) {
    %c0_i32 = arith.constant 0 : i32
    %c0_i32_0 = arith.constant 0 : i32
    %c0_i32_1 = arith.constant 0 : i32
    return %c0_i32, %c0_i32_0 : i32, i32
  }
  func.func @transform_15(%arg0: i32) -> (i32, i32) {
    %c0_i32 = arith.constant 0 : i32
    %c0_i32_0 = arith.constant 0 : i32
    %c0_i32_1 = arith.constant 0 : i32
    return %c0_i32, %c0_i32_0 : i32, i32
  }
  func.func @transform_16(%arg0: i32) -> (i32, i32) {
    %c0_i32 = arith.constant 0 : i32
    %c0_i32_0 = arith.constant 0 : i32
    %c0_i32_1 = arith.constant 0 : i32
    return %c0_i32, %c0_i32_0 : i32, i32
  }
  func.func @transform_17(%arg0: i32) -> (i32, i32) {
    %c0_i32 = arith.constant 0 : i32
    %c0_i32_0 = arith.constant 0 : i32
    %c0_i32_1 = arith.constant 0 : i32
    return %c0_i32, %c0_i32_0 : i32, i32
  }
  func.func @transform_18(%arg0: i32) -> (i32, i32) {
    %c0_i32 = arith.constant 0 : i32
    %c0_i32_0 = arith.constant 0 : i32
    %c0_i32_1 = arith.constant 0 : i32
    return %c0_i32, %c0_i32_0 : i32, i32
  }
  func.func @transform_19(%arg0: i32) -> (i32, i32) {
    %c0_i32 = arith.constant 0 : i32
    %c0_i32_0 = arith.constant 0 : i32
    %c0_i32_1 = arith.constant 0 : i32
    return %c0_i32, %c0_i32_0 : i32, i32
  }
  func.func @transform_21(%arg0: i32) -> (i32, i32) {
    %c0_i32 = arith.constant 0 : i32
    %c0_i32_0 = arith.constant 0 : i32
    %c0_i32_1 = arith.constant 0 : i32
    return %c0_i32, %c0_i32_0 : i32, i32
  }
}

</mosaic_0001>

<llo_original>
// kernel: learnloss_mix_forward.1
$region0: #{learnloss_mix_forward.1}
  #allocation0 [shape = 'u32[]', space=smem, size = 0x4, offset = 0x4, fixed_abs, tag = 'smem constant byte address 0x4 - core index']
  #allocation1 [shape = 'u32[144,128]{1,0:T(1,128)}', space=vmem, size = 0x12000, scoped, tag = 'internal scratch']
  #allocation2 [shape = 'bf16[2304,256]{1,0:T(16,128)(2,1)}', space=vmem, size = 0x120000, scoped, tag = 'scratch operand']
  #allocation3 [shape = 'f32[128,8]{1,0:T(8,128)}', space=vmem, size = 0x10000, scoped, tag = 'scratch operand']
  #allocation4 [shape = 'f32[32,8]{1,0:T(8,128)}', space=vmem, size = 0x4000, scoped, tag = 'scratch operand']
  #allocation5 [shape = 's32[1]{0}', space=sflag, size = 0x4, scoped, tag = 'scratch operand']
  #allocation6 [shape = 'f32[1,1]{1,0:T(1,128)S(1)}', space=vmem, size = 0x200, scoped, tag = 'scoped memory for learnloss_mix_forward.1']
  #allocation7 [shape = 's32[]', space=sflag, size = 0x4, offset = 0, fixed_abs, tag = 'sflag constant byte address 0x0 - dummy sync flag']
  %s0 = inlined_call_operand.vmem [shape: bf16[128,512], index: 0, kind: input, shape index: {}]
  %s1 = inlined_call_operand.vmem [shape: f32[128,128], index: 1, kind: input, shape index: {}]
  %s2 = inlined_call_operand.vmem [shape: f32[128,32], index: 2, kind: input, shape index: {}]
  %s3 = inlined_call_operand.vmem [shape: f32[128,8], index: 3, kind: input, shape index: {}]
  %s4 = inlined_call_operand.vmem [shape: f32[32,8], index: 4, kind: input, shape index: {}]
  %s5 = inlined_call_operand.vmem [shape: bf16[512,128], index: 5, kind: input, shape index: {}]
  %s6 = inlined_call_operand.vmem [shape: bf16[128,32], index: 6, kind: input, shape index: {}]
  %s7 = inlined_call_operand.vmem [shape: bf16[32,8], index: 7, kind: input, shape index: {}]
  %s8 = inlined_call_operand.vmem [shape: bf16[32,8], index: 8, kind: input, shape index: {}]
  %s9 = inlined_call_operand.vmem [shape: bf16[128,8], index: 9, kind: input, shape index: {}]
  %s10 = inlined_call_operand.vmem [shape: f32[1,128], index: 10, kind: input, shape index: {}]
  %s11 = inlined_call_operand.vmem [shape: f32[1,32], index: 11, kind: input, shape index: {}]
  %s12 = inlined_call_operand.vmem [shape: f32[1,8], index: 12, kind: input, shape index: {}]
  %s13 = inlined_call_operand.vmem [shape: f32[1,8], index: 13, kind: input, shape index: {}]
  %s14 = inlined_call_operand.vmem [shape: f32[1,8], index: 14, kind: input, shape index: {}]
  %s15 = inlined_call_operand.vmem [shape: bf16[2,2304], index: 15, kind: input, shape index: {}]
  %s16 = inlined_call_operand.vmem [shape: bf16[8,256], index: 16, kind: input, shape index: {}]
  %s17 = inlined_call_operand.vmem [shape: f32[1,256], index: 17, kind: input, shape index: {}]
  %s18 = inlined_call_operand.vmem [shape: bf16[256,1], index: 18, kind: input, shape index: {}]
  %s19 = inlined_call_operand.<no memory space> [shape: f32[1,1], index: 19, kind: input, shape index: {}]
  %s20 = inlined_call_operand.vmem [shape: bf16[2304,256], index: 20, kind: input, shape index: {}]
  %s21 = inlined_call_operand.vmem [shape: f32[2,1], index: 21, kind: output, shape index: {}]
  %s22 = sld [smem:[#allocation0]]
  $region138: #{learnloss_mix_forward.1} parent=0
    _
  %s24 = ssub.s32 1, %s22
  %s25 = scalar_select 0, %s24, %s22
  %v26 = vstv %s19
  %27 = vst [vmem:[#allocation6] sm:$0x1] %v26
  // Predicated region
  $region2: #{learnloss_mix_forward.1} parent=0 // pred_check
    _
  $region3: #{learnloss_mix_forward.1} parent=0 // pred_check_branch
    %29 = sbr.rel (0) target = $region5
  $region4: #{learnloss_mix_forward.1} parent=0 // pred_region
    _
  $region5: #{learnloss_mix_forward.1} parent=0 // pred_fallthru
    _
  // Predicated region
  $region6: #{learnloss_mix_forward.1} parent=0 // pred_check
    _
  $region7: #{learnloss_mix_forward.1} parent=0 // pred_check_branch
    %31 = sbr.rel (0) target = $region9
  $region8: #{learnloss_mix_forward.1} parent=0 // pred_region
    _
  $region9: #{learnloss_mix_forward.1} parent=0 // pred_fallthru
    _
  // Predicated region
  $region10: #{learnloss_mix_forward.1} parent=0 // pred_check
    _
  $region11: #{learnloss_mix_forward.1} parent=0 // pred_check_branch
    %33 = sbr.rel (0) target = $region13
  $region12: #{learnloss_mix_forward.1} parent=0 // pred_region
    _
  $region13: #{learnloss_mix_forward.1} parent=0 // pred_fallthru
    _
  // Predicated region
  $region14: #{learnloss_mix_forward.1} parent=0 // pred_check
    _
  $region15: #{learnloss_mix_forward.1} parent=0 // pred_check_branch
    %35 = sbr.rel (0) target = $region17
  $region16: #{learnloss_mix_forward.1} parent=0 // pred_region
    _
  $region17: #{learnloss_mix_forward.1} parent=0 // pred_fallthru
    _
  // Predicated region
  $region18: #{learnloss_mix_forward.1} parent=0 // pred_check
    _
  $region19: #{learnloss_mix_forward.1} parent=0 // pred_check_branch
    %37 = sbr.rel (0) target = $region21
  $region20: #{learnloss_mix_forward.1} parent=0 // pred_region
    _
  $region21: #{learnloss_mix_forward.1} parent=0 // pred_fallthru
    _
  // Predicated region
  $region22: #{learnloss_mix_forward.1} parent=0 // pred_check
    _
  $region23: #{learnloss_mix_forward.1} parent=0 // pred_check_branch
    %39 = sbr.rel (0) target = $region25
  $region24: #{learnloss_mix_forward.1} parent=0 // pred_region
    _
  $region25: #{learnloss_mix_forward.1} parent=0 // pred_fallthru
    _
  // Predicated region
  $region26: #{learnloss_mix_forward.1} parent=0 // pred_check
    _
  $region27: #{learnloss_mix_forward.1} parent=0 // pred_check_branch
    %41 = sbr.rel (0) target = $region29
  $region28: #{learnloss_mix_forward.1} parent=0 // pred_region
    _
  $region29: #{learnloss_mix_forward.1} parent=0 // pred_fallthru
    _
  // Predicated region
  $region30: #{learnloss_mix_forward.1} parent=0 // pred_check
    _
  $region31: #{learnloss_mix_forward.1} parent=0 // pred_check_branch
    %43 = sbr.rel (0) target = $region33
  $region32: #{learnloss_mix_forward.1} parent=0 // pred_region
    _
  $region33: #{learnloss_mix_forward.1} parent=0 // pred_fallthru
    _
  // Predicated region
  $region34: #{learnloss_mix_forward.1} parent=0 // pred_check
    _
  $region35: #{learnloss_mix_forward.1} parent=0 // pred_check_branch
    %45 = sbr.rel (0) target = $region37
  $region36: #{learnloss_mix_forward.1} parent=0 // pred_region
    _
  $region37: #{learnloss_mix_forward.1} parent=0 // pred_fallthru
    _
  // Predicated region
  $region38: #{learnloss_mix_forward.1} parent=0 // pred_check
    _
  $region39: #{learnloss_mix_forward.1} parent=0 // pred_check_branch
    %47 = sbr.rel (0) target = $region41
  $region40: #{learnloss_mix_forward.1} parent=0 // pred_region
    _
  $region41: #{learnloss_mix_forward.1} parent=0 // pred_fallthru
    _
  // Predicated region
  $region42: #{learnloss_mix_forward.1} parent=0 // pred_check
    _
  $region43: #{learnloss_mix_forward.1} parent=0 // pred_check_branch
    %49 = sbr.rel (0) target = $region45
  $region44: #{learnloss_mix_forward.1} parent=0 // pred_region
    _
  $region45: #{learnloss_mix_forward.1} parent=0 // pred_fallthru
    _
  // Predicated region
  $region46: #{learnloss_mix_forward.1} parent=0 // pred_check
    _
  $region47: #{learnloss_mix_forward.1} parent=0 // pred_check_branch
    %51 = sbr.rel (0) target = $region49
  $region48: #{learnloss_mix_forward.1} parent=0 // pred_region
    _
  $region49: #{learnloss_mix_forward.1} parent=0 // pred_fallthru
    _
  // Predicated region
  $region50: #{learnloss_mix_forward.1} parent=0 // pred_check
    _
  $region51: #{learnloss_mix_forward.1} parent=0 // pred_check_branch
    %53 = sbr.rel (0) target = $region53
  $region52: #{learnloss_mix_forward.1} parent=0 // pred_region
    _
  $region53: #{learnloss_mix_forward.1} parent=0 // pred_fallthru
    _
  // Predicated region
  $region54: #{learnloss_mix_forward.1} parent=0 // pred_check
    _
  $region55: #{learnloss_mix_forward.1} parent=0 // pred_check_branch
    %55 = sbr.rel (0) target = $region57
  $region56: #{learnloss_mix_forward.1} parent=0 // pred_region
    _
  $region57: #{learnloss_mix_forward.1} parent=0 // pred_fallthru
    _
  // Predicated region
  $region58: #{learnloss_mix_forward.1} parent=0 // pred_check
    _
  $region59: #{learnloss_mix_forward.1} parent=0 // pred_check_branch
    %57 = sbr.rel (0) target = $region61
  $region60: #{learnloss_mix_forward.1} parent=0 // pred_region
    _
  $region61: #{learnloss_mix_forward.1} parent=0 // pred_fallthru
    _
  // Predicated region
  $region62: #{learnloss_mix_forward.1} parent=0 // pred_check
    _
  $region63: #{learnloss_mix_forward.1} parent=0 // pred_check_branch
    %59 = sbr.rel (0) target = $region65
  $region64: #{learnloss_mix_forward.1} parent=0 // pred_region
    _
  $region65: #{learnloss_mix_forward.1} parent=0 // pred_fallthru
    _
  // Predicated region
  $region66: #{learnloss_mix_forward.1} parent=0 // pred_check
    _
  $region67: #{learnloss_mix_forward.1} parent=0 // pred_check_branch
    %61 = sbr.rel (0) target = $region69
  $region68: #{learnloss_mix_forward.1} parent=0 // pred_region
    _
  $region69: #{learnloss_mix_forward.1} parent=0 // pred_fallthru
    _
  // Predicated region
  $region70: #{learnloss_mix_forward.1} parent=0 // pred_check
    _
  $region71: #{learnloss_mix_forward.1} parent=0 // pred_check_branch
    %63 = sbr.rel (0) target = $region73
  $region72: #{learnloss_mix_forward.1} parent=0 // pred_region
    _
  $region73: #{learnloss_mix_forward.1} parent=0 // pred_fallthru
    _
  // Predicated region
  $region74: #{learnloss_mix_forward.1} parent=0 // pred_check
    _
  $region75: #{learnloss_mix_forward.1} parent=0 // pred_check_branch
    %65 = sbr.rel (0) target = $region77
  $region76: #{learnloss_mix_forward.1} parent=0 // pred_region
    _
  $region77: #{learnloss_mix_forward.1} parent=0 // pred_fallthru
    _
  // Predicated region
  $region78: #{learnloss_mix_forward.1} parent=0 // pred_check
    _
  $region79: #{learnloss_mix_forward.1} parent=0 // pred_check_branch
    %67 = sbr.rel (0) target = $region81
  $region80: #{learnloss_mix_forward.1} parent=0 // pred_region
    _
  $region81: #{learnloss_mix_forward.1} parent=0 // pred_fallthru
    _
  %p70 = scmp.lt.u32.totalorder 4, 8
  %p71 = pneg %p70
  // Predicated region
  $region82: #{learnloss_mix_forward.1} parent=0 // pred_check
    _
  $region83: #{learnloss_mix_forward.1} parent=0 // pred_check_branch
    %73 = sbr.rel (%p70) target = $region85
  $region84: #{learnloss_mix_forward.1} parent=0 // pred_region
    %s1238 = sand.u32 4, 7
    %p1239 = scmp.eq.s32.totalorder %s1238, 0
    // Predicated region
    $region97: #{learnloss_mix_forward.1} parent=84 // pred_check
      %p1240 = pneg %p1239
    $region98: #{learnloss_mix_forward.1} parent=84 // pred_check_branch
      %1242 = sbr.rel (%p1240) target = $region100
    $region99: #{learnloss_mix_forward.1} parent=84 // pred_region
      %s1243 = sshrl.u32 4, 3
      // While loop
      $region101: #{learnloss_mix_forward.1} parent=99 // loop_pre_header
        _
      $region102: #{learnloss_mix_forward.1} parent=99 // loop_header
        %s1247 = sphi 0, %s1249
        %p1248 = scmp.ge.s32.totalorder %s1247, %s1243
        %s1252 = sphi 0, %s2409
        %s1253 = sphi %s20, %s2412
        %s1254 = sphi [#allocation2], %s2413
      $region103: #{learnloss_mix_forward.1} parent=99 // loop_header_branch
        %1251 = sbr.rel (%p1248) target = $region107
      $region104: #{learnloss_mix_forward.1} parent=99 // loop_body
        %v1255 = vld [vmem:[%s1253] sm:$0xff]
        %1256 = vst [vmem:[%s1254] sm:$0xff] %v1255
        %v1257 = vld [vmem:[%s1253 + $0x8] sm:$0xff]
        %1258 = vst [vmem:[%s1254 + $0x4] sm:$0xff] %v1257
        %v1259 = vld [vmem:[%s1253 + $0x4] sm:$0xff]
        %1260 = vst [vmem:[%s1254 + $0x8] sm:$0xff] %v1259
        %v1261 = vld [vmem:[%s1253 + $0xc] sm:$0xff]
        %1262 = vst [vmem:[%s1254 + $0xc] sm:$0xff] %v1261
        %v1263 = vld [vmem:[%s1253 + $0x10] sm:$0xff]
        %1264 = vst [vmem:[%s1254 + $0x10] sm:$0xff] %v1263
        %v1265 = vld [vmem:[%s1253 + $0x18] sm:$0xff]
        %1266 = vst [vmem:[%s1254 + $0x14] sm:$0xff] %v1265
        %v1267 = vld [vmem:[%s1253 + $0x14] sm:$0xff]
        %1268 = vst [vmem:[%s1254 + $0x18] sm:$0xff] %v1267
        %v1269 = vld [vmem:[%s1253 + $0x1c] sm:$0xff]
        %1270 = vst [vmem:[%s1254 + $0x1c] sm:$0xff] %v1269
        %v1271 = vld [vmem:[%s1253 + $0x20] sm:$0xff]
        %1272 = vst [vmem:[%s1254 + $0x20] sm:$0xff] %v1271
        %v1273 = vld [vmem:[%s1253 + $0x28] sm:$0xff]
        %1274 = vst [vmem:[%s1254 + $0x24] sm:$0xff] %v1273
        %v1275 = vld [vmem:[%s1253 + $0x24] sm:$0xff]
        %1276 = vst [vmem:[%s1254 + $0x28] sm:$0xff] %v1275
        %v1277 = vld [vmem:[%s1253 + $0x2c] sm:$0xff]
        %1278 = vst [vmem:[%s1254 + $0x2c] sm:$0xff] %v1277
        %v1279 = vld [vmem:[%s1253 + $0x30] sm:$0xff]
        %1280 = vst [vmem:[%s1254 + $0x30] sm:$0xff] %v1279
        %v1281 = vld [vmem:[%s1253 + $0x38] sm:$0xff]
        %1282 = vst [vmem:[%s1254 + $0x34] sm:$0xff] %v1281
        %v1283 = vld [vmem:[%s1253 + $0x34] sm:$0xff]
        %1284 = vst [vmem:[%s1254 + $0x38] sm:$0xff] %v1283
        %v1285 = vld [vmem:[%s1253 + $0x3c] sm:$0xff]
        %1286 = vst [vmem:[%s1254 + $0x3c] sm:$0xff] %v1285
        %v1287 = vld [vmem:[%s1253 + $0x40] sm:$0xff]
        %1288 = vst [vmem:[%s1254 + $0x40] sm:$0xff] %v1287
        %v1289 = vld [vmem:[%s1253 + $0x48] sm:$0xff]
        %1290 = vst [vmem:[%s1254 + $0x44] sm:$0xff] %v1289
        %v1291 = vld [vmem:[%s1253 + $0x44] sm:$0xff]
        %1292 = vst [vmem:[%s1254 + $0x48] sm:$0xff] %v1291
        %v1293 = vld [vmem:[%s1253 + $0x4c] sm:$0xff]
        %1294 = vst [vmem:[%s1254 + $0x4c] sm:$0xff] %v1293
        %v1295 = vld [vmem:[%s1253 + $0x50] sm:$0xff]
        %1296 = vst [vmem:[%s1254 + $0x50] sm:$0xff] %v1295
        %v1297 = vld [vmem:[%s1253 + $0x58] sm:$0xff]
        %1298 = vst [vmem:[%s1254 + $0x54] sm:$0xff] %v1297
        %v1299 = vld [vmem:[%s1253 + $0x54] sm:$0xff]
        %1300 = vst [vmem:[%s1254 + $0x58] sm:$0xff] %v1299
        %v1301 = vld [vmem:[%s1253 + $0x5c] sm:$0xff]
        %1302 = vst [vmem:[%s1254 + $0x5c] sm:$0xff] %v1301
        %v1303 = vld [vmem:[%s1253 + $0x60] sm:$0xff]
        %1304 = vst [vmem:[%s1254 + $0x60] sm:$0xff] %v1303
        %v1305 = vld [vmem:[%s1253 + $0x68] sm:$0xff]
        %1306 = vst [vmem:[%s1254 + $0x64] sm:$0xff] %v1305
        %v1307 = vld [vmem:[%s1253 + $0x64] sm:$0xff]
        %1308 = vst [vmem:[%s1254 + $0x68] sm:$0xff] %v1307
        %v1309 = vld [vmem:[%s1253 + $0x6c] sm:$0xff]
        %1310 = vst [vmem:[%s1254 + $0x6c] sm:$0xff] %v1309
        %v1311 = vld [vmem:[%s1253 + $0x70] sm:$0xff]
        %1312 = vst [vmem:[%s1254 + $0x70] sm:$0xff] %v1311
        %v1313 = vld [vmem:[%s1253 + $0x78] sm:$0xff]
        %1314 = vst [vmem:[%s1254 + $0x74] sm:$0xff] %v1313
        %v1315 = vld [vmem:[%s1253 + $0x74] sm:$0xff]
        %1316 = vst [vmem:[%s1254 + $0x78] sm:$0xff] %v1315
        %v1317 = vld [vmem:[%s1253 + $0x7c] sm:$0xff]
        %1318 = vst [vmem:[%s1254 + $0x7c] sm:$0xff] %v1317
        %v1319 = vld [vmem:[%s1253 + $0x80] sm:$0xff]
        %1320 = vst [vmem:[%s1254 + $0x80] sm:$0xff] %v1319
        %v1321 = vld [vmem:[%s1253 + $0x88] sm:$0xff]
        %1322 = vst [vmem:[%s1254 + $0x84] sm:$0xff] %v1321
        %v1323 = vld [vmem:[%s1253 + $0x84] sm:$0xff]
        %1324 = vst [vmem:[%s1254 + $0x88] sm:$0xff] %v1323
        %v1325 = vld [vmem:[%s1253 + $0x8c] sm:$0xff]
        %1326 = vst [vmem:[%s1254 + $0x8c] sm:$0xff] %v1325
        %v1327 = vld [vmem:[%s1253 + $0x90] sm:$0xff]
        %1328 = vst [vmem:[%s1254 + $0x90] sm:$0xff] %v1327
        %v1329 = vld [vmem:[%s1253 + $0x98] sm:$0xff]
        %1330 = vst [vmem:[%s1254 + $0x94] sm:$0xff] %v1329
        %v1331 = vld [vmem:[%s1253 + $0x94] sm:$0xff]
        %1332 = vst [vmem:[%s1254 + $0x98] sm:$0xff] %v1331
        %v1333 = vld [vmem:[%s1253 + $0x9c] sm:$0xff]
        %1334 = vst [vmem:[%s1254 + $0x9c] sm:$0xff] %v1333
        %v1335 = vld [vmem:[%s1253 + $0xa0] sm:$0xff]
        %1336 = vst [vmem:[%s1254 + $0xa0] sm:$0xff] %v1335
        %v1337 = vld [vmem:[%s1253 + $0xa8] sm:$0xff]
        %1338 = vst [vmem:[%s1254 + $0xa4] sm:$0xff] %v1337
        %v1339 = vld [vmem:[%s1253 + $0xa4] sm:$0xff]
        %1340 = vst [vmem:[%s1254 + $0xa8] sm:$0xff] %v1339
        %v1341 = vld [vmem:[%s1253 + $0xac] sm:$0xff]
        %1342 = vst [vmem:[%s1254 + $0xac] sm:$0xff] %v1341
        %v1343 = vld [vmem:[%s1253 + $0xb0] sm:$0xff]
        %1344 = vst [vmem:[%s1254 + $0xb0] sm:$0xff] %v1343
        %v1345 = vld [vmem:[%s1253 + $0xb8] sm:$0xff]
        %1346 = vst [vmem:[%s1254 + $0xb4] sm:$0xff] %v1345
        %v1347 = vld [vmem:[%s1253 + $0xb4] sm:$0xff]
        %1348 = vst [vmem:[%s1254 + $0xb8] sm:$0xff] %v1347
        %v1349 = vld [vmem:[%s1253 + $0xbc] sm:$0xff]
        %1350 = vst [vmem:[%s1254 + $0xbc] sm:$0xff] %v1349
        %v1351 = vld [vmem:[%s1253 + $0xc0] sm:$0xff]
        %1352 = vst [vmem:[%s1254 + $0xc0] sm:$0xff] %v1351
        %v1353 = vld [vmem:[%s1253 + $0xc8] sm:$0xff]
        %1354 = vst [vmem:[%s1254 + $0xc4] sm:$0xff] %v1353
        %v1355 = vld [vmem:[%s1253 + $0xc4] sm:$0xff]
        %1356 = vst [vmem:[%s1254 + $0xc8] sm:$0xff] %v1355
        %v1357 = vld [vmem:[%s1253 + $0xcc] sm:$0xff]
        %1358 = vst [vmem:[%s1254 + $0xcc] sm:$0xff] %v1357
        %v1359 = vld [vmem:[%s1253 + $0xd0] sm:$0xff]
        %1360 = vst [vmem:[%s1254 + $0xd0] sm:$0xff] %v1359
        %v1361 = vld [vmem:[%s1253 + $0xd8] sm:$0xff]
        %1362 = vst [vmem:[%s1254 + $0xd4] sm:$0xff] %v1361
        %v1363 = vld [vmem:[%s1253 + $0xd4] sm:$0xff]
        %1364 = vst [vmem:[%s1254 + $0xd8] sm:$0xff] %v1363
        %v1365 = vld [vmem:[%s1253 + $0xdc] sm:$0xff]
        %1366 = vst [vmem:[%s1254 + $0xdc] sm:$0xff] %v1365
        %v1367 = vld [vmem:[%s1253 + $0xe0] sm:$0xff]
        %1368 = vst [vmem:[%s1254 + $0xe0] sm:$0xff] %v1367
        %v1369 = vld [vmem:[%s1253 + $0xe8] sm:$0xff]
        %1370 = vst [vmem:[%s1254 + $0xe4] sm:$0xff] %v1369
        %v1371 = vld [vmem:[%s1253 + $0xe4] sm:$0xff]
        %1372 = vst [vmem:[%s1254 + $0xe8] sm:$0xff] %v1371
        %v1373 = vld [vmem:[%s1253 + $0xec] sm:$0xff]
        %1374 = vst [vmem:[%s1254 + $0xec] sm:$0xff] %v1373
        %v1375 = vld [vmem:[%s1253 + $0xf0] sm:$0xff]
        %1376 = vst [vmem:[%s1254 + $0xf0] sm:$0xff] %v1375
        %v1377 = vld [vmem:[%s1253 + $0xf8] sm:$0xff]
        %1378 = vst [vmem:[%s1254 + $0xf4] sm:$0xff] %v1377
        %v1379 = vld [vmem:[%s1253 + $0xf4] sm:$0xff]
        %1380 = vst [vmem:[%s1254 + $0xf8] sm:$0xff] %v1379
        %v1381 = vld [vmem:[%s1253 + $0xfc] sm:$0xff]
        %1382 = vst [vmem:[%s1254 + $0xfc] sm:$0xff] %v1381
        %v1383 = vld [vmem:[%s1253 + $0x100] sm:$0xff]
        %1384 = vst [vmem:[%s1254 + $0x100] sm:$0xff] %v1383
        %v1385 = vld [vmem:[%s1253 + $0x108] sm:$0xff]
        %1386 = vst [vmem:[%s1254 + $0x104] sm:$0xff] %v1385
        %v1387 = vld [vmem:[%s1253 + $0x104] sm:$0xff]
        %1388 = vst [vmem:[%s1254 + $0x108] sm:$0xff] %v1387
        %v1389 = vld [vmem:[%s1253 + $0x10c] sm:$0xff]
        %1390 = vst [vmem:[%s1254 + $0x10c] sm:$0xff] %v1389
        %v1391 = vld [vmem:[%s1253 + $0x110] sm:$0xff]
        %1392 = vst [vmem:[%s1254 + $0x110] sm:$0xff] %v1391
        %v1393 = vld [vmem:[%s1253 + $0x118] sm:$0xff]
        %1394 = vst [vmem:[%s1254 + $0x114] sm:$0xff] %v1393
        %v1395 = vld [vmem:[%s1253 + $0x114] sm:$0xff]
        %1396 = vst [vmem:[%s1254 + $0x118] sm:$0xff] %v1395
        %v1397 = vld [vmem:[%s1253 + $0x11c] sm:$0xff]
        %1398 = vst [vmem:[%s1254 + $0x11c] sm:$0xff] %v1397
        %v1399 = vld [vmem:[%s1253 + $0x120] sm:$0xff]
        %1400 = vst [vmem:[%s1254 + $0x120] sm:$0xff] %v1399
        %v1401 = vld [vmem:[%s1253 + $0x128] sm:$0xff]
        %1402 = vst [vmem:[%s1254 + $0x124] sm:$0xff] %v1401
        %v1403 = vld [vmem:[%s1253 + $0x124] sm:$0xff]
        %1404 = vst [vmem:[%s1254 + $0x128] sm:$0xff] %v1403
        %v1405 = vld [vmem:[%s1253 + $0x12c] sm:$0xff]
        %1406 = vst [vmem:[%s1254 + $0x12c] sm:$0xff] %v1405
        %v1407 = vld [vmem:[%s1253 + $0x130] sm:$0xff]
        %1408 = vst [vmem:[%s1254 + $0x130] sm:$0xff] %v1407
        %v1409 = vld [vmem:[%s1253 + $0x138] sm:$0xff]
        %1410 = vst [vmem:[%s1254 + $0x134] sm:$0xff] %v1409
        %v1411 = vld [vmem:[%s1253 + $0x134] sm:$0xff]
        %1412 = vst [vmem:[%s1254 + $0x138] sm:$0xff] %v1411
        %v1413 = vld [vmem:[%s1253 + $0x13c] sm:$0xff]
        %1414 = vst [vmem:[%s1254 + $0x13c] sm:$0xff] %v1413
        %v1415 = vld [vmem:[%s1253 + $0x140] sm:$0xff]
        %1416 = vst [vmem:[%s1254 + $0x140] sm:$0xff] %v1415
        %v1417 = vld [vmem:[%s1253 + $0x148] sm:$0xff]
        %1418 = vst [vmem:[%s1254 + $0x144] sm:$0xff] %v1417
        %v1419 = vld [vmem:[%s1253 + $0x144] sm:$0xff]
        %1420 = vst [vmem:[%s1254 + $0x148] sm:$0xff] %v1419
        %v1421 = vld [vmem:[%s1253 + $0x14c] sm:$0xff]
        %1422 = vst [vmem:[%s1254 + $0x14c] sm:$0xff] %v1421
        %v1423 = vld [vmem:[%s1253 + $0x150] sm:$0xff]
        %1424 = vst [vmem:[%s1254 + $0x150] sm:$0xff] %v1423
        %v1425 = vld [vmem:[%s1253 + $0x158] sm:$0xff]
        %1426 = vst [vmem:[%s1254 + $0x154] sm:$0xff] %v1425
        %v1427 = vld [vmem:[%s1253 + $0x154] sm:$0xff]
        %1428 = vst [vmem:[%s1254 + $0x158] sm:$0xff] %v1427
        %v1429 = vld [vmem:[%s1253 + $0x15c] sm:$0xff]
        %1430 = vst [vmem:[%s1254 + $0x15c] sm:$0xff] %v1429
        %v1431 = vld [vmem:[%s1253 + $0x160] sm:$0xff]
        %1432 = vst [vmem:[%s1254 + $0x160] sm:$0xff] %v1431
        %v1433 = vld [vmem:[%s1253 + $0x168] sm:$0xff]
        %1434 = vst [vmem:[%s1254 + $0x164] sm:$0xff] %v1433
        %v1435 = vld [vmem:[%s1253 + $0x164] sm:$0xff]
        %1436 = vst [vmem:[%s1254 + $0x168] sm:$0xff] %v1435
        %v1437 = vld [vmem:[%s1253 + $0x16c] sm:$0xff]
        %1438 = vst [vmem:[%s1254 + $0x16c] sm:$0xff] %v1437
        %v1439 = vld [vmem:[%s1253 + $0x170] sm:$0xff]
        %1440 = vst [vmem:[%s1254 + $0x170] sm:$0xff] %v1439
        %v1441 = vld [vmem:[%s1253 + $0x178] sm:$0xff]
        %1442 = vst [vmem:[%s1254 + $0x174] sm:$0xff] %v1441
        %v1443 = vld [vmem:[%s1253 + $0x174] sm:$0xff]
        %1444 = vst [vmem:[%s1254 + $0x178] sm:$0xff] %v1443
        %v1445 = vld [vmem:[%s1253 + $0x17c] sm:$0xff]
        %1446 = vst [vmem:[%s1254 + $0x17c] sm:$0xff] %v1445
        %v1447 = vld [vmem:[%s1253 + $0x180] sm:$0xff]
        %1448 = vst [vmem:[%s1254 + $0x180] sm:$0xff] %v1447
        %v1449 = vld [vmem:[%s1253 + $0x188] sm:$0xff]
        %1450 = vst [vmem:[%s1254 + $0x184] sm:$0xff] %v1449
        %v1451 = vld [vmem:[%s1253 + $0x184] sm:$0xff]
        %1452 = vst [vmem:[%s1254 + $0x188] sm:$0xff] %v1451
        %v1453 = vld [vmem:[%s1253 + $0x18c] sm:$0xff]
        %1454 = vst [vmem:[%s1254 + $0x18c] sm:$0xff] %v1453
        %v1455 = vld [vmem:[%s1253 + $0x190] sm:$0xff]
        %1456 = vst [vmem:[%s1254 + $0x190] sm:$0xff] %v1455
        %v1457 = vld [vmem:[%s1253 + $0x198] sm:$0xff]
        %1458 = vst [vmem:[%s1254 + $0x194] sm:$0xff] %v1457
        %v1459 = vld [vmem:[%s1253 + $0x194] sm:$0xff]
        %1460 = vst [vmem:[%s1254 + $0x198] sm:$0xff] %v1459
        %v1461 = vld [vmem:[%s1253 + $0x19c] sm:$0xff]
        %1462 = vst [vmem:[%s1254 + $0x19c] sm:$0xff] %v1461
        %v1463 = vld [vmem:[%s1253 + $0x1a0] sm:$0xff]
        %1464 = vst [vmem:[%s1254 + $0x1a0] sm:$0xff] %v1463
        %v1465 = vld [vmem:[%s1253 + $0x1a8] sm:$0xff]
        %1466 = vst [vmem:[%s1254 + $0x1a4] sm:$0xff] %v1465
        %v1467 = vld [vmem:[%s1253 + $0x1a4] sm:$0xff]
        %1468 = vst [vmem:[%s1254 + $0x1a8] sm:$0xff] %v1467
        %v1469 = vld [vmem:[%s1253 + $0x1ac] sm:$0xff]
        %1470 = vst [vmem:[%s1254 + $0x1ac] sm:$0xff] %v1469
        %v1471 = vld [vmem:[%s1253 + $0x1b0] sm:$0xff]
        %1472 = vst [vmem:[%s1254 + $0x1b0] sm:$0xff] %v1471
        %v1473 = vld [vmem:[%s1253 + $0x1b8] sm:$0xff]
        %1474 = vst [vmem:[%s1254 + $0x1b4] sm:$0xff] %v1473
        %v1475 = vld [vmem:[%s1253 + $0x1b4] sm:$0xff]
        %1476 = vst [vmem:[%s1254 + $0x1b8] sm:$0xff] %v1475
        %v1477 = vld [vmem:[%s1253 + $0x1bc] sm:$0xff]
        %1478 = vst [vmem:[%s1254 + $0x1bc] sm:$0xff] %v1477
        %v1479 = vld [vmem:[%s1253 + $0x1c0] sm:$0xff]
        %1480 = vst [vmem:[%s1254 + $0x1c0] sm:$0xff] %v1479
        %v1481 = vld [vmem:[%s1253 + $0x1c8] sm:$0xff]
        %1482 = vst [vmem:[%s1254 + $0x1c4] sm:$0xff] %v1481
        %v1483 = vld [vmem:[%s1253 + $0x1c4] sm:$0xff]
        %1484 = vst [vmem:[%s1254 + $0x1c8] sm:$0xff] %v1483
        %v1485 = vld [vmem:[%s1253 + $0x1cc] sm:$0xff]
        %1486 = vst [vmem:[%s1254 + $0x1cc] sm:$0xff] %v1485
        %v1487 = vld [vmem:[%s1253 + $0x1d0] sm:$0xff]
        %1488 = vst [vmem:[%s1254 + $0x1d0] sm:$0xff] %v1487
        %v1489 = vld [vmem:[%s1253 + $0x1d8] sm:$0xff]
        %1490 = vst [vmem:[%s1254 + $0x1d4] sm:$0xff] %v1489
        %v1491 = vld [vmem:[%s1253 + $0x1d4] sm:$0xff]
        %1492 = vst [vmem:[%s1254 + $0x1d8] sm:$0xff] %v1491
        %v1493 = vld [vmem:[%s1253 + $0x1dc] sm:$0xff]
        %1494 = vst [vmem:[%s1254 + $0x1dc] sm:$0xff] %v1493
        %v1495 = vld [vmem:[%s1253 + $0x1e0] sm:$0xff]
        %1496 = vst [vmem:[%s1254 + $0x1e0] sm:$0xff] %v1495
        %v1497 = vld [vmem:[%s1253 + $0x1e8] sm:$0xff]
        %1498 = vst [vmem:[%s1254 + $0x1e4] sm:$0xff] %v1497
        %v1499 = vld [vmem:[%s1253 + $0x1e4] sm:$0xff]
        %1500 = vst [vmem:[%s1254 + $0x1e8] sm:$0xff] %v1499
        %v1501 = vld [vmem:[%s1253 + $0x1ec] sm:$0xff]
        %1502 = vst [vmem:[%s1254 + $0x1ec] sm:$0xff] %v1501
        %v1503 = vld [vmem:[%s1253 + $0x1f0] sm:$0xff]
        %1504 = vst [vmem:[%s1254 + $0x1f0] sm:$0xff] %v1503
        %v1505 = vld [vmem:[%s1253 + $0x1f8] sm:$0xff]
        %1506 = vst [vmem:[%s1254 + $0x1f4] sm:$0xff] %v1505
        %v1507 = vld [vmem:[%s1253 + $0x1f4] sm:$0xff]
        %1508 = vst [vmem:[%s1254 + $0x1f8] sm:$0xff] %v1507
        %v1509 = vld [vmem:[%s1253 + $0x1fc] sm:$0xff]
        %1510 = vst [vmem:[%s1254 + $0x1fc] sm:$0xff] %v1509
        %v1511 = vld [vmem:[%s1253 + $0x200] sm:$0xff]
        %1512 = vst [vmem:[%s1254 + $0x200] sm:$0xff] %v1511
        %v1513 = vld [vmem:[%s1253 + $0x208] sm:$0xff]
        %1514 = vst [vmem:[%s1254 + $0x204] sm:$0xff] %v1513
        %v1515 = vld [vmem:[%s1253 + $0x204] sm:$0xff]
        %1516 = vst [vmem:[%s1254 + $0x208] sm:$0xff] %v1515
        %v1517 = vld [vmem:[%s1253 + $0x20c] sm:$0xff]
        %1518 = vst [vmem:[%s1254 + $0x20c] sm:$0xff] %v1517
        %v1519 = vld [vmem:[%s1253 + $0x210] sm:$0xff]
        %1520 = vst [vmem:[%s1254 + $0x210] sm:$0xff] %v1519
        %v1521 = vld [vmem:[%s1253 + $0x218] sm:$0xff]
        %1522 = vst [vmem:[%s1254 + $0x214] sm:$0xff] %v1521
        %v1523 = vld [vmem:[%s1253 + $0x214] sm:$0xff]
        %1524 = vst [vmem:[%s1254 + $0x218] sm:$0xff] %v1523
        %v1525 = vld [vmem:[%s1253 + $0x21c] sm:$0xff]
        %1526 = vst [vmem:[%s1254 + $0x21c] sm:$0xff] %v1525
        %v1527 = vld [vmem:[%s1253 + $0x220] sm:$0xff]
        %1528 = vst [vmem:[%s1254 + $0x220] sm:$0xff] %v1527
        %v1529 = vld [vmem:[%s1253 + $0x228] sm:$0xff]
        %1530 = vst [vmem:[%s1254 + $0x224] sm:$0xff] %v1529
        %v1531 = vld [vmem:[%s1253 + $0x224] sm:$0xff]
        %1532 = vst [vmem:[%s1254 + $0x228] sm:$0xff] %v1531
        %v1533 = vld [vmem:[%s1253 + $0x22c] sm:$0xff]
        %1534 = vst [vmem:[%s1254 + $0x22c] sm:$0xff] %v1533
        %v1535 = vld [vmem:[%s1253 + $0x230] sm:$0xff]
        %1536 = vst [vmem:[%s1254 + $0x230] sm:$0xff] %v1535
        %v1537 = vld [vmem:[%s1253 + $0x238] sm:$0xff]
        %1538 = vst [vmem:[%s1254 + $0x234] sm:$0xff] %v1537
        %v1539 = vld [vmem:[%s1253 + $0x234] sm:$0xff]
        %1540 = vst [vmem:[%s1254 + $0x238] sm:$0xff] %v1539
        %v1541 = vld [vmem:[%s1253 + $0x23c] sm:$0xff]
        %1542 = vst [vmem:[%s1254 + $0x23c] sm:$0xff] %v1541
        %v1543 = vld [vmem:[%s1253 + $0x240] sm:$0xff]
        %1544 = vst [vmem:[%s1254 + $0x240] sm:$0xff] %v1543
        %v1545 = vld [vmem:[%s1253 + $0x248] sm:$0xff]
        %1546 = vst [vmem:[%s1254 + $0x244] sm:$0xff] %v1545
        %v1547 = vld [vmem:[%s1253 + $0x244] sm:$0xff]
        %1548 = vst [vmem:[%s1254 + $0x248] sm:$0xff] %v1547
        %v1549 = vld [vmem:[%s1253 + $0x24c] sm:$0xff]
        %1550 = vst [vmem:[%s1254 + $0x24c] sm:$0xff] %v1549
        %v1551 = vld [vmem:[%s1253 + $0x250] sm:$0xff]
        %1552 = vst [vmem:[%s1254 + $0x250] sm:$0xff] %v1551
        %v1553 = vld [vmem:[%s1253 + $0x258] sm:$0xff]
        %1554 = vst [vmem:[%s1254 + $0x254] sm:$0xff] %v1553
        %v1555 = vld [vmem:[%s1253 + $0x254] sm:$0xff]
        %1556 = vst [vmem:[%s1254 + $0x258] sm:$0xff] %v1555
        %v1557 = vld [vmem:[%s1253 + $0x25c] sm:$0xff]
        %1558 = vst [vmem:[%s1254 + $0x25c] sm:$0xff] %v1557
        %v1559 = vld [vmem:[%s1253 + $0x260] sm:$0xff]
        %1560 = vst [vmem:[%s1254 + $0x260] sm:$0xff] %v1559
        %v1561 = vld [vmem:[%s1253 + $0x268] sm:$0xff]
        %1562 = vst [vmem:[%s1254 + $0x264] sm:$0xff] %v1561
        %v1563 = vld [vmem:[%s1253 + $0x264] sm:$0xff]
        %1564 = vst [vmem:[%s1254 + $0x268] sm:$0xff] %v1563
        %v1565 = vld [vmem:[%s1253 + $0x26c] sm:$0xff]
        %1566 = vst [vmem:[%s1254 + $0x26c] sm:$0xff] %v1565
        %v1567 = vld [vmem:[%s1253 + $0x270] sm:$0xff]
        %1568 = vst [vmem:[%s1254 + $0x270] sm:$0xff] %v1567
        %v1569 = vld [vmem:[%s1253 + $0x278] sm:$0xff]
        %1570 = vst [vmem:[%s1254 + $0x274] sm:$0xff] %v1569
        %v1571 = vld [vmem:[%s1253 + $0x274] sm:$0xff]
        %1572 = vst [vmem:[%s1254 + $0x278] sm:$0xff] %v1571
        %v1573 = vld [vmem:[%s1253 + $0x27c] sm:$0xff]
        %1574 = vst [vmem:[%s1254 + $0x27c] sm:$0xff] %v1573
        %v1575 = vld [vmem:[%s1253 + $0x280] sm:$0xff]
        %1576 = vst [vmem:[%s1254 + $0x280] sm:$0xff] %v1575
        %v1577 = vld [vmem:[%s1253 + $0x288] sm:$0xff]
        %1578 = vst [vmem:[%s1254 + $0x284] sm:$0xff] %v1577
        %v1579 = vld [vmem:[%s1253 + $0x284] sm:$0xff]
        %1580 = vst [vmem:[%s1254 + $0x288] sm:$0xff] %v1579
        %v1581 = vld [vmem:[%s1253 + $0x28c] sm:$0xff]
        %1582 = vst [vmem:[%s1254 + $0x28c] sm:$0xff] %v1581
        %v1583 = vld [vmem:[%s1253 + $0x290] sm:$0xff]
        %1584 = vst [vmem:[%s1254 + $0x290] sm:$0xff] %v1583
        %v1585 = vld [vmem:[%s1253 + $0x298] sm:$0xff]
        %1586 = vst [vmem:[%s1254 + $0x294] sm:$0xff] %v1585
        %v1587 = vld [vmem:[%s1253 + $0x294] sm:$0xff]
        %1588 = vst [vmem:[%s1254 + $0x298] sm:$0xff] %v1587
        %v1589 = vld [vmem:[%s1253 + $0x29c] sm:$0xff]
        %1590 = vst [vmem:[%s1254 + $0x29c] sm:$0xff] %v1589
        %v1591 = vld [vmem:[%s1253 + $0x2a0] sm:$0xff]
        %1592 = vst [vmem:[%s1254 + $0x2a0] sm:$0xff] %v1591
        %v1593 = vld [vmem:[%s1253 + $0x2a8] sm:$0xff]
        %1594 = vst [vmem:[%s1254 + $0x2a4] sm:$0xff] %v1593
        %v1595 = vld [vmem:[%s1253 + $0x2a4] sm:$0xff]
        %1596 = vst [vmem:[%s1254 + $0x2a8] sm:$0xff] %v1595
        %v1597 = vld [vmem:[%s1253 + $0x2ac] sm:$0xff]
        %1598 = vst [vmem:[%s1254 + $0x2ac] sm:$0xff] %v1597
        %v1599 = vld [vmem:[%s1253 + $0x2b0] sm:$0xff]
        %1600 = vst [vmem:[%s1254 + $0x2b0] sm:$0xff] %v1599
        %v1601 = vld [vmem:[%s1253 + $0x2b8] sm:$0xff]
        %1602 = vst [vmem:[%s1254 + $0x2b4] sm:$0xff] %v1601
        %v1603 = vld [vmem:[%s1253 + $0x2b4] sm:$0xff]
        %1604 = vst [vmem:[%s1254 + $0x2b8] sm:$0xff] %v1603
        %v1605 = vld [vmem:[%s1253 + $0x2bc] sm:$0xff]
        %1606 = vst [vmem:[%s1254 + $0x2bc] sm:$0xff] %v1605
        %v1607 = vld [vmem:[%s1253 + $0x2c0] sm:$0xff]
        %1608 = vst [vmem:[%s1254 + $0x2c0] sm:$0xff] %v1607
        %v1609 = vld [vmem:[%s1253 + $0x2c8] sm:$0xff]
        %1610 = vst [vmem:[%s1254 + $0x2c4] sm:$0xff] %v1609
        %v1611 = vld [vmem:[%s1253 + $0x2c4] sm:$0xff]
        %1612 = vst [vmem:[%s1254 + $0x2c8] sm:$0xff] %v1611
        %v1613 = vld [vmem:[%s1253 + $0x2cc] sm:$0xff]
        %1614 = vst [vmem:[%s1254 + $0x2cc] sm:$0xff] %v1613
        %v1615 = vld [vmem:[%s1253 + $0x2d0] sm:$0xff]
        %1616 = vst [vmem:[%s1254 + $0x2d0] sm:$0xff] %v1615
        %v1617 = vld [vmem:[%s1253 + $0x2d8] sm:$0xff]
        %1618 = vst [vmem:[%s1254 + $0x2d4] sm:$0xff] %v1617
        %v1619 = vld [vmem:[%s1253 + $0x2d4] sm:$0xff]
        %1620 = vst [vmem:[%s1254 + $0x2d8] sm:$0xff] %v1619
        %v1621 = vld [vmem:[%s1253 + $0x2dc] sm:$0xff]
        %1622 = vst [vmem:[%s1254 + $0x2dc] sm:$0xff] %v1621
        %v1623 = vld [vmem:[%s1253 + $0x2e0] sm:$0xff]
        %1624 = vst [vmem:[%s1254 + $0x2e0] sm:$0xff] %v1623
        %v1625 = vld [vmem:[%s1253 + $0x2e8] sm:$0xff]
        %1626 = vst [vmem:[%s1254 + $0x2e4] sm:$0xff] %v1625
        %v1627 = vld [vmem:[%s1253 + $0x2e4] sm:$0xff]
        %1628 = vst [vmem:[%s1254 + $0x2e8] sm:$0xff] %v1627
        %v1629 = vld [vmem:[%s1253 + $0x2ec] sm:$0xff]
        %1630 = vst [vmem:[%s1254 + $0x2ec] sm:$0xff] %v1629
        %v1631 = vld [vmem:[%s1253 + $0x2f0] sm:$0xff]
        %1632 = vst [vmem:[%s1254 + $0x2f0] sm:$0xff] %v1631
        %v1633 = vld [vmem:[%s1253 + $0x2f8] sm:$0xff]
        %1634 = vst [vmem:[%s1254 + $0x2f4] sm:$0xff] %v1633
        %v1635 = vld [vmem:[%s1253 + $0x2f4] sm:$0xff]
        %1636 = vst [vmem:[%s1254 + $0x2f8] sm:$0xff] %v1635
        %v1637 = vld [vmem:[%s1253 + $0x2fc] sm:$0xff]
        %1638 = vst [vmem:[%s1254 + $0x2fc] sm:$0xff] %v1637
        %v1639 = vld [vmem:[%s1253 + $0x300] sm:$0xff]
        %1640 = vst [vmem:[%s1254 + $0x300] sm:$0xff] %v1639
        %v1641 = vld [vmem:[%s1253 + $0x308] sm:$0xff]
        %1642 = vst [vmem:[%s1254 + $0x304] sm:$0xff] %v1641
        %v1643 = vld [vmem:[%s1253 + $0x304] sm:$0xff]
        %1644 = vst [vmem:[%s1254 + $0x308] sm:$0xff] %v1643
        %v1645 = vld [vmem:[%s1253 + $0x30c] sm:$0xff]
        %1646 = vst [vmem:[%s1254 + $0x30c] sm:$0xff] %v1645
        %v1647 = vld [vmem:[%s1253 + $0x310] sm:$0xff]
        %1648 = vst [vmem:[%s1254 + $0x310] sm:$0xff] %v1647
        %v1649 = vld [vmem:[%s1253 + $0x318] sm:$0xff]
        %1650 = vst [vmem:[%s1254 + $0x314] sm:$0xff] %v1649
        %v1651 = vld [vmem:[%s1253 + $0x314] sm:$0xff]
        %1652 = vst [vmem:[%s1254 + $0x318] sm:$0xff] %v1651
        %v1653 = vld [vmem:[%s1253 + $0x31c] sm:$0xff]
        %1654 = vst [vmem:[%s1254 + $0x31c] sm:$0xff] %v1653
        %v1655 = vld [vmem:[%s1253 + $0x320] sm:$0xff]
        %1656 = vst [vmem:[%s1254 + $0x320] sm:$0xff] %v1655
        %v1657 = vld [vmem:[%s1253 + $0x328] sm:$0xff]
        %1658 = vst [vmem:[%s1254 + $0x324] sm:$0xff] %v1657
        %v1659 = vld [vmem:[%s1253 + $0x324] sm:$0xff]
        %1660 = vst [vmem:[%s1254 + $0x328] sm:$0xff] %v1659
        %v1661 = vld [vmem:[%s1253 + $0x32c] sm:$0xff]
        %1662 = vst [vmem:[%s1254 + $0x32c] sm:$0xff] %v1661
        %v1663 = vld [vmem:[%s1253 + $0x330] sm:$0xff]
        %1664 = vst [vmem:[%s1254 + $0x330] sm:$0xff] %v1663
        %v1665 = vld [vmem:[%s1253 + $0x338] sm:$0xff]
        %1666 = vst [vmem:[%s1254 + $0x334] sm:$0xff] %v1665
        %v1667 = vld [vmem:[%s1253 + $0x334] sm:$0xff]
        %1668 = vst [vmem:[%s1254 + $0x338] sm:$0xff] %v1667
        %v1669 = vld [vmem:[%s1253 + $0x33c] sm:$0xff]
        %1670 = vst [vmem:[%s1254 + $0x33c] sm:$0xff] %v1669
        %v1671 = vld [vmem:[%s1253 + $0x340] sm:$0xff]
        %1672 = vst [vmem:[%s1254 + $0x340] sm:$0xff] %v1671
        %v1673 = vld [vmem:[%s1253 + $0x348] sm:$0xff]
        %1674 = vst [vmem:[%s1254 + $0x344] sm:$0xff] %v1673
        %v1675 = vld [vmem:[%s1253 + $0x344] sm:$0xff]
        %1676 = vst [vmem:[%s1254 + $0x348] sm:$0xff] %v1675
        %v1677 = vld [vmem:[%s1253 + $0x34c] sm:$0xff]
        %1678 = vst [vmem:[%s1254 + $0x34c] sm:$0xff] %v1677
        %v1679 = vld [vmem:[%s1253 + $0x350] sm:$0xff]
        %1680 = vst [vmem:[%s1254 + $0x350] sm:$0xff] %v1679
        %v1681 = vld [vmem:[%s1253 + $0x358] sm:$0xff]
        %1682 = vst [vmem:[%s1254 + $0x354] sm:$0xff] %v1681
        %v1683 = vld [vmem:[%s1253 + $0x354] sm:$0xff]
        %1684 = vst [vmem:[%s1254 + $0x358] sm:$0xff] %v1683
        %v1685 = vld [vmem:[%s1253 + $0x35c] sm:$0xff]
        %1686 = vst [vmem:[%s1254 + $0x35c] sm:$0xff] %v1685
        %v1687 = vld [vmem:[%s1253 + $0x360] sm:$0xff]
        %1688 = vst [vmem:[%s1254 + $0x360] sm:$0xff] %v1687
        %v1689 = vld [vmem:[%s1253 + $0x368] sm:$0xff]
        %1690 = vst [vmem:[%s1254 + $0x364] sm:$0xff] %v1689
        %v1691 = vld [vmem:[%s1253 + $0x364] sm:$0xff]
        %1692 = vst [vmem:[%s1254 + $0x368] sm:$0xff] %v1691
        %v1693 = vld [vmem:[%s1253 + $0x36c] sm:$0xff]
        %1694 = vst [vmem:[%s1254 + $0x36c] sm:$0xff] %v1693
        %v1695 = vld [vmem:[%s1253 + $0x370] sm:$0xff]
        %1696 = vst [vmem:[%s1254 + $0x370] sm:$0xff] %v1695
        %v1697 = vld [vmem:[%s1253 + $0x378] sm:$0xff]
        %1698 = vst [vmem:[%s1254 + $0x374] sm:$0xff] %v1697
        %v1699 = vld [vmem:[%s1253 + $0x374] sm:$0xff]
        %1700 = vst [vmem:[%s1254 + $0x378] sm:$0xff] %v1699
        %v1701 = vld [vmem:[%s1253 + $0x37c] sm:$0xff]
        %1702 = vst [vmem:[%s1254 + $0x37c] sm:$0xff] %v1701
        %v1703 = vld [vmem:[%s1253 + $0x380] sm:$0xff]
        %1704 = vst [vmem:[%s1254 + $0x380] sm:$0xff] %v1703
        %v1705 = vld [vmem:[%s1253 + $0x388] sm:$0xff]
        %1706 = vst [vmem:[%s1254 + $0x384] sm:$0xff] %v1705
        %v1707 = vld [vmem:[%s1253 + $0x384] sm:$0xff]
        %1708 = vst [vmem:[%s1254 + $0x388] sm:$0xff] %v1707
        %v1709 = vld [vmem:[%s1253 + $0x38c] sm:$0xff]
        %1710 = vst [vmem:[%s1254 + $0x38c] sm:$0xff] %v1709
        %v1711 = vld [vmem:[%s1253 + $0x390] sm:$0xff]
        %1712 = vst [vmem:[%s1254 + $0x390] sm:$0xff] %v1711
        %v1713 = vld [vmem:[%s1253 + $0x398] sm:$0xff]
        %1714 = vst [vmem:[%s1254 + $0x394] sm:$0xff] %v1713
        %v1715 = vld [vmem:[%s1253 + $0x394] sm:$0xff]
        %1716 = vst [vmem:[%s1254 + $0x398] sm:$0xff] %v1715
        %v1717 = vld [vmem:[%s1253 + $0x39c] sm:$0xff]
        %1718 = vst [vmem:[%s1254 + $0x39c] sm:$0xff] %v1717
        %v1719 = vld [vmem:[%s1253 + $0x3a0] sm:$0xff]
        %1720 = vst [vmem:[%s1254 + $0x3a0] sm:$0xff] %v1719
        %v1721 = vld [vmem:[%s1253 + $0x3a8] sm:$0xff]
        %1722 = vst [vmem:[%s1254 + $0x3a4] sm:$0xff] %v1721
        %v1723 = vld [vmem:[%s1253 + $0x3a4] sm:$0xff]
        %1724 = vst [vmem:[%s1254 + $0x3a8] sm:$0xff] %v1723
        %v1725 = vld [vmem:[%s1253 + $0x3ac] sm:$0xff]
        %1726 = vst [vmem:[%s1254 + $0x3ac] sm:$0xff] %v1725
        %v1727 = vld [vmem:[%s1253 + $0x3b0] sm:$0xff]
        %1728 = vst [vmem:[%s1254 + $0x3b0] sm:$0xff] %v1727
        %v1729 = vld [vmem:[%s1253 + $0x3b8] sm:$0xff]
        %1730 = vst [vmem:[%s1254 + $0x3b4] sm:$0xff] %v1729
        %v1731 = vld [vmem:[%s1253 + $0x3b4] sm:$0xff]
        %1732 = vst [vmem:[%s1254 + $0x3b8] sm:$0xff] %v1731
        %v1733 = vld [vmem:[%s1253 + $0x3bc] sm:$0xff]
        %1734 = vst [vmem:[%s1254 + $0x3bc] sm:$0xff] %v1733
        %v1735 = vld [vmem:[%s1253 + $0x3c0] sm:$0xff]
        %1736 = vst [vmem:[%s1254 + $0x3c0] sm:$0xff] %v1735
        %v1737 = vld [vmem:[%s1253 + $0x3c8] sm:$0xff]
        %1738 = vst [vmem:[%s1254 + $0x3c4] sm:$0xff] %v1737
        %v1739 = vld [vmem:[%s1253 + $0x3c4] sm:$0xff]
        %1740 = vst [vmem:[%s1254 + $0x3c8] sm:$0xff] %v1739
        %v1741 = vld [vmem:[%s1253 + $0x3cc] sm:$0xff]
        %1742 = vst [vmem:[%s1254 + $0x3cc] sm:$0xff] %v1741
        %v1743 = vld [vmem:[%s1253 + $0x3d0] sm:$0xff]
        %1744 = vst [vmem:[%s1254 + $0x3d0] sm:$0xff] %v1743
        %v1745 = vld [vmem:[%s1253 + $0x3d8] sm:$0xff]
        %1746 = vst [vmem:[%s1254 + $0x3d4] sm:$0xff] %v1745
        %v1747 = vld [vmem:[%s1253 + $0x3d4] sm:$0xff]
        %1748 = vst [vmem:[%s1254 + $0x3d8] sm:$0xff] %v1747
        %v1749 = vld [vmem:[%s1253 + $0x3dc] sm:$0xff]
        %1750 = vst [vmem:[%s1254 + $0x3dc] sm:$0xff] %v1749
        %v1751 = vld [vmem:[%s1253 + $0x3e0] sm:$0xff]
        %1752 = vst [vmem:[%s1254 + $0x3e0] sm:$0xff] %v1751
        %v1753 = vld [vmem:[%s1253 + $0x3e8] sm:$0xff]
        %1754 = vst [vmem:[%s1254 + $0x3e4] sm:$0xff] %v1753
        %v1755 = vld [vmem:[%s1253 + $0x3e4] sm:$0xff]
        %1756 = vst [vmem:[%s1254 + $0x3e8] sm:$0xff] %v1755
        %v1757 = vld [vmem:[%s1253 + $0x3ec] sm:$0xff]
        %1758 = vst [vmem:[%s1254 + $0x3ec] sm:$0xff] %v1757
        %v1759 = vld [vmem:[%s1253 + $0x3f0] sm:$0xff]
        %1760 = vst [vmem:[%s1254 + $0x3f0] sm:$0xff] %v1759
        %v1761 = vld [vmem:[%s1253 + $0x3f8] sm:$0xff]
        %1762 = vst [vmem:[%s1254 + $0x3f4] sm:$0xff] %v1761
        %v1763 = vld [vmem:[%s1253 + $0x3f4] sm:$0xff]
        %1764 = vst [vmem:[%s1254 + $0x3f8] sm:$0xff] %v1763
        %v1765 = vld [vmem:[%s1253 + $0x3fc] sm:$0xff]
        %1766 = vst [vmem:[%s1254 + $0x3fc] sm:$0xff] %v1765
        %v1767 = vld [vmem:[%s1253 + $0x400] sm:$0xff]
        %1768 = vst [vmem:[%s1254 + $0x400] sm:$0xff] %v1767
        %v1769 = vld [vmem:[%s1253 + $0x408] sm:$0xff]
        %1770 = vst [vmem:[%s1254 + $0x404] sm:$0xff] %v1769
        %v1771 = vld [vmem:[%s1253 + $0x404] sm:$0xff]
        %1772 = vst [vmem:[%s1254 + $0x408] sm:$0xff] %v1771
        %v1773 = vld [vmem:[%s1253 + $0x40c] sm:$0xff]
        %1774 = vst [vmem:[%s1254 + $0x40c] sm:$0xff] %v1773
        %v1775 = vld [vmem:[%s1253 + $0x410] sm:$0xff]
        %1776 = vst [vmem:[%s1254 + $0x410] sm:$0xff] %v1775
        %v1777 = vld [vmem:[%s1253 + $0x418] sm:$0xff]
        %1778 = vst [vmem:[%s1254 + $0x414] sm:$0xff] %v1777
        %v1779 = vld [vmem:[%s1253 + $0x414] sm:$0xff]
        %1780 = vst [vmem:[%s1254 + $0x418] sm:$0xff] %v1779
        %v1781 = vld [vmem:[%s1253 + $0x41c] sm:$0xff]
        %1782 = vst [vmem:[%s1254 + $0x41c] sm:$0xff] %v1781
        %v1783 = vld [vmem:[%s1253 + $0x420] sm:$0xff]
        %1784 = vst [vmem:[%s1254 + $0x420] sm:$0xff] %v1783
        %v1785 = vld [vmem:[%s1253 + $0x428] sm:$0xff]
        %1786 = vst [vmem:[%s1254 + $0x424] sm:$0xff] %v1785
        %v1787 = vld [vmem:[%s1253 + $0x424] sm:$0xff]
        %1788 = vst [vmem:[%s1254 + $0x428] sm:$0xff] %v1787
        %v1789 = vld [vmem:[%s1253 + $0x42c] sm:$0xff]
        %1790 = vst [vmem:[%s1254 + $0x42c] sm:$0xff] %v1789
        %v1791 = vld [vmem:[%s1253 + $0x430] sm:$0xff]
        %1792 = vst [vmem:[%s1254 + $0x430] sm:$0xff] %v1791
        %v1793 = vld [vmem:[%s1253 + $0x438] sm:$0xff]
        %1794 = vst [vmem:[%s1254 + $0x434] sm:$0xff] %v1793
        %v1795 = vld [vmem:[%s1253 + $0x434] sm:$0xff]
        %1796 = vst [vmem:[%s1254 + $0x438] sm:$0xff] %v1795
        %v1797 = vld [vmem:[%s1253 + $0x43c] sm:$0xff]
        %1798 = vst [vmem:[%s1254 + $0x43c] sm:$0xff] %v1797
        %v1799 = vld [vmem:[%s1253 + $0x440] sm:$0xff]
        %1800 = vst [vmem:[%s1254 + $0x440] sm:$0xff] %v1799
        %v1801 = vld [vmem:[%s1253 + $0x448] sm:$0xff]
        %1802 = vst [vmem:[%s1254 + $0x444] sm:$0xff] %v1801
        %v1803 = vld [vmem:[%s1253 + $0x444] sm:$0xff]
        %1804 = vst [vmem:[%s1254 + $0x448] sm:$0xff] %v1803
        %v1805 = vld [vmem:[%s1253 + $0x44c] sm:$0xff]
        %1806 = vst [vmem:[%s1254 + $0x44c] sm:$0xff] %v1805
        %v1807 = vld [vmem:[%s1253 + $0x450] sm:$0xff]
        %1808 = vst [vmem:[%s1254 + $0x450] sm:$0xff] %v1807
        %v1809 = vld [vmem:[%s1253 + $0x458] sm:$0xff]
        %1810 = vst [vmem:[%s1254 + $0x454] sm:$0xff] %v1809
        %v1811 = vld [vmem:[%s1253 + $0x454] sm:$0xff]
        %1812 = vst [vmem:[%s1254 + $0x458] sm:$0xff] %v1811
        %v1813 = vld [vmem:[%s1253 + $0x45c] sm:$0xff]
        %1814 = vst [vmem:[%s1254 + $0x45c] sm:$0xff] %v1813
        %v1815 = vld [vmem:[%s1253 + $0x460] sm:$0xff]
        %1816 = vst [vmem:[%s1254 + $0x460] sm:$0xff] %v1815
        %v1817 = vld [vmem:[%s1253 + $0x468] sm:$0xff]
        %1818 = vst [vmem:[%s1254 + $0x464] sm:$0xff] %v1817
        %v1819 = vld [vmem:[%s1253 + $0x464] sm:$0xff]
        %1820 = vst [vmem:[%s1254 + $0x468] sm:$0xff] %v1819
        %v1821 = vld [vmem:[%s1253 + $0x46c] sm:$0xff]
        %1822 = vst [vmem:[%s1254 + $0x46c] sm:$0xff] %v1821
        %v1823 = vld [vmem:[%s1253 + $0x470] sm:$0xff]
        %1824 = vst [vmem:[%s1254 + $0x470] sm:$0xff] %v1823
        %v1825 = vld [vmem:[%s1253 + $0x478] sm:$0xff]
        %1826 = vst [vmem:[%s1254 + $0x474] sm:$0xff] %v1825
        %v1827 = vld [vmem:[%s1253 + $0x474] sm:$0xff]
        %1828 = vst [vmem:[%s1254 + $0x478] sm:$0xff] %v1827
        %v1829 = vld [vmem:[%s1253 + $0x47c] sm:$0xff]
        %1830 = vst [vmem:[%s1254 + $0x47c] sm:$0xff] %v1829
        %v1831 = vld [vmem:[%s1253 + $0x480] sm:$0xff]
        %1832 = vst [vmem:[%s1254 + $0x480] sm:$0xff] %v1831
        %v1833 = vld [vmem:[%s1253 + $0x488] sm:$0xff]
        %1834 = vst [vmem:[%s1254 + $0x484] sm:$0xff] %v1833
        %v1835 = vld [vmem:[%s1253 + $0x484] sm:$0xff]
        %1836 = vst [vmem:[%s1254 + $0x488] sm:$0xff] %v1835
        %v1837 = vld [vmem:[%s1253 + $0x48c] sm:$0xff]
        %1838 = vst [vmem:[%s1254 + $0x48c] sm:$0xff] %v1837
        %v1839 = vld [vmem:[%s1253 + $0x490] sm:$0xff]
        %1840 = vst [vmem:[%s1254 + $0x490] sm:$0xff] %v1839
        %v1841 = vld [vmem:[%s1253 + $0x498] sm:$0xff]
        %1842 = vst [vmem:[%s1254 + $0x494] sm:$0xff] %v1841
        %v1843 = vld [vmem:[%s1253 + $0x494] sm:$0xff]
        %1844 = vst [vmem:[%s1254 + $0x498] sm:$0xff] %v1843
        %v1845 = vld [vmem:[%s1253 + $0x49c] sm:$0xff]
        %1846 = vst [vmem:[%s1254 + $0x49c] sm:$0xff] %v1845
        %v1847 = vld [vmem:[%s1253 + $0x4a0] sm:$0xff]
        %1848 = vst [vmem:[%s1254 + $0x4a0] sm:$0xff] %v1847
        %v1849 = vld [vmem:[%s1253 + $0x4a8] sm:$0xff]
        %1850 = vst [vmem:[%s1254 + $0x4a4] sm:$0xff] %v1849
        %v1851 = vld [vmem:[%s1253 + $0x4a4] sm:$0xff]
        %1852 = vst [vmem:[%s1254 + $0x4a8] sm:$0xff] %v1851
        %v1853 = vld [vmem:[%s1253 + $0x4ac] sm:$0xff]
        %1854 = vst [vmem:[%s1254 + $0x4ac] sm:$0xff] %v1853
        %v1855 = vld [vmem:[%s1253 + $0x4b0] sm:$0xff]
        %1856 = vst [vmem:[%s1254 + $0x4b0] sm:$0xff] %v1855
        %v1857 = vld [vmem:[%s1253 + $0x4b8] sm:$0xff]
        %1858 = vst [vmem:[%s1254 + $0x4b4] sm:$0xff] %v1857
        %v1859 = vld [vmem:[%s1253 + $0x4b4] sm:$0xff]
        %1860 = vst [vmem:[%s1254 + $0x4b8] sm:$0xff] %v1859
        %v1861 = vld [vmem:[%s1253 + $0x4bc] sm:$0xff]
        %1862 = vst [vmem:[%s1254 + $0x4bc] sm:$0xff] %v1861
        %v1863 = vld [vmem:[%s1253 + $0x4c0] sm:$0xff]
        %1864 = vst [vmem:[%s1254 + $0x4c0] sm:$0xff] %v1863
        %v1865 = vld [vmem:[%s1253 + $0x4c8] sm:$0xff]
        %1866 = vst [vmem:[%s1254 + $0x4c4] sm:$0xff] %v1865
        %v1867 = vld [vmem:[%s1253 + $0x4c4] sm:$0xff]
        %1868 = vst [vmem:[%s1254 + $0x4c8] sm:$0xff] %v1867
        %v1869 = vld [vmem:[%s1253 + $0x4cc] sm:$0xff]
        %1870 = vst [vmem:[%s1254 + $0x4cc] sm:$0xff] %v1869
        %v1871 = vld [vmem:[%s1253 + $0x4d0] sm:$0xff]
        %1872 = vst [vmem:[%s1254 + $0x4d0] sm:$0xff] %v1871
        %v1873 = vld [vmem:[%s1253 + $0x4d8] sm:$0xff]
        %1874 = vst [vmem:[%s1254 + $0x4d4] sm:$0xff] %v1873
        %v1875 = vld [vmem:[%s1253 + $0x4d4] sm:$0xff]
        %1876 = vst [vmem:[%s1254 + $0x4d8] sm:$0xff] %v1875
        %v1877 = vld [vmem:[%s1253 + $0x4dc] sm:$0xff]
        %1878 = vst [vmem:[%s1254 + $0x4dc] sm:$0xff] %v1877
        %v1879 = vld [vmem:[%s1253 + $0x4e0] sm:$0xff]
        %1880 = vst [vmem:[%s1254 + $0x4e0] sm:$0xff] %v1879
        %v1881 = vld [vmem:[%s1253 + $0x4e8] sm:$0xff]
        %1882 = vst [vmem:[%s1254 + $0x4e4] sm:$0xff] %v1881
        %v1883 = vld [vmem:[%s1253 + $0x4e4] sm:$0xff]
        %1884 = vst [vmem:[%s1254 + $0x4e8] sm:$0xff] %v1883
        %v1885 = vld [vmem:[%s1253 + $0x4ec] sm:$0xff]
        %1886 = vst [vmem:[%s1254 + $0x4ec] sm:$0xff] %v1885
        %v1887 = vld [vmem:[%s1253 + $0x4f0] sm:$0xff]
        %1888 = vst [vmem:[%s1254 + $0x4f0] sm:$0xff] %v1887
        %v1889 = vld [vmem:[%s1253 + $0x4f8] sm:$0xff]
        %1890 = vst [vmem:[%s1254 + $0x4f4] sm:$0xff] %v1889
        %v1891 = vld [vmem:[%s1253 + $0x4f4] sm:$0xff]
        %1892 = vst [vmem:[%s1254 + $0x4f8] sm:$0xff] %v1891
        %v1893 = vld [vmem:[%s1253 + $0x4fc] sm:$0xff]
        %1894 = vst [vmem:[%s1254 + $0x4fc] sm:$0xff] %v1893
        %v1895 = vld [vmem:[%s1253 + $0x500] sm:$0xff]
        %1896 = vst [vmem:[%s1254 + $0x500] sm:$0xff] %v1895
        %v1897 = vld [vmem:[%s1253 + $0x508] sm:$0xff]
        %1898 = vst [vmem:[%s1254 + $0x504] sm:$0xff] %v1897
        %v1899 = vld [vmem:[%s1253 + $0x504] sm:$0xff]
        %1900 = vst [vmem:[%s1254 + $0x508] sm:$0xff] %v1899
        %v1901 = vld [vmem:[%s1253 + $0x50c] sm:$0xff]
        %1902 = vst [vmem:[%s1254 + $0x50c] sm:$0xff] %v1901
        %v1903 = vld [vmem:[%s1253 + $0x510] sm:$0xff]
        %1904 = vst [vmem:[%s1254 + $0x510] sm:$0xff] %v1903
        %v1905 = vld [vmem:[%s1253 + $0x518] sm:$0xff]
        %1906 = vst [vmem:[%s1254 + $0x514] sm:$0xff] %v1905
        %v1907 = vld [vmem:[%s1253 + $0x514] sm:$0xff]
        %1908 = vst [vmem:[%s1254 + $0x518] sm:$0xff] %v1907
        %v1909 = vld [vmem:[%s1253 + $0x51c] sm:$0xff]
        %1910 = vst [vmem:[%s1254 + $0x51c] sm:$0xff] %v1909
        %v1911 = vld [vmem:[%s1253 + $0x520] sm:$0xff]
        %1912 = vst [vmem:[%s1254 + $0x520] sm:$0xff] %v1911
        %v1913 = vld [vmem:[%s1253 + $0x528] sm:$0xff]
        %1914 = vst [vmem:[%s1254 + $0x524] sm:$0xff] %v1913
        %v1915 = vld [vmem:[%s1253 + $0x524] sm:$0xff]
        %1916 = vst [vmem:[%s1254 + $0x528] sm:$0xff] %v1915
        %v1917 = vld [vmem:[%s1253 + $0x52c] sm:$0xff]
        %1918 = vst [vmem:[%s1254 + $0x52c] sm:$0xff] %v1917
        %v1919 = vld [vmem:[%s1253 + $0x530] sm:$0xff]
        %1920 = vst [vmem:[%s1254 + $0x530] sm:$0xff] %v1919
        %v1921 = vld [vmem:[%s1253 + $0x538] sm:$0xff]
        %1922 = vst [vmem:[%s1254 + $0x534] sm:$0xff] %v1921
        %v1923 = vld [vmem:[%s1253 + $0x534] sm:$0xff]
        %1924 = vst [vmem:[%s1254 + $0x538] sm:$0xff] %v1923
        %v1925 = vld [vmem:[%s1253 + $0x53c] sm:$0xff]
        %1926 = vst [vmem:[%s1254 + $0x53c] sm:$0xff] %v1925
        %v1927 = vld [vmem:[%s1253 + $0x540] sm:$0xff]
        %1928 = vst [vmem:[%s1254 + $0x540] sm:$0xff] %v1927
        %v1929 = vld [vmem:[%s1253 + $0x548] sm:$0xff]
        %1930 = vst [vmem:[%s1254 + $0x544] sm:$0xff] %v1929
        %v1931 = vld [vmem:[%s1253 + $0x544] sm:$0xff]
        %1932 = vst [vmem:[%s1254 + $0x548] sm:$0xff] %v1931
        %v1933 = vld [vmem:[%s1253 + $0x54c] sm:$0xff]
        %1934 = vst [vmem:[%s1254 + $0x54c] sm:$0xff] %v1933
        %v1935 = vld [vmem:[%s1253 + $0x550] sm:$0xff]
        %1936 = vst [vmem:[%s1254 + $0x550] sm:$0xff] %v1935
        %v1937 = vld [vmem:[%s1253 + $0x558] sm:$0xff]
        %1938 = vst [vmem:[%s1254 + $0x554] sm:$0xff] %v1937
        %v1939 = vld [vmem:[%s1253 + $0x554] sm:$0xff]
        %1940 = vst [vmem:[%s1254 + $0x558] sm:$0xff] %v1939
        %v1941 = vld [vmem:[%s1253 + $0x55c] sm:$0xff]
        %1942 = vst [vmem:[%s1254 + $0x55c] sm:$0xff] %v1941
        %v1943 = vld [vmem:[%s1253 + $0x560] sm:$0xff]
        %1944 = vst [vmem:[%s1254 + $0x560] sm:$0xff] %v1943
        %v1945 = vld [vmem:[%s1253 + $0x568] sm:$0xff]
        %1946 = vst [vmem:[%s1254 + $0x564] sm:$0xff] %v1945
        %v1947 = vld [vmem:[%s1253 + $0x564] sm:$0xff]
        %1948 = vst [vmem:[%s1254 + $0x568] sm:$0xff] %v1947
        %v1949 = vld [vmem:[%s1253 + $0x56c] sm:$0xff]
        %1950 = vst [vmem:[%s1254 + $0x56c] sm:$0xff] %v1949
        %v1951 = vld [vmem:[%s1253 + $0x570] sm:$0xff]
        %1952 = vst [vmem:[%s1254 + $0x570] sm:$0xff] %v1951
        %v1953 = vld [vmem:[%s1253 + $0x578] sm:$0xff]
        %1954 = vst [vmem:[%s1254 + $0x574] sm:$0xff] %v1953
        %v1955 = vld [vmem:[%s1253 + $0x574] sm:$0xff]
        %1956 = vst [vmem:[%s1254 + $0x578] sm:$0xff] %v1955
        %v1957 = vld [vmem:[%s1253 + $0x57c] sm:$0xff]
        %1958 = vst [vmem:[%s1254 + $0x57c] sm:$0xff] %v1957
        %v1959 = vld [vmem:[%s1253 + $0x580] sm:$0xff]
        %1960 = vst [vmem:[%s1254 + $0x580] sm:$0xff] %v1959
        %v1961 = vld [vmem:[%s1253 + $0x588] sm:$0xff]
        %1962 = vst [vmem:[%s1254 + $0x584] sm:$0xff] %v1961
        %v1963 = vld [vmem:[%s1253 + $0x584] sm:$0xff]
        %1964 = vst [vmem:[%s1254 + $0x588] sm:$0xff] %v1963
        %v1965 = vld [vmem:[%s1253 + $0x58c] sm:$0xff]
        %1966 = vst [vmem:[%s1254 + $0x58c] sm:$0xff] %v1965
        %v1967 = vld [vmem:[%s1253 + $0x590] sm:$0xff]
        %1968 = vst [vmem:[%s1254 + $0x590] sm:$0xff] %v1967
        %v1969 = vld [vmem:[%s1253 + $0x598] sm:$0xff]
        %1970 = vst [vmem:[%s1254 + $0x594] sm:$0xff] %v1969
        %v1971 = vld [vmem:[%s1253 + $0x594] sm:$0xff]
        %1972 = vst [vmem:[%s1254 + $0x598] sm:$0xff] %v1971
        %v1973 = vld [vmem:[%s1253 + $0x59c] sm:$0xff]
        %1974 = vst [vmem:[%s1254 + $0x59c] sm:$0xff] %v1973
        %v1975 = vld [vmem:[%s1253 + $0x5a0] sm:$0xff]
        %1976 = vst [vmem:[%s1254 + $0x5a0] sm:$0xff] %v1975
        %v1977 = vld [vmem:[%s1253 + $0x5a8] sm:$0xff]
        %1978 = vst [vmem:[%s1254 + $0x5a4] sm:$0xff] %v1977
        %v1979 = vld [vmem:[%s1253 + $0x5a4] sm:$0xff]
        %1980 = vst [vmem:[%s1254 + $0x5a8] sm:$0xff] %v1979
        %v1981 = vld [vmem:[%s1253 + $0x5ac] sm:$0xff]
        %1982 = vst [vmem:[%s1254 + $0x5ac] sm:$0xff] %v1981
        %v1983 = vld [vmem:[%s1253 + $0x5b0] sm:$0xff]
        %1984 = vst [vmem:[%s1254 + $0x5b0] sm:$0xff] %v1983
        %v1985 = vld [vmem:[%s1253 + $0x5b8] sm:$0xff]
        %1986 = vst [vmem:[%s1254 + $0x5b4] sm:$0xff] %v1985
        %v1987 = vld [vmem:[%s1253 + $0x5b4] sm:$0xff]
        %1988 = vst [vmem:[%s1254 + $0x5b8] sm:$0xff] %v1987
        %v1989 = vld [vmem:[%s1253 + $0x5bc] sm:$0xff]
        %1990 = vst [vmem:[%s1254 + $0x5bc] sm:$0xff] %v1989
        %v1991 = vld [vmem:[%s1253 + $0x5c0] sm:$0xff]
        %1992 = vst [vmem:[%s1254 + $0x5c0] sm:$0xff] %v1991
        %v1993 = vld [vmem:[%s1253 + $0x5c8] sm:$0xff]
        %1994 = vst [vmem:[%s1254 + $0x5c4] sm:$0xff] %v1993
        %v1995 = vld [vmem:[%s1253 + $0x5c4] sm:$0xff]
        %1996 = vst [vmem:[%s1254 + $0x5c8] sm:$0xff] %v1995
        %v1997 = vld [vmem:[%s1253 + $0x5cc] sm:$0xff]
        %1998 = vst [vmem:[%s1254 + $0x5cc] sm:$0xff] %v1997
        %v1999 = vld [vmem:[%s1253 + $0x5d0] sm:$0xff]
        %2000 = vst [vmem:[%s1254 + $0x5d0] sm:$0xff] %v1999
        %v2001 = vld [vmem:[%s1253 + $0x5d8] sm:$0xff]
        %2002 = vst [vmem:[%s1254 + $0x5d4] sm:$0xff] %v2001
        %v2003 = vld [vmem:[%s1253 + $0x5d4] sm:$0xff]
        %2004 = vst [vmem:[%s1254 + $0x5d8] sm:$0xff] %v2003
        %v2005 = vld [vmem:[%s1253 + $0x5dc] sm:$0xff]
        %2006 = vst [vmem:[%s1254 + $0x5dc] sm:$0xff] %v2005
        %v2007 = vld [vmem:[%s1253 + $0x5e0] sm:$0xff]
        %2008 = vst [vmem:[%s1254 + $0x5e0] sm:$0xff] %v2007
        %v2009 = vld [vmem:[%s1253 + $0x5e8] sm:$0xff]
        %2010 = vst [vmem:[%s1254 + $0x5e4] sm:$0xff] %v2009
        %v2011 = vld [vmem:[%s1253 + $0x5e4] sm:$0xff]
        %2012 = vst [vmem:[%s1254 + $0x5e8] sm:$0xff] %v2011
        %v2013 = vld [vmem:[%s1253 + $0x5ec] sm:$0xff]
        %2014 = vst [vmem:[%s1254 + $0x5ec] sm:$0xff] %v2013
        %v2015 = vld [vmem:[%s1253 + $0x5f0] sm:$0xff]
        %2016 = vst [vmem:[%s1254 + $0x5f0] sm:$0xff] %v2015
        %v2017 = vld [vmem:[%s1253 + $0x5f8] sm:$0xff]
        %2018 = vst [vmem:[%s1254 + $0x5f4] sm:$0xff] %v2017
        %v2019 = vld [vmem:[%s1253 + $0x5f4] sm:$0xff]
        %2020 = vst [vmem:[%s1254 + $0x5f8] sm:$0xff] %v2019
        %v2021 = vld [vmem:[%s1253 + $0x5fc] sm:$0xff]
        %2022 = vst [vmem:[%s1254 + $0x5fc] sm:$0xff] %v2021
        %v2023 = vld [vmem:[%s1253 + $0x600] sm:$0xff]
        %2024 = vst [vmem:[%s1254 + $0x600] sm:$0xff] %v2023
        %v2025 = vld [vmem:[%s1253 + $0x608] sm:$0xff]
        %2026 = vst [vmem:[%s1254 + $0x604] sm:$0xff] %v2025
        %v2027 = vld [vmem:[%s1253 + $0x604] sm:$0xff]
        %2028 = vst [vmem:[%s1254 + $0x608] sm:$0xff] %v2027
        %v2029 = vld [vmem:[%s1253 + $0x60c] sm:$0xff]
        %2030 = vst [vmem:[%s1254 + $0x60c] sm:$0xff] %v2029
        %v2031 = vld [vmem:[%s1253 + $0x610] sm:$0xff]
        %2032 = vst [vmem:[%s1254 + $0x610] sm:$0xff] %v2031
        %v2033 = vld [vmem:[%s1253 + $0x618] sm:$0xff]
        %2034 = vst [vmem:[%s1254 + $0x614] sm:$0xff] %v2033
        %v2035 = vld [vmem:[%s1253 + $0x614] sm:$0xff]
        %2036 = vst [vmem:[%s1254 + $0x618] sm:$0xff] %v2035
        %v2037 = vld [vmem:[%s1253 + $0x61c] sm:$0xff]
        %2038 = vst [vmem:[%s1254 + $0x61c] sm:$0xff] %v2037
        %v2039 = vld [vmem:[%s1253 + $0x620] sm:$0xff]
        %2040 = vst [vmem:[%s1254 + $0x620] sm:$0xff] %v2039
        %v2041 = vld [vmem:[%s1253 + $0x628] sm:$0xff]
        %2042 = vst [vmem:[%s1254 + $0x624] sm:$0xff] %v2041
        %v2043 = vld [vmem:[%s1253 + $0x624] sm:$0xff]
        %2044 = vst [vmem:[%s1254 + $0x628] sm:$0xff] %v2043
        %v2045 = vld [vmem:[%s1253 + $0x62c] sm:$0xff]
        %2046 = vst [vmem:[%s1254 + $0x62c] sm:$0xff] %v2045
        %v2047 = vld [vmem:[%s1253 + $0x630] sm:$0xff]
        %2048 = vst [vmem:[%s1254 + $0x630] sm:$0xff] %v2047
        %v2049 = vld [vmem:[%s1253 + $0x638] sm:$0xff]
        %2050 = vst [vmem:[%s1254 + $0x634] sm:$0xff] %v2049
        %v2051 = vld [vmem:[%s1253 + $0x634] sm:$0xff]
        %2052 = vst [vmem:[%s1254 + $0x638] sm:$0xff] %v2051
        %v2053 = vld [vmem:[%s1253 + $0x63c] sm:$0xff]
        %2054 = vst [vmem:[%s1254 + $0x63c] sm:$0xff] %v2053
        %v2055 = vld [vmem:[%s1253 + $0x640] sm:$0xff]
        %2056 = vst [vmem:[%s1254 + $0x640] sm:$0xff] %v2055
        %v2057 = vld [vmem:[%s1253 + $0x648] sm:$0xff]
        %2058 = vst [vmem:[%s1254 + $0x644] sm:$0xff] %v2057
        %v2059 = vld [vmem:[%s1253 + $0x644] sm:$0xff]
        %2060 = vst [vmem:[%s1254 + $0x648] sm:$0xff] %v2059
        %v2061 = vld [vmem:[%s1253 + $0x64c] sm:$0xff]
        %2062 = vst [vmem:[%s1254 + $0x64c] sm:$0xff] %v2061
        %v2063 = vld [vmem:[%s1253 + $0x650] sm:$0xff]
        %2064 = vst [vmem:[%s1254 + $0x650] sm:$0xff] %v2063
        %v2065 = vld [vmem:[%s1253 + $0x658] sm:$0xff]
        %2066 = vst [vmem:[%s1254 + $0x654] sm:$0xff] %v2065
        %v2067 = vld [vmem:[%s1253 + $0x654] sm:$0xff]
        %2068 = vst [vmem:[%s1254 + $0x658] sm:$0xff] %v2067
        %v2069 = vld [vmem:[%s1253 + $0x65c] sm:$0xff]
        %2070 = vst [vmem:[%s1254 + $0x65c] sm:$0xff] %v2069
        %v2071 = vld [vmem:[%s1253 + $0x660] sm:$0xff]
        %2072 = vst [vmem:[%s1254 + $0x660] sm:$0xff] %v2071
        %v2073 = vld [vmem:[%s1253 + $0x668] sm:$0xff]
        %2074 = vst [vmem:[%s1254 + $0x664] sm:$0xff] %v2073
        %v2075 = vld [vmem:[%s1253 + $0x664] sm:$0xff]
        %2076 = vst [vmem:[%s1254 + $0x668] sm:$0xff] %v2075
        %v2077 = vld [vmem:[%s1253 + $0x66c] sm:$0xff]
        %2078 = vst [vmem:[%s1254 + $0x66c] sm:$0xff] %v2077
        %v2079 = vld [vmem:[%s1253 + $0x670] sm:$0xff]
        %2080 = vst [vmem:[%s1254 + $0x670] sm:$0xff] %v2079
        %v2081 = vld [vmem:[%s1253 + $0x678] sm:$0xff]
        %2082 = vst [vmem:[%s1254 + $0x674] sm:$0xff] %v2081
        %v2083 = vld [vmem:[%s1253 + $0x674] sm:$0xff]
        %2084 = vst [vmem:[%s1254 + $0x678] sm:$0xff] %v2083
        %v2085 = vld [vmem:[%s1253 + $0x67c] sm:$0xff]
        %2086 = vst [vmem:[%s1254 + $0x67c] sm:$0xff] %v2085
        %v2087 = vld [vmem:[%s1253 + $0x680] sm:$0xff]
        %2088 = vst [vmem:[%s1254 + $0x680] sm:$0xff] %v2087
        %v2089 = vld [vmem:[%s1253 + $0x688] sm:$0xff]
        %2090 = vst [vmem:[%s1254 + $0x684] sm:$0xff] %v2089
        %v2091 = vld [vmem:[%s1253 + $0x684] sm:$0xff]
        %2092 = vst [vmem:[%s1254 + $0x688] sm:$0xff] %v2091
        %v2093 = vld [vmem:[%s1253 + $0x68c] sm:$0xff]
        %2094 = vst [vmem:[%s1254 + $0x68c] sm:$0xff] %v2093
        %v2095 = vld [vmem:[%s1253 + $0x690] sm:$0xff]
        %2096 = vst [vmem:[%s1254 + $0x690] sm:$0xff] %v2095
        %v2097 = vld [vmem:[%s1253 + $0x698] sm:$0xff]
        %2098 = vst [vmem:[%s1254 + $0x694] sm:$0xff] %v2097
        %v2099 = vld [vmem:[%s1253 + $0x694] sm:$0xff]
        %2100 = vst [vmem:[%s1254 + $0x698] sm:$0xff] %v2099
        %v2101 = vld [vmem:[%s1253 + $0x69c] sm:$0xff]
        %2102 = vst [vmem:[%s1254 + $0x69c] sm:$0xff] %v2101
        %v2103 = vld [vmem:[%s1253 + $0x6a0] sm:$0xff]
        %2104 = vst [vmem:[%s1254 + $0x6a0] sm:$0xff] %v2103
        %v2105 = vld [vmem:[%s1253 + $0x6a8] sm:$0xff]
        %2106 = vst [vmem:[%s1254 + $0x6a4] sm:$0xff] %v2105
        %v2107 = vld [vmem:[%s1253 + $0x6a4] sm:$0xff]
        %2108 = vst [vmem:[%s1254 + $0x6a8] sm:$0xff] %v2107
        %v2109 = vld [vmem:[%s1253 + $0x6ac] sm:$0xff]
        %2110 = vst [vmem:[%s1254 + $0x6ac] sm:$0xff] %v2109
        %v2111 = vld [vmem:[%s1253 + $0x6b0] sm:$0xff]
        %2112 = vst [vmem:[%s1254 + $0x6b0] sm:$0xff] %v2111
        %v2113 = vld [vmem:[%s1253 + $0x6b8] sm:$0xff]
        %2114 = vst [vmem:[%s1254 + $0x6b4] sm:$0xff] %v2113
        %v2115 = vld [vmem:[%s1253 + $0x6b4] sm:$0xff]
        %2116 = vst [vmem:[%s1254 + $0x6b8] sm:$0xff] %v2115
        %v2117 = vld [vmem:[%s1253 + $0x6bc] sm:$0xff]
        %2118 = vst [vmem:[%s1254 + $0x6bc] sm:$0xff] %v2117
        %v2119 = vld [vmem:[%s1253 + $0x6c0] sm:$0xff]
        %2120 = vst [vmem:[%s1254 + $0x6c0] sm:$0xff] %v2119
        %v2121 = vld [vmem:[%s1253 + $0x6c8] sm:$0xff]
        %2122 = vst [vmem:[%s1254 + $0x6c4] sm:$0xff] %v2121
        %v2123 = vld [vmem:[%s1253 + $0x6c4] sm:$0xff]
        %2124 = vst [vmem:[%s1254 + $0x6c8] sm:$0xff] %v2123
        %v2125 = vld [vmem:[%s1253 + $0x6cc] sm:$0xff]
        %2126 = vst [vmem:[%s1254 + $0x6cc] sm:$0xff] %v2125
        %v2127 = vld [vmem:[%s1253 + $0x6d0] sm:$0xff]
        %2128 = vst [vmem:[%s1254 + $0x6d0] sm:$0xff] %v2127
        %v2129 = vld [vmem:[%s1253 + $0x6d8] sm:$0xff]
        %2130 = vst [vmem:[%s1254 + $0x6d4] sm:$0xff] %v2129
        %v2131 = vld [vmem:[%s1253 + $0x6d4] sm:$0xff]
        %2132 = vst [vmem:[%s1254 + $0x6d8] sm:$0xff] %v2131
        %v2133 = vld [vmem:[%s1253 + $0x6dc] sm:$0xff]
        %2134 = vst [vmem:[%s1254 + $0x6dc] sm:$0xff] %v2133
        %v2135 = vld [vmem:[%s1253 + $0x6e0] sm:$0xff]
        %2136 = vst [vmem:[%s1254 + $0x6e0] sm:$0xff] %v2135
        %v2137 = vld [vmem:[%s1253 + $0x6e8] sm:$0xff]
        %2138 = vst [vmem:[%s1254 + $0x6e4] sm:$0xff] %v2137
        %v2139 = vld [vmem:[%s1253 + $0x6e4] sm:$0xff]
        %2140 = vst [vmem:[%s1254 + $0x6e8] sm:$0xff] %v2139
        %v2141 = vld [vmem:[%s1253 + $0x6ec] sm:$0xff]
        %2142 = vst [vmem:[%s1254 + $0x6ec] sm:$0xff] %v2141
        %v2143 = vld [vmem:[%s1253 + $0x6f0] sm:$0xff]
        %2144 = vst [vmem:[%s1254 + $0x6f0] sm:$0xff] %v2143
        %v2145 = vld [vmem:[%s1253 + $0x6f8] sm:$0xff]
        %2146 = vst [vmem:[%s1254 + $0x6f4] sm:$0xff] %v2145
        %v2147 = vld [vmem:[%s1253 + $0x6f4] sm:$0xff]
        %2148 = vst [vmem:[%s1254 + $0x6f8] sm:$0xff] %v2147
        %v2149 = vld [vmem:[%s1253 + $0x6fc] sm:$0xff]
        %2150 = vst [vmem:[%s1254 + $0x6fc] sm:$0xff] %v2149
        %v2151 = vld [vmem:[%s1253 + $0x700] sm:$0xff]
        %2152 = vst [vmem:[%s1254 + $0x700] sm:$0xff] %v2151
        %v2153 = vld [vmem:[%s1253 + $0x708] sm:$0xff]
        %2154 = vst [vmem:[%s1254 + $0x704] sm:$0xff] %v2153
        %v2155 = vld [vmem:[%s1253 + $0x704] sm:$0xff]
        %2156 = vst [vmem:[%s1254 + $0x708] sm:$0xff] %v2155
        %v2157 = vld [vmem:[%s1253 + $0x70c] sm:$0xff]
        %2158 = vst [vmem:[%s1254 + $0x70c] sm:$0xff] %v2157
        %v2159 = vld [vmem:[%s1253 + $0x710] sm:$0xff]
        %2160 = vst [vmem:[%s1254 + $0x710] sm:$0xff] %v2159
        %v2161 = vld [vmem:[%s1253 + $0x718] sm:$0xff]
        %2162 = vst [vmem:[%s1254 + $0x714] sm:$0xff] %v2161
        %v2163 = vld [vmem:[%s1253 + $0x714] sm:$0xff]
        %2164 = vst [vmem:[%s1254 + $0x718] sm:$0xff] %v2163
        %v2165 = vld [vmem:[%s1253 + $0x71c] sm:$0xff]
        %2166 = vst [vmem:[%s1254 + $0x71c] sm:$0xff] %v2165
        %v2167 = vld [vmem:[%s1253 + $0x720] sm:$0xff]
        %2168 = vst [vmem:[%s1254 + $0x720] sm:$0xff] %v2167
        %v2169 = vld [vmem:[%s1253 + $0x728] sm:$0xff]
        %2170 = vst [vmem:[%s1254 + $0x724] sm:$0xff] %v2169
        %v2171 = vld [vmem:[%s1253 + $0x724] sm:$0xff]
        %2172 = vst [vmem:[%s1254 + $0x728] sm:$0xff] %v2171
        %v2173 = vld [vmem:[%s1253 + $0x72c] sm:$0xff]
        %2174 = vst [vmem:[%s1254 + $0x72c] sm:$0xff] %v2173
        %v2175 = vld [vmem:[%s1253 + $0x730] sm:$0xff]
        %2176 = vst [vmem:[%s1254 + $0x730] sm:$0xff] %v2175
        %v2177 = vld [vmem:[%s1253 + $0x738] sm:$0xff]
        %2178 = vst [vmem:[%s1254 + $0x734] sm:$0xff] %v2177
        %v2179 = vld [vmem:[%s1253 + $0x734] sm:$0xff]
        %2180 = vst [vmem:[%s1254 + $0x738] sm:$0xff] %v2179
        %v2181 = vld [vmem:[%s1253 + $0x73c] sm:$0xff]
        %2182 = vst [vmem:[%s1254 + $0x73c] sm:$0xff] %v2181
        %v2183 = vld [vmem:[%s1253 + $0x740] sm:$0xff]
        %2184 = vst [vmem:[%s1254 + $0x740] sm:$0xff] %v2183
        %v2185 = vld [vmem:[%s1253 + $0x748] sm:$0xff]
        %2186 = vst [vmem:[%s1254 + $0x744] sm:$0xff] %v2185
        %v2187 = vld [vmem:[%s1253 + $0x744] sm:$0xff]
        %2188 = vst [vmem:[%s1254 + $0x748] sm:$0xff] %v2187
        %v2189 = vld [vmem:[%s1253 + $0x74c] sm:$0xff]
        %2190 = vst [vmem:[%s1254 + $0x74c] sm:$0xff] %v2189
        %v2191 = vld [vmem:[%s1253 + $0x750] sm:$0xff]
        %2192 = vst [vmem:[%s1254 + $0x750] sm:$0xff] %v2191
        %v2193 = vld [vmem:[%s1253 + $0x758] sm:$0xff]
        %2194 = vst [vmem:[%s1254 + $0x754] sm:$0xff] %v2193
        %v2195 = vld [vmem:[%s1253 + $0x754] sm:$0xff]
        %2196 = vst [vmem:[%s1254 + $0x758] sm:$0xff] %v2195
        %v2197 = vld [vmem:[%s1253 + $0x75c] sm:$0xff]
        %2198 = vst [vmem:[%s1254 + $0x75c] sm:$0xff] %v2197
        %v2199 = vld [vmem:[%s1253 + $0x760] sm:$0xff]
        %2200 = vst [vmem:[%s1254 + $0x760] sm:$0xff] %v2199
        %v2201 = vld [vmem:[%s1253 + $0x768] sm:$0xff]
        %2202 = vst [vmem:[%s1254 + $0x764] sm:$0xff] %v2201
        %v2203 = vld [vmem:[%s1253 + $0x764] sm:$0xff]
        %2204 = vst [vmem:[%s1254 + $0x768] sm:$0xff] %v2203
        %v2205 = vld [vmem:[%s1253 + $0x76c] sm:$0xff]
        %2206 = vst [vmem:[%s1254 + $0x76c] sm:$0xff] %v2205
        %v2207 = vld [vmem:[%s1253 + $0x770] sm:$0xff]
        %2208 = vst [vmem:[%s1254 + $0x770] sm:$0xff] %v2207
        %v2209 = vld [vmem:[%s1253 + $0x778] sm:$0xff]
        %2210 = vst [vmem:[%s1254 + $0x774] sm:$0xff] %v2209
        %v2211 = vld [vmem:[%s1253 + $0x774] sm:$0xff]
        %2212 = vst [vmem:[%s1254 + $0x778] sm:$0xff] %v2211
        %v2213 = vld [vmem:[%s1253 + $0x77c] sm:$0xff]
        %2214 = vst [vmem:[%s1254 + $0x77c] sm:$0xff] %v2213
        %v2215 = vld [vmem:[%s1253 + $0x780] sm:$0xff]
        %2216 = vst [vmem:[%s1254 + $0x780] sm:$0xff] %v2215
        %v2217 = vld [vmem:[%s1253 + $0x788] sm:$0xff]
        %2218 = vst [vmem:[%s1254 + $0x784] sm:$0xff] %v2217
        %v2219 = vld [vmem:[%s1253 + $0x784] sm:$0xff]
        %2220 = vst [vmem:[%s1254 + $0x788] sm:$0xff] %v2219
        %v2221 = vld [vmem:[%s1253 + $0x78c] sm:$0xff]
        %2222 = vst [vmem:[%s1254 + $0x78c] sm:$0xff] %v2221
        %v2223 = vld [vmem:[%s1253 + $0x790] sm:$0xff]
        %2224 = vst [vmem:[%s1254 + $0x790] sm:$0xff] %v2223
        %v2225 = vld [vmem:[%s1253 + $0x798] sm:$0xff]
        %2226 = vst [vmem:[%s1254 + $0x794] sm:$0xff] %v2225
        %v2227 = vld [vmem:[%s1253 + $0x794] sm:$0xff]
        %2228 = vst [vmem:[%s1254 + $0x798] sm:$0xff] %v2227
        %v2229 = vld [vmem:[%s1253 + $0x79c] sm:$0xff]
        %2230 = vst [vmem:[%s1254 + $0x79c] sm:$0xff] %v2229
        %v2231 = vld [vmem:[%s1253 + $0x7a0] sm:$0xff]
        %2232 = vst [vmem:[%s1254 + $0x7a0] sm:$0xff] %v2231
        %v2233 = vld [vmem:[%s1253 + $0x7a8] sm:$0xff]
        %2234 = vst [vmem:[%s1254 + $0x7a4] sm:$0xff] %v2233
        %v2235 = vld [vmem:[%s1253 + $0x7a4] sm:$0xff]
        %2236 = vst [vmem:[%s1254 + $0x7a8] sm:$0xff] %v2235
        %v2237 = vld [vmem:[%s1253 + $0x7ac] sm:$0xff]
        %2238 = vst [vmem:[%s1254 + $0x7ac] sm:$0xff] %v2237
        %v2239 = vld [vmem:[%s1253 + $0x7b0] sm:$0xff]
        %2240 = vst [vmem:[%s1254 + $0x7b0] sm:$0xff] %v2239
        %v2241 = vld [vmem:[%s1253 + $0x7b8] sm:$0xff]
        %2242 = vst [vmem:[%s1254 + $0x7b4] sm:$0xff] %v2241
        %v2243 = vld [vmem:[%s1253 + $0x7b4] sm:$0xff]
        %2244 = vst [vmem:[%s1254 + $0x7b8] sm:$0xff] %v2243
        %v2245 = vld [vmem:[%s1253 + $0x7bc] sm:$0xff]
        %2246 = vst [vmem:[%s1254 + $0x7bc] sm:$0xff] %v2245
        %v2247 = vld [vmem:[%s1253 + $0x7c0] sm:$0xff]
        %2248 = vst [vmem:[%s1254 + $0x7c0] sm:$0xff] %v2247
        %v2249 = vld [vmem:[%s1253 + $0x7c8] sm:$0xff]
        %2250 = vst [vmem:[%s1254 + $0x7c4] sm:$0xff] %v2249
        %v2251 = vld [vmem:[%s1253 + $0x7c4] sm:$0xff]
        %2252 = vst [vmem:[%s1254 + $0x7c8] sm:$0xff] %v2251
        %v2253 = vld [vmem:[%s1253 + $0x7cc] sm:$0xff]
        %2254 = vst [vmem:[%s1254 + $0x7cc] sm:$0xff] %v2253
        %v2255 = vld [vmem:[%s1253 + $0x7d0] sm:$0xff]
        %2256 = vst [vmem:[%s1254 + $0x7d0] sm:$0xff] %v2255
        %v2257 = vld [vmem:[%s1253 + $0x7d8] sm:$0xff]
        %2258 = vst [vmem:[%s1254 + $0x7d4] sm:$0xff] %v2257
        %v2259 = vld [vmem:[%s1253 + $0x7d4] sm:$0xff]
        %2260 = vst [vmem:[%s1254 + $0x7d8] sm:$0xff] %v2259
        %v2261 = vld [vmem:[%s1253 + $0x7dc] sm:$0xff]
        %2262 = vst [vmem:[%s1254 + $0x7dc] sm:$0xff] %v2261
        %v2263 = vld [vmem:[%s1253 + $0x7e0] sm:$0xff]
        %2264 = vst [vmem:[%s1254 + $0x7e0] sm:$0xff] %v2263
        %v2265 = vld [vmem:[%s1253 + $0x7e8] sm:$0xff]
        %2266 = vst [vmem:[%s1254 + $0x7e4] sm:$0xff] %v2265
        %v2267 = vld [vmem:[%s1253 + $0x7e4] sm:$0xff]
        %2268 = vst [vmem:[%s1254 + $0x7e8] sm:$0xff] %v2267
        %v2269 = vld [vmem:[%s1253 + $0x7ec] sm:$0xff]
        %2270 = vst [vmem:[%s1254 + $0x7ec] sm:$0xff] %v2269
        %v2271 = vld [vmem:[%s1253 + $0x7f0] sm:$0xff]
        %2272 = vst [vmem:[%s1254 + $0x7f0] sm:$0xff] %v2271
        %v2273 = vld [vmem:[%s1253 + $0x7f8] sm:$0xff]
        %2274 = vst [vmem:[%s1254 + $0x7f4] sm:$0xff] %v2273
        %v2275 = vld [vmem:[%s1253 + $0x7f4] sm:$0xff]
        %2276 = vst [vmem:[%s1254 + $0x7f8] sm:$0xff] %v2275
        %v2277 = vld [vmem:[%s1253 + $0x7fc] sm:$0xff]
        %2278 = vst [vmem:[%s1254 + $0x7fc] sm:$0xff] %v2277
        %v2279 = vld [vmem:[%s1253 + $0x800] sm:$0xff]
        %2280 = vst [vmem:[%s1254 + $0x800] sm:$0xff] %v2279
        %v2281 = vld [vmem:[%s1253 + $0x808] sm:$0xff]
        %2282 = vst [vmem:[%s1254 + $0x804] sm:$0xff] %v2281
        %v2283 = vld [vmem:[%s1253 + $0x804] sm:$0xff]
        %2284 = vst [vmem:[%s1254 + $0x808] sm:$0xff] %v2283
        %v2285 = vld [vmem:[%s1253 + $0x80c] sm:$0xff]
        %2286 = vst [vmem:[%s1254 + $0x80c] sm:$0xff] %v2285
        %v2287 = vld [vmem:[%s1253 + $0x810] sm:$0xff]
        %2288 = vst [vmem:[%s1254 + $0x810] sm:$0xff] %v2287
        %v2289 = vld [vmem:[%s1253 + $0x818] sm:$0xff]
        %2290 = vst [vmem:[%s1254 + $0x814] sm:$0xff] %v2289
        %v2291 = vld [vmem:[%s1253 + $0x814] sm:$0xff]
        %2292 = vst [vmem:[%s1254 + $0x818] sm:$0xff] %v2291
        %v2293 = vld [vmem:[%s1253 + $0x81c] sm:$0xff]
        %2294 = vst [vmem:[%s1254 + $0x81c] sm:$0xff] %v2293
        %v2295 = vld [vmem:[%s1253 + $0x820] sm:$0xff]
        %2296 = vst [vmem:[%s1254 + $0x820] sm:$0xff] %v2295
        %v2297 = vld [vmem:[%s1253 + $0x828] sm:$0xff]
        %2298 = vst [vmem:[%s1254 + $0x824] sm:$0xff] %v2297
        %v2299 = vld [vmem:[%s1253 + $0x824] sm:$0xff]
        %2300 = vst [vmem:[%s1254 + $0x828] sm:$0xff] %v2299
        %v2301 = vld [vmem:[%s1253 + $0x82c] sm:$0xff]
        %2302 = vst [vmem:[%s1254 + $0x82c] sm:$0xff] %v2301
        %v2303 = vld [vmem:[%s1253 + $0x830] sm:$0xff]
        %2304 = vst [vmem:[%s1254 + $0x830] sm:$0xff] %v2303
        %v2305 = vld [vmem:[%s1253 + $0x838] sm:$0xff]
        %2306 = vst [vmem:[%s1254 + $0x834] sm:$0xff] %v2305
        %v2307 = vld [vmem:[%s1253 + $0x834] sm:$0xff]
        %2308 = vst [vmem:[%s1254 + $0x838] sm:$0xff] %v2307
        %v2309 = vld [vmem:[%s1253 + $0x83c] sm:$0xff]
        %2310 = vst [vmem:[%s1254 + $0x83c] sm:$0xff] %v2309
        %v2311 = vld [vmem:[%s1253 + $0x840] sm:$0xff]
        %2312 = vst [vmem:[%s1254 + $0x840] sm:$0xff] %v2311
        %v2313 = vld [vmem:[%s1253 + $0x848] sm:$0xff]
        %2314 = vst [vmem:[%s1254 + $0x844] sm:$0xff] %v2313
        %v2315 = vld [vmem:[%s1253 + $0x844] sm:$0xff]
        %2316 = vst [vmem:[%s1254 + $0x848] sm:$0xff] %v2315
        %v2317 = vld [vmem:[%s1253 + $0x84c] sm:$0xff]
        %2318 = vst [vmem:[%s1254 + $0x84c] sm:$0xff] %v2317
        %v2319 = vld [vmem:[%s1253 + $0x850] sm:$0xff]
        %2320 = vst [vmem:[%s1254 + $0x850] sm:$0xff] %v2319
        %v2321 = vld [vmem:[%s1253 + $0x858] sm:$0xff]
        %2322 = vst [vmem:[%s1254 + $0x854] sm:$0xff] %v2321
        %v2323 = vld [vmem:[%s1253 + $0x854] sm:$0xff]
        %2324 = vst [vmem:[%s1254 + $0x858] sm:$0xff] %v2323
        %v2325 = vld [vmem:[%s1253 + $0x85c] sm:$0xff]
        %2326 = vst [vmem:[%s1254 + $0x85c] sm:$0xff] %v2325
        %v2327 = vld [vmem:[%s1253 + $0x860] sm:$0xff]
        %2328 = vst [vmem:[%s1254 + $0x860] sm:$0xff] %v2327
        %v2329 = vld [vmem:[%s1253 + $0x868] sm:$0xff]
        %2330 = vst [vmem:[%s1254 + $0x864] sm:$0xff] %v2329
        %v2331 = vld [vmem:[%s1253 + $0x864] sm:$0xff]
        %2332 = vst [vmem:[%s1254 + $0x868] sm:$0xff] %v2331
        %v2333 = vld [vmem:[%s1253 + $0x86c] sm:$0xff]
        %2334 = vst [vmem:[%s1254 + $0x86c] sm:$0xff] %v2333
        %v2335 = vld [vmem:[%s1253 + $0x870] sm:$0xff]
        %2336 = vst [vmem:[%s1254 + $0x870] sm:$0xff] %v2335
        %v2337 = vld [vmem:[%s1253 + $0x878] sm:$0xff]
        %2338 = vst [vmem:[%s1254 + $0x874] sm:$0xff] %v2337
        %v2339 = vld [vmem:[%s1253 + $0x874] sm:$0xff]
        %2340 = vst [vmem:[%s1254 + $0x878] sm:$0xff] %v2339
        %v2341 = vld [vmem:[%s1253 + $0x87c] sm:$0xff]
        %2342 = vst [vmem:[%s1254 + $0x87c] sm:$0xff] %v2341
        %v2343 = vld [vmem:[%s1253 + $0x880] sm:$0xff]
        %2344 = vst [vmem:[%s1254 + $0x880] sm:$0xff] %v2343
        %v2345 = vld [vmem:[%s1253 + $0x888] sm:$0xff]
        %2346 = vst [vmem:[%s1254 + $0x884] sm:$0xff] %v2345
        %v2347 = vld [vmem:[%s1253 + $0x884] sm:$0xff]
        %2348 = vst [vmem:[%s1254 + $0x888] sm:$0xff] %v2347
        %v2349 = vld [vmem:[%s1253 + $0x88c] sm:$0xff]
        %2350 = vst [vmem:[%s1254 + $0x88c] sm:$0xff] %v2349
        %v2351 = vld [vmem:[%s1253 + $0x890] sm:$0xff]
        %2352 = vst [vmem:[%s1254 + $0x890] sm:$0xff] %v2351
        %v2353 = vld [vmem:[%s1253 + $0x898] sm:$0xff]
        %2354 = vst [vmem:[%s1254 + $0x894] sm:$0xff] %v2353
        %v2355 = vld [vmem:[%s1253 + $0x894] sm:$0xff]
        %2356 = vst [vmem:[%s1254 + $0x898] sm:$0xff] %v2355
        %v2357 = vld [vmem:[%s1253 + $0x89c] sm:$0xff]
        %2358 = vst [vmem:[%s1254 + $0x89c] sm:$0xff] %v2357
        %v2359 = vld [vmem:[%s1253 + $0x8a0] sm:$0xff]
        %2360 = vst [vmem:[%s1254 + $0x8a0] sm:$0xff] %v2359
        %v2361 = vld [vmem:[%s1253 + $0x8a8] sm:$0xff]
        %2362 = vst [vmem:[%s1254 + $0x8a4] sm:$0xff] %v2361
        %v2363 = vld [vmem:[%s1253 + $0x8a4] sm:$0xff]
        %2364 = vst [vmem:[%s1254 + $0x8a8] sm:$0xff] %v2363
        %v2365 = vld [vmem:[%s1253 + $0x8ac] sm:$0xff]
        %2366 = vst [vmem:[%s1254 + $0x8ac] sm:$0xff] %v2365
        %v2367 = vld [vmem:[%s1253 + $0x8b0] sm:$0xff]
        %2368 = vst [vmem:[%s1254 + $0x8b0] sm:$0xff] %v2367
        %v2369 = vld [vmem:[%s1253 + $0x8b8] sm:$0xff]
        %2370 = vst [vmem:[%s1254 + $0x8b4] sm:$0xff] %v2369
        %v2371 = vld [vmem:[%s1253 + $0x8b4] sm:$0xff]
        %2372 = vst [vmem:[%s1254 + $0x8b8] sm:$0xff] %v2371
        %v2373 = vld [vmem:[%s1253 + $0x8bc] sm:$0xff]
        %2374 = vst [vmem:[%s1254 + $0x8bc] sm:$0xff] %v2373
        %v2375 = vld [vmem:[%s1253 + $0x8c0] sm:$0xff]
        %2376 = vst [vmem:[%s1254 + $0x8c0] sm:$0xff] %v2375
        %v2377 = vld [vmem:[%s1253 + $0x8c8] sm:$0xff]
        %2378 = vst [vmem:[%s1254 + $0x8c4] sm:$0xff] %v2377
        %v2379 = vld [vmem:[%s1253 + $0x8c4] sm:$0xff]
        %2380 = vst [vmem:[%s1254 + $0x8c8] sm:$0xff] %v2379
        %v2381 = vld [vmem:[%s1253 + $0x8cc] sm:$0xff]
        %2382 = vst [vmem:[%s1254 + $0x8cc] sm:$0xff] %v2381
        %v2383 = vld [vmem:[%s1253 + $0x8d0] sm:$0xff]
        %2384 = vst [vmem:[%s1254 + $0x8d0] sm:$0xff] %v2383
        %v2385 = vld [vmem:[%s1253 + $0x8d8] sm:$0xff]
        %2386 = vst [vmem:[%s1254 + $0x8d4] sm:$0xff] %v2385
        %v2387 = vld [vmem:[%s1253 + $0x8d4] sm:$0xff]
        %2388 = vst [vmem:[%s1254 + $0x8d8] sm:$0xff] %v2387
        %v2389 = vld [vmem:[%s1253 + $0x8dc] sm:$0xff]
        %2390 = vst [vmem:[%s1254 + $0x8dc] sm:$0xff] %v2389
        %v2391 = vld [vmem:[%s1253 + $0x8e0] sm:$0xff]
        %2392 = vst [vmem:[%s1254 + $0x8e0] sm:$0xff] %v2391
        %v2393 = vld [vmem:[%s1253 + $0x8e8] sm:$0xff]
        %2394 = vst [vmem:[%s1254 + $0x8e4] sm:$0xff] %v2393
        %v2395 = vld [vmem:[%s1253 + $0x8e4] sm:$0xff]
        %2396 = vst [vmem:[%s1254 + $0x8e8] sm:$0xff] %v2395
        %v2397 = vld [vmem:[%s1253 + $0x8ec] sm:$0xff]
        %2398 = vst [vmem:[%s1254 + $0x8ec] sm:$0xff] %v2397
        %v2399 = vld [vmem:[%s1253 + $0x8f0] sm:$0xff]
        %2400 = vst [vmem:[%s1254 + $0x8f0] sm:$0xff] %v2399
        %v2401 = vld [vmem:[%s1253 + $0x8f8] sm:$0xff]
        %2402 = vst [vmem:[%s1254 + $0x8f4] sm:$0xff] %v2401
        %v2403 = vld [vmem:[%s1253 + $0x8f4] sm:$0xff]
        %2404 = vst [vmem:[%s1254 + $0x8f8] sm:$0xff] %v2403
        %v2405 = vld [vmem:[%s1253 + $0x8fc] sm:$0xff]
        %2406 = vst [vmem:[%s1254 + $0x8fc] sm:$0xff] %v2405
        %s2407 = sadd.s32 1, %s1252
        %p2408 = scmp.ge.s32.totalorder %s2407, %s1243
        %s2409 = scalar_select %p2408, 0, %s2407
        %s2410 = smul.u32 %s2409, 8
        %s2411 = smul.u32 %s2409, 8
        %s2412 = scalar_lea.vmem %s20, %s2410
        %s2413 = scalar_lea.vmem [#allocation2], %s2411
      $region105: #{learnloss_mix_forward.1} parent=99 // loop_footer
        %s1249 = sadd.s32 %s1247, 1
      $region106: #{learnloss_mix_forward.1} parent=99 // loop_footer_branch
        %1246 = sbr.rel target = $region102
      $region107: #{learnloss_mix_forward.1} parent=99 // loop_exit
        _
    $region100: #{learnloss_mix_forward.1} parent=84 // pred_fallthru
      _
    %p2414 = pneg %p1239
    // Predicated region
    $region108: #{learnloss_mix_forward.1} parent=84 // pred_check
      _
    $region109: #{learnloss_mix_forward.1} parent=84 // pred_check_branch
      %2416 = sbr.rel (%p1239) target = $region111
    $region110: #{learnloss_mix_forward.1} parent=84 // pred_region
      %s2417 = sand.u32 4, 7
      %s2418 = ssub.s32 4, %s2417
      %s2419 = scalar_lea.vmem %s20, %s2418
      %s2420 = ssub.s32 4, %s2417
      %s2421 = scalar_lea.vmem [#allocation2], %s2420
      %s2422 = sshrl.u32 4, 3
      // While loop
      $region112: #{learnloss_mix_forward.1} parent=110 // loop_pre_header
        _
      $region113: #{learnloss_mix_forward.1} parent=110 // loop_header
        %s2426 = sphi 0, %s2428
        %p2427 = scmp.ge.s32.totalorder %s2426, %s2422
        %s2431 = sphi 0, %s3588
        %s2432 = sphi %s20, %s3591
        %s2433 = sphi [#allocation2], %s3592
      $region114: #{learnloss_mix_forward.1} parent=110 // loop_header_branch
        %2430 = sbr.rel (%p2427) target = $region118
      $region115: #{learnloss_mix_forward.1} parent=110 // loop_body
        %v2434 = vld [vmem:[%s2432] sm:$0xff]
        %2435 = vst [vmem:[%s2433] sm:$0xff] %v2434
        %v2436 = vld [vmem:[%s2432 + $0x8] sm:$0xff]
        %2437 = vst [vmem:[%s2433 + $0x4] sm:$0xff] %v2436
        %v2438 = vld [vmem:[%s2432 + $0x4] sm:$0xff]
        %2439 = vst [vmem:[%s2433 + $0x8] sm:$0xff] %v2438
        %v2440 = vld [vmem:[%s2432 + $0xc] sm:$0xff]
        %2441 = vst [vmem:[%s2433 + $0xc] sm:$0xff] %v2440
        %v2442 = vld [vmem:[%s2432 + $0x10] sm:$0xff]
        %2443 = vst [vmem:[%s2433 + $0x10] sm:$0xff] %v2442
        %v2444 = vld [vmem:[%s2432 + $0x18] sm:$0xff]
        %2445 = vst [vmem:[%s2433 + $0x14] sm:$0xff] %v2444
        %v2446 = vld [vmem:[%s2432 + $0x14] sm:$0xff]
        %2447 = vst [vmem:[%s2433 + $0x18] sm:$0xff] %v2446
        %v2448 = vld [vmem:[%s2432 + $0x1c] sm:$0xff]
        %2449 = vst [vmem:[%s2433 + $0x1c] sm:$0xff] %v2448
        %v2450 = vld [vmem:[%s2432 + $0x20] sm:$0xff]
        %2451 = vst [vmem:[%s2433 + $0x20] sm:$0xff] %v2450
        %v2452 = vld [vmem:[%s2432 + $0x28] sm:$0xff]
        %2453 = vst [vmem:[%s2433 + $0x24] sm:$0xff] %v2452
        %v2454 = vld [vmem:[%s2432 + $0x24] sm:$0xff]
        %2455 = vst [vmem:[%s2433 + $0x28] sm:$0xff] %v2454
        %v2456 = vld [vmem:[%s2432 + $0x2c] sm:$0xff]
        %2457 = vst [vmem:[%s2433 + $0x2c] sm:$0xff] %v2456
        %v2458 = vld [vmem:[%s2432 + $0x30] sm:$0xff]
        %2459 = vst [vmem:[%s2433 + $0x30] sm:$0xff] %v2458
        %v2460 = vld [vmem:[%s2432 + $0x38] sm:$0xff]
        %2461 = vst [vmem:[%s2433 + $0x34] sm:$0xff] %v2460
        %v2462 = vld [vmem:[%s2432 + $0x34] sm:$0xff]
        %2463 = vst [vmem:[%s2433 + $0x38] sm:$0xff] %v2462
        %v2464 = vld [vmem:[%s2432 + $0x3c] sm:$0xff]
        %2465 = vst [vmem:[%s2433 + $0x3c] sm:$0xff] %v2464
        %v2466 = vld [vmem:[%s2432 + $0x40] sm:$0xff]
        %2467 = vst [vmem:[%s2433 + $0x40] sm:$0xff] %v2466
        %v2468 = vld [vmem:[%s2432 + $0x48] sm:$0xff]
        %2469 = vst [vmem:[%s2433 + $0x44] sm:$0xff] %v2468
        %v2470 = vld [vmem:[%s2432 + $0x44] sm:$0xff]
        %2471 = vst [vmem:[%s2433 + $0x48] sm:$0xff] %v2470
        %v2472 = vld [vmem:[%s2432 + $0x4c] sm:$0xff]
        %2473 = vst [vmem:[%s2433 + $0x4c] sm:$0xff] %v2472
        %v2474 = vld [vmem:[%s2432 + $0x50] sm:$0xff]
        %2475 = vst [vmem:[%s2433 + $0x50] sm:$0xff] %v2474
        %v2476 = vld [vmem:[%s2432 + $0x58] sm:$0xff]
        %2477 = vst [vmem:[%s2433 + $0x54] sm:$0xff] %v2476
        %v2478 = vld [vmem:[%s2432 + $0x54] sm:$0xff]
        %2479 = vst [vmem:[%s2433 + $0x58] sm:$0xff] %v2478
        %v2480 = vld [vmem:[%s2432 + $0x5c] sm:$0xff]
        %2481 = vst [vmem:[%s2433 + $0x5c] sm:$0xff] %v2480
        %v2482 = vld [vmem:[%s2432 + $0x60] sm:$0xff]
        %2483 = vst [vmem:[%s2433 + $0x60] sm:$0xff] %v2482
        %v2484 = vld [vmem:[%s2432 + $0x68] sm:$0xff]
        %2485 = vst [vmem:[%s2433 + $0x64] sm:$0xff] %v2484
        %v2486 = vld [vmem:[%s2432 + $0x64] sm:$0xff]
        %2487 = vst [vmem:[%s2433 + $0x68] sm:$0xff] %v2486
        %v2488 = vld [vmem:[%s2432 + $0x6c] sm:$0xff]
        %2489 = vst [vmem:[%s2433 + $0x6c] sm:$0xff] %v2488
        %v2490 = vld [vmem:[%s2432 + $0x70] sm:$0xff]
        %2491 = vst [vmem:[%s2433 + $0x70] sm:$0xff] %v2490
        %v2492 = vld [vmem:[%s2432 + $0x78] sm:$0xff]
        %2493 = vst [vmem:[%s2433 + $0x74] sm:$0xff] %v2492
        %v2494 = vld [vmem:[%s2432 + $0x74] sm:$0xff]
        %2495 = vst [vmem:[%s2433 + $0x78] sm:$0xff] %v2494
        %v2496 = vld [vmem:[%s2432 + $0x7c] sm:$0xff]
        %2497 = vst [vmem:[%s2433 + $0x7c] sm:$0xff] %v2496
        %v2498 = vld [vmem:[%s2432 + $0x80] sm:$0xff]
        %2499 = vst [vmem:[%s2433 + $0x80] sm:$0xff] %v2498
        %v2500 = vld [vmem:[%s2432 + $0x88] sm:$0xff]
        %2501 = vst [vmem:[%s2433 + $0x84] sm:$0xff] %v2500
        %v2502 = vld [vmem:[%s2432 + $0x84] sm:$0xff]
        %2503 = vst [vmem:[%s2433 + $0x88] sm:$0xff] %v2502
        %v2504 = vld [vmem:[%s2432 + $0x8c] sm:$0xff]
        %2505 = vst [vmem:[%s2433 + $0x8c] sm:$0xff] %v2504
        %v2506 = vld [vmem:[%s2432 + $0x90] sm:$0xff]
        %2507 = vst [vmem:[%s2433 + $0x90] sm:$0xff] %v2506
        %v2508 = vld [vmem:[%s2432 + $0x98] sm:$0xff]
        %2509 = vst [vmem:[%s2433 + $0x94] sm:$0xff] %v2508
        %v2510 = vld [vmem:[%s2432 + $0x94] sm:$0xff]
        %2511 = vst [vmem:[%s2433 + $0x98] sm:$0xff] %v2510
        %v2512 = vld [vmem:[%s2432 + $0x9c] sm:$0xff]
        %2513 = vst [vmem:[%s2433 + $0x9c] sm:$0xff] %v2512
        %v2514 = vld [vmem:[%s2432 + $0xa0] sm:$0xff]
        %2515 = vst [vmem:[%s2433 + $0xa0] sm:$0xff] %v2514
        %v2516 = vld [vmem:[%s2432 + $0xa8] sm:$0xff]
        %2517 = vst [vmem:[%s2433 + $0xa4] sm:$0xff] %v2516
        %v2518 = vld [vmem:[%s2432 + $0xa4] sm:$0xff]
        %2519 = vst [vmem:[%s2433 + $0xa8] sm:$0xff] %v2518
        %v2520 = vld [vmem:[%s2432 + $0xac] sm:$0xff]
        %2521 = vst [vmem:[%s2433 + $0xac] sm:$0xff] %v2520
        %v2522 = vld [vmem:[%s2432 + $0xb0] sm:$0xff]
        %2523 = vst [vmem:[%s2433 + $0xb0] sm:$0xff] %v2522
        %v2524 = vld [vmem:[%s2432 + $0xb8] sm:$0xff]
        %2525 = vst [vmem:[%s2433 + $0xb4] sm:$0xff] %v2524
        %v2526 = vld [vmem:[%s2432 + $0xb4] sm:$0xff]
        %2527 = vst [vmem:[%s2433 + $0xb8] sm:$0xff] %v2526
        %v2528 = vld [vmem:[%s2432 + $0xbc] sm:$0xff]
        %2529 = vst [vmem:[%s2433 + $0xbc] sm:$0xff] %v2528
        %v2530 = vld [vmem:[%s2432 + $0xc0] sm:$0xff]
        %2531 = vst [vmem:[%s2433 + $0xc0] sm:$0xff] %v2530
        %v2532 = vld [vmem:[%s2432 + $0xc8] sm:$0xff]
        %2533 = vst [vmem:[%s2433 + $0xc4] sm:$0xff] %v2532
        %v2534 = vld [vmem:[%s2432 + $0xc4] sm:$0xff]
        %2535 = vst [vmem:[%s2433 + $0xc8] sm:$0xff] %v2534
        %v2536 = vld [vmem:[%s2432 + $0xcc] sm:$0xff]
        %2537 = vst [vmem:[%s2433 + $0xcc] sm:$0xff] %v2536
        %v2538 = vld [vmem:[%s2432 + $0xd0] sm:$0xff]
        %2539 = vst [vmem:[%s2433 + $0xd0] sm:$0xff] %v2538
        %v2540 = vld [vmem:[%s2432 + $0xd8] sm:$0xff]
        %2541 = vst [vmem:[%s2433 + $0xd4] sm:$0xff] %v2540
        %v2542 = vld [vmem:[%s2432 + $0xd4] sm:$0xff]
        %2543 = vst [vmem:[%s2433 + $0xd8] sm:$0xff] %v2542
        %v2544 = vld [vmem:[%s2432 + $0xdc] sm:$0xff]
        %2545 = vst [vmem:[%s2433 + $0xdc] sm:$0xff] %v2544
        %v2546 = vld [vmem:[%s2432 + $0xe0] sm:$0xff]
        %2547 = vst [vmem:[%s2433 + $0xe0] sm:$0xff] %v2546
        %v2548 = vld [vmem:[%s2432 + $0xe8] sm:$0xff]
        %2549 = vst [vmem:[%s2433 + $0xe4] sm:$0xff] %v2548
        %v2550 = vld [vmem:[%s2432 + $0xe4] sm:$0xff]
        %2551 = vst [vmem:[%s2433 + $0xe8] sm:$0xff] %v2550
        %v2552 = vld [vmem:[%s2432 + $0xec] sm:$0xff]
        %2553 = vst [vmem:[%s2433 + $0xec] sm:$0xff] %v2552
        %v2554 = vld [vmem:[%s2432 + $0xf0] sm:$0xff]
        %2555 = vst [vmem:[%s2433 + $0xf0] sm:$0xff] %v2554
        %v2556 = vld [vmem:[%s2432 + $0xf8] sm:$0xff]
        %2557 = vst [vmem:[%s2433 + $0xf4] sm:$0xff] %v2556
        %v2558 = vld [vmem:[%s2432 + $0xf4] sm:$0xff]
        %2559 = vst [vmem:[%s2433 + $0xf8] sm:$0xff] %v2558
        %v2560 = vld [vmem:[%s2432 + $0xfc] sm:$0xff]
        %2561 = vst [vmem:[%s2433 + $0xfc] sm:$0xff] %v2560
        %v2562 = vld [vmem:[%s2432 + $0x100] sm:$0xff]
        %2563 = vst [vmem:[%s2433 + $0x100] sm:$0xff] %v2562
        %v2564 = vld [vmem:[%s2432 + $0x108] sm:$0xff]
        %2565 = vst [vmem:[%s2433 + $0x104] sm:$0xff] %v2564
        %v2566 = vld [vmem:[%s2432 + $0x104] sm:$0xff]
        %2567 = vst [vmem:[%s2433 + $0x108] sm:$0xff] %v2566
        %v2568 = vld [vmem:[%s2432 + $0x10c] sm:$0xff]
        %2569 = vst [vmem:[%s2433 + $0x10c] sm:$0xff] %v2568
        %v2570 = vld [vmem:[%s2432 + $0x110] sm:$0xff]
        %2571 = vst [vmem:[%s2433 + $0x110] sm:$0xff] %v2570
        %v2572 = vld [vmem:[%s2432 + $0x118] sm:$0xff]
        %2573 = vst [vmem:[%s2433 + $0x114] sm:$0xff] %v2572
        %v2574 = vld [vmem:[%s2432 + $0x114] sm:$0xff]
        %2575 = vst [vmem:[%s2433 + $0x118] sm:$0xff] %v2574
        %v2576 = vld [vmem:[%s2432 + $0x11c] sm:$0xff]
        %2577 = vst [vmem:[%s2433 + $0x11c] sm:$0xff] %v2576
        %v2578 = vld [vmem:[%s2432 + $0x120] sm:$0xff]
        %2579 = vst [vmem:[%s2433 + $0x120] sm:$0xff] %v2578
        %v2580 = vld [vmem:[%s2432 + $0x128] sm:$0xff]
        %2581 = vst [vmem:[%s2433 + $0x124] sm:$0xff] %v2580
        %v2582 = vld [vmem:[%s2432 + $0x124] sm:$0xff]
        %2583 = vst [vmem:[%s2433 + $0x128] sm:$0xff] %v2582
        %v2584 = vld [vmem:[%s2432 + $0x12c] sm:$0xff]
        %2585 = vst [vmem:[%s2433 + $0x12c] sm:$0xff] %v2584
        %v2586 = vld [vmem:[%s2432 + $0x130] sm:$0xff]
        %2587 = vst [vmem:[%s2433 + $0x130] sm:$0xff] %v2586
        %v2588 = vld [vmem:[%s2432 + $0x138] sm:$0xff]
        %2589 = vst [vmem:[%s2433 + $0x134] sm:$0xff] %v2588
        %v2590 = vld [vmem:[%s2432 + $0x134] sm:$0xff]
        %2591 = vst [vmem:[%s2433 + $0x138] sm:$0xff] %v2590
        %v2592 = vld [vmem:[%s2432 + $0x13c] sm:$0xff]
        %2593 = vst [vmem:[%s2433 + $0x13c] sm:$0xff] %v2592
        %v2594 = vld [vmem:[%s2432 + $0x140] sm:$0xff]
        %2595 = vst [vmem:[%s2433 + $0x140] sm:$0xff] %v2594
        %v2596 = vld [vmem:[%s2432 + $0x148] sm:$0xff]
        %2597 = vst [vmem:[%s2433 + $0x144] sm:$0xff] %v2596
        %v2598 = vld [vmem:[%s2432 + $0x144] sm:$0xff]
        %2599 = vst [vmem:[%s2433 + $0x148] sm:$0xff] %v2598
        %v2600 = vld [vmem:[%s2432 + $0x14c] sm:$0xff]
        %2601 = vst [vmem:[%s2433 + $0x14c] sm:$0xff] %v2600
        %v2602 = vld [vmem:[%s2432 + $0x150] sm:$0xff]
        %2603 = vst [vmem:[%s2433 + $0x150] sm:$0xff] %v2602
        %v2604 = vld [vmem:[%s2432 + $0x158] sm:$0xff]
        %2605 = vst [vmem:[%s2433 + $0x154] sm:$0xff] %v2604
        %v2606 = vld [vmem:[%s2432 + $0x154] sm:$0xff]
        %2607 = vst [vmem:[%s2433 + $0x158] sm:$0xff] %v2606
        %v2608 = vld [vmem:[%s2432 + $0x15c] sm:$0xff]
        %2609 = vst [vmem:[%s2433 + $0x15c] sm:$0xff] %v2608
        %v2610 = vld [vmem:[%s2432 + $0x160] sm:$0xff]
        %2611 = vst [vmem:[%s2433 + $0x160] sm:$0xff] %v2610
        %v2612 = vld [vmem:[%s2432 + $0x168] sm:$0xff]
        %2613 = vst [vmem:[%s2433 + $0x164] sm:$0xff] %v2612
        %v2614 = vld [vmem:[%s2432 + $0x164] sm:$0xff]
        %2615 = vst [vmem:[%s2433 + $0x168] sm:$0xff] %v2614
        %v2616 = vld [vmem:[%s2432 + $0x16c] sm:$0xff]
        %2617 = vst [vmem:[%s2433 + $0x16c] sm:$0xff] %v2616
        %v2618 = vld [vmem:[%s2432 + $0x170] sm:$0xff]
        %2619 = vst [vmem:[%s2433 + $0x170] sm:$0xff] %v2618
        %v2620 = vld [vmem:[%s2432 + $0x178] sm:$0xff]
        %2621 = vst [vmem:[%s2433 + $0x174] sm:$0xff] %v2620
        %v2622 = vld [vmem:[%s2432 + $0x174] sm:$0xff]
        %2623 = vst [vmem:[%s2433 + $0x178] sm:$0xff] %v2622
        %v2624 = vld [vmem:[%s2432 + $0x17c] sm:$0xff]
        %2625 = vst [vmem:[%s2433 + $0x17c] sm:$0xff] %v2624
        %v2626 = vld [vmem:[%s2432 + $0x180] sm:$0xff]
        %2627 = vst [vmem:[%s2433 + $0x180] sm:$0xff] %v2626
        %v2628 = vld [vmem:[%s2432 + $0x188] sm:$0xff]
        %2629 = vst [vmem:[%s2433 + $0x184] sm:$0xff] %v2628
        %v2630 = vld [vmem:[%s2432 + $0x184] sm:$0xff]
        %2631 = vst [vmem:[%s2433 + $0x188] sm:$0xff] %v2630
        %v2632 = vld [vmem:[%s2432 + $0x18c] sm:$0xff]
        %2633 = vst [vmem:[%s2433 + $0x18c] sm:$0xff] %v2632
        %v2634 = vld [vmem:[%s2432 + $0x190] sm:$0xff]
        %2635 = vst [vmem:[%s2433 + $0x190] sm:$0xff] %v2634
        %v2636 = vld [vmem:[%s2432 + $0x198] sm:$0xff]
        %2637 = vst [vmem:[%s2433 + $0x194] sm:$0xff] %v2636
        %v2638 = vld [vmem:[%s2432 + $0x194] sm:$0xff]
        %2639 = vst [vmem:[%s2433 + $0x198] sm:$0xff] %v2638
        %v2640 = vld [vmem:[%s2432 + $0x19c] sm:$0xff]
        %2641 = vst [vmem:[%s2433 + $0x19c] sm:$0xff] %v2640
        %v2642 = vld [vmem:[%s2432 + $0x1a0] sm:$0xff]
        %2643 = vst [vmem:[%s2433 + $0x1a0] sm:$0xff] %v2642
        %v2644 = vld [vmem:[%s2432 + $0x1a8] sm:$0xff]
        %2645 = vst [vmem:[%s2433 + $0x1a4] sm:$0xff] %v2644
        %v2646 = vld [vmem:[%s2432 + $0x1a4] sm:$0xff]
        %2647 = vst [vmem:[%s2433 + $0x1a8] sm:$0xff] %v2646
        %v2648 = vld [vmem:[%s2432 + $0x1ac] sm:$0xff]
        %2649 = vst [vmem:[%s2433 + $0x1ac] sm:$0xff] %v2648
        %v2650 = vld [vmem:[%s2432 + $0x1b0] sm:$0xff]
        %2651 = vst [vmem:[%s2433 + $0x1b0] sm:$0xff] %v2650
        %v2652 = vld [vmem:[%s2432 + $0x1b8] sm:$0xff]
        %2653 = vst [vmem:[%s2433 + $0x1b4] sm:$0xff] %v2652
        %v2654 = vld [vmem:[%s2432 + $0x1b4] sm:$0xff]
        %2655 = vst [vmem:[%s2433 + $0x1b8] sm:$0xff] %v2654
        %v2656 = vld [vmem:[%s2432 + $0x1bc] sm:$0xff]
        %2657 = vst [vmem:[%s2433 + $0x1bc] sm:$0xff] %v2656
        %v2658 = vld [vmem:[%s2432 + $0x1c0] sm:$0xff]
        %2659 = vst [vmem:[%s2433 + $0x1c0] sm:$0xff] %v2658
        %v2660 = vld [vmem:[%s2432 + $0x1c8] sm:$0xff]
        %2661 = vst [vmem:[%s2433 + $0x1c4] sm:$0xff] %v2660
        %v2662 = vld [vmem:[%s2432 + $0x1c4] sm:$0xff]
        %2663 = vst [vmem:[%s2433 + $0x1c8] sm:$0xff] %v2662
        %v2664 = vld [vmem:[%s2432 + $0x1cc] sm:$0xff]
        %2665 = vst [vmem:[%s2433 + $0x1cc] sm:$0xff] %v2664
        %v2666 = vld [vmem:[%s2432 + $0x1d0] sm:$0xff]
        %2667 = vst [vmem:[%s2433 + $0x1d0] sm:$0xff] %v2666
        %v2668 = vld [vmem:[%s2432 + $0x1d8] sm:$0xff]
        %2669 = vst [vmem:[%s2433 + $0x1d4] sm:$0xff] %v2668
        %v2670 = vld [vmem:[%s2432 + $0x1d4] sm:$0xff]
        %2671 = vst [vmem:[%s2433 + $0x1d8] sm:$0xff] %v2670
        %v2672 = vld [vmem:[%s2432 + $0x1dc] sm:$0xff]
        %2673 = vst [vmem:[%s2433 + $0x1dc] sm:$0xff] %v2672
        %v2674 = vld [vmem:[%s2432 + $0x1e0] sm:$0xff]
        %2675 = vst [vmem:[%s2433 + $0x1e0] sm:$0xff] %v2674
        %v2676 = vld [vmem:[%s2432 + $0x1e8] sm:$0xff]
        %2677 = vst [vmem:[%s2433 + $0x1e4] sm:$0xff] %v2676
        %v2678 = vld [vmem:[%s2432 + $0x1e4] sm:$0xff]
        %2679 = vst [vmem:[%s2433 + $0x1e8] sm:$0xff] %v2678
        %v2680 = vld [vmem:[%s2432 + $0x1ec] sm:$0xff]
        %2681 = vst [vmem:[%s2433 + $0x1ec] sm:$0xff] %v2680
        %v2682 = vld [vmem:[%s2432 + $0x1f0] sm:$0xff]
        %2683 = vst [vmem:[%s2433 + $0x1f0] sm:$0xff] %v2682
        %v2684 = vld [vmem:[%s2432 + $0x1f8] sm:$0xff]
        %2685 = vst [vmem:[%s2433 + $0x1f4] sm:$0xff] %v2684
        %v2686 = vld [vmem:[%s2432 + $0x1f4] sm:$0xff]
        %2687 = vst [vmem:[%s2433 + $0x1f8] sm:$0xff] %v2686
        %v2688 = vld [vmem:[%s2432 + $0x1fc] sm:$0xff]
        %2689 = vst [vmem:[%s2433 + $0x1fc] sm:$0xff] %v2688
        %v2690 = vld [vmem:[%s2432 + $0x200] sm:$0xff]
        %2691 = vst [vmem:[%s2433 + $0x200] sm:$0xff] %v2690
        %v2692 = vld [vmem:[%s2432 + $0x208] sm:$0xff]
        %2693 = vst [vmem:[%s2433 + $0x204] sm:$0xff] %v2692
        %v2694 = vld [vmem:[%s2432 + $0x204] sm:$0xff]
        %2695 = vst [vmem:[%s2433 + $0x208] sm:$0xff] %v2694
        %v2696 = vld [vmem:[%s2432 + $0x20c] sm:$0xff]
        %2697 = vst [vmem:[%s2433 + $0x20c] sm:$0xff] %v2696
        %v2698 = vld [vmem:[%s2432 + $0x210] sm:$0xff]
        %2699 = vst [vmem:[%s2433 + $0x210] sm:$0xff] %v2698
        %v2700 = vld [vmem:[%s2432 + $0x218] sm:$0xff]
        %2701 = vst [vmem:[%s2433 + $0x214] sm:$0xff] %v2700
        %v2702 = vld [vmem:[%s2432 + $0x214] sm:$0xff]
        %2703 = vst [vmem:[%s2433 + $0x218] sm:$0xff] %v2702
        %v2704 = vld [vmem:[%s2432 + $0x21c] sm:$0xff]
        %2705 = vst [vmem:[%s2433 + $0x21c] sm:$0xff] %v2704
        %v2706 = vld [vmem:[%s2432 + $0x220] sm:$0xff]
        %2707 = vst [vmem:[%s2433 + $0x220] sm:$0xff] %v2706
        %v2708 = vld [vmem:[%s2432 + $0x228] sm:$0xff]
        %2709 = vst [vmem:[%s2433 + $0x224] sm:$0xff] %v2708
        %v2710 = vld [vmem:[%s2432 + $0x224] sm:$0xff]
        %2711 = vst [vmem:[%s2433 + $0x228] sm:$0xff] %v2710
        %v2712 = vld [vmem:[%s2432 + $0x22c] sm:$0xff]
        %2713 = vst [vmem:[%s2433 + $0x22c] sm:$0xff] %v2712
        %v2714 = vld [vmem:[%s2432 + $0x230] sm:$0xff]
        %2715 = vst [vmem:[%s2433 + $0x230] sm:$0xff] %v2714
        %v2716 = vld [vmem:[%s2432 + $0x238] sm:$0xff]
        %2717 = vst [vmem:[%s2433 + $0x234] sm:$0xff] %v2716
        %v2718 = vld [vmem:[%s2432 + $0x234] sm:$0xff]
        %2719 = vst [vmem:[%s2433 + $0x238] sm:$0xff] %v2718
        %v2720 = vld [vmem:[%s2432 + $0x23c] sm:$0xff]
        %2721 = vst [vmem:[%s2433 + $0x23c] sm:$0xff] %v2720
        %v2722 = vld [vmem:[%s2432 + $0x240] sm:$0xff]
        %2723 = vst [vmem:[%s2433 + $0x240] sm:$0xff] %v2722
        %v2724 = vld [vmem:[%s2432 + $0x248] sm:$0xff]
        %2725 = vst [vmem:[%s2433 + $0x244] sm:$0xff] %v2724
        %v2726 = vld [vmem:[%s2432 + $0x244] sm:$0xff]
        %2727 = vst [vmem:[%s2433 + $0x248] sm:$0xff] %v2726
        %v2728 = vld [vmem:[%s2432 + $0x24c] sm:$0xff]
        %2729 = vst [vmem:[%s2433 + $0x24c] sm:$0xff] %v2728
        %v2730 = vld [vmem:[%s2432 + $0x250] sm:$0xff]
        %2731 = vst [vmem:[%s2433 + $0x250] sm:$0xff] %v2730
        %v2732 = vld [vmem:[%s2432 + $0x258] sm:$0xff]
        %2733 = vst [vmem:[%s2433 + $0x254] sm:$0xff] %v2732
        %v2734 = vld [vmem:[%s2432 + $0x254] sm:$0xff]
        %2735 = vst [vmem:[%s2433 + $0x258] sm:$0xff] %v2734
        %v2736 = vld [vmem:[%s2432 + $0x25c] sm:$0xff]
        %2737 = vst [vmem:[%s2433 + $0x25c] sm:$0xff] %v2736
        %v2738 = vld [vmem:[%s2432 + $0x260] sm:$0xff]
        %2739 = vst [vmem:[%s2433 + $0x260] sm:$0xff] %v2738
        %v2740 = vld [vmem:[%s2432 + $0x268] sm:$0xff]
        %2741 = vst [vmem:[%s2433 + $0x264] sm:$0xff] %v2740
        %v2742 = vld [vmem:[%s2432 + $0x264] sm:$0xff]
        %2743 = vst [vmem:[%s2433 + $0x268] sm:$0xff] %v2742
        %v2744 = vld [vmem:[%s2432 + $0x26c] sm:$0xff]
        %2745 = vst [vmem:[%s2433 + $0x26c] sm:$0xff] %v2744
        %v2746 = vld [vmem:[%s2432 + $0x270] sm:$0xff]
        %2747 = vst [vmem:[%s2433 + $0x270] sm:$0xff] %v2746
        %v2748 = vld [vmem:[%s2432 + $0x278] sm:$0xff]
        %2749 = vst [vmem:[%s2433 + $0x274] sm:$0xff] %v2748
        %v2750 = vld [vmem:[%s2432 + $0x274] sm:$0xff]
        %2751 = vst [vmem:[%s2433 + $0x278] sm:$0xff] %v2750
        %v2752 = vld [vmem:[%s2432 + $0x27c] sm:$0xff]
        %2753 = vst [vmem:[%s2433 + $0x27c] sm:$0xff] %v2752
        %v2754 = vld [vmem:[%s2432 + $0x280] sm:$0xff]
        %2755 = vst [vmem:[%s2433 + $0x280] sm:$0xff] %v2754
        %v2756 = vld [vmem:[%s2432 + $0x288] sm:$0xff]
        %2757 = vst [vmem:[%s2433 + $0x284] sm:$0xff] %v2756
        %v2758 = vld [vmem:[%s2432 + $0x284] sm:$0xff]
        %2759 = vst [vmem:[%s2433 + $0x288] sm:$0xff] %v2758
        %v2760 = vld [vmem:[%s2432 + $0x28c] sm:$0xff]
        %2761 = vst [vmem:[%s2433 + $0x28c] sm:$0xff] %v2760
        %v2762 = vld [vmem:[%s2432 + $0x290] sm:$0xff]
        %2763 = vst [vmem:[%s2433 + $0x290] sm:$0xff] %v2762
        %v2764 = vld [vmem:[%s2432 + $0x298] sm:$0xff]
        %2765 = vst [vmem:[%s2433 + $0x294] sm:$0xff] %v2764
        %v2766 = vld [vmem:[%s2432 + $0x294] sm:$0xff]
        %2767 = vst [vmem:[%s2433 + $0x298] sm:$0xff] %v2766
        %v2768 = vld [vmem:[%s2432 + $0x29c] sm:$0xff]
        %2769 = vst [vmem:[%s2433 + $0x29c] sm:$0xff] %v2768
        %v2770 = vld [vmem:[%s2432 + $0x2a0] sm:$0xff]
        %2771 = vst [vmem:[%s2433 + $0x2a0] sm:$0xff] %v2770
        %v2772 = vld [vmem:[%s2432 + $0x2a8] sm:$0xff]
        %2773 = vst [vmem:[%s2433 + $0x2a4] sm:$0xff] %v2772
        %v2774 = vld [vmem:[%s2432 + $0x2a4] sm:$0xff]
        %2775 = vst [vmem:[%s2433 + $0x2a8] sm:$0xff] %v2774
        %v2776 = vld [vmem:[%s2432 + $0x2ac] sm:$0xff]
        %2777 = vst [vmem:[%s2433 + $0x2ac] sm:$0xff] %v2776
        %v2778 = vld [vmem:[%s2432 + $0x2b0] sm:$0xff]
        %2779 = vst [vmem:[%s2433 + $0x2b0] sm:$0xff] %v2778
        %v2780 = vld [vmem:[%s2432 + $0x2b8] sm:$0xff]
        %2781 = vst [vmem:[%s2433 + $0x2b4] sm:$0xff] %v2780
        %v2782 = vld [vmem:[%s2432 + $0x2b4] sm:$0xff]
        %2783 = vst [vmem:[%s2433 + $0x2b8] sm:$0xff] %v2782
        %v2784 = vld [vmem:[%s2432 + $0x2bc] sm:$0xff]
        %2785 = vst [vmem:[%s2433 + $0x2bc] sm:$0xff] %v2784
        %v2786 = vld [vmem:[%s2432 + $0x2c0] sm:$0xff]
        %2787 = vst [vmem:[%s2433 + $0x2c0] sm:$0xff] %v2786
        %v2788 = vld [vmem:[%s2432 + $0x2c8] sm:$0xff]
        %2789 = vst [vmem:[%s2433 + $0x2c4] sm:$0xff] %v2788
        %v2790 = vld [vmem:[%s2432 + $0x2c4] sm:$0xff]
        %2791 = vst [vmem:[%s2433 + $0x2c8] sm:$0xff] %v2790
        %v2792 = vld [vmem:[%s2432 + $0x2cc] sm:$0xff]
        %2793 = vst [vmem:[%s2433 + $0x2cc] sm:$0xff] %v2792
        %v2794 = vld [vmem:[%s2432 + $0x2d0] sm:$0xff]
        %2795 = vst [vmem:[%s2433 + $0x2d0] sm:$0xff] %v2794
        %v2796 = vld [vmem:[%s2432 + $0x2d8] sm:$0xff]
        %2797 = vst [vmem:[%s2433 + $0x2d4] sm:$0xff] %v2796
        %v2798 = vld [vmem:[%s2432 + $0x2d4] sm:$0xff]
        %2799 = vst [vmem:[%s2433 + $0x2d8] sm:$0xff] %v2798
        %v2800 = vld [vmem:[%s2432 + $0x2dc] sm:$0xff]
        %2801 = vst [vmem:[%s2433 + $0x2dc] sm:$0xff] %v2800
        %v2802 = vld [vmem:[%s2432 + $0x2e0] sm:$0xff]
        %2803 = vst [vmem:[%s2433 + $0x2e0] sm:$0xff] %v2802
        %v2804 = vld [vmem:[%s2432 + $0x2e8] sm:$0xff]
        %2805 = vst [vmem:[%s2433 + $0x2e4] sm:$0xff] %v2804
        %v2806 = vld [vmem:[%s2432 + $0x2e4] sm:$0xff]
        %2807 = vst [vmem:[%s2433 + $0x2e8] sm:$0xff] %v2806
        %v2808 = vld [vmem:[%s2432 + $0x2ec] sm:$0xff]
        %2809 = vst [vmem:[%s2433 + $0x2ec] sm:$0xff] %v2808
        %v2810 = vld [vmem:[%s2432 + $0x2f0] sm:$0xff]
        %2811 = vst [vmem:[%s2433 + $0x2f0] sm:$0xff] %v2810
        %v2812 = vld [vmem:[%s2432 + $0x2f8] sm:$0xff]
        %2813 = vst [vmem:[%s2433 + $0x2f4] sm:$0xff] %v2812
        %v2814 = vld [vmem:[%s2432 + $0x2f4] sm:$0xff]
        %2815 = vst [vmem:[%s2433 + $0x2f8] sm:$0xff] %v2814
        %v2816 = vld [vmem:[%s2432 + $0x2fc] sm:$0xff]
        %2817 = vst [vmem:[%s2433 + $0x2fc] sm:$0xff] %v2816
        %v2818 = vld [vmem:[%s2432 + $0x300] sm:$0xff]
        %2819 = vst [vmem:[%s2433 + $0x300] sm:$0xff] %v2818
        %v2820 = vld [vmem:[%s2432 + $0x308] sm:$0xff]
        %2821 = vst [vmem:[%s2433 + $0x304] sm:$0xff] %v2820
        %v2822 = vld [vmem:[%s2432 + $0x304] sm:$0xff]
        %2823 = vst [vmem:[%s2433 + $0x308] sm:$0xff] %v2822
        %v2824 = vld [vmem:[%s2432 + $0x30c] sm:$0xff]
        %2825 = vst [vmem:[%s2433 + $0x30c] sm:$0xff] %v2824
        %v2826 = vld [vmem:[%s2432 + $0x310] sm:$0xff]
        %2827 = vst [vmem:[%s2433 + $0x310] sm:$0xff] %v2826
        %v2828 = vld [vmem:[%s2432 + $0x318] sm:$0xff]
        %2829 = vst [vmem:[%s2433 + $0x314] sm:$0xff] %v2828
        %v2830 = vld [vmem:[%s2432 + $0x314] sm:$0xff]
        %2831 = vst [vmem:[%s2433 + $0x318] sm:$0xff] %v2830
        %v2832 = vld [vmem:[%s2432 + $0x31c] sm:$0xff]
        %2833 = vst [vmem:[%s2433 + $0x31c] sm:$0xff] %v2832
        %v2834 = vld [vmem:[%s2432 + $0x320] sm:$0xff]
        %2835 = vst [vmem:[%s2433 + $0x320] sm:$0xff] %v2834
        %v2836 = vld [vmem:[%s2432 + $0x328] sm:$0xff]
        %2837 = vst [vmem:[%s2433 + $0x324] sm:$0xff] %v2836
        %v2838 = vld [vmem:[%s2432 + $0x324] sm:$0xff]
        %2839 = vst [vmem:[%s2433 + $0x328] sm:$0xff] %v2838
        %v2840 = vld [vmem:[%s2432 + $0x32c] sm:$0xff]
        %2841 = vst [vmem:[%s2433 + $0x32c] sm:$0xff] %v2840
        %v2842 = vld [vmem:[%s2432 + $0x330] sm:$0xff]
        %2843 = vst [vmem:[%s2433 + $0x330] sm:$0xff] %v2842
        %v2844 = vld [vmem:[%s2432 + $0x338] sm:$0xff]
        %2845 = vst [vmem:[%s2433 + $0x334] sm:$0xff] %v2844
        %v2846 = vld [vmem:[%s2432 + $0x334] sm:$0xff]
        %2847 = vst [vmem:[%s2433 + $0x338] sm:$0xff] %v2846
        %v2848 = vld [vmem:[%s2432 + $0x33c] sm:$0xff]
        %2849 = vst [vmem:[%s2433 + $0x33c] sm:$0xff] %v2848
        %v2850 = vld [vmem:[%s2432 + $0x340] sm:$0xff]
        %2851 = vst [vmem:[%s2433 + $0x340] sm:$0xff] %v2850
        %v2852 = vld [vmem:[%s2432 + $0x348] sm:$0xff]
        %2853 = vst [vmem:[%s2433 + $0x344] sm:$0xff] %v2852
        %v2854 = vld [vmem:[%s2432 + $0x344] sm:$0xff]
        %2855 = vst [vmem:[%s2433 + $0x348] sm:$0xff] %v2854
        %v2856 = vld [vmem:[%s2432 + $0x34c] sm:$0xff]
        %2857 = vst [vmem:[%s2433 + $0x34c] sm:$0xff] %v2856
        %v2858 = vld [vmem:[%s2432 + $0x350] sm:$0xff]
        %2859 = vst [vmem:[%s2433 + $0x350] sm:$0xff] %v2858
        %v2860 = vld [vmem:[%s2432 + $0x358] sm:$0xff]
        %2861 = vst [vmem:[%s2433 + $0x354] sm:$0xff] %v2860
        %v2862 = vld [vmem:[%s2432 + $0x354] sm:$0xff]
        %2863 = vst [vmem:[%s2433 + $0x358] sm:$0xff] %v2862
        %v2864 = vld [vmem:[%s2432 + $0x35c] sm:$0xff]
        %2865 = vst [vmem:[%s2433 + $0x35c] sm:$0xff] %v2864
        %v2866 = vld [vmem:[%s2432 + $0x360] sm:$0xff]
        %2867 = vst [vmem:[%s2433 + $0x360] sm:$0xff] %v2866
        %v2868 = vld [vmem:[%s2432 + $0x368] sm:$0xff]
        %2869 = vst [vmem:[%s2433 + $0x364] sm:$0xff] %v2868
        %v2870 = vld [vmem:[%s2432 + $0x364] sm:$0xff]
        %2871 = vst [vmem:[%s2433 + $0x368] sm:$0xff] %v2870
        %v2872 = vld [vmem:[%s2432 + $0x36c] sm:$0xff]
        %2873 = vst [vmem:[%s2433 + $0x36c] sm:$0xff] %v2872
        %v2874 = vld [vmem:[%s2432 + $0x370] sm:$0xff]
        %2875 = vst [vmem:[%s2433 + $0x370] sm:$0xff] %v2874
        %v2876 = vld [vmem:[%s2432 + $0x378] sm:$0xff]
        %2877 = vst [vmem:[%s2433 + $0x374] sm:$0xff] %v2876
        %v2878 = vld [vmem:[%s2432 + $0x374] sm:$0xff]
        %2879 = vst [vmem:[%s2433 + $0x378] sm:$0xff] %v2878
        %v2880 = vld [vmem:[%s2432 + $0x37c] sm:$0xff]
        %2881 = vst [vmem:[%s2433 + $0x37c] sm:$0xff] %v2880
        %v2882 = vld [vmem:[%s2432 + $0x380] sm:$0xff]
        %2883 = vst [vmem:[%s2433 + $0x380] sm:$0xff] %v2882
        %v2884 = vld [vmem:[%s2432 + $0x388] sm:$0xff]
        %2885 = vst [vmem:[%s2433 + $0x384] sm:$0xff] %v2884
        %v2886 = vld [vmem:[%s2432 + $0x384] sm:$0xff]
        %2887 = vst [vmem:[%s2433 + $0x388] sm:$0xff] %v2886
        %v2888 = vld [vmem:[%s2432 + $0x38c] sm:$0xff]
        %2889 = vst [vmem:[%s2433 + $0x38c] sm:$0xff] %v2888
        %v2890 = vld [vmem:[%s2432 + $0x390] sm:$0xff]
        %2891 = vst [vmem:[%s2433 + $0x390] sm:$0xff] %v2890
        %v2892 = vld [vmem:[%s2432 + $0x398] sm:$0xff]
        %2893 = vst [vmem:[%s2433 + $0x394] sm:$0xff] %v2892
        %v2894 = vld [vmem:[%s2432 + $0x394] sm:$0xff]
        %2895 = vst [vmem:[%s2433 + $0x398] sm:$0xff] %v2894
        %v2896 = vld [vmem:[%s2432 + $0x39c] sm:$0xff]
        %2897 = vst [vmem:[%s2433 + $0x39c] sm:$0xff] %v2896
        %v2898 = vld [vmem:[%s2432 + $0x3a0] sm:$0xff]
        %2899 = vst [vmem:[%s2433 + $0x3a0] sm:$0xff] %v2898
        %v2900 = vld [vmem:[%s2432 + $0x3a8] sm:$0xff]
        %2901 = vst [vmem:[%s2433 + $0x3a4] sm:$0xff] %v2900
        %v2902 = vld [vmem:[%s2432 + $0x3a4] sm:$0xff]
        %2903 = vst [vmem:[%s2433 + $0x3a8] sm:$0xff] %v2902
        %v2904 = vld [vmem:[%s2432 + $0x3ac] sm:$0xff]
        %2905 = vst [vmem:[%s2433 + $0x3ac] sm:$0xff] %v2904
        %v2906 = vld [vmem:[%s2432 + $0x3b0] sm:$0xff]
        %2907 = vst [vmem:[%s2433 + $0x3b0] sm:$0xff] %v2906
        %v2908 = vld [vmem:[%s2432 + $0x3b8] sm:$0xff]
        %2909 = vst [vmem:[%s2433 + $0x3b4] sm:$0xff] %v2908
        %v2910 = vld [vmem:[%s2432 + $0x3b4] sm:$0xff]
        %2911 = vst [vmem:[%s2433 + $0x3b8] sm:$0xff] %v2910
        %v2912 = vld [vmem:[%s2432 + $0x3bc] sm:$0xff]
        %2913 = vst [vmem:[%s2433 + $0x3bc] sm:$0xff] %v2912
        %v2914 = vld [vmem:[%s2432 + $0x3c0] sm:$0xff]
        %2915 = vst [vmem:[%s2433 + $0x3c0] sm:$0xff] %v2914
        %v2916 = vld [vmem:[%s2432 + $0x3c8] sm:$0xff]
        %2917 = vst [vmem:[%s2433 + $0x3c4] sm:$0xff] %v2916
        %v2918 = vld [vmem:[%s2432 + $0x3c4] sm:$0xff]
        %2919 = vst [vmem:[%s2433 + $0x3c8] sm:$0xff] %v2918
        %v2920 = vld [vmem:[%s2432 + $0x3cc] sm:$0xff]
        %2921 = vst [vmem:[%s2433 + $0x3cc] sm:$0xff] %v2920
        %v2922 = vld [vmem:[%s2432 + $0x3d0] sm:$0xff]
        %2923 = vst [vmem:[%s2433 + $0x3d0] sm:$0xff] %v2922
        %v2924 = vld [vmem:[%s2432 + $0x3d8] sm:$0xff]
        %2925 = vst [vmem:[%s2433 + $0x3d4] sm:$0xff] %v2924
        %v2926 = vld [vmem:[%s2432 + $0x3d4] sm:$0xff]
        %2927 = vst [vmem:[%s2433 + $0x3d8] sm:$0xff] %v2926
        %v2928 = vld [vmem:[%s2432 + $0x3dc] sm:$0xff]
        %2929 = vst [vmem:[%s2433 + $0x3dc] sm:$0xff] %v2928
        %v2930 = vld [vmem:[%s2432 + $0x3e0] sm:$0xff]
        %2931 = vst [vmem:[%s2433 + $0x3e0] sm:$0xff] %v2930
        %v2932 = vld [vmem:[%s2432 + $0x3e8] sm:$0xff]
        %2933 = vst [vmem:[%s2433 + $0x3e4] sm:$0xff] %v2932
        %v2934 = vld [vmem:[%s2432 + $0x3e4] sm:$0xff]
        %2935 = vst [vmem:[%s2433 + $0x3e8] sm:$0xff] %v2934
        %v2936 = vld [vmem:[%s2432 + $0x3ec] sm:$0xff]
        %2937 = vst [vmem:[%s2433 + $0x3ec] sm:$0xff] %v2936
        %v2938 = vld [vmem:[%s2432 + $0x3f0] sm:$0xff]
        %2939 = vst [vmem:[%s2433 + $0x3f0] sm:$0xff] %v2938
        %v2940 = vld [vmem:[%s2432 + $0x3f8] sm:$0xff]
        %2941 = vst [vmem:[%s2433 + $0x3f4] sm:$0xff] %v2940
        %v2942 = vld [vmem:[%s2432 + $0x3f4] sm:$0xff]
        %2943 = vst [vmem:[%s2433 + $0x3f8] sm:$0xff] %v2942
        %v2944 = vld [vmem:[%s2432 + $0x3fc] sm:$0xff]
        %2945 = vst [vmem:[%s2433 + $0x3fc] sm:$0xff] %v2944
        %v2946 = vld [vmem:[%s2432 + $0x400] sm:$0xff]
        %2947 = vst [vmem:[%s2433 + $0x400] sm:$0xff] %v2946
        %v2948 = vld [vmem:[%s2432 + $0x408] sm:$0xff]
        %2949 = vst [vmem:[%s2433 + $0x404] sm:$0xff] %v2948
        %v2950 = vld [vmem:[%s2432 + $0x404] sm:$0xff]
        %2951 = vst [vmem:[%s2433 + $0x408] sm:$0xff] %v2950
        %v2952 = vld [vmem:[%s2432 + $0x40c] sm:$0xff]
        %2953 = vst [vmem:[%s2433 + $0x40c] sm:$0xff] %v2952
        %v2954 = vld [vmem:[%s2432 + $0x410] sm:$0xff]
        %2955 = vst [vmem:[%s2433 + $0x410] sm:$0xff] %v2954
        %v2956 = vld [vmem:[%s2432 + $0x418] sm:$0xff]
        %2957 = vst [vmem:[%s2433 + $0x414] sm:$0xff] %v2956
        %v2958 = vld [vmem:[%s2432 + $0x414] sm:$0xff]
        %2959 = vst [vmem:[%s2433 + $0x418] sm:$0xff] %v2958
        %v2960 = vld [vmem:[%s2432 + $0x41c] sm:$0xff]
        %2961 = vst [vmem:[%s2433 + $0x41c] sm:$0xff] %v2960
        %v2962 = vld [vmem:[%s2432 + $0x420] sm:$0xff]
        %2963 = vst [vmem:[%s2433 + $0x420] sm:$0xff] %v2962
        %v2964 = vld [vmem:[%s2432 + $0x428] sm:$0xff]
        %2965 = vst [vmem:[%s2433 + $0x424] sm:$0xff] %v2964
        %v2966 = vld [vmem:[%s2432 + $0x424] sm:$0xff]
        %2967 = vst [vmem:[%s2433 + $0x428] sm:$0xff] %v2966
        %v2968 = vld [vmem:[%s2432 + $0x42c] sm:$0xff]
        %2969 = vst [vmem:[%s2433 + $0x42c] sm:$0xff] %v2968
        %v2970 = vld [vmem:[%s2432 + $0x430] sm:$0xff]
        %2971 = vst [vmem:[%s2433 + $0x430] sm:$0xff] %v2970
        %v2972 = vld [vmem:[%s2432 + $0x438] sm:$0xff]
        %2973 = vst [vmem:[%s2433 + $0x434] sm:$0xff] %v2972
        %v2974 = vld [vmem:[%s2432 + $0x434] sm:$0xff]
        %2975 = vst [vmem:[%s2433 + $0x438] sm:$0xff] %v2974
        %v2976 = vld [vmem:[%s2432 + $0x43c] sm:$0xff]
        %2977 = vst [vmem:[%s2433 + $0x43c] sm:$0xff] %v2976
        %v2978 = vld [vmem:[%s2432 + $0x440] sm:$0xff]
        %2979 = vst [vmem:[%s2433 + $0x440] sm:$0xff] %v2978
        %v2980 = vld [vmem:[%s2432 + $0x448] sm:$0xff]
        %2981 = vst [vmem:[%s2433 + $0x444] sm:$0xff] %v2980
        %v2982 = vld [vmem:[%s2432 + $0x444] sm:$0xff]
        %2983 = vst [vmem:[%s2433 + $0x448] sm:$0xff] %v2982
        %v2984 = vld [vmem:[%s2432 + $0x44c] sm:$0xff]
        %2985 = vst [vmem:[%s2433 + $0x44c] sm:$0xff] %v2984
        %v2986 = vld [vmem:[%s2432 + $0x450] sm:$0xff]
        %2987 = vst [vmem:[%s2433 + $0x450] sm:$0xff] %v2986
        %v2988 = vld [vmem:[%s2432 + $0x458] sm:$0xff]
        %2989 = vst [vmem:[%s2433 + $0x454] sm:$0xff] %v2988
        %v2990 = vld [vmem:[%s2432 + $0x454] sm:$0xff]
        %2991 = vst [vmem:[%s2433 + $0x458] sm:$0xff] %v2990
        %v2992 = vld [vmem:[%s2432 + $0x45c] sm:$0xff]
        %2993 = vst [vmem:[%s2433 + $0x45c] sm:$0xff] %v2992
        %v2994 = vld [vmem:[%s2432 + $0x460] sm:$0xff]
        %2995 = vst [vmem:[%s2433 + $0x460] sm:$0xff] %v2994
        %v2996 = vld [vmem:[%s2432 + $0x468] sm:$0xff]
        %2997 = vst [vmem:[%s2433 + $0x464] sm:$0xff] %v2996
        %v2998 = vld [vmem:[%s2432 + $0x464] sm:$0xff]
        %2999 = vst [vmem:[%s2433 + $0x468] sm:$0xff] %v2998
        %v3000 = vld [vmem:[%s2432 + $0x46c] sm:$0xff]
        %3001 = vst [vmem:[%s2433 + $0x46c] sm:$0xff] %v3000
        %v3002 = vld [vmem:[%s2432 + $0x470] sm:$0xff]
        %3003 = vst [vmem:[%s2433 + $0x470] sm:$0xff] %v3002
        %v3004 = vld [vmem:[%s2432 + $0x478] sm:$0xff]
        %3005 = vst [vmem:[%s2433 + $0x474] sm:$0xff] %v3004
        %v3006 = vld [vmem:[%s2432 + $0x474] sm:$0xff]
        %3007 = vst [vmem:[%s2433 + $0x478] sm:$0xff] %v3006
        %v3008 = vld [vmem:[%s2432 + $0x47c] sm:$0xff]
        %3009 = vst [vmem:[%s2433 + $0x47c] sm:$0xff] %v3008
        %v3010 = vld [vmem:[%s2432 + $0x480] sm:$0xff]
        %3011 = vst [vmem:[%s2433 + $0x480] sm:$0xff] %v3010
        %v3012 = vld [vmem:[%s2432 + $0x488] sm:$0xff]
        %3013 = vst [vmem:[%s2433 + $0x484] sm:$0xff] %v3012
        %v3014 = vld [vmem:[%s2432 + $0x484] sm:$0xff]
        %3015 = vst [vmem:[%s2433 + $0x488] sm:$0xff] %v3014
        %v3016 = vld [vmem:[%s2432 + $0x48c] sm:$0xff]
        %3017 = vst [vmem:[%s2433 + $0x48c] sm:$0xff] %v3016
        %v3018 = vld [vmem:[%s2432 + $0x490] sm:$0xff]
        %3019 = vst [vmem:[%s2433 + $0x490] sm:$0xff] %v3018
        %v3020 = vld [vmem:[%s2432 + $0x498] sm:$0xff]
        %3021 = vst [vmem:[%s2433 + $0x494] sm:$0xff] %v3020
        %v3022 = vld [vmem:[%s2432 + $0x494] sm:$0xff]
        %3023 = vst [vmem:[%s2433 + $0x498] sm:$0xff] %v3022
        %v3024 = vld [vmem:[%s2432 + $0x49c] sm:$0xff]
        %3025 = vst [vmem:[%s2433 + $0x49c] sm:$0xff] %v3024
        %v3026 = vld [vmem:[%s2432 + $0x4a0] sm:$0xff]
        %3027 = vst [vmem:[%s2433 + $0x4a0] sm:$0xff] %v3026
        %v3028 = vld [vmem:[%s2432 + $0x4a8] sm:$0xff]
        %3029 = vst [vmem:[%s2433 + $0x4a4] sm:$0xff] %v3028
        %v3030 = vld [vmem:[%s2432 + $0x4a4] sm:$0xff]
        %3031 = vst [vmem:[%s2433 + $0x4a8] sm:$0xff] %v3030
        %v3032 = vld [vmem:[%s2432 + $0x4ac] sm:$0xff]
        %3033 = vst [vmem:[%s2433 + $0x4ac] sm:$0xff] %v3032
        %v3034 = vld [vmem:[%s2432 + $0x4b0] sm:$0xff]
        %3035 = vst [vmem:[%s2433 + $0x4b0] sm:$0xff] %v3034
        %v3036 = vld [vmem:[%s2432 + $0x4b8] sm:$0xff]
        %3037 = vst [vmem:[%s2433 + $0x4b4] sm:$0xff] %v3036
        %v3038 = vld [vmem:[%s2432 + $0x4b4] sm:$0xff]
        %3039 = vst [vmem:[%s2433 + $0x4b8] sm:$0xff] %v3038
        %v3040 = vld [vmem:[%s2432 + $0x4bc] sm:$0xff]
        %3041 = vst [vmem:[%s2433 + $0x4bc] sm:$0xff] %v3040
        %v3042 = vld [vmem:[%s2432 + $0x4c0] sm:$0xff]
        %3043 = vst [vmem:[%s2433 + $0x4c0] sm:$0xff] %v3042
        %v3044 = vld [vmem:[%s2432 + $0x4c8] sm:$0xff]
        %3045 = vst [vmem:[%s2433 + $0x4c4] sm:$0xff] %v3044
        %v3046 = vld [vmem:[%s2432 + $0x4c4] sm:$0xff]
        %3047 = vst [vmem:[%s2433 + $0x4c8] sm:$0xff] %v3046
        %v3048 = vld [vmem:[%s2432 + $0x4cc] sm:$0xff]
        %3049 = vst [vmem:[%s2433 + $0x4cc] sm:$0xff] %v3048
        %v3050 = vld [vmem:[%s2432 + $0x4d0] sm:$0xff]
        %3051 = vst [vmem:[%s2433 + $0x4d0] sm:$0xff] %v3050
        %v3052 = vld [vmem:[%s2432 + $0x4d8] sm:$0xff]
        %3053 = vst [vmem:[%s2433 + $0x4d4] sm:$0xff] %v3052
        %v3054 = vld [vmem:[%s2432 + $0x4d4] sm:$0xff]
        %3055 = vst [vmem:[%s2433 + $0x4d8] sm:$0xff] %v3054
        %v3056 = vld [vmem:[%s2432 + $0x4dc] sm:$0xff]
        %3057 = vst [vmem:[%s2433 + $0x4dc] sm:$0xff] %v3056
        %v3058 = vld [vmem:[%s2432 + $0x4e0] sm:$0xff]
        %3059 = vst [vmem:[%s2433 + $0x4e0] sm:$0xff] %v3058
        %v3060 = vld [vmem:[%s2432 + $0x4e8] sm:$0xff]
        %3061 = vst [vmem:[%s2433 + $0x4e4] sm:$0xff] %v3060
        %v3062 = vld [vmem:[%s2432 + $0x4e4] sm:$0xff]
        %3063 = vst [vmem:[%s2433 + $0x4e8] sm:$0xff] %v3062
        %v3064 = vld [vmem:[%s2432 + $0x4ec] sm:$0xff]
        %3065 = vst [vmem:[%s2433 + $0x4ec] sm:$0xff] %v3064
        %v3066 = vld [vmem:[%s2432 + $0x4f0] sm:$0xff]
        %3067 = vst [vmem:[%s2433 + $0x4f0] sm:$0xff] %v3066
        %v3068 = vld [vmem:[%s2432 + $0x4f8] sm:$0xff]
        %3069 = vst [vmem:[%s2433 + $0x4f4] sm:$0xff] %v3068
        %v3070 = vld [vmem:[%s2432 + $0x4f4] sm:$0xff]
        %3071 = vst [vmem:[%s2433 + $0x4f8] sm:$0xff] %v3070
        %v3072 = vld [vmem:[%s2432 + $0x4fc] sm:$0xff]
        %3073 = vst [vmem:[%s2433 + $0x4fc] sm:$0xff] %v3072
        %v3074 = vld [vmem:[%s2432 + $0x500] sm:$0xff]
        %3075 = vst [vmem:[%s2433 + $0x500] sm:$0xff] %v3074
        %v3076 = vld [vmem:[%s2432 + $0x508] sm:$0xff]
        %3077 = vst [vmem:[%s2433 + $0x504] sm:$0xff] %v3076
        %v3078 = vld [vmem:[%s2432 + $0x504] sm:$0xff]
        %3079 = vst [vmem:[%s2433 + $0x508] sm:$0xff] %v3078
        %v3080 = vld [vmem:[%s2432 + $0x50c] sm:$0xff]
        %3081 = vst [vmem:[%s2433 + $0x50c] sm:$0xff] %v3080
        %v3082 = vld [vmem:[%s2432 + $0x510] sm:$0xff]
        %3083 = vst [vmem:[%s2433 + $0x510] sm:$0xff] %v3082
        %v3084 = vld [vmem:[%s2432 + $0x518] sm:$0xff]
        %3085 = vst [vmem:[%s2433 + $0x514] sm:$0xff] %v3084
        %v3086 = vld [vmem:[%s2432 + $0x514] sm:$0xff]
        %3087 = vst [vmem:[%s2433 + $0x518] sm:$0xff] %v3086
        %v3088 = vld [vmem:[%s2432 + $0x51c] sm:$0xff]
        %3089 = vst [vmem:[%s2433 + $0x51c] sm:$0xff] %v3088
        %v3090 = vld [vmem:[%s2432 + $0x520] sm:$0xff]
        %3091 = vst [vmem:[%s2433 + $0x520] sm:$0xff] %v3090
        %v3092 = vld [vmem:[%s2432 + $0x528] sm:$0xff]
        %3093 = vst [vmem:[%s2433 + $0x524] sm:$0xff] %v3092
        %v3094 = vld [vmem:[%s2432 + $0x524] sm:$0xff]
        %3095 = vst [vmem:[%s2433 + $0x528] sm:$0xff] %v3094
        %v3096 = vld [vmem:[%s2432 + $0x52c] sm:$0xff]
        %3097 = vst [vmem:[%s2433 + $0x52c] sm:$0xff] %v3096
        %v3098 = vld [vmem:[%s2432 + $0x530] sm:$0xff]
        %3099 = vst [vmem:[%s2433 + $0x530] sm:$0xff] %v3098
        %v3100 = vld [vmem:[%s2432 + $0x538] sm:$0xff]
        %3101 = vst [vmem:[%s2433 + $0x534] sm:$0xff] %v3100
        %v3102 = vld [vmem:[%s2432 + $0x534] sm:$0xff]
        %3103 = vst [vmem:[%s2433 + $0x538] sm:$0xff] %v3102
        %v3104 = vld [vmem:[%s2432 + $0x53c] sm:$0xff]
        %3105 = vst [vmem:[%s2433 + $0x53c] sm:$0xff] %v3104
        %v3106 = vld [vmem:[%s2432 + $0x540] sm:$0xff]
        %3107 = vst [vmem:[%s2433 + $0x540] sm:$0xff] %v3106
        %v3108 = vld [vmem:[%s2432 + $0x548] sm:$0xff]
        %3109 = vst [vmem:[%s2433 + $0x544] sm:$0xff] %v3108
        %v3110 = vld [vmem:[%s2432 + $0x544] sm:$0xff]
        %3111 = vst [vmem:[%s2433 + $0x548] sm:$0xff] %v3110
        %v3112 = vld [vmem:[%s2432 + $0x54c] sm:$0xff]
        %3113 = vst [vmem:[%s2433 + $0x54c] sm:$0xff] %v3112
        %v3114 = vld [vmem:[%s2432 + $0x550] sm:$0xff]
        %3115 = vst [vmem:[%s2433 + $0x550] sm:$0xff] %v3114
        %v3116 = vld [vmem:[%s2432 + $0x558] sm:$0xff]
        %3117 = vst [vmem:[%s2433 + $0x554] sm:$0xff] %v3116
        %v3118 = vld [vmem:[%s2432 + $0x554] sm:$0xff]
        %3119 = vst [vmem:[%s2433 + $0x558] sm:$0xff] %v3118
        %v3120 = vld [vmem:[%s2432 + $0x55c] sm:$0xff]
        %3121 = vst [vmem:[%s2433 + $0x55c] sm:$0xff] %v3120
        %v3122 = vld [vmem:[%s2432 + $0x560] sm:$0xff]
        %3123 = vst [vmem:[%s2433 + $0x560] sm:$0xff] %v3122
        %v3124 = vld [vmem:[%s2432 + $0x568] sm:$0xff]
        %3125 = vst [vmem:[%s2433 + $0x564] sm:$0xff] %v3124
        %v3126 = vld [vmem:[%s2432 + $0x564] sm:$0xff]
        %3127 = vst [vmem:[%s2433 + $0x568] sm:$0xff] %v3126
        %v3128 = vld [vmem:[%s2432 + $0x56c] sm:$0xff]
        %3129 = vst [vmem:[%s2433 + $0x56c] sm:$0xff] %v3128
        %v3130 = vld [vmem:[%s2432 + $0x570] sm:$0xff]
        %3131 = vst [vmem:[%s2433 + $0x570] sm:$0xff] %v3130
        %v3132 = vld [vmem:[%s2432 + $0x578] sm:$0xff]
        %3133 = vst [vmem:[%s2433 + $0x574] sm:$0xff] %v3132
        %v3134 = vld [vmem:[%s2432 + $0x574] sm:$0xff]
        %3135 = vst [vmem:[%s2433 + $0x578] sm:$0xff] %v3134
        %v3136 = vld [vmem:[%s2432 + $0x57c] sm:$0xff]
        %3137 = vst [vmem:[%s2433 + $0x57c] sm:$0xff] %v3136
        %v3138 = vld [vmem:[%s2432 + $0x580] sm:$0xff]
        %3139 = vst [vmem:[%s2433 + $0x580] sm:$0xff] %v3138
        %v3140 = vld [vmem:[%s2432 + $0x588] sm:$0xff]
        %3141 = vst [vmem:[%s2433 + $0x584] sm:$0xff] %v3140
        %v3142 = vld [vmem:[%s2432 + $0x584] sm:$0xff]
        %3143 = vst [vmem:[%s2433 + $0x588] sm:$0xff] %v3142
        %v3144 = vld [vmem:[%s2432 + $0x58c] sm:$0xff]
        %3145 = vst [vmem:[%s2433 + $0x58c] sm:$0xff] %v3144
        %v3146 = vld [vmem:[%s2432 + $0x590] sm:$0xff]
        %3147 = vst [vmem:[%s2433 + $0x590] sm:$0xff] %v3146
        %v3148 = vld [vmem:[%s2432 + $0x598] sm:$0xff]
        %3149 = vst [vmem:[%s2433 + $0x594] sm:$0xff] %v3148
        %v3150 = vld [vmem:[%s2432 + $0x594] sm:$0xff]
        %3151 = vst [vmem:[%s2433 + $0x598] sm:$0xff] %v3150
        %v3152 = vld [vmem:[%s2432 + $0x59c] sm:$0xff]
        %3153 = vst [vmem:[%s2433 + $0x59c] sm:$0xff] %v3152
        %v3154 = vld [vmem:[%s2432 + $0x5a0] sm:$0xff]
        %3155 = vst [vmem:[%s2433 + $0x5a0] sm:$0xff] %v3154
        %v3156 = vld [vmem:[%s2432 + $0x5a8] sm:$0xff]
        %3157 = vst [vmem:[%s2433 + $0x5a4] sm:$0xff] %v3156
        %v3158 = vld [vmem:[%s2432 + $0x5a4] sm:$0xff]
        %3159 = vst [vmem:[%s2433 + $0x5a8] sm:$0xff] %v3158
        %v3160 = vld [vmem:[%s2432 + $0x5ac] sm:$0xff]
        %3161 = vst [vmem:[%s2433 + $0x5ac] sm:$0xff] %v3160
        %v3162 = vld [vmem:[%s2432 + $0x5b0] sm:$0xff]
        %3163 = vst [vmem:[%s2433 + $0x5b0] sm:$0xff] %v3162
        %v3164 = vld [vmem:[%s2432 + $0x5b8] sm:$0xff]
        %3165 = vst [vmem:[%s2433 + $0x5b4] sm:$0xff] %v3164
        %v3166 = vld [vmem:[%s2432 + $0x5b4] sm:$0xff]
        %3167 = vst [vmem:[%s2433 + $0x5b8] sm:$0xff] %v3166
        %v3168 = vld [vmem:[%s2432 + $0x5bc] sm:$0xff]
        %3169 = vst [vmem:[%s2433 + $0x5bc] sm:$0xff] %v3168
        %v3170 = vld [vmem:[%s2432 + $0x5c0] sm:$0xff]
        %3171 = vst [vmem:[%s2433 + $0x5c0] sm:$0xff] %v3170
        %v3172 = vld [vmem:[%s2432 + $0x5c8] sm:$0xff]
        %3173 = vst [vmem:[%s2433 + $0x5c4] sm:$0xff] %v3172
        %v3174 = vld [vmem:[%s2432 + $0x5c4] sm:$0xff]
        %3175 = vst [vmem:[%s2433 + $0x5c8] sm:$0xff] %v3174
        %v3176 = vld [vmem:[%s2432 + $0x5cc] sm:$0xff]
        %3177 = vst [vmem:[%s2433 + $0x5cc] sm:$0xff] %v3176
        %v3178 = vld [vmem:[%s2432 + $0x5d0] sm:$0xff]
        %3179 = vst [vmem:[%s2433 + $0x5d0] sm:$0xff] %v3178
        %v3180 = vld [vmem:[%s2432 + $0x5d8] sm:$0xff]
        %3181 = vst [vmem:[%s2433 + $0x5d4] sm:$0xff] %v3180
        %v3182 = vld [vmem:[%s2432 + $0x5d4] sm:$0xff]
        %3183 = vst [vmem:[%s2433 + $0x5d8] sm:$0xff] %v3182
        %v3184 = vld [vmem:[%s2432 + $0x5dc] sm:$0xff]
        %3185 = vst [vmem:[%s2433 + $0x5dc] sm:$0xff] %v3184
        %v3186 = vld [vmem:[%s2432 + $0x5e0] sm:$0xff]
        %3187 = vst [vmem:[%s2433 + $0x5e0] sm:$0xff] %v3186
        %v3188 = vld [vmem:[%s2432 + $0x5e8] sm:$0xff]
        %3189 = vst [vmem:[%s2433 + $0x5e4] sm:$0xff] %v3188
        %v3190 = vld [vmem:[%s2432 + $0x5e4] sm:$0xff]
        %3191 = vst [vmem:[%s2433 + $0x5e8] sm:$0xff] %v3190
        %v3192 = vld [vmem:[%s2432 + $0x5ec] sm:$0xff]
        %3193 = vst [vmem:[%s2433 + $0x5ec] sm:$0xff] %v3192
        %v3194 = vld [vmem:[%s2432 + $0x5f0] sm:$0xff]
        %3195 = vst [vmem:[%s2433 + $0x5f0] sm:$0xff] %v3194
        %v3196 = vld [vmem:[%s2432 + $0x5f8] sm:$0xff]
        %3197 = vst [vmem:[%s2433 + $0x5f4] sm:$0xff] %v3196
        %v3198 = vld [vmem:[%s2432 + $0x5f4] sm:$0xff]
        %3199 = vst [vmem:[%s2433 + $0x5f8] sm:$0xff] %v3198
        %v3200 = vld [vmem:[%s2432 + $0x5fc] sm:$0xff]
        %3201 = vst [vmem:[%s2433 + $0x5fc] sm:$0xff] %v3200
        %v3202 = vld [vmem:[%s2432 + $0x600] sm:$0xff]
        %3203 = vst [vmem:[%s2433 + $0x600] sm:$0xff] %v3202
        %v3204 = vld [vmem:[%s2432 + $0x608] sm:$0xff]
        %3205 = vst [vmem:[%s2433 + $0x604] sm:$0xff] %v3204
        %v3206 = vld [vmem:[%s2432 + $0x604] sm:$0xff]
        %3207 = vst [vmem:[%s2433 + $0x608] sm:$0xff] %v3206
        %v3208 = vld [vmem:[%s2432 + $0x60c] sm:$0xff]
        %3209 = vst [vmem:[%s2433 + $0x60c] sm:$0xff] %v3208
        %v3210 = vld [vmem:[%s2432 + $0x610] sm:$0xff]
        %3211 = vst [vmem:[%s2433 + $0x610] sm:$0xff] %v3210
        %v3212 = vld [vmem:[%s2432 + $0x618] sm:$0xff]
        %3213 = vst [vmem:[%s2433 + $0x614] sm:$0xff] %v3212
        %v3214 = vld [vmem:[%s2432 + $0x614] sm:$0xff]
        %3215 = vst [vmem:[%s2433 + $0x618] sm:$0xff] %v3214
        %v3216 = vld [vmem:[%s2432 + $0x61c] sm:$0xff]
        %3217 = vst [vmem:[%s2433 + $0x61c] sm:$0xff] %v3216
        %v3218 = vld [vmem:[%s2432 + $0x620] sm:$0xff]
        %3219 = vst [vmem:[%s2433 + $0x620] sm:$0xff] %v3218
        %v3220 = vld [vmem:[%s2432 + $0x628] sm:$0xff]
        %3221 = vst [vmem:[%s2433 + $0x624] sm:$0xff] %v3220
        %v3222 = vld [vmem:[%s2432 + $0x624] sm:$0xff]
        %3223 = vst [vmem:[%s2433 + $0x628] sm:$0xff] %v3222
        %v3224 = vld [vmem:[%s2432 + $0x62c] sm:$0xff]
        %3225 = vst [vmem:[%s2433 + $0x62c] sm:$0xff] %v3224
        %v3226 = vld [vmem:[%s2432 + $0x630] sm:$0xff]
        %3227 = vst [vmem:[%s2433 + $0x630] sm:$0xff] %v3226
        %v3228 = vld [vmem:[%s2432 + $0x638] sm:$0xff]
        %3229 = vst [vmem:[%s2433 + $0x634] sm:$0xff] %v3228
        %v3230 = vld [vmem:[%s2432 + $0x634] sm:$0xff]
        %3231 = vst [vmem:[%s2433 + $0x638] sm:$0xff] %v3230
        %v3232 = vld [vmem:[%s2432 + $0x63c] sm:$0xff]
        %3233 = vst [vmem:[%s2433 + $0x63c] sm:$0xff] %v3232
        %v3234 = vld [vmem:[%s2432 + $0x640] sm:$0xff]
        %3235 = vst [vmem:[%s2433 + $0x640] sm:$0xff] %v3234
        %v3236 = vld [vmem:[%s2432 + $0x648] sm:$0xff]
        %3237 = vst [vmem:[%s2433 + $0x644] sm:$0xff] %v3236
        %v3238 = vld [vmem:[%s2432 + $0x644] sm:$0xff]
        %3239 = vst [vmem:[%s2433 + $0x648] sm:$0xff] %v3238
        %v3240 = vld [vmem:[%s2432 + $0x64c] sm:$0xff]
        %3241 = vst [vmem:[%s2433 + $0x64c] sm:$0xff] %v3240
        %v3242 = vld [vmem:[%s2432 + $0x650] sm:$0xff]
        %3243 = vst [vmem:[%s2433 + $0x650] sm:$0xff] %v3242
        %v3244 = vld [vmem:[%s2432 + $0x658] sm:$0xff]
        %3245 = vst [vmem:[%s2433 + $0x654] sm:$0xff] %v3244
        %v3246 = vld [vmem:[%s2432 + $0x654] sm:$0xff]
        %3247 = vst [vmem:[%s2433 + $0x658] sm:$0xff] %v3246
        %v3248 = vld [vmem:[%s2432 + $0x65c] sm:$0xff]
        %3249 = vst [vmem:[%s2433 + $0x65c] sm:$0xff] %v3248
        %v3250 = vld [vmem:[%s2432 + $0x660] sm:$0xff]
        %3251 = vst [vmem:[%s2433 + $0x660] sm:$0xff] %v3250
        %v3252 = vld [vmem:[%s2432 + $0x668] sm:$0xff]
        %3253 = vst [vmem:[%s2433 + $0x664] sm:$0xff] %v3252
        %v3254 = vld [vmem:[%s2432 + $0x664] sm:$0xff]
        %3255 = vst [vmem:[%s2433 + $0x668] sm:$0xff] %v3254
        %v3256 = vld [vmem:[%s2432 + $0x66c] sm:$0xff]
        %3257 = vst [vmem:[%s2433 + $0x66c] sm:$0xff] %v3256
        %v3258 = vld [vmem:[%s2432 + $0x670] sm:$0xff]
        %3259 = vst [vmem:[%s2433 + $0x670] sm:$0xff] %v3258
        %v3260 = vld [vmem:[%s2432 + $0x678] sm:$0xff]
        %3261 = vst [vmem:[%s2433 + $0x674] sm:$0xff] %v3260
        %v3262 = vld [vmem:[%s2432 + $0x674] sm:$0xff]
        %3263 = vst [vmem:[%s2433 + $0x678] sm:$0xff] %v3262
        %v3264 = vld [vmem:[%s2432 + $0x67c] sm:$0xff]
        %3265 = vst [vmem:[%s2433 + $0x67c] sm:$0xff] %v3264
        %v3266 = vld [vmem:[%s2432 + $0x680] sm:$0xff]
        %3267 = vst [vmem:[%s2433 + $0x680] sm:$0xff] %v3266
        %v3268 = vld [vmem:[%s2432 + $0x688] sm:$0xff]
        %3269 = vst [vmem:[%s2433 + $0x684] sm:$0xff] %v3268
        %v3270 = vld [vmem:[%s2432 + $0x684] sm:$0xff]
        %3271 = vst [vmem:[%s2433 + $0x688] sm:$0xff] %v3270
        %v3272 = vld [vmem:[%s2432 + $0x68c] sm:$0xff]
        %3273 = vst [vmem:[%s2433 + $0x68c] sm:$0xff] %v3272
        %v3274 = vld [vmem:[%s2432 + $0x690] sm:$0xff]
        %3275 = vst [vmem:[%s2433 + $0x690] sm:$0xff] %v3274
        %v3276 = vld [vmem:[%s2432 + $0x698] sm:$0xff]
        %3277 = vst [vmem:[%s2433 + $0x694] sm:$0xff] %v3276
        %v3278 = vld [vmem:[%s2432 + $0x694] sm:$0xff]
        %3279 = vst [vmem:[%s2433 + $0x698] sm:$0xff] %v3278
        %v3280 = vld [vmem:[%s2432 + $0x69c] sm:$0xff]
        %3281 = vst [vmem:[%s2433 + $0x69c] sm:$0xff] %v3280
        %v3282 = vld [vmem:[%s2432 + $0x6a0] sm:$0xff]
        %3283 = vst [vmem:[%s2433 + $0x6a0] sm:$0xff] %v3282
        %v3284 = vld [vmem:[%s2432 + $0x6a8] sm:$0xff]
        %3285 = vst [vmem:[%s2433 + $0x6a4] sm:$0xff] %v3284
        %v3286 = vld [vmem:[%s2432 + $0x6a4] sm:$0xff]
        %3287 = vst [vmem:[%s2433 + $0x6a8] sm:$0xff] %v3286
        %v3288 = vld [vmem:[%s2432 + $0x6ac] sm:$0xff]
        %3289 = vst [vmem:[%s2433 + $0x6ac] sm:$0xff] %v3288
        %v3290 = vld [vmem:[%s2432 + $0x6b0] sm:$0xff]
        %3291 = vst [vmem:[%s2433 + $0x6b0] sm:$0xff] %v3290
        %v3292 = vld [vmem:[%s2432 + $0x6b8] sm:$0xff]
        %3293 = vst [vmem:[%s2433 + $0x6b4] sm:$0xff] %v3292
        %v3294 = vld [vmem:[%s2432 + $0x6b4] sm:$0xff]
        %3295 = vst [vmem:[%s2433 + $0x6b8] sm:$0xff] %v3294
        %v3296 = vld [vmem:[%s2432 + $0x6bc] sm:$0xff]
        %3297 = vst [vmem:[%s2433 + $0x6bc] sm:$0xff] %v3296
        %v3298 = vld [vmem:[%s2432 + $0x6c0] sm:$0xff]
        %3299 = vst [vmem:[%s2433 + $0x6c0] sm:$0xff] %v3298
        %v3300 = vld [vmem:[%s2432 + $0x6c8] sm:$0xff]
        %3301 = vst [vmem:[%s2433 + $0x6c4] sm:$0xff] %v3300
        %v3302 = vld [vmem:[%s2432 + $0x6c4] sm:$0xff]
        %3303 = vst [vmem:[%s2433 + $0x6c8] sm:$0xff] %v3302
        %v3304 = vld [vmem:[%s2432 + $0x6cc] sm:$0xff]
        %3305 = vst [vmem:[%s2433 + $0x6cc] sm:$0xff] %v3304
        %v3306 = vld [vmem:[%s2432 + $0x6d0] sm:$0xff]
        %3307 = vst [vmem:[%s2433 + $0x6d0] sm:$0xff] %v3306
        %v3308 = vld [vmem:[%s2432 + $0x6d8] sm:$0xff]
        %3309 = vst [vmem:[%s2433 + $0x6d4] sm:$0xff] %v3308
        %v3310 = vld [vmem:[%s2432 + $0x6d4] sm:$0xff]
        %3311 = vst [vmem:[%s2433 + $0x6d8] sm:$0xff] %v3310
        %v3312 = vld [vmem:[%s2432 + $0x6dc] sm:$0xff]
        %3313 = vst [vmem:[%s2433 + $0x6dc] sm:$0xff] %v3312
        %v3314 = vld [vmem:[%s2432 + $0x6e0] sm:$0xff]
        %3315 = vst [vmem:[%s2433 + $0x6e0] sm:$0xff] %v3314
        %v3316 = vld [vmem:[%s2432 + $0x6e8] sm:$0xff]
        %3317 = vst [vmem:[%s2433 + $0x6e4] sm:$0xff] %v3316
        %v3318 = vld [vmem:[%s2432 + $0x6e4] sm:$0xff]
        %3319 = vst [vmem:[%s2433 + $0x6e8] sm:$0xff] %v3318
        %v3320 = vld [vmem:[%s2432 + $0x6ec] sm:$0xff]
        %3321 = vst [vmem:[%s2433 + $0x6ec] sm:$0xff] %v3320
        %v3322 = vld [vmem:[%s2432 + $0x6f0] sm:$0xff]
        %3323 = vst [vmem:[%s2433 + $0x6f0] sm:$0xff] %v3322
        %v3324 = vld [vmem:[%s2432 + $0x6f8] sm:$0xff]
        %3325 = vst [vmem:[%s2433 + $0x6f4] sm:$0xff] %v3324
        %v3326 = vld [vmem:[%s2432 + $0x6f4] sm:$0xff]
        %3327 = vst [vmem:[%s2433 + $0x6f8] sm:$0xff] %v3326
        %v3328 = vld [vmem:[%s2432 + $0x6fc] sm:$0xff]
        %3329 = vst [vmem:[%s2433 + $0x6fc] sm:$0xff] %v3328
        %v3330 = vld [vmem:[%s2432 + $0x700] sm:$0xff]
        %3331 = vst [vmem:[%s2433 + $0x700] sm:$0xff] %v3330
        %v3332 = vld [vmem:[%s2432 + $0x708] sm:$0xff]
        %3333 = vst [vmem:[%s2433 + $0x704] sm:$0xff] %v3332
        %v3334 = vld [vmem:[%s2432 + $0x704] sm:$0xff]
        %3335 = vst [vmem:[%s2433 + $0x708] sm:$0xff] %v3334
        %v3336 = vld [vmem:[%s2432 + $0x70c] sm:$0xff]
        %3337 = vst [vmem:[%s2433 + $0x70c] sm:$0xff] %v3336
        %v3338 = vld [vmem:[%s2432 + $0x710] sm:$0xff]
        %3339 = vst [vmem:[%s2433 + $0x710] sm:$0xff] %v3338
        %v3340 = vld [vmem:[%s2432 + $0x718] sm:$0xff]
        %3341 = vst [vmem:[%s2433 + $0x714] sm:$0xff] %v3340
        %v3342 = vld [vmem:[%s2432 + $0x714] sm:$0xff]
        %3343 = vst [vmem:[%s2433 + $0x718] sm:$0xff] %v3342
        %v3344 = vld [vmem:[%s2432 + $0x71c] sm:$0xff]
        %3345 = vst [vmem:[%s2433 + $0x71c] sm:$0xff] %v3344
        %v3346 = vld [vmem:[%s2432 + $0x720] sm:$0xff]
        %3347 = vst [vmem:[%s2433 + $0x720] sm:$0xff] %v3346
        %v3348 = vld [vmem:[%s2432 + $0x728] sm:$0xff]
        %3349 = vst [vmem:[%s2433 + $0x724] sm:$0xff] %v3348
        %v3350 = vld [vmem:[%s2432 + $0x724] sm:$0xff]
        %3351 = vst [vmem:[%s2433 + $0x728] sm:$0xff] %v3350
        %v3352 = vld [vmem:[%s2432 + $0x72c] sm:$0xff]
        %3353 = vst [vmem:[%s2433 + $0x72c] sm:$0xff] %v3352
        %v3354 = vld [vmem:[%s2432 + $0x730] sm:$0xff]
        %3355 = vst [vmem:[%s2433 + $0x730] sm:$0xff] %v3354
        %v3356 = vld [vmem:[%s2432 + $0x738] sm:$0xff]
        %3357 = vst [vmem:[%s2433 + $0x734] sm:$0xff] %v3356
        %v3358 = vld [vmem:[%s2432 + $0x734] sm:$0xff]
        %3359 = vst [vmem:[%s2433 + $0x738] sm:$0xff] %v3358
        %v3360 = vld [vmem:[%s2432 + $0x73c] sm:$0xff]
        %3361 = vst [vmem:[%s2433 + $0x73c] sm:$0xff] %v3360
        %v3362 = vld [vmem:[%s2432 + $0x740] sm:$0xff]
        %3363 = vst [vmem:[%s2433 + $0x740] sm:$0xff] %v3362
        %v3364 = vld [vmem:[%s2432 + $0x748] sm:$0xff]
        %3365 = vst [vmem:[%s2433 + $0x744] sm:$0xff] %v3364
        %v3366 = vld [vmem:[%s2432 + $0x744] sm:$0xff]
        %3367 = vst [vmem:[%s2433 + $0x748] sm:$0xff] %v3366
        %v3368 = vld [vmem:[%s2432 + $0x74c] sm:$0xff]
        %3369 = vst [vmem:[%s2433 + $0x74c] sm:$0xff] %v3368
        %v3370 = vld [vmem:[%s2432 + $0x750] sm:$0xff]
        %3371 = vst [vmem:[%s2433 + $0x750] sm:$0xff] %v3370
        %v3372 = vld [vmem:[%s2432 + $0x758] sm:$0xff]
        %3373 = vst [vmem:[%s2433 + $0x754] sm:$0xff] %v3372
        %v3374 = vld [vmem:[%s2432 + $0x754] sm:$0xff]
        %3375 = vst [vmem:[%s2433 + $0x758] sm:$0xff] %v3374
        %v3376 = vld [vmem:[%s2432 + $0x75c] sm:$0xff]
        %3377 = vst [vmem:[%s2433 + $0x75c] sm:$0xff] %v3376
        %v3378 = vld [vmem:[%s2432 + $0x760] sm:$0xff]
        %3379 = vst [vmem:[%s2433 + $0x760] sm:$0xff] %v3378
        %v3380 = vld [vmem:[%s2432 + $0x768] sm:$0xff]
        %3381 = vst [vmem:[%s2433 + $0x764] sm:$0xff] %v3380
        %v3382 = vld [vmem:[%s2432 + $0x764] sm:$0xff]
        %3383 = vst [vmem:[%s2433 + $0x768] sm:$0xff] %v3382
        %v3384 = vld [vmem:[%s2432 + $0x76c] sm:$0xff]
        %3385 = vst [vmem:[%s2433 + $0x76c] sm:$0xff] %v3384
        %v3386 = vld [vmem:[%s2432 + $0x770] sm:$0xff]
        %3387 = vst [vmem:[%s2433 + $0x770] sm:$0xff] %v3386
        %v3388 = vld [vmem:[%s2432 + $0x778] sm:$0xff]
        %3389 = vst [vmem:[%s2433 + $0x774] sm:$0xff] %v3388
        %v3390 = vld [vmem:[%s2432 + $0x774] sm:$0xff]
        %3391 = vst [vmem:[%s2433 + $0x778] sm:$0xff] %v3390
        %v3392 = vld [vmem:[%s2432 + $0x77c] sm:$0xff]
        %3393 = vst [vmem:[%s2433 + $0x77c] sm:$0xff] %v3392
        %v3394 = vld [vmem:[%s2432 + $0x780] sm:$0xff]
        %3395 = vst [vmem:[%s2433 + $0x780] sm:$0xff] %v3394
        %v3396 = vld [vmem:[%s2432 + $0x788] sm:$0xff]
        %3397 = vst [vmem:[%s2433 + $0x784] sm:$0xff] %v3396
        %v3398 = vld [vmem:[%s2432 + $0x784] sm:$0xff]
        %3399 = vst [vmem:[%s2433 + $0x788] sm:$0xff] %v3398
        %v3400 = vld [vmem:[%s2432 + $0x78c] sm:$0xff]
        %3401 = vst [vmem:[%s2433 + $0x78c] sm:$0xff] %v3400
        %v3402 = vld [vmem:[%s2432 + $0x790] sm:$0xff]
        %3403 = vst [vmem:[%s2433 + $0x790] sm:$0xff] %v3402
        %v3404 = vld [vmem:[%s2432 + $0x798] sm:$0xff]
        %3405 = vst [vmem:[%s2433 + $0x794] sm:$0xff] %v3404
        %v3406 = vld [vmem:[%s2432 + $0x794] sm:$0xff]
        %3407 = vst [vmem:[%s2433 + $0x798] sm:$0xff] %v3406
        %v3408 = vld [vmem:[%s2432 + $0x79c] sm:$0xff]
        %3409 = vst [vmem:[%s2433 + $0x79c] sm:$0xff] %v3408
        %v3410 = vld [vmem:[%s2432 + $0x7a0] sm:$0xff]
        %3411 = vst [vmem:[%s2433 + $0x7a0] sm:$0xff] %v3410
        %v3412 = vld [vmem:[%s2432 + $0x7a8] sm:$0xff]
        %3413 = vst [vmem:[%s2433 + $0x7a4] sm:$0xff] %v3412
        %v3414 = vld [vmem:[%s2432 + $0x7a4] sm:$0xff]
        %3415 = vst [vmem:[%s2433 + $0x7a8] sm:$0xff] %v3414
        %v3416 = vld [vmem:[%s2432 + $0x7ac] sm:$0xff]
        %3417 = vst [vmem:[%s2433 + $0x7ac] sm:$0xff] %v3416
        %v3418 = vld [vmem:[%s2432 + $0x7b0] sm:$0xff]
        %3419 = vst [vmem:[%s2433 + $0x7b0] sm:$0xff] %v3418
        %v3420 = vld [vmem:[%s2432 + $0x7b8] sm:$0xff]
        %3421 = vst [vmem:[%s2433 + $0x7b4] sm:$0xff] %v3420
        %v3422 = vld [vmem:[%s2432 + $0x7b4] sm:$0xff]
        %3423 = vst [vmem:[%s2433 + $0x7b8] sm:$0xff] %v3422
        %v3424 = vld [vmem:[%s2432 + $0x7bc] sm:$0xff]
        %3425 = vst [vmem:[%s2433 + $0x7bc] sm:$0xff] %v3424
        %v3426 = vld [vmem:[%s2432 + $0x7c0] sm:$0xff]
        %3427 = vst [vmem:[%s2433 + $0x7c0] sm:$0xff] %v3426
        %v3428 = vld [vmem:[%s2432 + $0x7c8] sm:$0xff]
        %3429 = vst [vmem:[%s2433 + $0x7c4] sm:$0xff] %v3428
        %v3430 = vld [vmem:[%s2432 + $0x7c4] sm:$0xff]
        %3431 = vst [vmem:[%s2433 + $0x7c8] sm:$0xff] %v3430
        %v3432 = vld [vmem:[%s2432 + $0x7cc] sm:$0xff]
        %3433 = vst [vmem:[%s2433 + $0x7cc] sm:$0xff] %v3432
        %v3434 = vld [vmem:[%s2432 + $0x7d0] sm:$0xff]
        %3435 = vst [vmem:[%s2433 + $0x7d0] sm:$0xff] %v3434
        %v3436 = vld [vmem:[%s2432 + $0x7d8] sm:$0xff]
        %3437 = vst [vmem:[%s2433 + $0x7d4] sm:$0xff] %v3436
        %v3438 = vld [vmem:[%s2432 + $0x7d4] sm:$0xff]
        %3439 = vst [vmem:[%s2433 + $0x7d8] sm:$0xff] %v3438
        %v3440 = vld [vmem:[%s2432 + $0x7dc] sm:$0xff]
        %3441 = vst [vmem:[%s2433 + $0x7dc] sm:$0xff] %v3440
        %v3442 = vld [vmem:[%s2432 + $0x7e0] sm:$0xff]
        %3443 = vst [vmem:[%s2433 + $0x7e0] sm:$0xff] %v3442
        %v3444 = vld [vmem:[%s2432 + $0x7e8] sm:$0xff]
        %3445 = vst [vmem:[%s2433 + $0x7e4] sm:$0xff] %v3444
        %v3446 = vld [vmem:[%s2432 + $0x7e4] sm:$0xff]
        %3447 = vst [vmem:[%s2433 + $0x7e8] sm:$0xff] %v3446
        %v3448 = vld [vmem:[%s2432 + $0x7ec] sm:$0xff]
        %3449 = vst [vmem:[%s2433 + $0x7ec] sm:$0xff] %v3448
        %v3450 = vld [vmem:[%s2432 + $0x7f0] sm:$0xff]
        %3451 = vst [vmem:[%s2433 + $0x7f0] sm:$0xff] %v3450
        %v3452 = vld [vmem:[%s2432 + $0x7f8] sm:$0xff]
        %3453 = vst [vmem:[%s2433 + $0x7f4] sm:$0xff] %v3452
        %v3454 = vld [vmem:[%s2432 + $0x7f4] sm:$0xff]
        %3455 = vst [vmem:[%s2433 + $0x7f8] sm:$0xff] %v3454
        %v3456 = vld [vmem:[%s2432 + $0x7fc] sm:$0xff]
        %3457 = vst [vmem:[%s2433 + $0x7fc] sm:$0xff] %v3456
        %v3458 = vld [vmem:[%s2432 + $0x800] sm:$0xff]
        %3459 = vst [vmem:[%s2433 + $0x800] sm:$0xff] %v3458
        %v3460 = vld [vmem:[%s2432 + $0x808] sm:$0xff]
        %3461 = vst [vmem:[%s2433 + $0x804] sm:$0xff] %v3460
        %v3462 = vld [vmem:[%s2432 + $0x804] sm:$0xff]
        %3463 = vst [vmem:[%s2433 + $0x808] sm:$0xff] %v3462
        %v3464 = vld [vmem:[%s2432 + $0x80c] sm:$0xff]
        %3465 = vst [vmem:[%s2433 + $0x80c] sm:$0xff] %v3464
        %v3466 = vld [vmem:[%s2432 + $0x810] sm:$0xff]
        %3467 = vst [vmem:[%s2433 + $0x810] sm:$0xff] %v3466
        %v3468 = vld [vmem:[%s2432 + $0x818] sm:$0xff]
        %3469 = vst [vmem:[%s2433 + $0x814] sm:$0xff] %v3468
        %v3470 = vld [vmem:[%s2432 + $0x814] sm:$0xff]
        %3471 = vst [vmem:[%s2433 + $0x818] sm:$0xff] %v3470
        %v3472 = vld [vmem:[%s2432 + $0x81c] sm:$0xff]
        %3473 = vst [vmem:[%s2433 + $0x81c] sm:$0xff] %v3472
        %v3474 = vld [vmem:[%s2432 + $0x820] sm:$0xff]
        %3475 = vst [vmem:[%s2433 + $0x820] sm:$0xff] %v3474
        %v3476 = vld [vmem:[%s2432 + $0x828] sm:$0xff]
        %3477 = vst [vmem:[%s2433 + $0x824] sm:$0xff] %v3476
        %v3478 = vld [vmem:[%s2432 + $0x824] sm:$0xff]
        %3479 = vst [vmem:[%s2433 + $0x828] sm:$0xff] %v3478
        %v3480 = vld [vmem:[%s2432 + $0x82c] sm:$0xff]
        %3481 = vst [vmem:[%s2433 + $0x82c] sm:$0xff] %v3480
        %v3482 = vld [vmem:[%s2432 + $0x830] sm:$0xff]
        %3483 = vst [vmem:[%s2433 + $0x830] sm:$0xff] %v3482
        %v3484 = vld [vmem:[%s2432 + $0x838] sm:$0xff]
        %3485 = vst [vmem:[%s2433 + $0x834] sm:$0xff] %v3484
        %v3486 = vld [vmem:[%s2432 + $0x834] sm:$0xff]
        %3487 = vst [vmem:[%s2433 + $0x838] sm:$0xff] %v3486
        %v3488 = vld [vmem:[%s2432 + $0x83c] sm:$0xff]
        %3489 = vst [vmem:[%s2433 + $0x83c] sm:$0xff] %v3488
        %v3490 = vld [vmem:[%s2432 + $0x840] sm:$0xff]
        %3491 = vst [vmem:[%s2433 + $0x840] sm:$0xff] %v3490
        %v3492 = vld [vmem:[%s2432 + $0x848] sm:$0xff]
        %3493 = vst [vmem:[%s2433 + $0x844] sm:$0xff] %v3492
        %v3494 = vld [vmem:[%s2432 + $0x844] sm:$0xff]
        %3495 = vst [vmem:[%s2433 + $0x848] sm:$0xff] %v3494
        %v3496 = vld [vmem:[%s2432 + $0x84c] sm:$0xff]
        %3497 = vst [vmem:[%s2433 + $0x84c] sm:$0xff] %v3496
        %v3498 = vld [vmem:[%s2432 + $0x850] sm:$0xff]
        %3499 = vst [vmem:[%s2433 + $0x850] sm:$0xff] %v3498
        %v3500 = vld [vmem:[%s2432 + $0x858] sm:$0xff]
        %3501 = vst [vmem:[%s2433 + $0x854] sm:$0xff] %v3500
        %v3502 = vld [vmem:[%s2432 + $0x854] sm:$0xff]
        %3503 = vst [vmem:[%s2433 + $0x858] sm:$0xff] %v3502
        %v3504 = vld [vmem:[%s2432 + $0x85c] sm:$0xff]
        %3505 = vst [vmem:[%s2433 + $0x85c] sm:$0xff] %v3504
        %v3506 = vld [vmem:[%s2432 + $0x860] sm:$0xff]
        %3507 = vst [vmem:[%s2433 + $0x860] sm:$0xff] %v3506
        %v3508 = vld [vmem:[%s2432 + $0x868] sm:$0xff]
        %3509 = vst [vmem:[%s2433 + $0x864] sm:$0xff] %v3508
        %v3510 = vld [vmem:[%s2432 + $0x864] sm:$0xff]
        %3511 = vst [vmem:[%s2433 + $0x868] sm:$0xff] %v3510
        %v3512 = vld [vmem:[%s2432 + $0x86c] sm:$0xff]
        %3513 = vst [vmem:[%s2433 + $0x86c] sm:$0xff] %v3512
        %v3514 = vld [vmem:[%s2432 + $0x870] sm:$0xff]
        %3515 = vst [vmem:[%s2433 + $0x870] sm:$0xff] %v3514
        %v3516 = vld [vmem:[%s2432 + $0x878] sm:$0xff]
        %3517 = vst [vmem:[%s2433 + $0x874] sm:$0xff] %v3516
        %v3518 = vld [vmem:[%s2432 + $0x874] sm:$0xff]
        %3519 = vst [vmem:[%s2433 + $0x878] sm:$0xff] %v3518
        %v3520 = vld [vmem:[%s2432 + $0x87c] sm:$0xff]
        %3521 = vst [vmem:[%s2433 + $0x87c] sm:$0xff] %v3520
        %v3522 = vld [vmem:[%s2432 + $0x880] sm:$0xff]
        %3523 = vst [vmem:[%s2433 + $0x880] sm:$0xff] %v3522
        %v3524 = vld [vmem:[%s2432 + $0x888] sm:$0xff]
        %3525 = vst [vmem:[%s2433 + $0x884] sm:$0xff] %v3524
        %v3526 = vld [vmem:[%s2432 + $0x884] sm:$0xff]
        %3527 = vst [vmem:[%s2433 + $0x888] sm:$0xff] %v3526
        %v3528 = vld [vmem:[%s2432 + $0x88c] sm:$0xff]
        %3529 = vst [vmem:[%s2433 + $0x88c] sm:$0xff] %v3528
        %v3530 = vld [vmem:[%s2432 + $0x890] sm:$0xff]
        %3531 = vst [vmem:[%s2433 + $0x890] sm:$0xff] %v3530
        %v3532 = vld [vmem:[%s2432 + $0x898] sm:$0xff]
        %3533 = vst [vmem:[%s2433 + $0x894] sm:$0xff] %v3532
        %v3534 = vld [vmem:[%s2432 + $0x894] sm:$0xff]
        %3535 = vst [vmem:[%s2433 + $0x898] sm:$0xff] %v3534
        %v3536 = vld [vmem:[%s2432 + $0x89c] sm:$0xff]
        %3537 = vst [vmem:[%s2433 + $0x89c] sm:$0xff] %v3536
        %v3538 = vld [vmem:[%s2432 + $0x8a0] sm:$0xff]
        %3539 = vst [vmem:[%s2433 + $0x8a0] sm:$0xff] %v3538
        %v3540 = vld [vmem:[%s2432 + $0x8a8] sm:$0xff]
        %3541 = vst [vmem:[%s2433 + $0x8a4] sm:$0xff] %v3540
        %v3542 = vld [vmem:[%s2432 + $0x8a4] sm:$0xff]
        %3543 = vst [vmem:[%s2433 + $0x8a8] sm:$0xff] %v3542
        %v3544 = vld [vmem:[%s2432 + $0x8ac] sm:$0xff]
        %3545 = vst [vmem:[%s2433 + $0x8ac] sm:$0xff] %v3544
        %v3546 = vld [vmem:[%s2432 + $0x8b0] sm:$0xff]
        %3547 = vst [vmem:[%s2433 + $0x8b0] sm:$0xff] %v3546
        %v3548 = vld [vmem:[%s2432 + $0x8b8] sm:$0xff]
        %3549 = vst [vmem:[%s2433 + $0x8b4] sm:$0xff] %v3548
        %v3550 = vld [vmem:[%s2432 + $0x8b4] sm:$0xff]
        %3551 = vst [vmem:[%s2433 + $0x8b8] sm:$0xff] %v3550
        %v3552 = vld [vmem:[%s2432 + $0x8bc] sm:$0xff]
        %3553 = vst [vmem:[%s2433 + $0x8bc] sm:$0xff] %v3552
        %v3554 = vld [vmem:[%s2432 + $0x8c0] sm:$0xff]
        %3555 = vst [vmem:[%s2433 + $0x8c0] sm:$0xff] %v3554
        %v3556 = vld [vmem:[%s2432 + $0x8c8] sm:$0xff]
        %3557 = vst [vmem:[%s2433 + $0x8c4] sm:$0xff] %v3556
        %v3558 = vld [vmem:[%s2432 + $0x8c4] sm:$0xff]
        %3559 = vst [vmem:[%s2433 + $0x8c8] sm:$0xff] %v3558
        %v3560 = vld [vmem:[%s2432 + $0x8cc] sm:$0xff]
        %3561 = vst [vmem:[%s2433 + $0x8cc] sm:$0xff] %v3560
        %v3562 = vld [vmem:[%s2432 + $0x8d0] sm:$0xff]
        %3563 = vst [vmem:[%s2433 + $0x8d0] sm:$0xff] %v3562
        %v3564 = vld [vmem:[%s2432 + $0x8d8] sm:$0xff]
        %3565 = vst [vmem:[%s2433 + $0x8d4] sm:$0xff] %v3564
        %v3566 = vld [vmem:[%s2432 + $0x8d4] sm:$0xff]
        %3567 = vst [vmem:[%s2433 + $0x8d8] sm:$0xff] %v3566
        %v3568 = vld [vmem:[%s2432 + $0x8dc] sm:$0xff]
        %3569 = vst [vmem:[%s2433 + $0x8dc] sm:$0xff] %v3568
        %v3570 = vld [vmem:[%s2432 + $0x8e0] sm:$0xff]
        %3571 = vst [vmem:[%s2433 + $0x8e0] sm:$0xff] %v3570
        %v3572 = vld [vmem:[%s2432 + $0x8e8] sm:$0xff]
        %3573 = vst [vmem:[%s2433 + $0x8e4] sm:$0xff] %v3572
        %v3574 = vld [vmem:[%s2432 + $0x8e4] sm:$0xff]
        %3575 = vst [vmem:[%s2433 + $0x8e8] sm:$0xff] %v3574
        %v3576 = vld [vmem:[%s2432 + $0x8ec] sm:$0xff]
        %3577 = vst [vmem:[%s2433 + $0x8ec] sm:$0xff] %v3576
        %v3578 = vld [vmem:[%s2432 + $0x8f0] sm:$0xff]
        %3579 = vst [vmem:[%s2433 + $0x8f0] sm:$0xff] %v3578
        %v3580 = vld [vmem:[%s2432 + $0x8f8] sm:$0xff]
        %3581 = vst [vmem:[%s2433 + $0x8f4] sm:$0xff] %v3580
        %v3582 = vld [vmem:[%s2432 + $0x8f4] sm:$0xff]
        %3583 = vst [vmem:[%s2433 + $0x8f8] sm:$0xff] %v3582
        %v3584 = vld [vmem:[%s2432 + $0x8fc] sm:$0xff]
        %3585 = vst [vmem:[%s2433 + $0x8fc] sm:$0xff] %v3584
        %s3586 = sadd.s32 1, %s2431
        %p3587 = scmp.ge.s32.totalorder %s3586, %s2422
        %s3588 = scalar_select %p3587, 0, %s3586
        %s3589 = smul.u32 %s3588, 8
        %s3590 = smul.u32 %s3588, 8
        %s3591 = scalar_lea.vmem %s20, %s3589
        %s3592 = scalar_lea.vmem [#allocation2], %s3590
      $region116: #{learnloss_mix_forward.1} parent=110 // loop_footer
        %s2428 = sadd.s32 %s2426, 1
      $region117: #{learnloss_mix_forward.1} parent=110 // loop_footer_branch
        %2425 = sbr.rel target = $region113
      $region118: #{learnloss_mix_forward.1} parent=110 // loop_exit
        _
      %s3593 = sshllo.u32 0, %s2417
      loop: start=0, step=1, limit=1
      $region119: #{learnloss_mix_forward.1} parent=110 // loop_pre_header
        _
      $region120: #{learnloss_mix_forward.1} parent=110 // loop_header
        %s3595 = sphi 0, %s3599
        %p3596 = scmp.ge.s32.totalorder %s3595, 1
        %s3600 = sphi %s2419, %s2419
        %s3601 = sphi %s2421, %s2421
      $region121: #{learnloss_mix_forward.1} parent=110 // loop_header_branch
        %3598 = sbr.rel (%p3596) target = $region125
      $region122: #{learnloss_mix_forward.1} parent=110 // loop_body
        %v3602 = vld [vmem:[%s3600] sm:%s3593]
        %3603 = vst [vmem:[%s3601] sm:%s3593] %v3602
        %v3604 = vld [vmem:[%s3600 + $0x8] sm:%s3593]
        %3605 = vst [vmem:[%s3601 + $0x4] sm:%s3593] %v3604
        %v3606 = vld [vmem:[%s3600 + $0x4] sm:%s3593]
        %3607 = vst [vmem:[%s3601 + $0x8] sm:%s3593] %v3606
        %v3608 = vld [vmem:[%s3600 + $0xc] sm:%s3593]
        %3609 = vst [vmem:[%s3601 + $0xc] sm:%s3593] %v3608
        %v3610 = vld [vmem:[%s3600 + $0x10] sm:%s3593]
        %3611 = vst [vmem:[%s3601 + $0x10] sm:%s3593] %v3610
        %v3612 = vld [vmem:[%s3600 + $0x18] sm:%s3593]
        %3613 = vst [vmem:[%s3601 + $0x14] sm:%s3593] %v3612
        %v3614 = vld [vmem:[%s3600 + $0x14] sm:%s3593]
        %3615 = vst [vmem:[%s3601 + $0x18] sm:%s3593] %v3614
        %v3616 = vld [vmem:[%s3600 + $0x1c] sm:%s3593]
        %3617 = vst [vmem:[%s3601 + $0x1c] sm:%s3593] %v3616
        %v3618 = vld [vmem:[%s3600 + $0x20] sm:%s3593]
        %3619 = vst [vmem:[%s3601 + $0x20] sm:%s3593] %v3618
        %v3620 = vld [vmem:[%s3600 + $0x28] sm:%s3593]
        %3621 = vst [vmem:[%s3601 + $0x24] sm:%s3593] %v3620
        %v3622 = vld [vmem:[%s3600 + $0x24] sm:%s3593]
        %3623 = vst [vmem:[%s3601 + $0x28] sm:%s3593] %v3622
        %v3624 = vld [vmem:[%s3600 + $0x2c] sm:%s3593]
        %3625 = vst [vmem:[%s3601 + $0x2c] sm:%s3593] %v3624
        %v3626 = vld [vmem:[%s3600 + $0x30] sm:%s3593]
        %3627 = vst [vmem:[%s3601 + $0x30] sm:%s3593] %v3626
        %v3628 = vld [vmem:[%s3600 + $0x38] sm:%s3593]
        %3629 = vst [vmem:[%s3601 + $0x34] sm:%s3593] %v3628
        %v3630 = vld [vmem:[%s3600 + $0x34] sm:%s3593]
        %3631 = vst [vmem:[%s3601 + $0x38] sm:%s3593] %v3630
        %v3632 = vld [vmem:[%s3600 + $0x3c] sm:%s3593]
        %3633 = vst [vmem:[%s3601 + $0x3c] sm:%s3593] %v3632
        %v3634 = vld [vmem:[%s3600 + $0x40] sm:%s3593]
        %3635 = vst [vmem:[%s3601 + $0x40] sm:%s3593] %v3634
        %v3636 = vld [vmem:[%s3600 + $0x48] sm:%s3593]
        %3637 = vst [vmem:[%s3601 + $0x44] sm:%s3593] %v3636
        %v3638 = vld [vmem:[%s3600 + $0x44] sm:%s3593]
        %3639 = vst [vmem:[%s3601 + $0x48] sm:%s3593] %v3638
        %v3640 = vld [vmem:[%s3600 + $0x4c] sm:%s3593]
        %3641 = vst [vmem:[%s3601 + $0x4c] sm:%s3593] %v3640
        %v3642 = vld [vmem:[%s3600 + $0x50] sm:%s3593]
        %3643 = vst [vmem:[%s3601 + $0x50] sm:%s3593] %v3642
        %v3644 = vld [vmem:[%s3600 + $0x58] sm:%s3593]
        %3645 = vst [vmem:[%s3601 + $0x54] sm:%s3593] %v3644
        %v3646 = vld [vmem:[%s3600 + $0x54] sm:%s3593]
        %3647 = vst [vmem:[%s3601 + $0x58] sm:%s3593] %v3646
        %v3648 = vld [vmem:[%s3600 + $0x5c] sm:%s3593]
        %3649 = vst [vmem:[%s3601 + $0x5c] sm:%s3593] %v3648
        %v3650 = vld [vmem:[%s3600 + $0x60] sm:%s3593]
        %3651 = vst [vmem:[%s3601 + $0x60] sm:%s3593] %v3650
        %v3652 = vld [vmem:[%s3600 + $0x68] sm:%s3593]
        %3653 = vst [vmem:[%s3601 + $0x64] sm:%s3593] %v3652
        %v3654 = vld [vmem:[%s3600 + $0x64] sm:%s3593]
        %3655 = vst [vmem:[%s3601 + $0x68] sm:%s3593] %v3654
        %v3656 = vld [vmem:[%s3600 + $0x6c] sm:%s3593]
        %3657 = vst [vmem:[%s3601 + $0x6c] sm:%s3593] %v3656
        %v3658 = vld [vmem:[%s3600 + $0x70] sm:%s3593]
        %3659 = vst [vmem:[%s3601 + $0x70] sm:%s3593] %v3658
        %v3660 = vld [vmem:[%s3600 + $0x78] sm:%s3593]
        %3661 = vst [vmem:[%s3601 + $0x74] sm:%s3593] %v3660
        %v3662 = vld [vmem:[%s3600 + $0x74] sm:%s3593]
        %3663 = vst [vmem:[%s3601 + $0x78] sm:%s3593] %v3662
        %v3664 = vld [vmem:[%s3600 + $0x7c] sm:%s3593]
        %3665 = vst [vmem:[%s3601 + $0x7c] sm:%s3593] %v3664
        %v3666 = vld [vmem:[%s3600 + $0x80] sm:%s3593]
        %3667 = vst [vmem:[%s3601 + $0x80] sm:%s3593] %v3666
        %v3668 = vld [vmem:[%s3600 + $0x88] sm:%s3593]
        %3669 = vst [vmem:[%s3601 + $0x84] sm:%s3593] %v3668
        %v3670 = vld [vmem:[%s3600 + $0x84] sm:%s3593]
        %3671 = vst [vmem:[%s3601 + $0x88] sm:%s3593] %v3670
        %v3672 = vld [vmem:[%s3600 + $0x8c] sm:%s3593]
        %3673 = vst [vmem:[%s3601 + $0x8c] sm:%s3593] %v3672
        %v3674 = vld [vmem:[%s3600 + $0x90] sm:%s3593]
        %3675 = vst [vmem:[%s3601 + $0x90] sm:%s3593] %v3674
        %v3676 = vld [vmem:[%s3600 + $0x98] sm:%s3593]
        %3677 = vst [vmem:[%s3601 + $0x94] sm:%s3593] %v3676
        %v3678 = vld [vmem:[%s3600 + $0x94] sm:%s3593]
        %3679 = vst [vmem:[%s3601 + $0x98] sm:%s3593] %v3678
        %v3680 = vld [vmem:[%s3600 + $0x9c] sm:%s3593]
        %3681 = vst [vmem:[%s3601 + $0x9c] sm:%s3593] %v3680
        %v3682 = vld [vmem:[%s3600 + $0xa0] sm:%s3593]
        %3683 = vst [vmem:[%s3601 + $0xa0] sm:%s3593] %v3682
        %v3684 = vld [vmem:[%s3600 + $0xa8] sm:%s3593]
        %3685 = vst [vmem:[%s3601 + $0xa4] sm:%s3593] %v3684
        %v3686 = vld [vmem:[%s3600 + $0xa4] sm:%s3593]
        %3687 = vst [vmem:[%s3601 + $0xa8] sm:%s3593] %v3686
        %v3688 = vld [vmem:[%s3600 + $0xac] sm:%s3593]
        %3689 = vst [vmem:[%s3601 + $0xac] sm:%s3593] %v3688
        %v3690 = vld [vmem:[%s3600 + $0xb0] sm:%s3593]
        %3691 = vst [vmem:[%s3601 + $0xb0] sm:%s3593] %v3690
        %v3692 = vld [vmem:[%s3600 + $0xb8] sm:%s3593]
        %3693 = vst [vmem:[%s3601 + $0xb4] sm:%s3593] %v3692
        %v3694 = vld [vmem:[%s3600 + $0xb4] sm:%s3593]
        %3695 = vst [vmem:[%s3601 + $0xb8] sm:%s3593] %v3694
        %v3696 = vld [vmem:[%s3600 + $0xbc] sm:%s3593]
        %3697 = vst [vmem:[%s3601 + $0xbc] sm:%s3593] %v3696
        %v3698 = vld [vmem:[%s3600 + $0xc0] sm:%s3593]
        %3699 = vst [vmem:[%s3601 + $0xc0] sm:%s3593] %v3698
        %v3700 = vld [vmem:[%s3600 + $0xc8] sm:%s3593]
        %3701 = vst [vmem:[%s3601 + $0xc4] sm:%s3593] %v3700
        %v3702 = vld [vmem:[%s3600 + $0xc4] sm:%s3593]
        %3703 = vst [vmem:[%s3601 + $0xc8] sm:%s3593] %v3702
        %v3704 = vld [vmem:[%s3600 + $0xcc] sm:%s3593]
        %3705 = vst [vmem:[%s3601 + $0xcc] sm:%s3593] %v3704
        %v3706 = vld [vmem:[%s3600 + $0xd0] sm:%s3593]
        %3707 = vst [vmem:[%s3601 + $0xd0] sm:%s3593] %v3706
        %v3708 = vld [vmem:[%s3600 + $0xd8] sm:%s3593]
        %3709 = vst [vmem:[%s3601 + $0xd4] sm:%s3593] %v3708
        %v3710 = vld [vmem:[%s3600 + $0xd4] sm:%s3593]
        %3711 = vst [vmem:[%s3601 + $0xd8] sm:%s3593] %v3710
        %v3712 = vld [vmem:[%s3600 + $0xdc] sm:%s3593]
        %3713 = vst [vmem:[%s3601 + $0xdc] sm:%s3593] %v3712
        %v3714 = vld [vmem:[%s3600 + $0xe0] sm:%s3593]
        %3715 = vst [vmem:[%s3601 + $0xe0] sm:%s3593] %v3714
        %v3716 = vld [vmem:[%s3600 + $0xe8] sm:%s3593]
        %3717 = vst [vmem:[%s3601 + $0xe4] sm:%s3593] %v3716
        %v3718 = vld [vmem:[%s3600 + $0xe4] sm:%s3593]
        %3719 = vst [vmem:[%s3601 + $0xe8] sm:%s3593] %v3718
        %v3720 = vld [vmem:[%s3600 + $0xec] sm:%s3593]
        %3721 = vst [vmem:[%s3601 + $0xec] sm:%s3593] %v3720
        %v3722 = vld [vmem:[%s3600 + $0xf0] sm:%s3593]
        %3723 = vst [vmem:[%s3601 + $0xf0] sm:%s3593] %v3722
        %v3724 = vld [vmem:[%s3600 + $0xf8] sm:%s3593]
        %3725 = vst [vmem:[%s3601 + $0xf4] sm:%s3593] %v3724
        %v3726 = vld [vmem:[%s3600 + $0xf4] sm:%s3593]
        %3727 = vst [vmem:[%s3601 + $0xf8] sm:%s3593] %v3726
        %v3728 = vld [vmem:[%s3600 + $0xfc] sm:%s3593]
        %3729 = vst [vmem:[%s3601 + $0xfc] sm:%s3593] %v3728
        %v3730 = vld [vmem:[%s3600 + $0x100] sm:%s3593]
        %3731 = vst [vmem:[%s3601 + $0x100] sm:%s3593] %v3730
        %v3732 = vld [vmem:[%s3600 + $0x108] sm:%s3593]
        %3733 = vst [vmem:[%s3601 + $0x104] sm:%s3593] %v3732
        %v3734 = vld [vmem:[%s3600 + $0x104] sm:%s3593]
        %3735 = vst [vmem:[%s3601 + $0x108] sm:%s3593] %v3734
        %v3736 = vld [vmem:[%s3600 + $0x10c] sm:%s3593]
        %3737 = vst [vmem:[%s3601 + $0x10c] sm:%s3593] %v3736
        %v3738 = vld [vmem:[%s3600 + $0x110] sm:%s3593]
        %3739 = vst [vmem:[%s3601 + $0x110] sm:%s3593] %v3738
        %v3740 = vld [vmem:[%s3600 + $0x118] sm:%s3593]
        %3741 = vst [vmem:[%s3601 + $0x114] sm:%s3593] %v3740
        %v3742 = vld [vmem:[%s3600 + $0x114] sm:%s3593]
        %3743 = vst [vmem:[%s3601 + $0x118] sm:%s3593] %v3742
        %v3744 = vld [vmem:[%s3600 + $0x11c] sm:%s3593]
        %3745 = vst [vmem:[%s3601 + $0x11c] sm:%s3593] %v3744
        %v3746 = vld [vmem:[%s3600 + $0x120] sm:%s3593]
        %3747 = vst [vmem:[%s3601 + $0x120] sm:%s3593] %v3746
        %v3748 = vld [vmem:[%s3600 + $0x128] sm:%s3593]
        %3749 = vst [vmem:[%s3601 + $0x124] sm:%s3593] %v3748
        %v3750 = vld [vmem:[%s3600 + $0x124] sm:%s3593]
        %3751 = vst [vmem:[%s3601 + $0x128] sm:%s3593] %v3750
        %v3752 = vld [vmem:[%s3600 + $0x12c] sm:%s3593]
        %3753 = vst [vmem:[%s3601 + $0x12c] sm:%s3593] %v3752
        %v3754 = vld [vmem:[%s3600 + $0x130] sm:%s3593]
        %3755 = vst [vmem:[%s3601 + $0x130] sm:%s3593] %v3754
        %v3756 = vld [vmem:[%s3600 + $0x138] sm:%s3593]
        %3757 = vst [vmem:[%s3601 + $0x134] sm:%s3593] %v3756
        %v3758 = vld [vmem:[%s3600 + $0x134] sm:%s3593]
        %3759 = vst [vmem:[%s3601 + $0x138] sm:%s3593] %v3758
        %v3760 = vld [vmem:[%s3600 + $0x13c] sm:%s3593]
        %3761 = vst [vmem:[%s3601 + $0x13c] sm:%s3593] %v3760
        %v3762 = vld [vmem:[%s3600 + $0x140] sm:%s3593]
        %3763 = vst [vmem:[%s3601 + $0x140] sm:%s3593] %v3762
        %v3764 = vld [vmem:[%s3600 + $0x148] sm:%s3593]
        %3765 = vst [vmem:[%s3601 + $0x144] sm:%s3593] %v3764
        %v3766 = vld [vmem:[%s3600 + $0x144] sm:%s3593]
        %3767 = vst [vmem:[%s3601 + $0x148] sm:%s3593] %v3766
        %v3768 = vld [vmem:[%s3600 + $0x14c] sm:%s3593]
        %3769 = vst [vmem:[%s3601 + $0x14c] sm:%s3593] %v3768
        %v3770 = vld [vmem:[%s3600 + $0x150] sm:%s3593]
        %3771 = vst [vmem:[%s3601 + $0x150] sm:%s3593] %v3770
        %v3772 = vld [vmem:[%s3600 + $0x158] sm:%s3593]
        %3773 = vst [vmem:[%s3601 + $0x154] sm:%s3593] %v3772
        %v3774 = vld [vmem:[%s3600 + $0x154] sm:%s3593]
        %3775 = vst [vmem:[%s3601 + $0x158] sm:%s3593] %v3774
        %v3776 = vld [vmem:[%s3600 + $0x15c] sm:%s3593]
        %3777 = vst [vmem:[%s3601 + $0x15c] sm:%s3593] %v3776
        %v3778 = vld [vmem:[%s3600 + $0x160] sm:%s3593]
        %3779 = vst [vmem:[%s3601 + $0x160] sm:%s3593] %v3778
        %v3780 = vld [vmem:[%s3600 + $0x168] sm:%s3593]
        %3781 = vst [vmem:[%s3601 + $0x164] sm:%s3593] %v3780
        %v3782 = vld [vmem:[%s3600 + $0x164] sm:%s3593]
        %3783 = vst [vmem:[%s3601 + $0x168] sm:%s3593] %v3782
        %v3784 = vld [vmem:[%s3600 + $0x16c] sm:%s3593]
        %3785 = vst [vmem:[%s3601 + $0x16c] sm:%s3593] %v3784
        %v3786 = vld [vmem:[%s3600 + $0x170] sm:%s3593]
        %3787 = vst [vmem:[%s3601 + $0x170] sm:%s3593] %v3786
        %v3788 = vld [vmem:[%s3600 + $0x178] sm:%s3593]
        %3789 = vst [vmem:[%s3601 + $0x174] sm:%s3593] %v3788
        %v3790 = vld [vmem:[%s3600 + $0x174] sm:%s3593]
        %3791 = vst [vmem:[%s3601 + $0x178] sm:%s3593] %v3790
        %v3792 = vld [vmem:[%s3600 + $0x17c] sm:%s3593]
        %3793 = vst [vmem:[%s3601 + $0x17c] sm:%s3593] %v3792
        %v3794 = vld [vmem:[%s3600 + $0x180] sm:%s3593]
        %3795 = vst [vmem:[%s3601 + $0x180] sm:%s3593] %v3794
        %v3796 = vld [vmem:[%s3600 + $0x188] sm:%s3593]
        %3797 = vst [vmem:[%s3601 + $0x184] sm:%s3593] %v3796
        %v3798 = vld [vmem:[%s3600 + $0x184] sm:%s3593]
        %3799 = vst [vmem:[%s3601 + $0x188] sm:%s3593] %v3798
        %v3800 = vld [vmem:[%s3600 + $0x18c] sm:%s3593]
        %3801 = vst [vmem:[%s3601 + $0x18c] sm:%s3593] %v3800
        %v3802 = vld [vmem:[%s3600 + $0x190] sm:%s3593]
        %3803 = vst [vmem:[%s3601 + $0x190] sm:%s3593] %v3802
        %v3804 = vld [vmem:[%s3600 + $0x198] sm:%s3593]
        %3805 = vst [vmem:[%s3601 + $0x194] sm:%s3593] %v3804
        %v3806 = vld [vmem:[%s3600 + $0x194] sm:%s3593]
        %3807 = vst [vmem:[%s3601 + $0x198] sm:%s3593] %v3806
        %v3808 = vld [vmem:[%s3600 + $0x19c] sm:%s3593]
        %3809 = vst [vmem:[%s3601 + $0x19c] sm:%s3593] %v3808
        %v3810 = vld [vmem:[%s3600 + $0x1a0] sm:%s3593]
        %3811 = vst [vmem:[%s3601 + $0x1a0] sm:%s3593] %v3810
        %v3812 = vld [vmem:[%s3600 + $0x1a8] sm:%s3593]
        %3813 = vst [vmem:[%s3601 + $0x1a4] sm:%s3593] %v3812
        %v3814 = vld [vmem:[%s3600 + $0x1a4] sm:%s3593]
        %3815 = vst [vmem:[%s3601 + $0x1a8] sm:%s3593] %v3814
        %v3816 = vld [vmem:[%s3600 + $0x1ac] sm:%s3593]
        %3817 = vst [vmem:[%s3601 + $0x1ac] sm:%s3593] %v3816
        %v3818 = vld [vmem:[%s3600 + $0x1b0] sm:%s3593]
        %3819 = vst [vmem:[%s3601 + $0x1b0] sm:%s3593] %v3818
        %v3820 = vld [vmem:[%s3600 + $0x1b8] sm:%s3593]
        %3821 = vst [vmem:[%s3601 + $0x1b4] sm:%s3593] %v3820
        %v3822 = vld [vmem:[%s3600 + $0x1b4] sm:%s3593]
        %3823 = vst [vmem:[%s3601 + $0x1b8] sm:%s3593] %v3822
        %v3824 = vld [vmem:[%s3600 + $0x1bc] sm:%s3593]
        %3825 = vst [vmem:[%s3601 + $0x1bc] sm:%s3593] %v3824
        %v3826 = vld [vmem:[%s3600 + $0x1c0] sm:%s3593]
        %3827 = vst [vmem:[%s3601 + $0x1c0] sm:%s3593] %v3826
        %v3828 = vld [vmem:[%s3600 + $0x1c8] sm:%s3593]
        %3829 = vst [vmem:[%s3601 + $0x1c4] sm:%s3593] %v3828
        %v3830 = vld [vmem:[%s3600 + $0x1c4] sm:%s3593]
        %3831 = vst [vmem:[%s3601 + $0x1c8] sm:%s3593] %v3830
        %v3832 = vld [vmem:[%s3600 + $0x1cc] sm:%s3593]
        %3833 = vst [vmem:[%s3601 + $0x1cc] sm:%s3593] %v3832
        %v3834 = vld [vmem:[%s3600 + $0x1d0] sm:%s3593]
        %3835 = vst [vmem:[%s3601 + $0x1d0] sm:%s3593] %v3834
        %v3836 = vld [vmem:[%s3600 + $0x1d8] sm:%s3593]
        %3837 = vst [vmem:[%s3601 + $0x1d4] sm:%s3593] %v3836
        %v3838 = vld [vmem:[%s3600 + $0x1d4] sm:%s3593]
        %3839 = vst [vmem:[%s3601 + $0x1d8] sm:%s3593] %v3838
        %v3840 = vld [vmem:[%s3600 + $0x1dc] sm:%s3593]
        %3841 = vst [vmem:[%s3601 + $0x1dc] sm:%s3593] %v3840
        %v3842 = vld [vmem:[%s3600 + $0x1e0] sm:%s3593]
        %3843 = vst [vmem:[%s3601 + $0x1e0] sm:%s3593] %v3842
        %v3844 = vld [vmem:[%s3600 + $0x1e8] sm:%s3593]
        %3845 = vst [vmem:[%s3601 + $0x1e4] sm:%s3593] %v3844
        %v3846 = vld [vmem:[%s3600 + $0x1e4] sm:%s3593]
        %3847 = vst [vmem:[%s3601 + $0x1e8] sm:%s3593] %v3846
        %v3848 = vld [vmem:[%s3600 + $0x1ec] sm:%s3593]
        %3849 = vst [vmem:[%s3601 + $0x1ec] sm:%s3593] %v3848
        %v3850 = vld [vmem:[%s3600 + $0x1f0] sm:%s3593]
        %3851 = vst [vmem:[%s3601 + $0x1f0] sm:%s3593] %v3850
        %v3852 = vld [vmem:[%s3600 + $0x1f8] sm:%s3593]
        %3853 = vst [vmem:[%s3601 + $0x1f4] sm:%s3593] %v3852
        %v3854 = vld [vmem:[%s3600 + $0x1f4] sm:%s3593]
        %3855 = vst [vmem:[%s3601 + $0x1f8] sm:%s3593] %v3854
        %v3856 = vld [vmem:[%s3600 + $0x1fc] sm:%s3593]
        %3857 = vst [vmem:[%s3601 + $0x1fc] sm:%s3593] %v3856
        %v3858 = vld [vmem:[%s3600 + $0x200] sm:%s3593]
        %3859 = vst [vmem:[%s3601 + $0x200] sm:%s3593] %v3858
        %v3860 = vld [vmem:[%s3600 + $0x208] sm:%s3593]
        %3861 = vst [vmem:[%s3601 + $0x204] sm:%s3593] %v3860
        %v3862 = vld [vmem:[%s3600 + $0x204] sm:%s3593]
        %3863 = vst [vmem:[%s3601 + $0x208] sm:%s3593] %v3862
        %v3864 = vld [vmem:[%s3600 + $0x20c] sm:%s3593]
        %3865 = vst [vmem:[%s3601 + $0x20c] sm:%s3593] %v3864
        %v3866 = vld [vmem:[%s3600 + $0x210] sm:%s3593]
        %3867 = vst [vmem:[%s3601 + $0x210] sm:%s3593] %v3866
        %v3868 = vld [vmem:[%s3600 + $0x218] sm:%s3593]
        %3869 = vst [vmem:[%s3601 + $0x214] sm:%s3593] %v3868
        %v3870 = vld [vmem:[%s3600 + $0x214] sm:%s3593]
        %3871 = vst [vmem:[%s3601 + $0x218] sm:%s3593] %v3870
        %v3872 = vld [vmem:[%s3600 + $0x21c] sm:%s3593]
        %3873 = vst [vmem:[%s3601 + $0x21c] sm:%s3593] %v3872
        %v3874 = vld [vmem:[%s3600 + $0x220] sm:%s3593]
        %3875 = vst [vmem:[%s3601 + $0x220] sm:%s3593] %v3874
        %v3876 = vld [vmem:[%s3600 + $0x228] sm:%s3593]
        %3877 = vst [vmem:[%s3601 + $0x224] sm:%s3593] %v3876
        %v3878 = vld [vmem:[%s3600 + $0x224] sm:%s3593]
        %3879 = vst [vmem:[%s3601 + $0x228] sm:%s3593] %v3878
        %v3880 = vld [vmem:[%s3600 + $0x22c] sm:%s3593]
        %3881 = vst [vmem:[%s3601 + $0x22c] sm:%s3593] %v3880
        %v3882 = vld [vmem:[%s3600 + $0x230] sm:%s3593]
        %3883 = vst [vmem:[%s3601 + $0x230] sm:%s3593] %v3882
        %v3884 = vld [vmem:[%s3600 + $0x238] sm:%s3593]
        %3885 = vst [vmem:[%s3601 + $0x234] sm:%s3593] %v3884
        %v3886 = vld [vmem:[%s3600 + $0x234] sm:%s3593]
        %3887 = vst [vmem:[%s3601 + $0x238] sm:%s3593] %v3886
        %v3888 = vld [vmem:[%s3600 + $0x23c] sm:%s3593]
        %3889 = vst [vmem:[%s3601 + $0x23c] sm:%s3593] %v3888
        %v3890 = vld [vmem:[%s3600 + $0x240] sm:%s3593]
        %3891 = vst [vmem:[%s3601 + $0x240] sm:%s3593] %v3890
        %v3892 = vld [vmem:[%s3600 + $0x248] sm:%s3593]
        %3893 = vst [vmem:[%s3601 + $0x244] sm:%s3593] %v3892
        %v3894 = vld [vmem:[%s3600 + $0x244] sm:%s3593]
        %3895 = vst [vmem:[%s3601 + $0x248] sm:%s3593] %v3894
        %v3896 = vld [vmem:[%s3600 + $0x24c] sm:%s3593]
        %3897 = vst [vmem:[%s3601 + $0x24c] sm:%s3593] %v3896
        %v3898 = vld [vmem:[%s3600 + $0x250] sm:%s3593]
        %3899 = vst [vmem:[%s3601 + $0x250] sm:%s3593] %v3898
        %v3900 = vld [vmem:[%s3600 + $0x258] sm:%s3593]
        %3901 = vst [vmem:[%s3601 + $0x254] sm:%s3593] %v3900
        %v3902 = vld [vmem:[%s3600 + $0x254] sm:%s3593]
        %3903 = vst [vmem:[%s3601 + $0x258] sm:%s3593] %v3902
        %v3904 = vld [vmem:[%s3600 + $0x25c] sm:%s3593]
        %3905 = vst [vmem:[%s3601 + $0x25c] sm:%s3593] %v3904
        %v3906 = vld [vmem:[%s3600 + $0x260] sm:%s3593]
        %3907 = vst [vmem:[%s3601 + $0x260] sm:%s3593] %v3906
        %v3908 = vld [vmem:[%s3600 + $0x268] sm:%s3593]
        %3909 = vst [vmem:[%s3601 + $0x264] sm:%s3593] %v3908
        %v3910 = vld [vmem:[%s3600 + $0x264] sm:%s3593]
        %3911 = vst [vmem:[%s3601 + $0x268] sm:%s3593] %v3910
        %v3912 = vld [vmem:[%s3600 + $0x26c] sm:%s3593]
        %3913 = vst [vmem:[%s3601 + $0x26c] sm:%s3593] %v3912
        %v3914 = vld [vmem:[%s3600 + $0x270] sm:%s3593]
        %3915 = vst [vmem:[%s3601 + $0x270] sm:%s3593] %v3914
        %v3916 = vld [vmem:[%s3600 + $0x278] sm:%s3593]
        %3917 = vst [vmem:[%s3601 + $0x274] sm:%s3593] %v3916
        %v3918 = vld [vmem:[%s3600 + $0x274] sm:%s3593]
        %3919 = vst [vmem:[%s3601 + $0x278] sm:%s3593] %v3918
        %v3920 = vld [vmem:[%s3600 + $0x27c] sm:%s3593]
        %3921 = vst [vmem:[%s3601 + $0x27c] sm:%s3593] %v3920
        %v3922 = vld [vmem:[%s3600 + $0x280] sm:%s3593]
        %3923 = vst [vmem:[%s3601 + $0x280] sm:%s3593] %v3922
        %v3924 = vld [vmem:[%s3600 + $0x288] sm:%s3593]
        %3925 = vst [vmem:[%s3601 + $0x284] sm:%s3593] %v3924
        %v3926 = vld [vmem:[%s3600 + $0x284] sm:%s3593]
        %3927 = vst [vmem:[%s3601 + $0x288] sm:%s3593] %v3926
        %v3928 = vld [vmem:[%s3600 + $0x28c] sm:%s3593]
        %3929 = vst [vmem:[%s3601 + $0x28c] sm:%s3593] %v3928
        %v3930 = vld [vmem:[%s3600 + $0x290] sm:%s3593]
        %3931 = vst [vmem:[%s3601 + $0x290] sm:%s3593] %v3930
        %v3932 = vld [vmem:[%s3600 + $0x298] sm:%s3593]
        %3933 = vst [vmem:[%s3601 + $0x294] sm:%s3593] %v3932
        %v3934 = vld [vmem:[%s3600 + $0x294] sm:%s3593]
        %3935 = vst [vmem:[%s3601 + $0x298] sm:%s3593] %v3934
        %v3936 = vld [vmem:[%s3600 + $0x29c] sm:%s3593]
        %3937 = vst [vmem:[%s3601 + $0x29c] sm:%s3593] %v3936
        %v3938 = vld [vmem:[%s3600 + $0x2a0] sm:%s3593]
        %3939 = vst [vmem:[%s3601 + $0x2a0] sm:%s3593] %v3938
        %v3940 = vld [vmem:[%s3600 + $0x2a8] sm:%s3593]
        %3941 = vst [vmem:[%s3601 + $0x2a4] sm:%s3593] %v3940
        %v3942 = vld [vmem:[%s3600 + $0x2a4] sm:%s3593]
        %3943 = vst [vmem:[%s3601 + $0x2a8] sm:%s3593] %v3942
        %v3944 = vld [vmem:[%s3600 + $0x2ac] sm:%s3593]
        %3945 = vst [vmem:[%s3601 + $0x2ac] sm:%s3593] %v3944
        %v3946 = vld [vmem:[%s3600 + $0x2b0] sm:%s3593]
        %3947 = vst [vmem:[%s3601 + $0x2b0] sm:%s3593] %v3946
        %v3948 = vld [vmem:[%s3600 + $0x2b8] sm:%s3593]
        %3949 = vst [vmem:[%s3601 + $0x2b4] sm:%s3593] %v3948
        %v3950 = vld [vmem:[%s3600 + $0x2b4] sm:%s3593]
        %3951 = vst [vmem:[%s3601 + $0x2b8] sm:%s3593] %v3950
        %v3952 = vld [vmem:[%s3600 + $0x2bc] sm:%s3593]
        %3953 = vst [vmem:[%s3601 + $0x2bc] sm:%s3593] %v3952
        %v3954 = vld [vmem:[%s3600 + $0x2c0] sm:%s3593]
        %3955 = vst [vmem:[%s3601 + $0x2c0] sm:%s3593] %v3954
        %v3956 = vld [vmem:[%s3600 + $0x2c8] sm:%s3593]
        %3957 = vst [vmem:[%s3601 + $0x2c4] sm:%s3593] %v3956
        %v3958 = vld [vmem:[%s3600 + $0x2c4] sm:%s3593]
        %3959 = vst [vmem:[%s3601 + $0x2c8] sm:%s3593] %v3958
        %v3960 = vld [vmem:[%s3600 + $0x2cc] sm:%s3593]
        %3961 = vst [vmem:[%s3601 + $0x2cc] sm:%s3593] %v3960
        %v3962 = vld [vmem:[%s3600 + $0x2d0] sm:%s3593]
        %3963 = vst [vmem:[%s3601 + $0x2d0] sm:%s3593] %v3962
        %v3964 = vld [vmem:[%s3600 + $0x2d8] sm:%s3593]
        %3965 = vst [vmem:[%s3601 + $0x2d4] sm:%s3593] %v3964
        %v3966 = vld [vmem:[%s3600 + $0x2d4] sm:%s3593]
        %3967 = vst [vmem:[%s3601 + $0x2d8] sm:%s3593] %v3966
        %v3968 = vld [vmem:[%s3600 + $0x2dc] sm:%s3593]
        %3969 = vst [vmem:[%s3601 + $0x2dc] sm:%s3593] %v3968
        %v3970 = vld [vmem:[%s3600 + $0x2e0] sm:%s3593]
        %3971 = vst [vmem:[%s3601 + $0x2e0] sm:%s3593] %v3970
        %v3972 = vld [vmem:[%s3600 + $0x2e8] sm:%s3593]
        %3973 = vst [vmem:[%s3601 + $0x2e4] sm:%s3593] %v3972
        %v3974 = vld [vmem:[%s3600 + $0x2e4] sm:%s3593]
        %3975 = vst [vmem:[%s3601 + $0x2e8] sm:%s3593] %v3974
        %v3976 = vld [vmem:[%s3600 + $0x2ec] sm:%s3593]
        %3977 = vst [vmem:[%s3601 + $0x2ec] sm:%s3593] %v3976
        %v3978 = vld [vmem:[%s3600 + $0x2f0] sm:%s3593]
        %3979 = vst [vmem:[%s3601 + $0x2f0] sm:%s3593] %v3978
        %v3980 = vld [vmem:[%s3600 + $0x2f8] sm:%s3593]
        %3981 = vst [vmem:[%s3601 + $0x2f4] sm:%s3593] %v3980
        %v3982 = vld [vmem:[%s3600 + $0x2f4] sm:%s3593]
        %3983 = vst [vmem:[%s3601 + $0x2f8] sm:%s3593] %v3982
        %v3984 = vld [vmem:[%s3600 + $0x2fc] sm:%s3593]
        %3985 = vst [vmem:[%s3601 + $0x2fc] sm:%s3593] %v3984
        %v3986 = vld [vmem:[%s3600 + $0x300] sm:%s3593]
        %3987 = vst [vmem:[%s3601 + $0x300] sm:%s3593] %v3986
        %v3988 = vld [vmem:[%s3600 + $0x308] sm:%s3593]
        %3989 = vst [vmem:[%s3601 + $0x304] sm:%s3593] %v3988
        %v3990 = vld [vmem:[%s3600 + $0x304] sm:%s3593]
        %3991 = vst [vmem:[%s3601 + $0x308] sm:%s3593] %v3990
        %v3992 = vld [vmem:[%s3600 + $0x30c] sm:%s3593]
        %3993 = vst [vmem:[%s3601 + $0x30c] sm:%s3593] %v3992
        %v3994 = vld [vmem:[%s3600 + $0x310] sm:%s3593]
        %3995 = vst [vmem:[%s3601 + $0x310] sm:%s3593] %v3994
        %v3996 = vld [vmem:[%s3600 + $0x318] sm:%s3593]
        %3997 = vst [vmem:[%s3601 + $0x314] sm:%s3593] %v3996
        %v3998 = vld [vmem:[%s3600 + $0x314] sm:%s3593]
        %3999 = vst [vmem:[%s3601 + $0x318] sm:%s3593] %v3998
        %v4000 = vld [vmem:[%s3600 + $0x31c] sm:%s3593]
        %4001 = vst [vmem:[%s3601 + $0x31c] sm:%s3593] %v4000
        %v4002 = vld [vmem:[%s3600 + $0x320] sm:%s3593]
        %4003 = vst [vmem:[%s3601 + $0x320] sm:%s3593] %v4002
        %v4004 = vld [vmem:[%s3600 + $0x328] sm:%s3593]
        %4005 = vst [vmem:[%s3601 + $0x324] sm:%s3593] %v4004
        %v4006 = vld [vmem:[%s3600 + $0x324] sm:%s3593]
        %4007 = vst [vmem:[%s3601 + $0x328] sm:%s3593] %v4006
        %v4008 = vld [vmem:[%s3600 + $0x32c] sm:%s3593]
        %4009 = vst [vmem:[%s3601 + $0x32c] sm:%s3593] %v4008
        %v4010 = vld [vmem:[%s3600 + $0x330] sm:%s3593]
        %4011 = vst [vmem:[%s3601 + $0x330] sm:%s3593] %v4010
        %v4012 = vld [vmem:[%s3600 + $0x338] sm:%s3593]
        %4013 = vst [vmem:[%s3601 + $0x334] sm:%s3593] %v4012
        %v4014 = vld [vmem:[%s3600 + $0x334] sm:%s3593]
        %4015 = vst [vmem:[%s3601 + $0x338] sm:%s3593] %v4014
        %v4016 = vld [vmem:[%s3600 + $0x33c] sm:%s3593]
        %4017 = vst [vmem:[%s3601 + $0x33c] sm:%s3593] %v4016
        %v4018 = vld [vmem:[%s3600 + $0x340] sm:%s3593]
        %4019 = vst [vmem:[%s3601 + $0x340] sm:%s3593] %v4018
        %v4020 = vld [vmem:[%s3600 + $0x348] sm:%s3593]
        %4021 = vst [vmem:[%s3601 + $0x344] sm:%s3593] %v4020
        %v4022 = vld [vmem:[%s3600 + $0x344] sm:%s3593]
        %4023 = vst [vmem:[%s3601 + $0x348] sm:%s3593] %v4022
        %v4024 = vld [vmem:[%s3600 + $0x34c] sm:%s3593]
        %4025 = vst [vmem:[%s3601 + $0x34c] sm:%s3593] %v4024
        %v4026 = vld [vmem:[%s3600 + $0x350] sm:%s3593]
        %4027 = vst [vmem:[%s3601 + $0x350] sm:%s3593] %v4026
        %v4028 = vld [vmem:[%s3600 + $0x358] sm:%s3593]
        %4029 = vst [vmem:[%s3601 + $0x354] sm:%s3593] %v4028
        %v4030 = vld [vmem:[%s3600 + $0x354] sm:%s3593]
        %4031 = vst [vmem:[%s3601 + $0x358] sm:%s3593] %v4030
        %v4032 = vld [vmem:[%s3600 + $0x35c] sm:%s3593]
        %4033 = vst [vmem:[%s3601 + $0x35c] sm:%s3593] %v4032
        %v4034 = vld [vmem:[%s3600 + $0x360] sm:%s3593]
        %4035 = vst [vmem:[%s3601 + $0x360] sm:%s3593] %v4034
        %v4036 = vld [vmem:[%s3600 + $0x368] sm:%s3593]
        %4037 = vst [vmem:[%s3601 + $0x364] sm:%s3593] %v4036
        %v4038 = vld [vmem:[%s3600 + $0x364] sm:%s3593]
        %4039 = vst [vmem:[%s3601 + $0x368] sm:%s3593] %v4038
        %v4040 = vld [vmem:[%s3600 + $0x36c] sm:%s3593]
        %4041 = vst [vmem:[%s3601 + $0x36c] sm:%s3593] %v4040
        %v4042 = vld [vmem:[%s3600 + $0x370] sm:%s3593]
        %4043 = vst [vmem:[%s3601 + $0x370] sm:%s3593] %v4042
        %v4044 = vld [vmem:[%s3600 + $0x378] sm:%s3593]
        %4045 = vst [vmem:[%s3601 + $0x374] sm:%s3593] %v4044
        %v4046 = vld [vmem:[%s3600 + $0x374] sm:%s3593]
        %4047 = vst [vmem:[%s3601 + $0x378] sm:%s3593] %v4046
        %v4048 = vld [vmem:[%s3600 + $0x37c] sm:%s3593]
        %4049 = vst [vmem:[%s3601 + $0x37c] sm:%s3593] %v4048
        %v4050 = vld [vmem:[%s3600 + $0x380] sm:%s3593]
        %4051 = vst [vmem:[%s3601 + $0x380] sm:%s3593] %v4050
        %v4052 = vld [vmem:[%s3600 + $0x388] sm:%s3593]
        %4053 = vst [vmem:[%s3601 + $0x384] sm:%s3593] %v4052
        %v4054 = vld [vmem:[%s3600 + $0x384] sm:%s3593]
        %4055 = vst [vmem:[%s3601 + $0x388] sm:%s3593] %v4054
        %v4056 = vld [vmem:[%s3600 + $0x38c] sm:%s3593]
        %4057 = vst [vmem:[%s3601 + $0x38c] sm:%s3593] %v4056
        %v4058 = vld [vmem:[%s3600 + $0x390] sm:%s3593]
        %4059 = vst [vmem:[%s3601 + $0x390] sm:%s3593] %v4058
        %v4060 = vld [vmem:[%s3600 + $0x398] sm:%s3593]
        %4061 = vst [vmem:[%s3601 + $0x394] sm:%s3593] %v4060
        %v4062 = vld [vmem:[%s3600 + $0x394] sm:%s3593]
        %4063 = vst [vmem:[%s3601 + $0x398] sm:%s3593] %v4062
        %v4064 = vld [vmem:[%s3600 + $0x39c] sm:%s3593]
        %4065 = vst [vmem:[%s3601 + $0x39c] sm:%s3593] %v4064
        %v4066 = vld [vmem:[%s3600 + $0x3a0] sm:%s3593]
        %4067 = vst [vmem:[%s3601 + $0x3a0] sm:%s3593] %v4066
        %v4068 = vld [vmem:[%s3600 + $0x3a8] sm:%s3593]
        %4069 = vst [vmem:[%s3601 + $0x3a4] sm:%s3593] %v4068
        %v4070 = vld [vmem:[%s3600 + $0x3a4] sm:%s3593]
        %4071 = vst [vmem:[%s3601 + $0x3a8] sm:%s3593] %v4070
        %v4072 = vld [vmem:[%s3600 + $0x3ac] sm:%s3593]
        %4073 = vst [vmem:[%s3601 + $0x3ac] sm:%s3593] %v4072
        %v4074 = vld [vmem:[%s3600 + $0x3b0] sm:%s3593]
        %4075 = vst [vmem:[%s3601 + $0x3b0] sm:%s3593] %v4074
        %v4076 = vld [vmem:[%s3600 + $0x3b8] sm:%s3593]
        %4077 = vst [vmem:[%s3601 + $0x3b4] sm:%s3593] %v4076
        %v4078 = vld [vmem:[%s3600 + $0x3b4] sm:%s3593]
        %4079 = vst [vmem:[%s3601 + $0x3b8] sm:%s3593] %v4078
        %v4080 = vld [vmem:[%s3600 + $0x3bc] sm:%s3593]
        %4081 = vst [vmem:[%s3601 + $0x3bc] sm:%s3593] %v4080
        %v4082 = vld [vmem:[%s3600 + $0x3c0] sm:%s3593]
        %4083 = vst [vmem:[%s3601 + $0x3c0] sm:%s3593] %v4082
        %v4084 = vld [vmem:[%s3600 + $0x3c8] sm:%s3593]
        %4085 = vst [vmem:[%s3601 + $0x3c4] sm:%s3593] %v4084
        %v4086 = vld [vmem:[%s3600 + $0x3c4] sm:%s3593]
        %4087 = vst [vmem:[%s3601 + $0x3c8] sm:%s3593] %v4086
        %v4088 = vld [vmem:[%s3600 + $0x3cc] sm:%s3593]
        %4089 = vst [vmem:[%s3601 + $0x3cc] sm:%s3593] %v4088
        %v4090 = vld [vmem:[%s3600 + $0x3d0] sm:%s3593]
        %4091 = vst [vmem:[%s3601 + $0x3d0] sm:%s3593] %v4090
        %v4092 = vld [vmem:[%s3600 + $0x3d8] sm:%s3593]
        %4093 = vst [vmem:[%s3601 + $0x3d4] sm:%s3593] %v4092
        %v4094 = vld [vmem:[%s3600 + $0x3d4] sm:%s3593]
        %4095 = vst [vmem:[%s3601 + $0x3d8] sm:%s3593] %v4094
        %v4096 = vld [vmem:[%s3600 + $0x3dc] sm:%s3593]
        %4097 = vst [vmem:[%s3601 + $0x3dc] sm:%s3593] %v4096
        %v4098 = vld [vmem:[%s3600 + $0x3e0] sm:%s3593]
        %4099 = vst [vmem:[%s3601 + $0x3e0] sm:%s3593] %v4098
        %v4100 = vld [vmem:[%s3600 + $0x3e8] sm:%s3593]
        %4101 = vst [vmem:[%s3601 + $0x3e4] sm:%s3593] %v4100
        %v4102 = vld [vmem:[%s3600 + $0x3e4] sm:%s3593]
        %4103 = vst [vmem:[%s3601 + $0x3e8] sm:%s3593] %v4102
        %v4104 = vld [vmem:[%s3600 + $0x3ec] sm:%s3593]
        %4105 = vst [vmem:[%s3601 + $0x3ec] sm:%s3593] %v4104
        %v4106 = vld [vmem:[%s3600 + $0x3f0] sm:%s3593]
        %4107 = vst [vmem:[%s3601 + $0x3f0] sm:%s3593] %v4106
        %v4108 = vld [vmem:[%s3600 + $0x3f8] sm:%s3593]
        %4109 = vst [vmem:[%s3601 + $0x3f4] sm:%s3593] %v4108
        %v4110 = vld [vmem:[%s3600 + $0x3f4] sm:%s3593]
        %4111 = vst [vmem:[%s3601 + $0x3f8] sm:%s3593] %v4110
        %v4112 = vld [vmem:[%s3600 + $0x3fc] sm:%s3593]
        %4113 = vst [vmem:[%s3601 + $0x3fc] sm:%s3593] %v4112
        %v4114 = vld [vmem:[%s3600 + $0x400] sm:%s3593]
        %4115 = vst [vmem:[%s3601 + $0x400] sm:%s3593] %v4114
        %v4116 = vld [vmem:[%s3600 + $0x408] sm:%s3593]
        %4117 = vst [vmem:[%s3601 + $0x404] sm:%s3593] %v4116
        %v4118 = vld [vmem:[%s3600 + $0x404] sm:%s3593]
        %4119 = vst [vmem:[%s3601 + $0x408] sm:%s3593] %v4118
        %v4120 = vld [vmem:[%s3600 + $0x40c] sm:%s3593]
        %4121 = vst [vmem:[%s3601 + $0x40c] sm:%s3593] %v4120
        %v4122 = vld [vmem:[%s3600 + $0x410] sm:%s3593]
        %4123 = vst [vmem:[%s3601 + $0x410] sm:%s3593] %v4122
        %v4124 = vld [vmem:[%s3600 + $0x418] sm:%s3593]
        %4125 = vst [vmem:[%s3601 + $0x414] sm:%s3593] %v4124
        %v4126 = vld [vmem:[%s3600 + $0x414] sm:%s3593]
        %4127 = vst [vmem:[%s3601 + $0x418] sm:%s3593] %v4126
        %v4128 = vld [vmem:[%s3600 + $0x41c] sm:%s3593]
        %4129 = vst [vmem:[%s3601 + $0x41c] sm:%s3593] %v4128
        %v4130 = vld [vmem:[%s3600 + $0x420] sm:%s3593]
        %4131 = vst [vmem:[%s3601 + $0x420] sm:%s3593] %v4130
        %v4132 = vld [vmem:[%s3600 + $0x428] sm:%s3593]
        %4133 = vst [vmem:[%s3601 + $0x424] sm:%s3593] %v4132
        %v4134 = vld [vmem:[%s3600 + $0x424] sm:%s3593]
        %4135 = vst [vmem:[%s3601 + $0x428] sm:%s3593] %v4134
        %v4136 = vld [vmem:[%s3600 + $0x42c] sm:%s3593]
        %4137 = vst [vmem:[%s3601 + $0x42c] sm:%s3593] %v4136
        %v4138 = vld [vmem:[%s3600 + $0x430] sm:%s3593]
        %4139 = vst [vmem:[%s3601 + $0x430] sm:%s3593] %v4138
        %v4140 = vld [vmem:[%s3600 + $0x438] sm:%s3593]
        %4141 = vst [vmem:[%s3601 + $0x434] sm:%s3593] %v4140
        %v4142 = vld [vmem:[%s3600 + $0x434] sm:%s3593]
        %4143 = vst [vmem:[%s3601 + $0x438] sm:%s3593] %v4142
        %v4144 = vld [vmem:[%s3600 + $0x43c] sm:%s3593]
        %4145 = vst [vmem:[%s3601 + $0x43c] sm:%s3593] %v4144
        %v4146 = vld [vmem:[%s3600 + $0x440] sm:%s3593]
        %4147 = vst [vmem:[%s3601 + $0x440] sm:%s3593] %v4146
        %v4148 = vld [vmem:[%s3600 + $0x448] sm:%s3593]
        %4149 = vst [vmem:[%s3601 + $0x444] sm:%s3593] %v4148
        %v4150 = vld [vmem:[%s3600 + $0x444] sm:%s3593]
        %4151 = vst [vmem:[%s3601 + $0x448] sm:%s3593] %v4150
        %v4152 = vld [vmem:[%s3600 + $0x44c] sm:%s3593]
        %4153 = vst [vmem:[%s3601 + $0x44c] sm:%s3593] %v4152
        %v4154 = vld [vmem:[%s3600 + $0x450] sm:%s3593]
        %4155 = vst [vmem:[%s3601 + $0x450] sm:%s3593] %v4154
        %v4156 = vld [vmem:[%s3600 + $0x458] sm:%s3593]
        %4157 = vst [vmem:[%s3601 + $0x454] sm:%s3593] %v4156
        %v4158 = vld [vmem:[%s3600 + $0x454] sm:%s3593]
        %4159 = vst [vmem:[%s3601 + $0x458] sm:%s3593] %v4158
        %v4160 = vld [vmem:[%s3600 + $0x45c] sm:%s3593]
        %4161 = vst [vmem:[%s3601 + $0x45c] sm:%s3593] %v4160
        %v4162 = vld [vmem:[%s3600 + $0x460] sm:%s3593]
        %4163 = vst [vmem:[%s3601 + $0x460] sm:%s3593] %v4162
        %v4164 = vld [vmem:[%s3600 + $0x468] sm:%s3593]
        %4165 = vst [vmem:[%s3601 + $0x464] sm:%s3593] %v4164
        %v4166 = vld [vmem:[%s3600 + $0x464] sm:%s3593]
        %4167 = vst [vmem:[%s3601 + $0x468] sm:%s3593] %v4166
        %v4168 = vld [vmem:[%s3600 + $0x46c] sm:%s3593]
        %4169 = vst [vmem:[%s3601 + $0x46c] sm:%s3593] %v4168
        %v4170 = vld [vmem:[%s3600 + $0x470] sm:%s3593]
        %4171 = vst [vmem:[%s3601 + $0x470] sm:%s3593] %v4170
        %v4172 = vld [vmem:[%s3600 + $0x478] sm:%s3593]
        %4173 = vst [vmem:[%s3601 + $0x474] sm:%s3593] %v4172
        %v4174 = vld [vmem:[%s3600 + $0x474] sm:%s3593]
        %4175 = vst [vmem:[%s3601 + $0x478] sm:%s3593] %v4174
        %v4176 = vld [vmem:[%s3600 + $0x47c] sm:%s3593]
        %4177 = vst [vmem:[%s3601 + $0x47c] sm:%s3593] %v4176
        %v4178 = vld [vmem:[%s3600 + $0x480] sm:%s3593]
        %4179 = vst [vmem:[%s3601 + $0x480] sm:%s3593] %v4178
        %v4180 = vld [vmem:[%s3600 + $0x488] sm:%s3593]
        %4181 = vst [vmem:[%s3601 + $0x484] sm:%s3593] %v4180
        %v4182 = vld [vmem:[%s3600 + $0x484] sm:%s3593]
        %4183 = vst [vmem:[%s3601 + $0x488] sm:%s3593] %v4182
        %v4184 = vld [vmem:[%s3600 + $0x48c] sm:%s3593]
        %4185 = vst [vmem:[%s3601 + $0x48c] sm:%s3593] %v4184
        %v4186 = vld [vmem:[%s3600 + $0x490] sm:%s3593]
        %4187 = vst [vmem:[%s3601 + $0x490] sm:%s3593] %v4186
        %v4188 = vld [vmem:[%s3600 + $0x498] sm:%s3593]
        %4189 = vst [vmem:[%s3601 + $0x494] sm:%s3593] %v4188
        %v4190 = vld [vmem:[%s3600 + $0x494] sm:%s3593]
        %4191 = vst [vmem:[%s3601 + $0x498] sm:%s3593] %v4190
        %v4192 = vld [vmem:[%s3600 + $0x49c] sm:%s3593]
        %4193 = vst [vmem:[%s3601 + $0x49c] sm:%s3593] %v4192
        %v4194 = vld [vmem:[%s3600 + $0x4a0] sm:%s3593]
        %4195 = vst [vmem:[%s3601 + $0x4a0] sm:%s3593] %v4194
        %v4196 = vld [vmem:[%s3600 + $0x4a8] sm:%s3593]
        %4197 = vst [vmem:[%s3601 + $0x4a4] sm:%s3593] %v4196
        %v4198 = vld [vmem:[%s3600 + $0x4a4] sm:%s3593]
        %4199 = vst [vmem:[%s3601 + $0x4a8] sm:%s3593] %v4198
        %v4200 = vld [vmem:[%s3600 + $0x4ac] sm:%s3593]
        %4201 = vst [vmem:[%s3601 + $0x4ac] sm:%s3593] %v4200
        %v4202 = vld [vmem:[%s3600 + $0x4b0] sm:%s3593]
        %4203 = vst [vmem:[%s3601 + $0x4b0] sm:%s3593] %v4202
        %v4204 = vld [vmem:[%s3600 + $0x4b8] sm:%s3593]
        %4205 = vst [vmem:[%s3601 + $0x4b4] sm:%s3593] %v4204
        %v4206 = vld [vmem:[%s3600 + $0x4b4] sm:%s3593]
        %4207 = vst [vmem:[%s3601 + $0x4b8] sm:%s3593] %v4206
        %v4208 = vld [vmem:[%s3600 + $0x4bc] sm:%s3593]
        %4209 = vst [vmem:[%s3601 + $0x4bc] sm:%s3593] %v4208
        %v4210 = vld [vmem:[%s3600 + $0x4c0] sm:%s3593]
        %4211 = vst [vmem:[%s3601 + $0x4c0] sm:%s3593] %v4210
        %v4212 = vld [vmem:[%s3600 + $0x4c8] sm:%s3593]
        %4213 = vst [vmem:[%s3601 + $0x4c4] sm:%s3593] %v4212
        %v4214 = vld [vmem:[%s3600 + $0x4c4] sm:%s3593]
        %4215 = vst [vmem:[%s3601 + $0x4c8] sm:%s3593] %v4214
        %v4216 = vld [vmem:[%s3600 + $0x4cc] sm:%s3593]
        %4217 = vst [vmem:[%s3601 + $0x4cc] sm:%s3593] %v4216
        %v4218 = vld [vmem:[%s3600 + $0x4d0] sm:%s3593]
        %4219 = vst [vmem:[%s3601 + $0x4d0] sm:%s3593] %v4218
        %v4220 = vld [vmem:[%s3600 + $0x4d8] sm:%s3593]
        %4221 = vst [vmem:[%s3601 + $0x4d4] sm:%s3593] %v4220
        %v4222 = vld [vmem:[%s3600 + $0x4d4] sm:%s3593]
        %4223 = vst [vmem:[%s3601 + $0x4d8] sm:%s3593] %v4222
        %v4224 = vld [vmem:[%s3600 + $0x4dc] sm:%s3593]
        %4225 = vst [vmem:[%s3601 + $0x4dc] sm:%s3593] %v4224
        %v4226 = vld [vmem:[%s3600 + $0x4e0] sm:%s3593]
        %4227 = vst [vmem:[%s3601 + $0x4e0] sm:%s3593] %v4226
        %v4228 = vld [vmem:[%s3600 + $0x4e8] sm:%s3593]
        %4229 = vst [vmem:[%s3601 + $0x4e4] sm:%s3593] %v4228
        %v4230 = vld [vmem:[%s3600 + $0x4e4] sm:%s3593]
        %4231 = vst [vmem:[%s3601 + $0x4e8] sm:%s3593] %v4230
        %v4232 = vld [vmem:[%s3600 + $0x4ec] sm:%s3593]
        %4233 = vst [vmem:[%s3601 + $0x4ec] sm:%s3593] %v4232
        %v4234 = vld [vmem:[%s3600 + $0x4f0] sm:%s3593]
        %4235 = vst [vmem:[%s3601 + $0x4f0] sm:%s3593] %v4234
        %v4236 = vld [vmem:[%s3600 + $0x4f8] sm:%s3593]
        %4237 = vst [vmem:[%s3601 + $0x4f4] sm:%s3593] %v4236
        %v4238 = vld [vmem:[%s3600 + $0x4f4] sm:%s3593]
        %4239 = vst [vmem:[%s3601 + $0x4f8] sm:%s3593] %v4238
        %v4240 = vld [vmem:[%s3600 + $0x4fc] sm:%s3593]
        %4241 = vst [vmem:[%s3601 + $0x4fc] sm:%s3593] %v4240
        %v4242 = vld [vmem:[%s3600 + $0x500] sm:%s3593]
        %4243 = vst [vmem:[%s3601 + $0x500] sm:%s3593] %v4242
        %v4244 = vld [vmem:[%s3600 + $0x508] sm:%s3593]
        %4245 = vst [vmem:[%s3601 + $0x504] sm:%s3593] %v4244
        %v4246 = vld [vmem:[%s3600 + $0x504] sm:%s3593]
        %4247 = vst [vmem:[%s3601 + $0x508] sm:%s3593] %v4246
        %v4248 = vld [vmem:[%s3600 + $0x50c] sm:%s3593]
        %4249 = vst [vmem:[%s3601 + $0x50c] sm:%s3593] %v4248
        %v4250 = vld [vmem:[%s3600 + $0x510] sm:%s3593]
        %4251 = vst [vmem:[%s3601 + $0x510] sm:%s3593] %v4250
        %v4252 = vld [vmem:[%s3600 + $0x518] sm:%s3593]
        %4253 = vst [vmem:[%s3601 + $0x514] sm:%s3593] %v4252
        %v4254 = vld [vmem:[%s3600 + $0x514] sm:%s3593]
        %4255 = vst [vmem:[%s3601 + $0x518] sm:%s3593] %v4254
        %v4256 = vld [vmem:[%s3600 + $0x51c] sm:%s3593]
        %4257 = vst [vmem:[%s3601 + $0x51c] sm:%s3593] %v4256
        %v4258 = vld [vmem:[%s3600 + $0x520] sm:%s3593]
        %4259 = vst [vmem:[%s3601 + $0x520] sm:%s3593] %v4258
        %v4260 = vld [vmem:[%s3600 + $0x528] sm:%s3593]
        %4261 = vst [vmem:[%s3601 + $0x524] sm:%s3593] %v4260
        %v4262 = vld [vmem:[%s3600 + $0x524] sm:%s3593]
        %4263 = vst [vmem:[%s3601 + $0x528] sm:%s3593] %v4262
        %v4264 = vld [vmem:[%s3600 + $0x52c] sm:%s3593]
        %4265 = vst [vmem:[%s3601 + $0x52c] sm:%s3593] %v4264
        %v4266 = vld [vmem:[%s3600 + $0x530] sm:%s3593]
        %4267 = vst [vmem:[%s3601 + $0x530] sm:%s3593] %v4266
        %v4268 = vld [vmem:[%s3600 + $0x538] sm:%s3593]
        %4269 = vst [vmem:[%s3601 + $0x534] sm:%s3593] %v4268
        %v4270 = vld [vmem:[%s3600 + $0x534] sm:%s3593]
        %4271 = vst [vmem:[%s3601 + $0x538] sm:%s3593] %v4270
        %v4272 = vld [vmem:[%s3600 + $0x53c] sm:%s3593]
        %4273 = vst [vmem:[%s3601 + $0x53c] sm:%s3593] %v4272
        %v4274 = vld [vmem:[%s3600 + $0x540] sm:%s3593]
        %4275 = vst [vmem:[%s3601 + $0x540] sm:%s3593] %v4274
        %v4276 = vld [vmem:[%s3600 + $0x548] sm:%s3593]
        %4277 = vst [vmem:[%s3601 + $0x544] sm:%s3593] %v4276
        %v4278 = vld [vmem:[%s3600 + $0x544] sm:%s3593]
        %4279 = vst [vmem:[%s3601 + $0x548] sm:%s3593] %v4278
        %v4280 = vld [vmem:[%s3600 + $0x54c] sm:%s3593]
        %4281 = vst [vmem:[%s3601 + $0x54c] sm:%s3593] %v4280
        %v4282 = vld [vmem:[%s3600 + $0x550] sm:%s3593]
        %4283 = vst [vmem:[%s3601 + $0x550] sm:%s3593] %v4282
        %v4284 = vld [vmem:[%s3600 + $0x558] sm:%s3593]
        %4285 = vst [vmem:[%s3601 + $0x554] sm:%s3593] %v4284
        %v4286 = vld [vmem:[%s3600 + $0x554] sm:%s3593]
        %4287 = vst [vmem:[%s3601 + $0x558] sm:%s3593] %v4286
        %v4288 = vld [vmem:[%s3600 + $0x55c] sm:%s3593]
        %4289 = vst [vmem:[%s3601 + $0x55c] sm:%s3593] %v4288
        %v4290 = vld [vmem:[%s3600 + $0x560] sm:%s3593]
        %4291 = vst [vmem:[%s3601 + $0x560] sm:%s3593] %v4290
        %v4292 = vld [vmem:[%s3600 + $0x568] sm:%s3593]
        %4293 = vst [vmem:[%s3601 + $0x564] sm:%s3593] %v4292
        %v4294 = vld [vmem:[%s3600 + $0x564] sm:%s3593]
        %4295 = vst [vmem:[%s3601 + $0x568] sm:%s3593] %v4294
        %v4296 = vld [vmem:[%s3600 + $0x56c] sm:%s3593]
        %4297 = vst [vmem:[%s3601 + $0x56c] sm:%s3593] %v4296
        %v4298 = vld [vmem:[%s3600 + $0x570] sm:%s3593]
        %4299 = vst [vmem:[%s3601 + $0x570] sm:%s3593] %v4298
        %v4300 = vld [vmem:[%s3600 + $0x578] sm:%s3593]
        %4301 = vst [vmem:[%s3601 + $0x574] sm:%s3593] %v4300
        %v4302 = vld [vmem:[%s3600 + $0x574] sm:%s3593]
        %4303 = vst [vmem:[%s3601 + $0x578] sm:%s3593] %v4302
        %v4304 = vld [vmem:[%s3600 + $0x57c] sm:%s3593]
        %4305 = vst [vmem:[%s3601 + $0x57c] sm:%s3593] %v4304
        %v4306 = vld [vmem:[%s3600 + $0x580] sm:%s3593]
        %4307 = vst [vmem:[%s3601 + $0x580] sm:%s3593] %v4306
        %v4308 = vld [vmem:[%s3600 + $0x588] sm:%s3593]
        %4309 = vst [vmem:[%s3601 + $0x584] sm:%s3593] %v4308
        %v4310 = vld [vmem:[%s3600 + $0x584] sm:%s3593]
        %4311 = vst [vmem:[%s3601 + $0x588] sm:%s3593] %v4310
        %v4312 = vld [vmem:[%s3600 + $0x58c] sm:%s3593]
        %4313 = vst [vmem:[%s3601 + $0x58c] sm:%s3593] %v4312
        %v4314 = vld [vmem:[%s3600 + $0x590] sm:%s3593]
        %4315 = vst [vmem:[%s3601 + $0x590] sm:%s3593] %v4314
        %v4316 = vld [vmem:[%s3600 + $0x598] sm:%s3593]
        %4317 = vst [vmem:[%s3601 + $0x594] sm:%s3593] %v4316
        %v4318 = vld [vmem:[%s3600 + $0x594] sm:%s3593]
        %4319 = vst [vmem:[%s3601 + $0x598] sm:%s3593] %v4318
        %v4320 = vld [vmem:[%s3600 + $0x59c] sm:%s3593]
        %4321 = vst [vmem:[%s3601 + $0x59c] sm:%s3593] %v4320
        %v4322 = vld [vmem:[%s3600 + $0x5a0] sm:%s3593]
        %4323 = vst [vmem:[%s3601 + $0x5a0] sm:%s3593] %v4322
        %v4324 = vld [vmem:[%s3600 + $0x5a8] sm:%s3593]
        %4325 = vst [vmem:[%s3601 + $0x5a4] sm:%s3593] %v4324
        %v4326 = vld [vmem:[%s3600 + $0x5a4] sm:%s3593]
        %4327 = vst [vmem:[%s3601 + $0x5a8] sm:%s3593] %v4326
        %v4328 = vld [vmem:[%s3600 + $0x5ac] sm:%s3593]
        %4329 = vst [vmem:[%s3601 + $0x5ac] sm:%s3593] %v4328
        %v4330 = vld [vmem:[%s3600 + $0x5b0] sm:%s3593]
        %4331 = vst [vmem:[%s3601 + $0x5b0] sm:%s3593] %v4330
        %v4332 = vld [vmem:[%s3600 + $0x5b8] sm:%s3593]
        %4333 = vst [vmem:[%s3601 + $0x5b4] sm:%s3593] %v4332
        %v4334 = vld [vmem:[%s3600 + $0x5b4] sm:%s3593]
        %4335 = vst [vmem:[%s3601 + $0x5b8] sm:%s3593] %v4334
        %v4336 = vld [vmem:[%s3600 + $0x5bc] sm:%s3593]
        %4337 = vst [vmem:[%s3601 + $0x5bc] sm:%s3593] %v4336
        %v4338 = vld [vmem:[%s3600 + $0x5c0] sm:%s3593]
        %4339 = vst [vmem:[%s3601 + $0x5c0] sm:%s3593] %v4338
        %v4340 = vld [vmem:[%s3600 + $0x5c8] sm:%s3593]
        %4341 = vst [vmem:[%s3601 + $0x5c4] sm:%s3593] %v4340
        %v4342 = vld [vmem:[%s3600 + $0x5c4] sm:%s3593]
        %4343 = vst [vmem:[%s3601 + $0x5c8] sm:%s3593] %v4342
        %v4344 = vld [vmem:[%s3600 + $0x5cc] sm:%s3593]
        %4345 = vst [vmem:[%s3601 + $0x5cc] sm:%s3593] %v4344
        %v4346 = vld [vmem:[%s3600 + $0x5d0] sm:%s3593]
        %4347 = vst [vmem:[%s3601 + $0x5d0] sm:%s3593] %v4346
        %v4348 = vld [vmem:[%s3600 + $0x5d8] sm:%s3593]
        %4349 = vst [vmem:[%s3601 + $0x5d4] sm:%s3593] %v4348
        %v4350 = vld [vmem:[%s3600 + $0x5d4] sm:%s3593]
        %4351 = vst [vmem:[%s3601 + $0x5d8] sm:%s3593] %v4350
        %v4352 = vld [vmem:[%s3600 + $0x5dc] sm:%s3593]
        %4353 = vst [vmem:[%s3601 + $0x5dc] sm:%s3593] %v4352
        %v4354 = vld [vmem:[%s3600 + $0x5e0] sm:%s3593]
        %4355 = vst [vmem:[%s3601 + $0x5e0] sm:%s3593] %v4354
        %v4356 = vld [vmem:[%s3600 + $0x5e8] sm:%s3593]
        %4357 = vst [vmem:[%s3601 + $0x5e4] sm:%s3593] %v4356
        %v4358 = vld [vmem:[%s3600 + $0x5e4] sm:%s3593]
        %4359 = vst [vmem:[%s3601 + $0x5e8] sm:%s3593] %v4358
        %v4360 = vld [vmem:[%s3600 + $0x5ec] sm:%s3593]
        %4361 = vst [vmem:[%s3601 + $0x5ec] sm:%s3593] %v4360
        %v4362 = vld [vmem:[%s3600 + $0x5f0] sm:%s3593]
        %4363 = vst [vmem:[%s3601 + $0x5f0] sm:%s3593] %v4362
        %v4364 = vld [vmem:[%s3600 + $0x5f8] sm:%s3593]
        %4365 = vst [vmem:[%s3601 + $0x5f4] sm:%s3593] %v4364
        %v4366 = vld [vmem:[%s3600 + $0x5f4] sm:%s3593]
        %4367 = vst [vmem:[%s3601 + $0x5f8] sm:%s3593] %v4366
        %v4368 = vld [vmem:[%s3600 + $0x5fc] sm:%s3593]
        %4369 = vst [vmem:[%s3601 + $0x5fc] sm:%s3593] %v4368
        %v4370 = vld [vmem:[%s3600 + $0x600] sm:%s3593]
        %4371 = vst [vmem:[%s3601 + $0x600] sm:%s3593] %v4370
        %v4372 = vld [vmem:[%s3600 + $0x608] sm:%s3593]
        %4373 = vst [vmem:[%s3601 + $0x604] sm:%s3593] %v4372
        %v4374 = vld [vmem:[%s3600 + $0x604] sm:%s3593]
        %4375 = vst [vmem:[%s3601 + $0x608] sm:%s3593] %v4374
        %v4376 = vld [vmem:[%s3600 + $0x60c] sm:%s3593]
        %4377 = vst [vmem:[%s3601 + $0x60c] sm:%s3593] %v4376
        %v4378 = vld [vmem:[%s3600 + $0x610] sm:%s3593]
        %4379 = vst [vmem:[%s3601 + $0x610] sm:%s3593] %v4378
        %v4380 = vld [vmem:[%s3600 + $0x618] sm:%s3593]
        %4381 = vst [vmem:[%s3601 + $0x614] sm:%s3593] %v4380
        %v4382 = vld [vmem:[%s3600 + $0x614] sm:%s3593]
        %4383 = vst [vmem:[%s3601 + $0x618] sm:%s3593] %v4382
        %v4384 = vld [vmem:[%s3600 + $0x61c] sm:%s3593]
        %4385 = vst [vmem:[%s3601 + $0x61c] sm:%s3593] %v4384
        %v4386 = vld [vmem:[%s3600 + $0x620] sm:%s3593]
        %4387 = vst [vmem:[%s3601 + $0x620] sm:%s3593] %v4386
        %v4388 = vld [vmem:[%s3600 + $0x628] sm:%s3593]
        %4389 = vst [vmem:[%s3601 + $0x624] sm:%s3593] %v4388
        %v4390 = vld [vmem:[%s3600 + $0x624] sm:%s3593]
        %4391 = vst [vmem:[%s3601 + $0x628] sm:%s3593] %v4390
        %v4392 = vld [vmem:[%s3600 + $0x62c] sm:%s3593]
        %4393 = vst [vmem:[%s3601 + $0x62c] sm:%s3593] %v4392
        %v4394 = vld [vmem:[%s3600 + $0x630] sm:%s3593]
        %4395 = vst [vmem:[%s3601 + $0x630] sm:%s3593] %v4394
        %v4396 = vld [vmem:[%s3600 + $0x638] sm:%s3593]
        %4397 = vst [vmem:[%s3601 + $0x634] sm:%s3593] %v4396
        %v4398 = vld [vmem:[%s3600 + $0x634] sm:%s3593]
        %4399 = vst [vmem:[%s3601 + $0x638] sm:%s3593] %v4398
        %v4400 = vld [vmem:[%s3600 + $0x63c] sm:%s3593]
        %4401 = vst [vmem:[%s3601 + $0x63c] sm:%s3593] %v4400
        %v4402 = vld [vmem:[%s3600 + $0x640] sm:%s3593]
        %4403 = vst [vmem:[%s3601 + $0x640] sm:%s3593] %v4402
        %v4404 = vld [vmem:[%s3600 + $0x648] sm:%s3593]
        %4405 = vst [vmem:[%s3601 + $0x644] sm:%s3593] %v4404
        %v4406 = vld [vmem:[%s3600 + $0x644] sm:%s3593]
        %4407 = vst [vmem:[%s3601 + $0x648] sm:%s3593] %v4406
        %v4408 = vld [vmem:[%s3600 + $0x64c] sm:%s3593]
        %4409 = vst [vmem:[%s3601 + $0x64c] sm:%s3593] %v4408
        %v4410 = vld [vmem:[%s3600 + $0x650] sm:%s3593]
        %4411 = vst [vmem:[%s3601 + $0x650] sm:%s3593] %v4410
        %v4412 = vld [vmem:[%s3600 + $0x658] sm:%s3593]
        %4413 = vst [vmem:[%s3601 + $0x654] sm:%s3593] %v4412
        %v4414 = vld [vmem:[%s3600 + $0x654] sm:%s3593]
        %4415 = vst [vmem:[%s3601 + $0x658] sm:%s3593] %v4414
        %v4416 = vld [vmem:[%s3600 + $0x65c] sm:%s3593]
        %4417 = vst [vmem:[%s3601 + $0x65c] sm:%s3593] %v4416
        %v4418 = vld [vmem:[%s3600 + $0x660] sm:%s3593]
        %4419 = vst [vmem:[%s3601 + $0x660] sm:%s3593] %v4418
        %v4420 = vld [vmem:[%s3600 + $0x668] sm:%s3593]
        %4421 = vst [vmem:[%s3601 + $0x664] sm:%s3593] %v4420
        %v4422 = vld [vmem:[%s3600 + $0x664] sm:%s3593]
        %4423 = vst [vmem:[%s3601 + $0x668] sm:%s3593] %v4422
        %v4424 = vld [vmem:[%s3600 + $0x66c] sm:%s3593]
        %4425 = vst [vmem:[%s3601 + $0x66c] sm:%s3593] %v4424
        %v4426 = vld [vmem:[%s3600 + $0x670] sm:%s3593]
        %4427 = vst [vmem:[%s3601 + $0x670] sm:%s3593] %v4426
        %v4428 = vld [vmem:[%s3600 + $0x678] sm:%s3593]
        %4429 = vst [vmem:[%s3601 + $0x674] sm:%s3593] %v4428
        %v4430 = vld [vmem:[%s3600 + $0x674] sm:%s3593]
        %4431 = vst [vmem:[%s3601 + $0x678] sm:%s3593] %v4430
        %v4432 = vld [vmem:[%s3600 + $0x67c] sm:%s3593]
        %4433 = vst [vmem:[%s3601 + $0x67c] sm:%s3593] %v4432
        %v4434 = vld [vmem:[%s3600 + $0x680] sm:%s3593]
        %4435 = vst [vmem:[%s3601 + $0x680] sm:%s3593] %v4434
        %v4436 = vld [vmem:[%s3600 + $0x688] sm:%s3593]
        %4437 = vst [vmem:[%s3601 + $0x684] sm:%s3593] %v4436
        %v4438 = vld [vmem:[%s3600 + $0x684] sm:%s3593]
        %4439 = vst [vmem:[%s3601 + $0x688] sm:%s3593] %v4438
        %v4440 = vld [vmem:[%s3600 + $0x68c] sm:%s3593]
        %4441 = vst [vmem:[%s3601 + $0x68c] sm:%s3593] %v4440
        %v4442 = vld [vmem:[%s3600 + $0x690] sm:%s3593]
        %4443 = vst [vmem:[%s3601 + $0x690] sm:%s3593] %v4442
        %v4444 = vld [vmem:[%s3600 + $0x698] sm:%s3593]
        %4445 = vst [vmem:[%s3601 + $0x694] sm:%s3593] %v4444
        %v4446 = vld [vmem:[%s3600 + $0x694] sm:%s3593]
        %4447 = vst [vmem:[%s3601 + $0x698] sm:%s3593] %v4446
        %v4448 = vld [vmem:[%s3600 + $0x69c] sm:%s3593]
        %4449 = vst [vmem:[%s3601 + $0x69c] sm:%s3593] %v4448
        %v4450 = vld [vmem:[%s3600 + $0x6a0] sm:%s3593]
        %4451 = vst [vmem:[%s3601 + $0x6a0] sm:%s3593] %v4450
        %v4452 = vld [vmem:[%s3600 + $0x6a8] sm:%s3593]
        %4453 = vst [vmem:[%s3601 + $0x6a4] sm:%s3593] %v4452
        %v4454 = vld [vmem:[%s3600 + $0x6a4] sm:%s3593]
        %4455 = vst [vmem:[%s3601 + $0x6a8] sm:%s3593] %v4454
        %v4456 = vld [vmem:[%s3600 + $0x6ac] sm:%s3593]
        %4457 = vst [vmem:[%s3601 + $0x6ac] sm:%s3593] %v4456
        %v4458 = vld [vmem:[%s3600 + $0x6b0] sm:%s3593]
        %4459 = vst [vmem:[%s3601 + $0x6b0] sm:%s3593] %v4458
        %v4460 = vld [vmem:[%s3600 + $0x6b8] sm:%s3593]
        %4461 = vst [vmem:[%s3601 + $0x6b4] sm:%s3593] %v4460
        %v4462 = vld [vmem:[%s3600 + $0x6b4] sm:%s3593]
        %4463 = vst [vmem:[%s3601 + $0x6b8] sm:%s3593] %v4462
        %v4464 = vld [vmem:[%s3600 + $0x6bc] sm:%s3593]
        %4465 = vst [vmem:[%s3601 + $0x6bc] sm:%s3593] %v4464
        %v4466 = vld [vmem:[%s3600 + $0x6c0] sm:%s3593]
        %4467 = vst [vmem:[%s3601 + $0x6c0] sm:%s3593] %v4466
        %v4468 = vld [vmem:[%s3600 + $0x6c8] sm:%s3593]
        %4469 = vst [vmem:[%s3601 + $0x6c4] sm:%s3593] %v4468
        %v4470 = vld [vmem:[%s3600 + $0x6c4] sm:%s3593]
        %4471 = vst [vmem:[%s3601 + $0x6c8] sm:%s3593] %v4470
        %v4472 = vld [vmem:[%s3600 + $0x6cc] sm:%s3593]
        %4473 = vst [vmem:[%s3601 + $0x6cc] sm:%s3593] %v4472
        %v4474 = vld [vmem:[%s3600 + $0x6d0] sm:%s3593]
        %4475 = vst [vmem:[%s3601 + $0x6d0] sm:%s3593] %v4474
        %v4476 = vld [vmem:[%s3600 + $0x6d8] sm:%s3593]
        %4477 = vst [vmem:[%s3601 + $0x6d4] sm:%s3593] %v4476
        %v4478 = vld [vmem:[%s3600 + $0x6d4] sm:%s3593]
        %4479 = vst [vmem:[%s3601 + $0x6d8] sm:%s3593] %v4478
        %v4480 = vld [vmem:[%s3600 + $0x6dc] sm:%s3593]
        %4481 = vst [vmem:[%s3601 + $0x6dc] sm:%s3593] %v4480
        %v4482 = vld [vmem:[%s3600 + $0x6e0] sm:%s3593]
        %4483 = vst [vmem:[%s3601 + $0x6e0] sm:%s3593] %v4482
        %v4484 = vld [vmem:[%s3600 + $0x6e8] sm:%s3593]
        %4485 = vst [vmem:[%s3601 + $0x6e4] sm:%s3593] %v4484
        %v4486 = vld [vmem:[%s3600 + $0x6e4] sm:%s3593]
        %4487 = vst [vmem:[%s3601 + $0x6e8] sm:%s3593] %v4486
        %v4488 = vld [vmem:[%s3600 + $0x6ec] sm:%s3593]
        %4489 = vst [vmem:[%s3601 + $0x6ec] sm:%s3593] %v4488
        %v4490 = vld [vmem:[%s3600 + $0x6f0] sm:%s3593]
        %4491 = vst [vmem:[%s3601 + $0x6f0] sm:%s3593] %v4490
        %v4492 = vld [vmem:[%s3600 + $0x6f8] sm:%s3593]
        %4493 = vst [vmem:[%s3601 + $0x6f4] sm:%s3593] %v4492
        %v4494 = vld [vmem:[%s3600 + $0x6f4] sm:%s3593]
        %4495 = vst [vmem:[%s3601 + $0x6f8] sm:%s3593] %v4494
        %v4496 = vld [vmem:[%s3600 + $0x6fc] sm:%s3593]
        %4497 = vst [vmem:[%s3601 + $0x6fc] sm:%s3593] %v4496
        %v4498 = vld [vmem:[%s3600 + $0x700] sm:%s3593]
        %4499 = vst [vmem:[%s3601 + $0x700] sm:%s3593] %v4498
        %v4500 = vld [vmem:[%s3600 + $0x708] sm:%s3593]
        %4501 = vst [vmem:[%s3601 + $0x704] sm:%s3593] %v4500
        %v4502 = vld [vmem:[%s3600 + $0x704] sm:%s3593]
        %4503 = vst [vmem:[%s3601 + $0x708] sm:%s3593] %v4502
        %v4504 = vld [vmem:[%s3600 + $0x70c] sm:%s3593]
        %4505 = vst [vmem:[%s3601 + $0x70c] sm:%s3593] %v4504
        %v4506 = vld [vmem:[%s3600 + $0x710] sm:%s3593]
        %4507 = vst [vmem:[%s3601 + $0x710] sm:%s3593] %v4506
        %v4508 = vld [vmem:[%s3600 + $0x718] sm:%s3593]
        %4509 = vst [vmem:[%s3601 + $0x714] sm:%s3593] %v4508
        %v4510 = vld [vmem:[%s3600 + $0x714] sm:%s3593]
        %4511 = vst [vmem:[%s3601 + $0x718] sm:%s3593] %v4510
        %v4512 = vld [vmem:[%s3600 + $0x71c] sm:%s3593]
        %4513 = vst [vmem:[%s3601 + $0x71c] sm:%s3593] %v4512
        %v4514 = vld [vmem:[%s3600 + $0x720] sm:%s3593]
        %4515 = vst [vmem:[%s3601 + $0x720] sm:%s3593] %v4514
        %v4516 = vld [vmem:[%s3600 + $0x728] sm:%s3593]
        %4517 = vst [vmem:[%s3601 + $0x724] sm:%s3593] %v4516
        %v4518 = vld [vmem:[%s3600 + $0x724] sm:%s3593]
        %4519 = vst [vmem:[%s3601 + $0x728] sm:%s3593] %v4518
        %v4520 = vld [vmem:[%s3600 + $0x72c] sm:%s3593]
        %4521 = vst [vmem:[%s3601 + $0x72c] sm:%s3593] %v4520
        %v4522 = vld [vmem:[%s3600 + $0x730] sm:%s3593]
        %4523 = vst [vmem:[%s3601 + $0x730] sm:%s3593] %v4522
        %v4524 = vld [vmem:[%s3600 + $0x738] sm:%s3593]
        %4525 = vst [vmem:[%s3601 + $0x734] sm:%s3593] %v4524
        %v4526 = vld [vmem:[%s3600 + $0x734] sm:%s3593]
        %4527 = vst [vmem:[%s3601 + $0x738] sm:%s3593] %v4526
        %v4528 = vld [vmem:[%s3600 + $0x73c] sm:%s3593]
        %4529 = vst [vmem:[%s3601 + $0x73c] sm:%s3593] %v4528
        %v4530 = vld [vmem:[%s3600 + $0x740] sm:%s3593]
        %4531 = vst [vmem:[%s3601 + $0x740] sm:%s3593] %v4530
        %v4532 = vld [vmem:[%s3600 + $0x748] sm:%s3593]
        %4533 = vst [vmem:[%s3601 + $0x744] sm:%s3593] %v4532
        %v4534 = vld [vmem:[%s3600 + $0x744] sm:%s3593]
        %4535 = vst [vmem:[%s3601 + $0x748] sm:%s3593] %v4534
        %v4536 = vld [vmem:[%s3600 + $0x74c] sm:%s3593]
        %4537 = vst [vmem:[%s3601 + $0x74c] sm:%s3593] %v4536
        %v4538 = vld [vmem:[%s3600 + $0x750] sm:%s3593]
        %4539 = vst [vmem:[%s3601 + $0x750] sm:%s3593] %v4538
        %v4540 = vld [vmem:[%s3600 + $0x758] sm:%s3593]
        %4541 = vst [vmem:[%s3601 + $0x754] sm:%s3593] %v4540
        %v4542 = vld [vmem:[%s3600 + $0x754] sm:%s3593]
        %4543 = vst [vmem:[%s3601 + $0x758] sm:%s3593] %v4542
        %v4544 = vld [vmem:[%s3600 + $0x75c] sm:%s3593]
        %4545 = vst [vmem:[%s3601 + $0x75c] sm:%s3593] %v4544
        %v4546 = vld [vmem:[%s3600 + $0x760] sm:%s3593]
        %4547 = vst [vmem:[%s3601 + $0x760] sm:%s3593] %v4546
        %v4548 = vld [vmem:[%s3600 + $0x768] sm:%s3593]
        %4549 = vst [vmem:[%s3601 + $0x764] sm:%s3593] %v4548
        %v4550 = vld [vmem:[%s3600 + $0x764] sm:%s3593]
        %4551 = vst [vmem:[%s3601 + $0x768] sm:%s3593] %v4550
        %v4552 = vld [vmem:[%s3600 + $0x76c] sm:%s3593]
        %4553 = vst [vmem:[%s3601 + $0x76c] sm:%s3593] %v4552
        %v4554 = vld [vmem:[%s3600 + $0x770] sm:%s3593]
        %4555 = vst [vmem:[%s3601 + $0x770] sm:%s3593] %v4554
        %v4556 = vld [vmem:[%s3600 + $0x778] sm:%s3593]
        %4557 = vst [vmem:[%s3601 + $0x774] sm:%s3593] %v4556
        %v4558 = vld [vmem:[%s3600 + $0x774] sm:%s3593]
        %4559 = vst [vmem:[%s3601 + $0x778] sm:%s3593] %v4558
        %v4560 = vld [vmem:[%s3600 + $0x77c] sm:%s3593]
        %4561 = vst [vmem:[%s3601 + $0x77c] sm:%s3593] %v4560
        %v4562 = vld [vmem:[%s3600 + $0x780] sm:%s3593]
        %4563 = vst [vmem:[%s3601 + $0x780] sm:%s3593] %v4562
        %v4564 = vld [vmem:[%s3600 + $0x788] sm:%s3593]
        %4565 = vst [vmem:[%s3601 + $0x784] sm:%s3593] %v4564
        %v4566 = vld [vmem:[%s3600 + $0x784] sm:%s3593]
        %4567 = vst [vmem:[%s3601 + $0x788] sm:%s3593] %v4566
        %v4568 = vld [vmem:[%s3600 + $0x78c] sm:%s3593]
        %4569 = vst [vmem:[%s3601 + $0x78c] sm:%s3593] %v4568
        %v4570 = vld [vmem:[%s3600 + $0x790] sm:%s3593]
        %4571 = vst [vmem:[%s3601 + $0x790] sm:%s3593] %v4570
        %v4572 = vld [vmem:[%s3600 + $0x798] sm:%s3593]
        %4573 = vst [vmem:[%s3601 + $0x794] sm:%s3593] %v4572
        %v4574 = vld [vmem:[%s3600 + $0x794] sm:%s3593]
        %4575 = vst [vmem:[%s3601 + $0x798] sm:%s3593] %v4574
        %v4576 = vld [vmem:[%s3600 + $0x79c] sm:%s3593]
        %4577 = vst [vmem:[%s3601 + $0x79c] sm:%s3593] %v4576
        %v4578 = vld [vmem:[%s3600 + $0x7a0] sm:%s3593]
        %4579 = vst [vmem:[%s3601 + $0x7a0] sm:%s3593] %v4578
        %v4580 = vld [vmem:[%s3600 + $0x7a8] sm:%s3593]
        %4581 = vst [vmem:[%s3601 + $0x7a4] sm:%s3593] %v4580
        %v4582 = vld [vmem:[%s3600 + $0x7a4] sm:%s3593]
        %4583 = vst [vmem:[%s3601 + $0x7a8] sm:%s3593] %v4582
        %v4584 = vld [vmem:[%s3600 + $0x7ac] sm:%s3593]
        %4585 = vst [vmem:[%s3601 + $0x7ac] sm:%s3593] %v4584
        %v4586 = vld [vmem:[%s3600 + $0x7b0] sm:%s3593]
        %4587 = vst [vmem:[%s3601 + $0x7b0] sm:%s3593] %v4586
        %v4588 = vld [vmem:[%s3600 + $0x7b8] sm:%s3593]
        %4589 = vst [vmem:[%s3601 + $0x7b4] sm:%s3593] %v4588
        %v4590 = vld [vmem:[%s3600 + $0x7b4] sm:%s3593]
        %4591 = vst [vmem:[%s3601 + $0x7b8] sm:%s3593] %v4590
        %v4592 = vld [vmem:[%s3600 + $0x7bc] sm:%s3593]
        %4593 = vst [vmem:[%s3601 + $0x7bc] sm:%s3593] %v4592
        %v4594 = vld [vmem:[%s3600 + $0x7c0] sm:%s3593]
        %4595 = vst [vmem:[%s3601 + $0x7c0] sm:%s3593] %v4594
        %v4596 = vld [vmem:[%s3600 + $0x7c8] sm:%s3593]
        %4597 = vst [vmem:[%s3601 + $0x7c4] sm:%s3593] %v4596
        %v4598 = vld [vmem:[%s3600 + $0x7c4] sm:%s3593]
        %4599 = vst [vmem:[%s3601 + $0x7c8] sm:%s3593] %v4598
        %v4600 = vld [vmem:[%s3600 + $0x7cc] sm:%s3593]
        %4601 = vst [vmem:[%s3601 + $0x7cc] sm:%s3593] %v4600
        %v4602 = vld [vmem:[%s3600 + $0x7d0] sm:%s3593]
        %4603 = vst [vmem:[%s3601 + $0x7d0] sm:%s3593] %v4602
        %v4604 = vld [vmem:[%s3600 + $0x7d8] sm:%s3593]
        %4605 = vst [vmem:[%s3601 + $0x7d4] sm:%s3593] %v4604
        %v4606 = vld [vmem:[%s3600 + $0x7d4] sm:%s3593]
        %4607 = vst [vmem:[%s3601 + $0x7d8] sm:%s3593] %v4606
        %v4608 = vld [vmem:[%s3600 + $0x7dc] sm:%s3593]
        %4609 = vst [vmem:[%s3601 + $0x7dc] sm:%s3593] %v4608
        %v4610 = vld [vmem:[%s3600 + $0x7e0] sm:%s3593]
        %4611 = vst [vmem:[%s3601 + $0x7e0] sm:%s3593] %v4610
        %v4612 = vld [vmem:[%s3600 + $0x7e8] sm:%s3593]
        %4613 = vst [vmem:[%s3601 + $0x7e4] sm:%s3593] %v4612
        %v4614 = vld [vmem:[%s3600 + $0x7e4] sm:%s3593]
        %4615 = vst [vmem:[%s3601 + $0x7e8] sm:%s3593] %v4614
        %v4616 = vld [vmem:[%s3600 + $0x7ec] sm:%s3593]
        %4617 = vst [vmem:[%s3601 + $0x7ec] sm:%s3593] %v4616
        %v4618 = vld [vmem:[%s3600 + $0x7f0] sm:%s3593]
        %4619 = vst [vmem:[%s3601 + $0x7f0] sm:%s3593] %v4618
        %v4620 = vld [vmem:[%s3600 + $0x7f8] sm:%s3593]
        %4621 = vst [vmem:[%s3601 + $0x7f4] sm:%s3593] %v4620
        %v4622 = vld [vmem:[%s3600 + $0x7f4] sm:%s3593]
        %4623 = vst [vmem:[%s3601 + $0x7f8] sm:%s3593] %v4622
        %v4624 = vld [vmem:[%s3600 + $0x7fc] sm:%s3593]
        %4625 = vst [vmem:[%s3601 + $0x7fc] sm:%s3593] %v4624
        %v4626 = vld [vmem:[%s3600 + $0x800] sm:%s3593]
        %4627 = vst [vmem:[%s3601 + $0x800] sm:%s3593] %v4626
        %v4628 = vld [vmem:[%s3600 + $0x808] sm:%s3593]
        %4629 = vst [vmem:[%s3601 + $0x804] sm:%s3593] %v4628
        %v4630 = vld [vmem:[%s3600 + $0x804] sm:%s3593]
        %4631 = vst [vmem:[%s3601 + $0x808] sm:%s3593] %v4630
        %v4632 = vld [vmem:[%s3600 + $0x80c] sm:%s3593]
        %4633 = vst [vmem:[%s3601 + $0x80c] sm:%s3593] %v4632
        %v4634 = vld [vmem:[%s3600 + $0x810] sm:%s3593]
        %4635 = vst [vmem:[%s3601 + $0x810] sm:%s3593] %v4634
        %v4636 = vld [vmem:[%s3600 + $0x818] sm:%s3593]
        %4637 = vst [vmem:[%s3601 + $0x814] sm:%s3593] %v4636
        %v4638 = vld [vmem:[%s3600 + $0x814] sm:%s3593]
        %4639 = vst [vmem:[%s3601 + $0x818] sm:%s3593] %v4638
        %v4640 = vld [vmem:[%s3600 + $0x81c] sm:%s3593]
        %4641 = vst [vmem:[%s3601 + $0x81c] sm:%s3593] %v4640
        %v4642 = vld [vmem:[%s3600 + $0x820] sm:%s3593]
        %4643 = vst [vmem:[%s3601 + $0x820] sm:%s3593] %v4642
        %v4644 = vld [vmem:[%s3600 + $0x828] sm:%s3593]
        %4645 = vst [vmem:[%s3601 + $0x824] sm:%s3593] %v4644
        %v4646 = vld [vmem:[%s3600 + $0x824] sm:%s3593]
        %4647 = vst [vmem:[%s3601 + $0x828] sm:%s3593] %v4646
        %v4648 = vld [vmem:[%s3600 + $0x82c] sm:%s3593]
        %4649 = vst [vmem:[%s3601 + $0x82c] sm:%s3593] %v4648
        %v4650 = vld [vmem:[%s3600 + $0x830] sm:%s3593]
        %4651 = vst [vmem:[%s3601 + $0x830] sm:%s3593] %v4650
        %v4652 = vld [vmem:[%s3600 + $0x838] sm:%s3593]
        %4653 = vst [vmem:[%s3601 + $0x834] sm:%s3593] %v4652
        %v4654 = vld [vmem:[%s3600 + $0x834] sm:%s3593]
        %4655 = vst [vmem:[%s3601 + $0x838] sm:%s3593] %v4654
        %v4656 = vld [vmem:[%s3600 + $0x83c] sm:%s3593]
        %4657 = vst [vmem:[%s3601 + $0x83c] sm:%s3593] %v4656
        %v4658 = vld [vmem:[%s3600 + $0x840] sm:%s3593]
        %4659 = vst [vmem:[%s3601 + $0x840] sm:%s3593] %v4658
        %v4660 = vld [vmem:[%s3600 + $0x848] sm:%s3593]
        %4661 = vst [vmem:[%s3601 + $0x844] sm:%s3593] %v4660
        %v4662 = vld [vmem:[%s3600 + $0x844] sm:%s3593]
        %4663 = vst [vmem:[%s3601 + $0x848] sm:%s3593] %v4662
        %v4664 = vld [vmem:[%s3600 + $0x84c] sm:%s3593]
        %4665 = vst [vmem:[%s3601 + $0x84c] sm:%s3593] %v4664
        %v4666 = vld [vmem:[%s3600 + $0x850] sm:%s3593]
        %4667 = vst [vmem:[%s3601 + $0x850] sm:%s3593] %v4666
        %v4668 = vld [vmem:[%s3600 + $0x858] sm:%s3593]
        %4669 = vst [vmem:[%s3601 + $0x854] sm:%s3593] %v4668
        %v4670 = vld [vmem:[%s3600 + $0x854] sm:%s3593]
        %4671 = vst [vmem:[%s3601 + $0x858] sm:%s3593] %v4670
        %v4672 = vld [vmem:[%s3600 + $0x85c] sm:%s3593]
        %4673 = vst [vmem:[%s3601 + $0x85c] sm:%s3593] %v4672
        %v4674 = vld [vmem:[%s3600 + $0x860] sm:%s3593]
        %4675 = vst [vmem:[%s3601 + $0x860] sm:%s3593] %v4674
        %v4676 = vld [vmem:[%s3600 + $0x868] sm:%s3593]
        %4677 = vst [vmem:[%s3601 + $0x864] sm:%s3593] %v4676
        %v4678 = vld [vmem:[%s3600 + $0x864] sm:%s3593]
        %4679 = vst [vmem:[%s3601 + $0x868] sm:%s3593] %v4678
        %v4680 = vld [vmem:[%s3600 + $0x86c] sm:%s3593]
        %4681 = vst [vmem:[%s3601 + $0x86c] sm:%s3593] %v4680
        %v4682 = vld [vmem:[%s3600 + $0x870] sm:%s3593]
        %4683 = vst [vmem:[%s3601 + $0x870] sm:%s3593] %v4682
        %v4684 = vld [vmem:[%s3600 + $0x878] sm:%s3593]
        %4685 = vst [vmem:[%s3601 + $0x874] sm:%s3593] %v4684
        %v4686 = vld [vmem:[%s3600 + $0x874] sm:%s3593]
        %4687 = vst [vmem:[%s3601 + $0x878] sm:%s3593] %v4686
        %v4688 = vld [vmem:[%s3600 + $0x87c] sm:%s3593]
        %4689 = vst [vmem:[%s3601 + $0x87c] sm:%s3593] %v4688
        %v4690 = vld [vmem:[%s3600 + $0x880] sm:%s3593]
        %4691 = vst [vmem:[%s3601 + $0x880] sm:%s3593] %v4690
        %v4692 = vld [vmem:[%s3600 + $0x888] sm:%s3593]
        %4693 = vst [vmem:[%s3601 + $0x884] sm:%s3593] %v4692
        %v4694 = vld [vmem:[%s3600 + $0x884] sm:%s3593]
        %4695 = vst [vmem:[%s3601 + $0x888] sm:%s3593] %v4694
        %v4696 = vld [vmem:[%s3600 + $0x88c] sm:%s3593]
        %4697 = vst [vmem:[%s3601 + $0x88c] sm:%s3593] %v4696
        %v4698 = vld [vmem:[%s3600 + $0x890] sm:%s3593]
        %4699 = vst [vmem:[%s3601 + $0x890] sm:%s3593] %v4698
        %v4700 = vld [vmem:[%s3600 + $0x898] sm:%s3593]
        %4701 = vst [vmem:[%s3601 + $0x894] sm:%s3593] %v4700
        %v4702 = vld [vmem:[%s3600 + $0x894] sm:%s3593]
        %4703 = vst [vmem:[%s3601 + $0x898] sm:%s3593] %v4702
        %v4704 = vld [vmem:[%s3600 + $0x89c] sm:%s3593]
        %4705 = vst [vmem:[%s3601 + $0x89c] sm:%s3593] %v4704
        %v4706 = vld [vmem:[%s3600 + $0x8a0] sm:%s3593]
        %4707 = vst [vmem:[%s3601 + $0x8a0] sm:%s3593] %v4706
        %v4708 = vld [vmem:[%s3600 + $0x8a8] sm:%s3593]
        %4709 = vst [vmem:[%s3601 + $0x8a4] sm:%s3593] %v4708
        %v4710 = vld [vmem:[%s3600 + $0x8a4] sm:%s3593]
        %4711 = vst [vmem:[%s3601 + $0x8a8] sm:%s3593] %v4710
        %v4712 = vld [vmem:[%s3600 + $0x8ac] sm:%s3593]
        %4713 = vst [vmem:[%s3601 + $0x8ac] sm:%s3593] %v4712
        %v4714 = vld [vmem:[%s3600 + $0x8b0] sm:%s3593]
        %4715 = vst [vmem:[%s3601 + $0x8b0] sm:%s3593] %v4714
        %v4716 = vld [vmem:[%s3600 + $0x8b8] sm:%s3593]
        %4717 = vst [vmem:[%s3601 + $0x8b4] sm:%s3593] %v4716
        %v4718 = vld [vmem:[%s3600 + $0x8b4] sm:%s3593]
        %4719 = vst [vmem:[%s3601 + $0x8b8] sm:%s3593] %v4718
        %v4720 = vld [vmem:[%s3600 + $0x8bc] sm:%s3593]
        %4721 = vst [vmem:[%s3601 + $0x8bc] sm:%s3593] %v4720
        %v4722 = vld [vmem:[%s3600 + $0x8c0] sm:%s3593]
        %4723 = vst [vmem:[%s3601 + $0x8c0] sm:%s3593] %v4722
        %v4724 = vld [vmem:[%s3600 + $0x8c8] sm:%s3593]
        %4725 = vst [vmem:[%s3601 + $0x8c4] sm:%s3593] %v4724
        %v4726 = vld [vmem:[%s3600 + $0x8c4] sm:%s3593]
        %4727 = vst [vmem:[%s3601 + $0x8c8] sm:%s3593] %v4726
        %v4728 = vld [vmem:[%s3600 + $0x8cc] sm:%s3593]
        %4729 = vst [vmem:[%s3601 + $0x8cc] sm:%s3593] %v4728
        %v4730 = vld [vmem:[%s3600 + $0x8d0] sm:%s3593]
        %4731 = vst [vmem:[%s3601 + $0x8d0] sm:%s3593] %v4730
        %v4732 = vld [vmem:[%s3600 + $0x8d8] sm:%s3593]
        %4733 = vst [vmem:[%s3601 + $0x8d4] sm:%s3593] %v4732
        %v4734 = vld [vmem:[%s3600 + $0x8d4] sm:%s3593]
        %4735 = vst [vmem:[%s3601 + $0x8d8] sm:%s3593] %v4734
        %v4736 = vld [vmem:[%s3600 + $0x8dc] sm:%s3593]
        %4737 = vst [vmem:[%s3601 + $0x8dc] sm:%s3593] %v4736
        %v4738 = vld [vmem:[%s3600 + $0x8e0] sm:%s3593]
        %4739 = vst [vmem:[%s3601 + $0x8e0] sm:%s3593] %v4738
        %v4740 = vld [vmem:[%s3600 + $0x8e8] sm:%s3593]
        %4741 = vst [vmem:[%s3601 + $0x8e4] sm:%s3593] %v4740
        %v4742 = vld [vmem:[%s3600 + $0x8e4] sm:%s3593]
        %4743 = vst [vmem:[%s3601 + $0x8e8] sm:%s3593] %v4742
        %v4744 = vld [vmem:[%s3600 + $0x8ec] sm:%s3593]
        %4745 = vst [vmem:[%s3601 + $0x8ec] sm:%s3593] %v4744
        %v4746 = vld [vmem:[%s3600 + $0x8f0] sm:%s3593]
        %4747 = vst [vmem:[%s3601 + $0x8f0] sm:%s3593] %v4746
        %v4748 = vld [vmem:[%s3600 + $0x8f8] sm:%s3593]
        %4749 = vst [vmem:[%s3601 + $0x8f4] sm:%s3593] %v4748
        %v4750 = vld [vmem:[%s3600 + $0x8f4] sm:%s3593]
        %4751 = vst [vmem:[%s3601 + $0x8f8] sm:%s3593] %v4750
        %v4752 = vld [vmem:[%s3600 + $0x8fc] sm:%s3593]
        %4753 = vst [vmem:[%s3601 + $0x8fc] sm:%s3593] %v4752
      $region123: #{learnloss_mix_forward.1} parent=110 // loop_footer
        %s3599 = sadd.s32 1, %s3595
      $region124: #{learnloss_mix_forward.1} parent=110 // loop_footer_branch
        %3594 = sbr.rel target = $region120
      $region125: #{learnloss_mix_forward.1} parent=110 // loop_exit
        _
    $region111: #{learnloss_mix_forward.1} parent=84 // pred_fallthru
      _
  $region85: #{learnloss_mix_forward.1} parent=0 // pred_fallthru
    _
  // Predicated region
  $region86: #{learnloss_mix_forward.1} parent=0 // pred_check
    %p74 = pneg %p70
  $region87: #{learnloss_mix_forward.1} parent=0 // pred_check_branch
    %76 = sbr.rel (%p74) target = $region89
  $region88: #{learnloss_mix_forward.1} parent=0 // pred_region
    %s77 = sshllo.u32 0, 4
    loop: start=0, step=1, limit=1
    $region90: #{learnloss_mix_forward.1} parent=88 // loop_pre_header
      _
    $region91: #{learnloss_mix_forward.1} parent=88 // loop_header
      %s79 = sphi 0, %s83
      %p80 = scmp.ge.s32.totalorder %s79, 1
      %s84 = sphi %s20, %s20
      %s85 = sphi [#allocation2], [#allocation2]
    $region92: #{learnloss_mix_forward.1} parent=88 // loop_header_branch
      %82 = sbr.rel (%p80) target = $region96
    $region93: #{learnloss_mix_forward.1} parent=88 // loop_body
      %v86 = vld [vmem:[%s84] sm:%s77]
      %87 = vst [vmem:[%s85] sm:%s77] %v86
      %v88 = vld [vmem:[%s84 + $0x8] sm:%s77]
      %89 = vst [vmem:[%s85 + $0x4] sm:%s77] %v88
      %v90 = vld [vmem:[%s84 + $0x4] sm:%s77]
      %91 = vst [vmem:[%s85 + $0x8] sm:%s77] %v90
      %v92 = vld [vmem:[%s84 + $0xc] sm:%s77]
      %93 = vst [vmem:[%s85 + $0xc] sm:%s77] %v92
      %v94 = vld [vmem:[%s84 + $0x10] sm:%s77]
      %95 = vst [vmem:[%s85 + $0x10] sm:%s77] %v94
      %v96 = vld [vmem:[%s84 + $0x18] sm:%s77]
      %97 = vst [vmem:[%s85 + $0x14] sm:%s77] %v96
      %v98 = vld [vmem:[%s84 + $0x14] sm:%s77]
      %99 = vst [vmem:[%s85 + $0x18] sm:%s77] %v98
      %v100 = vld [vmem:[%s84 + $0x1c] sm:%s77]
      %101 = vst [vmem:[%s85 + $0x1c] sm:%s77] %v100
      %v102 = vld [vmem:[%s84 + $0x20] sm:%s77]
      %103 = vst [vmem:[%s85 + $0x20] sm:%s77] %v102
      %v104 = vld [vmem:[%s84 + $0x28] sm:%s77]
      %105 = vst [vmem:[%s85 + $0x24] sm:%s77] %v104
      %v106 = vld [vmem:[%s84 + $0x24] sm:%s77]
      %107 = vst [vmem:[%s85 + $0x28] sm:%s77] %v106
      %v108 = vld [vmem:[%s84 + $0x2c] sm:%s77]
      %109 = vst [vmem:[%s85 + $0x2c] sm:%s77] %v108
      %v110 = vld [vmem:[%s84 + $0x30] sm:%s77]
      %111 = vst [vmem:[%s85 + $0x30] sm:%s77] %v110
      %v112 = vld [vmem:[%s84 + $0x38] sm:%s77]
      %113 = vst [vmem:[%s85 + $0x34] sm:%s77] %v112
      %v114 = vld [vmem:[%s84 + $0x34] sm:%s77]
      %115 = vst [vmem:[%s85 + $0x38] sm:%s77] %v114
      %v116 = vld [vmem:[%s84 + $0x3c] sm:%s77]
      %117 = vst [vmem:[%s85 + $0x3c] sm:%s77] %v116
      %v118 = vld [vmem:[%s84 + $0x40] sm:%s77]
      %119 = vst [vmem:[%s85 + $0x40] sm:%s77] %v118
      %v120 = vld [vmem:[%s84 + $0x48] sm:%s77]
      %121 = vst [vmem:[%s85 + $0x44] sm:%s77] %v120
      %v122 = vld [vmem:[%s84 + $0x44] sm:%s77]
      %123 = vst [vmem:[%s85 + $0x48] sm:%s77] %v122
      %v124 = vld [vmem:[%s84 + $0x4c] sm:%s77]
      %125 = vst [vmem:[%s85 + $0x4c] sm:%s77] %v124
      %v126 = vld [vmem:[%s84 + $0x50] sm:%s77]
      %127 = vst [vmem:[%s85 + $0x50] sm:%s77] %v126
      %v128 = vld [vmem:[%s84 + $0x58] sm:%s77]
      %129 = vst [vmem:[%s85 + $0x54] sm:%s77] %v128
      %v130 = vld [vmem:[%s84 + $0x54] sm:%s77]
      %131 = vst [vmem:[%s85 + $0x58] sm:%s77] %v130
      %v132 = vld [vmem:[%s84 + $0x5c] sm:%s77]
      %133 = vst [vmem:[%s85 + $0x5c] sm:%s77] %v132
      %v134 = vld [vmem:[%s84 + $0x60] sm:%s77]
      %135 = vst [vmem:[%s85 + $0x60] sm:%s77] %v134
      %v136 = vld [vmem:[%s84 + $0x68] sm:%s77]
      %137 = vst [vmem:[%s85 + $0x64] sm:%s77] %v136
      %v138 = vld [vmem:[%s84 + $0x64] sm:%s77]
      %139 = vst [vmem:[%s85 + $0x68] sm:%s77] %v138
      %v140 = vld [vmem:[%s84 + $0x6c] sm:%s77]
      %141 = vst [vmem:[%s85 + $0x6c] sm:%s77] %v140
      %v142 = vld [vmem:[%s84 + $0x70] sm:%s77]
      %143 = vst [vmem:[%s85 + $0x70] sm:%s77] %v142
      %v144 = vld [vmem:[%s84 + $0x78] sm:%s77]
      %145 = vst [vmem:[%s85 + $0x74] sm:%s77] %v144
      %v146 = vld [vmem:[%s84 + $0x74] sm:%s77]
      %147 = vst [vmem:[%s85 + $0x78] sm:%s77] %v146
      %v148 = vld [vmem:[%s84 + $0x7c] sm:%s77]
      %149 = vst [vmem:[%s85 + $0x7c] sm:%s77] %v148
      %v150 = vld [vmem:[%s84 + $0x80] sm:%s77]
      %151 = vst [vmem:[%s85 + $0x80] sm:%s77] %v150
      %v152 = vld [vmem:[%s84 + $0x88] sm:%s77]
      %153 = vst [vmem:[%s85 + $0x84] sm:%s77] %v152
      %v154 = vld [vmem:[%s84 + $0x84] sm:%s77]
      %155 = vst [vmem:[%s85 + $0x88] sm:%s77] %v154
      %v156 = vld [vmem:[%s84 + $0x8c] sm:%s77]
      %157 = vst [vmem:[%s85 + $0x8c] sm:%s77] %v156
      %v158 = vld [vmem:[%s84 + $0x90] sm:%s77]
      %159 = vst [vmem:[%s85 + $0x90] sm:%s77] %v158
      %v160 = vld [vmem:[%s84 + $0x98] sm:%s77]
      %161 = vst [vmem:[%s85 + $0x94] sm:%s77] %v160
      %v162 = vld [vmem:[%s84 + $0x94] sm:%s77]
      %163 = vst [vmem:[%s85 + $0x98] sm:%s77] %v162
      %v164 = vld [vmem:[%s84 + $0x9c] sm:%s77]
      %165 = vst [vmem:[%s85 + $0x9c] sm:%s77] %v164
      %v166 = vld [vmem:[%s84 + $0xa0] sm:%s77]
      %167 = vst [vmem:[%s85 + $0xa0] sm:%s77] %v166
      %v168 = vld [vmem:[%s84 + $0xa8] sm:%s77]
      %169 = vst [vmem:[%s85 + $0xa4] sm:%s77] %v168
      %v170 = vld [vmem:[%s84 + $0xa4] sm:%s77]
      %171 = vst [vmem:[%s85 + $0xa8] sm:%s77] %v170
      %v172 = vld [vmem:[%s84 + $0xac] sm:%s77]
      %173 = vst [vmem:[%s85 + $0xac] sm:%s77] %v172
      %v174 = vld [vmem:[%s84 + $0xb0] sm:%s77]
      %175 = vst [vmem:[%s85 + $0xb0] sm:%s77] %v174
      %v176 = vld [vmem:[%s84 + $0xb8] sm:%s77]
      %177 = vst [vmem:[%s85 + $0xb4] sm:%s77] %v176
      %v178 = vld [vmem:[%s84 + $0xb4] sm:%s77]
      %179 = vst [vmem:[%s85 + $0xb8] sm:%s77] %v178
      %v180 = vld [vmem:[%s84 + $0xbc] sm:%s77]
      %181 = vst [vmem:[%s85 + $0xbc] sm:%s77] %v180
      %v182 = vld [vmem:[%s84 + $0xc0] sm:%s77]
      %183 = vst [vmem:[%s85 + $0xc0] sm:%s77] %v182
      %v184 = vld [vmem:[%s84 + $0xc8] sm:%s77]
      %185 = vst [vmem:[%s85 + $0xc4] sm:%s77] %v184
      %v186 = vld [vmem:[%s84 + $0xc4] sm:%s77]
      %187 = vst [vmem:[%s85 + $0xc8] sm:%s77] %v186
      %v188 = vld [vmem:[%s84 + $0xcc] sm:%s77]
      %189 = vst [vmem:[%s85 + $0xcc] sm:%s77] %v188
      %v190 = vld [vmem:[%s84 + $0xd0] sm:%s77]
      %191 = vst [vmem:[%s85 + $0xd0] sm:%s77] %v190
      %v192 = vld [vmem:[%s84 + $0xd8] sm:%s77]
      %193 = vst [vmem:[%s85 + $0xd4] sm:%s77] %v192
      %v194 = vld [vmem:[%s84 + $0xd4] sm:%s77]
      %195 = vst [vmem:[%s85 + $0xd8] sm:%s77] %v194
      %v196 = vld [vmem:[%s84 + $0xdc] sm:%s77]
      %197 = vst [vmem:[%s85 + $0xdc] sm:%s77] %v196
      %v198 = vld [vmem:[%s84 + $0xe0] sm:%s77]
      %199 = vst [vmem:[%s85 + $0xe0] sm:%s77] %v198
      %v200 = vld [vmem:[%s84 + $0xe8] sm:%s77]
      %201 = vst [vmem:[%s85 + $0xe4] sm:%s77] %v200
      %v202 = vld [vmem:[%s84 + $0xe4] sm:%s77]
      %203 = vst [vmem:[%s85 + $0xe8] sm:%s77] %v202
      %v204 = vld [vmem:[%s84 + $0xec] sm:%s77]
      %205 = vst [vmem:[%s85 + $0xec] sm:%s77] %v204
      %v206 = vld [vmem:[%s84 + $0xf0] sm:%s77]
      %207 = vst [vmem:[%s85 + $0xf0] sm:%s77] %v206
      %v208 = vld [vmem:[%s84 + $0xf8] sm:%s77]
      %209 = vst [vmem:[%s85 + $0xf4] sm:%s77] %v208
      %v210 = vld [vmem:[%s84 + $0xf4] sm:%s77]
      %211 = vst [vmem:[%s85 + $0xf8] sm:%s77] %v210
      %v212 = vld [vmem:[%s84 + $0xfc] sm:%s77]
      %213 = vst [vmem:[%s85 + $0xfc] sm:%s77] %v212
      %v214 = vld [vmem:[%s84 + $0x100] sm:%s77]
      %215 = vst [vmem:[%s85 + $0x100] sm:%s77] %v214
      %v216 = vld [vmem:[%s84 + $0x108] sm:%s77]
      %217 = vst [vmem:[%s85 + $0x104] sm:%s77] %v216
      %v218 = vld [vmem:[%s84 + $0x104] sm:%s77]
      %219 = vst [vmem:[%s85 + $0x108] sm:%s77] %v218
      %v220 = vld [vmem:[%s84 + $0x10c] sm:%s77]
      %221 = vst [vmem:[%s85 + $0x10c] sm:%s77] %v220
      %v222 = vld [vmem:[%s84 + $0x110] sm:%s77]
      %223 = vst [vmem:[%s85 + $0x110] sm:%s77] %v222
      %v224 = vld [vmem:[%s84 + $0x118] sm:%s77]
      %225 = vst [vmem:[%s85 + $0x114] sm:%s77] %v224
      %v226 = vld [vmem:[%s84 + $0x114] sm:%s77]
      %227 = vst [vmem:[%s85 + $0x118] sm:%s77] %v226
      %v228 = vld [vmem:[%s84 + $0x11c] sm:%s77]
      %229 = vst [vmem:[%s85 + $0x11c] sm:%s77] %v228
      %v230 = vld [vmem:[%s84 + $0x120] sm:%s77]
      %231 = vst [vmem:[%s85 + $0x120] sm:%s77] %v230
      %v232 = vld [vmem:[%s84 + $0x128] sm:%s77]
      %233 = vst [vmem:[%s85 + $0x124] sm:%s77] %v232
      %v234 = vld [vmem:[%s84 + $0x124] sm:%s77]
      %235 = vst [vmem:[%s85 + $0x128] sm:%s77] %v234
      %v236 = vld [vmem:[%s84 + $0x12c] sm:%s77]
      %237 = vst [vmem:[%s85 + $0x12c] sm:%s77] %v236
      %v238 = vld [vmem:[%s84 + $0x130] sm:%s77]
      %239 = vst [vmem:[%s85 + $0x130] sm:%s77] %v238
      %v240 = vld [vmem:[%s84 + $0x138] sm:%s77]
      %241 = vst [vmem:[%s85 + $0x134] sm:%s77] %v240
      %v242 = vld [vmem:[%s84 + $0x134] sm:%s77]
      %243 = vst [vmem:[%s85 + $0x138] sm:%s77] %v242
      %v244 = vld [vmem:[%s84 + $0x13c] sm:%s77]
      %245 = vst [vmem:[%s85 + $0x13c] sm:%s77] %v244
      %v246 = vld [vmem:[%s84 + $0x140] sm:%s77]
      %247 = vst [vmem:[%s85 + $0x140] sm:%s77] %v246
      %v248 = vld [vmem:[%s84 + $0x148] sm:%s77]
      %249 = vst [vmem:[%s85 + $0x144] sm:%s77] %v248
      %v250 = vld [vmem:[%s84 + $0x144] sm:%s77]
      %251 = vst [vmem:[%s85 + $0x148] sm:%s77] %v250
      %v252 = vld [vmem:[%s84 + $0x14c] sm:%s77]
      %253 = vst [vmem:[%s85 + $0x14c] sm:%s77] %v252
      %v254 = vld [vmem:[%s84 + $0x150] sm:%s77]
      %255 = vst [vmem:[%s85 + $0x150] sm:%s77] %v254
      %v256 = vld [vmem:[%s84 + $0x158] sm:%s77]
      %257 = vst [vmem:[%s85 + $0x154] sm:%s77] %v256
      %v258 = vld [vmem:[%s84 + $0x154] sm:%s77]
      %259 = vst [vmem:[%s85 + $0x158] sm:%s77] %v258
      %v260 = vld [vmem:[%s84 + $0x15c] sm:%s77]
      %261 = vst [vmem:[%s85 + $0x15c] sm:%s77] %v260
      %v262 = vld [vmem:[%s84 + $0x160] sm:%s77]
      %263 = vst [vmem:[%s85 + $0x160] sm:%s77] %v262
      %v264 = vld [vmem:[%s84 + $0x168] sm:%s77]
      %265 = vst [vmem:[%s85 + $0x164] sm:%s77] %v264
      %v266 = vld [vmem:[%s84 + $0x164] sm:%s77]
      %267 = vst [vmem:[%s85 + $0x168] sm:%s77] %v266
      %v268 = vld [vmem:[%s84 + $0x16c] sm:%s77]
      %269 = vst [vmem:[%s85 + $0x16c] sm:%s77] %v268
      %v270 = vld [vmem:[%s84 + $0x170] sm:%s77]
      %271 = vst [vmem:[%s85 + $0x170] sm:%s77] %v270
      %v272 = vld [vmem:[%s84 + $0x178] sm:%s77]
      %273 = vst [vmem:[%s85 + $0x174] sm:%s77] %v272
      %v274 = vld [vmem:[%s84 + $0x174] sm:%s77]
      %275 = vst [vmem:[%s85 + $0x178] sm:%s77] %v274
      %v276 = vld [vmem:[%s84 + $0x17c] sm:%s77]
      %277 = vst [vmem:[%s85 + $0x17c] sm:%s77] %v276
      %v278 = vld [vmem:[%s84 + $0x180] sm:%s77]
      %279 = vst [vmem:[%s85 + $0x180] sm:%s77] %v278
      %v280 = vld [vmem:[%s84 + $0x188] sm:%s77]
      %281 = vst [vmem:[%s85 + $0x184] sm:%s77] %v280
      %v282 = vld [vmem:[%s84 + $0x184] sm:%s77]
      %283 = vst [vmem:[%s85 + $0x188] sm:%s77] %v282
      %v284 = vld [vmem:[%s84 + $0x18c] sm:%s77]
      %285 = vst [vmem:[%s85 + $0x18c] sm:%s77] %v284
      %v286 = vld [vmem:[%s84 + $0x190] sm:%s77]
      %287 = vst [vmem:[%s85 + $0x190] sm:%s77] %v286
      %v288 = vld [vmem:[%s84 + $0x198] sm:%s77]
      %289 = vst [vmem:[%s85 + $0x194] sm:%s77] %v288
      %v290 = vld [vmem:[%s84 + $0x194] sm:%s77]
      %291 = vst [vmem:[%s85 + $0x198] sm:%s77] %v290
      %v292 = vld [vmem:[%s84 + $0x19c] sm:%s77]
      %293 = vst [vmem:[%s85 + $0x19c] sm:%s77] %v292
      %v294 = vld [vmem:[%s84 + $0x1a0] sm:%s77]
      %295 = vst [vmem:[%s85 + $0x1a0] sm:%s77] %v294
      %v296 = vld [vmem:[%s84 + $0x1a8] sm:%s77]
      %297 = vst [vmem:[%s85 + $0x1a4] sm:%s77] %v296
      %v298 = vld [vmem:[%s84 + $0x1a4] sm:%s77]
      %299 = vst [vmem:[%s85 + $0x1a8] sm:%s77] %v298
      %v300 = vld [vmem:[%s84 + $0x1ac] sm:%s77]
      %301 = vst [vmem:[%s85 + $0x1ac] sm:%s77] %v300
      %v302 = vld [vmem:[%s84 + $0x1b0] sm:%s77]
      %303 = vst [vmem:[%s85 + $0x1b0] sm:%s77] %v302
      %v304 = vld [vmem:[%s84 + $0x1b8] sm:%s77]
      %305 = vst [vmem:[%s85 + $0x1b4] sm:%s77] %v304
      %v306 = vld [vmem:[%s84 + $0x1b4] sm:%s77]
      %307 = vst [vmem:[%s85 + $0x1b8] sm:%s77] %v306
      %v308 = vld [vmem:[%s84 + $0x1bc] sm:%s77]
      %309 = vst [vmem:[%s85 + $0x1bc] sm:%s77] %v308
      %v310 = vld [vmem:[%s84 + $0x1c0] sm:%s77]
      %311 = vst [vmem:[%s85 + $0x1c0] sm:%s77] %v310
      %v312 = vld [vmem:[%s84 + $0x1c8] sm:%s77]
      %313 = vst [vmem:[%s85 + $0x1c4] sm:%s77] %v312
      %v314 = vld [vmem:[%s84 + $0x1c4] sm:%s77]
      %315 = vst [vmem:[%s85 + $0x1c8] sm:%s77] %v314
      %v316 = vld [vmem:[%s84 + $0x1cc] sm:%s77]
      %317 = vst [vmem:[%s85 + $0x1cc] sm:%s77] %v316
      %v318 = vld [vmem:[%s84 + $0x1d0] sm:%s77]
      %319 = vst [vmem:[%s85 + $0x1d0] sm:%s77] %v318
      %v320 = vld [vmem:[%s84 + $0x1d8] sm:%s77]
      %321 = vst [vmem:[%s85 + $0x1d4] sm:%s77] %v320
      %v322 = vld [vmem:[%s84 + $0x1d4] sm:%s77]
      %323 = vst [vmem:[%s85 + $0x1d8] sm:%s77] %v322
      %v324 = vld [vmem:[%s84 + $0x1dc] sm:%s77]
      %325 = vst [vmem:[%s85 + $0x1dc] sm:%s77] %v324
      %v326 = vld [vmem:[%s84 + $0x1e0] sm:%s77]
      %327 = vst [vmem:[%s85 + $0x1e0] sm:%s77] %v326
      %v328 = vld [vmem:[%s84 + $0x1e8] sm:%s77]
      %329 = vst [vmem:[%s85 + $0x1e4] sm:%s77] %v328
      %v330 = vld [vmem:[%s84 + $0x1e4] sm:%s77]
      %331 = vst [vmem:[%s85 + $0x1e8] sm:%s77] %v330
      %v332 = vld [vmem:[%s84 + $0x1ec] sm:%s77]
      %333 = vst [vmem:[%s85 + $0x1ec] sm:%s77] %v332
      %v334 = vld [vmem:[%s84 + $0x1f0] sm:%s77]
      %335 = vst [vmem:[%s85 + $0x1f0] sm:%s77] %v334
      %v336 = vld [vmem:[%s84 + $0x1f8] sm:%s77]
      %337 = vst [vmem:[%s85 + $0x1f4] sm:%s77] %v336
      %v338 = vld [vmem:[%s84 + $0x1f4] sm:%s77]
      %339 = vst [vmem:[%s85 + $0x1f8] sm:%s77] %v338
      %v340 = vld [vmem:[%s84 + $0x1fc] sm:%s77]
      %341 = vst [vmem:[%s85 + $0x1fc] sm:%s77] %v340
      %v342 = vld [vmem:[%s84 + $0x200] sm:%s77]
      %343 = vst [vmem:[%s85 + $0x200] sm:%s77] %v342
      %v344 = vld [vmem:[%s84 + $0x208] sm:%s77]
      %345 = vst [vmem:[%s85 + $0x204] sm:%s77] %v344
      %v346 = vld [vmem:[%s84 + $0x204] sm:%s77]
      %347 = vst [vmem:[%s85 + $0x208] sm:%s77] %v346
      %v348 = vld [vmem:[%s84 + $0x20c] sm:%s77]
      %349 = vst [vmem:[%s85 + $0x20c] sm:%s77] %v348
      %v350 = vld [vmem:[%s84 + $0x210] sm:%s77]
      %351 = vst [vmem:[%s85 + $0x210] sm:%s77] %v350
      %v352 = vld [vmem:[%s84 + $0x218] sm:%s77]
      %353 = vst [vmem:[%s85 + $0x214] sm:%s77] %v352
      %v354 = vld [vmem:[%s84 + $0x214] sm:%s77]
      %355 = vst [vmem:[%s85 + $0x218] sm:%s77] %v354
      %v356 = vld [vmem:[%s84 + $0x21c] sm:%s77]
      %357 = vst [vmem:[%s85 + $0x21c] sm:%s77] %v356
      %v358 = vld [vmem:[%s84 + $0x220] sm:%s77]
      %359 = vst [vmem:[%s85 + $0x220] sm:%s77] %v358
      %v360 = vld [vmem:[%s84 + $0x228] sm:%s77]
      %361 = vst [vmem:[%s85 + $0x224] sm:%s77] %v360
      %v362 = vld [vmem:[%s84 + $0x224] sm:%s77]
      %363 = vst [vmem:[%s85 + $0x228] sm:%s77] %v362
      %v364 = vld [vmem:[%s84 + $0x22c] sm:%s77]
      %365 = vst [vmem:[%s85 + $0x22c] sm:%s77] %v364
      %v366 = vld [vmem:[%s84 + $0x230] sm:%s77]
      %367 = vst [vmem:[%s85 + $0x230] sm:%s77] %v366
      %v368 = vld [vmem:[%s84 + $0x238] sm:%s77]
      %369 = vst [vmem:[%s85 + $0x234] sm:%s77] %v368
      %v370 = vld [vmem:[%s84 + $0x234] sm:%s77]
      %371 = vst [vmem:[%s85 + $0x238] sm:%s77] %v370
      %v372 = vld [vmem:[%s84 + $0x23c] sm:%s77]
      %373 = vst [vmem:[%s85 + $0x23c] sm:%s77] %v372
      %v374 = vld [vmem:[%s84 + $0x240] sm:%s77]
      %375 = vst [vmem:[%s85 + $0x240] sm:%s77] %v374
      %v376 = vld [vmem:[%s84 + $0x248] sm:%s77]
      %377 = vst [vmem:[%s85 + $0x244] sm:%s77] %v376
      %v378 = vld [vmem:[%s84 + $0x244] sm:%s77]
      %379 = vst [vmem:[%s85 + $0x248] sm:%s77] %v378
      %v380 = vld [vmem:[%s84 + $0x24c] sm:%s77]
      %381 = vst [vmem:[%s85 + $0x24c] sm:%s77] %v380
      %v382 = vld [vmem:[%s84 + $0x250] sm:%s77]
      %383 = vst [vmem:[%s85 + $0x250] sm:%s77] %v382
      %v384 = vld [vmem:[%s84 + $0x258] sm:%s77]
      %385 = vst [vmem:[%s85 + $0x254] sm:%s77] %v384
      %v386 = vld [vmem:[%s84 + $0x254] sm:%s77]
      %387 = vst [vmem:[%s85 + $0x258] sm:%s77] %v386
      %v388 = vld [vmem:[%s84 + $0x25c] sm:%s77]
      %389 = vst [vmem:[%s85 + $0x25c] sm:%s77] %v388
      %v390 = vld [vmem:[%s84 + $0x260] sm:%s77]
      %391 = vst [vmem:[%s85 + $0x260] sm:%s77] %v390
      %v392 = vld [vmem:[%s84 + $0x268] sm:%s77]
      %393 = vst [vmem:[%s85 + $0x264] sm:%s77] %v392
      %v394 = vld [vmem:[%s84 + $0x264] sm:%s77]
      %395 = vst [vmem:[%s85 + $0x268] sm:%s77] %v394
      %v396 = vld [vmem:[%s84 + $0x26c] sm:%s77]
      %397 = vst [vmem:[%s85 + $0x26c] sm:%s77] %v396
      %v398 = vld [vmem:[%s84 + $0x270] sm:%s77]
      %399 = vst [vmem:[%s85 + $0x270] sm:%s77] %v398
      %v400 = vld [vmem:[%s84 + $0x278] sm:%s77]
      %401 = vst [vmem:[%s85 + $0x274] sm:%s77] %v400
      %v402 = vld [vmem:[%s84 + $0x274] sm:%s77]
      %403 = vst [vmem:[%s85 + $0x278] sm:%s77] %v402
      %v404 = vld [vmem:[%s84 + $0x27c] sm:%s77]
      %405 = vst [vmem:[%s85 + $0x27c] sm:%s77] %v404
      %v406 = vld [vmem:[%s84 + $0x280] sm:%s77]
      %407 = vst [vmem:[%s85 + $0x280] sm:%s77] %v406
      %v408 = vld [vmem:[%s84 + $0x288] sm:%s77]
      %409 = vst [vmem:[%s85 + $0x284] sm:%s77] %v408
      %v410 = vld [vmem:[%s84 + $0x284] sm:%s77]
      %411 = vst [vmem:[%s85 + $0x288] sm:%s77] %v410
      %v412 = vld [vmem:[%s84 + $0x28c] sm:%s77]
      %413 = vst [vmem:[%s85 + $0x28c] sm:%s77] %v412
      %v414 = vld [vmem:[%s84 + $0x290] sm:%s77]
      %415 = vst [vmem:[%s85 + $0x290] sm:%s77] %v414
      %v416 = vld [vmem:[%s84 + $0x298] sm:%s77]
      %417 = vst [vmem:[%s85 + $0x294] sm:%s77] %v416
      %v418 = vld [vmem:[%s84 + $0x294] sm:%s77]
      %419 = vst [vmem:[%s85 + $0x298] sm:%s77] %v418
      %v420 = vld [vmem:[%s84 + $0x29c] sm:%s77]
      %421 = vst [vmem:[%s85 + $0x29c] sm:%s77] %v420
      %v422 = vld [vmem:[%s84 + $0x2a0] sm:%s77]
      %423 = vst [vmem:[%s85 + $0x2a0] sm:%s77] %v422
      %v424 = vld [vmem:[%s84 + $0x2a8] sm:%s77]
      %425 = vst [vmem:[%s85 + $0x2a4] sm:%s77] %v424
      %v426 = vld [vmem:[%s84 + $0x2a4] sm:%s77]
      %427 = vst [vmem:[%s85 + $0x2a8] sm:%s77] %v426
      %v428 = vld [vmem:[%s84 + $0x2ac] sm:%s77]
      %429 = vst [vmem:[%s85 + $0x2ac] sm:%s77] %v428
      %v430 = vld [vmem:[%s84 + $0x2b0] sm:%s77]
      %431 = vst [vmem:[%s85 + $0x2b0] sm:%s77] %v430
      %v432 = vld [vmem:[%s84 + $0x2b8] sm:%s77]
      %433 = vst [vmem:[%s85 + $0x2b4] sm:%s77] %v432
      %v434 = vld [vmem:[%s84 + $0x2b4] sm:%s77]
      %435 = vst [vmem:[%s85 + $0x2b8] sm:%s77] %v434
      %v436 = vld [vmem:[%s84 + $0x2bc] sm:%s77]
      %437 = vst [vmem:[%s85 + $0x2bc] sm:%s77] %v436
      %v438 = vld [vmem:[%s84 + $0x2c0] sm:%s77]
      %439 = vst [vmem:[%s85 + $0x2c0] sm:%s77] %v438
      %v440 = vld [vmem:[%s84 + $0x2c8] sm:%s77]
      %441 = vst [vmem:[%s85 + $0x2c4] sm:%s77] %v440
      %v442 = vld [vmem:[%s84 + $0x2c4] sm:%s77]
      %443 = vst [vmem:[%s85 + $0x2c8] sm:%s77] %v442
      %v444 = vld [vmem:[%s84 + $0x2cc] sm:%s77]
      %445 = vst [vmem:[%s85 + $0x2cc] sm:%s77] %v444
      %v446 = vld [vmem:[%s84 + $0x2d0] sm:%s77]
      %447 = vst [vmem:[%s85 + $0x2d0] sm:%s77] %v446
      %v448 = vld [vmem:[%s84 + $0x2d8] sm:%s77]
      %449 = vst [vmem:[%s85 + $0x2d4] sm:%s77] %v448
      %v450 = vld [vmem:[%s84 + $0x2d4] sm:%s77]
      %451 = vst [vmem:[%s85 + $0x2d8] sm:%s77] %v450
      %v452 = vld [vmem:[%s84 + $0x2dc] sm:%s77]
      %453 = vst [vmem:[%s85 + $0x2dc] sm:%s77] %v452
      %v454 = vld [vmem:[%s84 + $0x2e0] sm:%s77]
      %455 = vst [vmem:[%s85 + $0x2e0] sm:%s77] %v454
      %v456 = vld [vmem:[%s84 + $0x2e8] sm:%s77]
      %457 = vst [vmem:[%s85 + $0x2e4] sm:%s77] %v456
      %v458 = vld [vmem:[%s84 + $0x2e4] sm:%s77]
      %459 = vst [vmem:[%s85 + $0x2e8] sm:%s77] %v458
      %v460 = vld [vmem:[%s84 + $0x2ec] sm:%s77]
      %461 = vst [vmem:[%s85 + $0x2ec] sm:%s77] %v460
      %v462 = vld [vmem:[%s84 + $0x2f0] sm:%s77]
      %463 = vst [vmem:[%s85 + $0x2f0] sm:%s77] %v462
      %v464 = vld [vmem:[%s84 + $0x2f8] sm:%s77]
      %465 = vst [vmem:[%s85 + $0x2f4] sm:%s77] %v464
      %v466 = vld [vmem:[%s84 + $0x2f4] sm:%s77]
      %467 = vst [vmem:[%s85 + $0x2f8] sm:%s77] %v466
      %v468 = vld [vmem:[%s84 + $0x2fc] sm:%s77]
      %469 = vst [vmem:[%s85 + $0x2fc] sm:%s77] %v468
      %v470 = vld [vmem:[%s84 + $0x300] sm:%s77]
      %471 = vst [vmem:[%s85 + $0x300] sm:%s77] %v470
      %v472 = vld [vmem:[%s84 + $0x308] sm:%s77]
      %473 = vst [vmem:[%s85 + $0x304] sm:%s77] %v472
      %v474 = vld [vmem:[%s84 + $0x304] sm:%s77]
      %475 = vst [vmem:[%s85 + $0x308] sm:%s77] %v474
      %v476 = vld [vmem:[%s84 + $0x30c] sm:%s77]
      %477 = vst [vmem:[%s85 + $0x30c] sm:%s77] %v476
      %v478 = vld [vmem:[%s84 + $0x310] sm:%s77]
      %479 = vst [vmem:[%s85 + $0x310] sm:%s77] %v478
      %v480 = vld [vmem:[%s84 + $0x318] sm:%s77]
      %481 = vst [vmem:[%s85 + $0x314] sm:%s77] %v480
      %v482 = vld [vmem:[%s84 + $0x314] sm:%s77]
      %483 = vst [vmem:[%s85 + $0x318] sm:%s77] %v482
      %v484 = vld [vmem:[%s84 + $0x31c] sm:%s77]
      %485 = vst [vmem:[%s85 + $0x31c] sm:%s77] %v484
      %v486 = vld [vmem:[%s84 + $0x320] sm:%s77]
      %487 = vst [vmem:[%s85 + $0x320] sm:%s77] %v486
      %v488 = vld [vmem:[%s84 + $0x328] sm:%s77]
      %489 = vst [vmem:[%s85 + $0x324] sm:%s77] %v488
      %v490 = vld [vmem:[%s84 + $0x324] sm:%s77]
      %491 = vst [vmem:[%s85 + $0x328] sm:%s77] %v490
      %v492 = vld [vmem:[%s84 + $0x32c] sm:%s77]
      %493 = vst [vmem:[%s85 + $0x32c] sm:%s77] %v492
      %v494 = vld [vmem:[%s84 + $0x330] sm:%s77]
      %495 = vst [vmem:[%s85 + $0x330] sm:%s77] %v494
      %v496 = vld [vmem:[%s84 + $0x338] sm:%s77]
      %497 = vst [vmem:[%s85 + $0x334] sm:%s77] %v496
      %v498 = vld [vmem:[%s84 + $0x334] sm:%s77]
      %499 = vst [vmem:[%s85 + $0x338] sm:%s77] %v498
      %v500 = vld [vmem:[%s84 + $0x33c] sm:%s77]
      %501 = vst [vmem:[%s85 + $0x33c] sm:%s77] %v500
      %v502 = vld [vmem:[%s84 + $0x340] sm:%s77]
      %503 = vst [vmem:[%s85 + $0x340] sm:%s77] %v502
      %v504 = vld [vmem:[%s84 + $0x348] sm:%s77]
      %505 = vst [vmem:[%s85 + $0x344] sm:%s77] %v504
      %v506 = vld [vmem:[%s84 + $0x344] sm:%s77]
      %507 = vst [vmem:[%s85 + $0x348] sm:%s77] %v506
      %v508 = vld [vmem:[%s84 + $0x34c] sm:%s77]
      %509 = vst [vmem:[%s85 + $0x34c] sm:%s77] %v508
      %v510 = vld [vmem:[%s84 + $0x350] sm:%s77]
      %511 = vst [vmem:[%s85 + $0x350] sm:%s77] %v510
      %v512 = vld [vmem:[%s84 + $0x358] sm:%s77]
      %513 = vst [vmem:[%s85 + $0x354] sm:%s77] %v512
      %v514 = vld [vmem:[%s84 + $0x354] sm:%s77]
      %515 = vst [vmem:[%s85 + $0x358] sm:%s77] %v514
      %v516 = vld [vmem:[%s84 + $0x35c] sm:%s77]
      %517 = vst [vmem:[%s85 + $0x35c] sm:%s77] %v516
      %v518 = vld [vmem:[%s84 + $0x360] sm:%s77]
      %519 = vst [vmem:[%s85 + $0x360] sm:%s77] %v518
      %v520 = vld [vmem:[%s84 + $0x368] sm:%s77]
      %521 = vst [vmem:[%s85 + $0x364] sm:%s77] %v520
      %v522 = vld [vmem:[%s84 + $0x364] sm:%s77]
      %523 = vst [vmem:[%s85 + $0x368] sm:%s77] %v522
      %v524 = vld [vmem:[%s84 + $0x36c] sm:%s77]
      %525 = vst [vmem:[%s85 + $0x36c] sm:%s77] %v524
      %v526 = vld [vmem:[%s84 + $0x370] sm:%s77]
      %527 = vst [vmem:[%s85 + $0x370] sm:%s77] %v526
      %v528 = vld [vmem:[%s84 + $0x378] sm:%s77]
      %529 = vst [vmem:[%s85 + $0x374] sm:%s77] %v528
      %v530 = vld [vmem:[%s84 + $0x374] sm:%s77]
      %531 = vst [vmem:[%s85 + $0x378] sm:%s77] %v530
      %v532 = vld [vmem:[%s84 + $0x37c] sm:%s77]
      %533 = vst [vmem:[%s85 + $0x37c] sm:%s77] %v532
      %v534 = vld [vmem:[%s84 + $0x380] sm:%s77]
      %535 = vst [vmem:[%s85 + $0x380] sm:%s77] %v534
      %v536 = vld [vmem:[%s84 + $0x388] sm:%s77]
      %537 = vst [vmem:[%s85 + $0x384] sm:%s77] %v536
      %v538 = vld [vmem:[%s84 + $0x384] sm:%s77]
      %539 = vst [vmem:[%s85 + $0x388] sm:%s77] %v538
      %v540 = vld [vmem:[%s84 + $0x38c] sm:%s77]
      %541 = vst [vmem:[%s85 + $0x38c] sm:%s77] %v540
      %v542 = vld [vmem:[%s84 + $0x390] sm:%s77]
      %543 = vst [vmem:[%s85 + $0x390] sm:%s77] %v542
      %v544 = vld [vmem:[%s84 + $0x398] sm:%s77]
      %545 = vst [vmem:[%s85 + $0x394] sm:%s77] %v544
      %v546 = vld [vmem:[%s84 + $0x394] sm:%s77]
      %547 = vst [vmem:[%s85 + $0x398] sm:%s77] %v546
      %v548 = vld [vmem:[%s84 + $0x39c] sm:%s77]
      %549 = vst [vmem:[%s85 + $0x39c] sm:%s77] %v548
      %v550 = vld [vmem:[%s84 + $0x3a0] sm:%s77]
      %551 = vst [vmem:[%s85 + $0x3a0] sm:%s77] %v550
      %v552 = vld [vmem:[%s84 + $0x3a8] sm:%s77]
      %553 = vst [vmem:[%s85 + $0x3a4] sm:%s77] %v552
      %v554 = vld [vmem:[%s84 + $0x3a4] sm:%s77]
      %555 = vst [vmem:[%s85 + $0x3a8] sm:%s77] %v554
      %v556 = vld [vmem:[%s84 + $0x3ac] sm:%s77]
      %557 = vst [vmem:[%s85 + $0x3ac] sm:%s77] %v556
      %v558 = vld [vmem:[%s84 + $0x3b0] sm:%s77]
      %559 = vst [vmem:[%s85 + $0x3b0] sm:%s77] %v558
      %v560 = vld [vmem:[%s84 + $0x3b8] sm:%s77]
      %561 = vst [vmem:[%s85 + $0x3b4] sm:%s77] %v560
      %v562 = vld [vmem:[%s84 + $0x3b4] sm:%s77]
      %563 = vst [vmem:[%s85 + $0x3b8] sm:%s77] %v562
      %v564 = vld [vmem:[%s84 + $0x3bc] sm:%s77]
      %565 = vst [vmem:[%s85 + $0x3bc] sm:%s77] %v564
      %v566 = vld [vmem:[%s84 + $0x3c0] sm:%s77]
      %567 = vst [vmem:[%s85 + $0x3c0] sm:%s77] %v566
      %v568 = vld [vmem:[%s84 + $0x3c8] sm:%s77]
      %569 = vst [vmem:[%s85 + $0x3c4] sm:%s77] %v568
      %v570 = vld [vmem:[%s84 + $0x3c4] sm:%s77]
      %571 = vst [vmem:[%s85 + $0x3c8] sm:%s77] %v570
      %v572 = vld [vmem:[%s84 + $0x3cc] sm:%s77]
      %573 = vst [vmem:[%s85 + $0x3cc] sm:%s77] %v572
      %v574 = vld [vmem:[%s84 + $0x3d0] sm:%s77]
      %575 = vst [vmem:[%s85 + $0x3d0] sm:%s77] %v574
      %v576 = vld [vmem:[%s84 + $0x3d8] sm:%s77]
      %577 = vst [vmem:[%s85 + $0x3d4] sm:%s77] %v576
      %v578 = vld [vmem:[%s84 + $0x3d4] sm:%s77]
      %579 = vst [vmem:[%s85 + $0x3d8] sm:%s77] %v578
      %v580 = vld [vmem:[%s84 + $0x3dc] sm:%s77]
      %581 = vst [vmem:[%s85 + $0x3dc] sm:%s77] %v580
      %v582 = vld [vmem:[%s84 + $0x3e0] sm:%s77]
      %583 = vst [vmem:[%s85 + $0x3e0] sm:%s77] %v582
      %v584 = vld [vmem:[%s84 + $0x3e8] sm:%s77]
      %585 = vst [vmem:[%s85 + $0x3e4] sm:%s77] %v584
      %v586 = vld [vmem:[%s84 + $0x3e4] sm:%s77]
      %587 = vst [vmem:[%s85 + $0x3e8] sm:%s77] %v586
      %v588 = vld [vmem:[%s84 + $0x3ec] sm:%s77]
      %589 = vst [vmem:[%s85 + $0x3ec] sm:%s77] %v588
      %v590 = vld [vmem:[%s84 + $0x3f0] sm:%s77]
      %591 = vst [vmem:[%s85 + $0x3f0] sm:%s77] %v590
      %v592 = vld [vmem:[%s84 + $0x3f8] sm:%s77]
      %593 = vst [vmem:[%s85 + $0x3f4] sm:%s77] %v592
      %v594 = vld [vmem:[%s84 + $0x3f4] sm:%s77]
      %595 = vst [vmem:[%s85 + $0x3f8] sm:%s77] %v594
      %v596 = vld [vmem:[%s84 + $0x3fc] sm:%s77]
      %597 = vst [vmem:[%s85 + $0x3fc] sm:%s77] %v596
      %v598 = vld [vmem:[%s84 + $0x400] sm:%s77]
      %599 = vst [vmem:[%s85 + $0x400] sm:%s77] %v598
      %v600 = vld [vmem:[%s84 + $0x408] sm:%s77]
      %601 = vst [vmem:[%s85 + $0x404] sm:%s77] %v600
      %v602 = vld [vmem:[%s84 + $0x404] sm:%s77]
      %603 = vst [vmem:[%s85 + $0x408] sm:%s77] %v602
      %v604 = vld [vmem:[%s84 + $0x40c] sm:%s77]
      %605 = vst [vmem:[%s85 + $0x40c] sm:%s77] %v604
      %v606 = vld [vmem:[%s84 + $0x410] sm:%s77]
      %607 = vst [vmem:[%s85 + $0x410] sm:%s77] %v606
      %v608 = vld [vmem:[%s84 + $0x418] sm:%s77]
      %609 = vst [vmem:[%s85 + $0x414] sm:%s77] %v608
      %v610 = vld [vmem:[%s84 + $0x414] sm:%s77]
      %611 = vst [vmem:[%s85 + $0x418] sm:%s77] %v610
      %v612 = vld [vmem:[%s84 + $0x41c] sm:%s77]
      %613 = vst [vmem:[%s85 + $0x41c] sm:%s77] %v612
      %v614 = vld [vmem:[%s84 + $0x420] sm:%s77]
      %615 = vst [vmem:[%s85 + $0x420] sm:%s77] %v614
      %v616 = vld [vmem:[%s84 + $0x428] sm:%s77]
      %617 = vst [vmem:[%s85 + $0x424] sm:%s77] %v616
      %v618 = vld [vmem:[%s84 + $0x424] sm:%s77]
      %619 = vst [vmem:[%s85 + $0x428] sm:%s77] %v618
      %v620 = vld [vmem:[%s84 + $0x42c] sm:%s77]
      %621 = vst [vmem:[%s85 + $0x42c] sm:%s77] %v620
      %v622 = vld [vmem:[%s84 + $0x430] sm:%s77]
      %623 = vst [vmem:[%s85 + $0x430] sm:%s77] %v622
      %v624 = vld [vmem:[%s84 + $0x438] sm:%s77]
      %625 = vst [vmem:[%s85 + $0x434] sm:%s77] %v624
      %v626 = vld [vmem:[%s84 + $0x434] sm:%s77]
      %627 = vst [vmem:[%s85 + $0x438] sm:%s77] %v626
      %v628 = vld [vmem:[%s84 + $0x43c] sm:%s77]
      %629 = vst [vmem:[%s85 + $0x43c] sm:%s77] %v628
      %v630 = vld [vmem:[%s84 + $0x440] sm:%s77]
      %631 = vst [vmem:[%s85 + $0x440] sm:%s77] %v630
      %v632 = vld [vmem:[%s84 + $0x448] sm:%s77]
      %633 = vst [vmem:[%s85 + $0x444] sm:%s77] %v632
      %v634 = vld [vmem:[%s84 + $0x444] sm:%s77]
      %635 = vst [vmem:[%s85 + $0x448] sm:%s77] %v634
      %v636 = vld [vmem:[%s84 + $0x44c] sm:%s77]
      %637 = vst [vmem:[%s85 + $0x44c] sm:%s77] %v636
      %v638 = vld [vmem:[%s84 + $0x450] sm:%s77]
      %639 = vst [vmem:[%s85 + $0x450] sm:%s77] %v638
      %v640 = vld [vmem:[%s84 + $0x458] sm:%s77]
      %641 = vst [vmem:[%s85 + $0x454] sm:%s77] %v640
      %v642 = vld [vmem:[%s84 + $0x454] sm:%s77]
      %643 = vst [vmem:[%s85 + $0x458] sm:%s77] %v642
      %v644 = vld [vmem:[%s84 + $0x45c] sm:%s77]
      %645 = vst [vmem:[%s85 + $0x45c] sm:%s77] %v644
      %v646 = vld [vmem:[%s84 + $0x460] sm:%s77]
      %647 = vst [vmem:[%s85 + $0x460] sm:%s77] %v646
      %v648 = vld [vmem:[%s84 + $0x468] sm:%s77]
      %649 = vst [vmem:[%s85 + $0x464] sm:%s77] %v648
      %v650 = vld [vmem:[%s84 + $0x464] sm:%s77]
      %651 = vst [vmem:[%s85 + $0x468] sm:%s77] %v650
      %v652 = vld [vmem:[%s84 + $0x46c] sm:%s77]
      %653 = vst [vmem:[%s85 + $0x46c] sm:%s77] %v652
      %v654 = vld [vmem:[%s84 + $0x470] sm:%s77]
      %655 = vst [vmem:[%s85 + $0x470] sm:%s77] %v654
      %v656 = vld [vmem:[%s84 + $0x478] sm:%s77]
      %657 = vst [vmem:[%s85 + $0x474] sm:%s77] %v656
      %v658 = vld [vmem:[%s84 + $0x474] sm:%s77]
      %659 = vst [vmem:[%s85 + $0x478] sm:%s77] %v658
      %v660 = vld [vmem:[%s84 + $0x47c] sm:%s77]
      %661 = vst [vmem:[%s85 + $0x47c] sm:%s77] %v660
      %v662 = vld [vmem:[%s84 + $0x480] sm:%s77]
      %663 = vst [vmem:[%s85 + $0x480] sm:%s77] %v662
      %v664 = vld [vmem:[%s84 + $0x488] sm:%s77]
      %665 = vst [vmem:[%s85 + $0x484] sm:%s77] %v664
      %v666 = vld [vmem:[%s84 + $0x484] sm:%s77]
      %667 = vst [vmem:[%s85 + $0x488] sm:%s77] %v666
      %v668 = vld [vmem:[%s84 + $0x48c] sm:%s77]
      %669 = vst [vmem:[%s85 + $0x48c] sm:%s77] %v668
      %v670 = vld [vmem:[%s84 + $0x490] sm:%s77]
      %671 = vst [vmem:[%s85 + $0x490] sm:%s77] %v670
      %v672 = vld [vmem:[%s84 + $0x498] sm:%s77]
      %673 = vst [vmem:[%s85 + $0x494] sm:%s77] %v672
      %v674 = vld [vmem:[%s84 + $0x494] sm:%s77]
      %675 = vst [vmem:[%s85 + $0x498] sm:%s77] %v674
      %v676 = vld [vmem:[%s84 + $0x49c] sm:%s77]
      %677 = vst [vmem:[%s85 + $0x49c] sm:%s77] %v676
      %v678 = vld [vmem:[%s84 + $0x4a0] sm:%s77]
      %679 = vst [vmem:[%s85 + $0x4a0] sm:%s77] %v678
      %v680 = vld [vmem:[%s84 + $0x4a8] sm:%s77]
      %681 = vst [vmem:[%s85 + $0x4a4] sm:%s77] %v680
      %v682 = vld [vmem:[%s84 + $0x4a4] sm:%s77]
      %683 = vst [vmem:[%s85 + $0x4a8] sm:%s77] %v682
      %v684 = vld [vmem:[%s84 + $0x4ac] sm:%s77]
      %685 = vst [vmem:[%s85 + $0x4ac] sm:%s77] %v684
      %v686 = vld [vmem:[%s84 + $0x4b0] sm:%s77]
      %687 = vst [vmem:[%s85 + $0x4b0] sm:%s77] %v686
      %v688 = vld [vmem:[%s84 + $0x4b8] sm:%s77]
      %689 = vst [vmem:[%s85 + $0x4b4] sm:%s77] %v688
      %v690 = vld [vmem:[%s84 + $0x4b4] sm:%s77]
      %691 = vst [vmem:[%s85 + $0x4b8] sm:%s77] %v690
      %v692 = vld [vmem:[%s84 + $0x4bc] sm:%s77]
      %693 = vst [vmem:[%s85 + $0x4bc] sm:%s77] %v692
      %v694 = vld [vmem:[%s84 + $0x4c0] sm:%s77]
      %695 = vst [vmem:[%s85 + $0x4c0] sm:%s77] %v694
      %v696 = vld [vmem:[%s84 + $0x4c8] sm:%s77]
      %697 = vst [vmem:[%s85 + $0x4c4] sm:%s77] %v696
      %v698 = vld [vmem:[%s84 + $0x4c4] sm:%s77]
      %699 = vst [vmem:[%s85 + $0x4c8] sm:%s77] %v698
      %v700 = vld [vmem:[%s84 + $0x4cc] sm:%s77]
      %701 = vst [vmem:[%s85 + $0x4cc] sm:%s77] %v700
      %v702 = vld [vmem:[%s84 + $0x4d0] sm:%s77]
      %703 = vst [vmem:[%s85 + $0x4d0] sm:%s77] %v702
      %v704 = vld [vmem:[%s84 + $0x4d8] sm:%s77]
      %705 = vst [vmem:[%s85 + $0x4d4] sm:%s77] %v704
      %v706 = vld [vmem:[%s84 + $0x4d4] sm:%s77]
      %707 = vst [vmem:[%s85 + $0x4d8] sm:%s77] %v706
      %v708 = vld [vmem:[%s84 + $0x4dc] sm:%s77]
      %709 = vst [vmem:[%s85 + $0x4dc] sm:%s77] %v708
      %v710 = vld [vmem:[%s84 + $0x4e0] sm:%s77]
      %711 = vst [vmem:[%s85 + $0x4e0] sm:%s77] %v710
      %v712 = vld [vmem:[%s84 + $0x4e8] sm:%s77]
      %713 = vst [vmem:[%s85 + $0x4e4] sm:%s77] %v712
      %v714 = vld [vmem:[%s84 + $0x4e4] sm:%s77]
      %715 = vst [vmem:[%s85 + $0x4e8] sm:%s77] %v714
      %v716 = vld [vmem:[%s84 + $0x4ec] sm:%s77]
      %717 = vst [vmem:[%s85 + $0x4ec] sm:%s77] %v716
      %v718 = vld [vmem:[%s84 + $0x4f0] sm:%s77]
      %719 = vst [vmem:[%s85 + $0x4f0] sm:%s77] %v718
      %v720 = vld [vmem:[%s84 + $0x4f8] sm:%s77]
      %721 = vst [vmem:[%s85 + $0x4f4] sm:%s77] %v720
      %v722 = vld [vmem:[%s84 + $0x4f4] sm:%s77]
      %723 = vst [vmem:[%s85 + $0x4f8] sm:%s77] %v722
      %v724 = vld [vmem:[%s84 + $0x4fc] sm:%s77]
      %725 = vst [vmem:[%s85 + $0x4fc] sm:%s77] %v724
      %v726 = vld [vmem:[%s84 + $0x500] sm:%s77]
      %727 = vst [vmem:[%s85 + $0x500] sm:%s77] %v726
      %v728 = vld [vmem:[%s84 + $0x508] sm:%s77]
      %729 = vst [vmem:[%s85 + $0x504] sm:%s77] %v728
      %v730 = vld [vmem:[%s84 + $0x504] sm:%s77]
      %731 = vst [vmem:[%s85 + $0x508] sm:%s77] %v730
      %v732 = vld [vmem:[%s84 + $0x50c] sm:%s77]
      %733 = vst [vmem:[%s85 + $0x50c] sm:%s77] %v732
      %v734 = vld [vmem:[%s84 + $0x510] sm:%s77]
      %735 = vst [vmem:[%s85 + $0x510] sm:%s77] %v734
      %v736 = vld [vmem:[%s84 + $0x518] sm:%s77]
      %737 = vst [vmem:[%s85 + $0x514] sm:%s77] %v736
      %v738 = vld [vmem:[%s84 + $0x514] sm:%s77]
      %739 = vst [vmem:[%s85 + $0x518] sm:%s77] %v738
      %v740 = vld [vmem:[%s84 + $0x51c] sm:%s77]
      %741 = vst [vmem:[%s85 + $0x51c] sm:%s77] %v740
      %v742 = vld [vmem:[%s84 + $0x520] sm:%s77]
      %743 = vst [vmem:[%s85 + $0x520] sm:%s77] %v742
      %v744 = vld [vmem:[%s84 + $0x528] sm:%s77]
      %745 = vst [vmem:[%s85 + $0x524] sm:%s77] %v744
      %v746 = vld [vmem:[%s84 + $0x524] sm:%s77]
      %747 = vst [vmem:[%s85 + $0x528] sm:%s77] %v746
      %v748 = vld [vmem:[%s84 + $0x52c] sm:%s77]
      %749 = vst [vmem:[%s85 + $0x52c] sm:%s77] %v748
      %v750 = vld [vmem:[%s84 + $0x530] sm:%s77]
      %751 = vst [vmem:[%s85 + $0x530] sm:%s77] %v750
      %v752 = vld [vmem:[%s84 + $0x538] sm:%s77]
      %753 = vst [vmem:[%s85 + $0x534] sm:%s77] %v752
      %v754 = vld [vmem:[%s84 + $0x534] sm:%s77]
      %755 = vst [vmem:[%s85 + $0x538] sm:%s77] %v754
      %v756 = vld [vmem:[%s84 + $0x53c] sm:%s77]
      %757 = vst [vmem:[%s85 + $0x53c] sm:%s77] %v756
      %v758 = vld [vmem:[%s84 + $0x540] sm:%s77]
      %759 = vst [vmem:[%s85 + $0x540] sm:%s77] %v758
      %v760 = vld [vmem:[%s84 + $0x548] sm:%s77]
      %761 = vst [vmem:[%s85 + $0x544] sm:%s77] %v760
      %v762 = vld [vmem:[%s84 + $0x544] sm:%s77]
      %763 = vst [vmem:[%s85 + $0x548] sm:%s77] %v762
      %v764 = vld [vmem:[%s84 + $0x54c] sm:%s77]
      %765 = vst [vmem:[%s85 + $0x54c] sm:%s77] %v764
      %v766 = vld [vmem:[%s84 + $0x550] sm:%s77]
      %767 = vst [vmem:[%s85 + $0x550] sm:%s77] %v766
      %v768 = vld [vmem:[%s84 + $0x558] sm:%s77]
      %769 = vst [vmem:[%s85 + $0x554] sm:%s77] %v768
      %v770 = vld [vmem:[%s84 + $0x554] sm:%s77]
      %771 = vst [vmem:[%s85 + $0x558] sm:%s77] %v770
      %v772 = vld [vmem:[%s84 + $0x55c] sm:%s77]
      %773 = vst [vmem:[%s85 + $0x55c] sm:%s77] %v772
      %v774 = vld [vmem:[%s84 + $0x560] sm:%s77]
      %775 = vst [vmem:[%s85 + $0x560] sm:%s77] %v774
      %v776 = vld [vmem:[%s84 + $0x568] sm:%s77]
      %777 = vst [vmem:[%s85 + $0x564] sm:%s77] %v776
      %v778 = vld [vmem:[%s84 + $0x564] sm:%s77]
      %779 = vst [vmem:[%s85 + $0x568] sm:%s77] %v778
      %v780 = vld [vmem:[%s84 + $0x56c] sm:%s77]
      %781 = vst [vmem:[%s85 + $0x56c] sm:%s77] %v780
      %v782 = vld [vmem:[%s84 + $0x570] sm:%s77]
      %783 = vst [vmem:[%s85 + $0x570] sm:%s77] %v782
      %v784 = vld [vmem:[%s84 + $0x578] sm:%s77]
      %785 = vst [vmem:[%s85 + $0x574] sm:%s77] %v784
      %v786 = vld [vmem:[%s84 + $0x574] sm:%s77]
      %787 = vst [vmem:[%s85 + $0x578] sm:%s77] %v786
      %v788 = vld [vmem:[%s84 + $0x57c] sm:%s77]
      %789 = vst [vmem:[%s85 + $0x57c] sm:%s77] %v788
      %v790 = vld [vmem:[%s84 + $0x580] sm:%s77]
      %791 = vst [vmem:[%s85 + $0x580] sm:%s77] %v790
      %v792 = vld [vmem:[%s84 + $0x588] sm:%s77]
      %793 = vst [vmem:[%s85 + $0x584] sm:%s77] %v792
      %v794 = vld [vmem:[%s84 + $0x584] sm:%s77]
      %795 = vst [vmem:[%s85 + $0x588] sm:%s77] %v794
      %v796 = vld [vmem:[%s84 + $0x58c] sm:%s77]
      %797 = vst [vmem:[%s85 + $0x58c] sm:%s77] %v796
      %v798 = vld [vmem:[%s84 + $0x590] sm:%s77]
      %799 = vst [vmem:[%s85 + $0x590] sm:%s77] %v798
      %v800 = vld [vmem:[%s84 + $0x598] sm:%s77]
      %801 = vst [vmem:[%s85 + $0x594] sm:%s77] %v800
      %v802 = vld [vmem:[%s84 + $0x594] sm:%s77]
      %803 = vst [vmem:[%s85 + $0x598] sm:%s77] %v802
      %v804 = vld [vmem:[%s84 + $0x59c] sm:%s77]
      %805 = vst [vmem:[%s85 + $0x59c] sm:%s77] %v804
      %v806 = vld [vmem:[%s84 + $0x5a0] sm:%s77]
      %807 = vst [vmem:[%s85 + $0x5a0] sm:%s77] %v806
      %v808 = vld [vmem:[%s84 + $0x5a8] sm:%s77]
      %809 = vst [vmem:[%s85 + $0x5a4] sm:%s77] %v808
      %v810 = vld [vmem:[%s84 + $0x5a4] sm:%s77]
      %811 = vst [vmem:[%s85 + $0x5a8] sm:%s77] %v810
      %v812 = vld [vmem:[%s84 + $0x5ac] sm:%s77]
      %813 = vst [vmem:[%s85 + $0x5ac] sm:%s77] %v812
      %v814 = vld [vmem:[%s84 + $0x5b0] sm:%s77]
      %815 = vst [vmem:[%s85 + $0x5b0] sm:%s77] %v814
      %v816 = vld [vmem:[%s84 + $0x5b8] sm:%s77]
      %817 = vst [vmem:[%s85 + $0x5b4] sm:%s77] %v816
      %v818 = vld [vmem:[%s84 + $0x5b4] sm:%s77]
      %819 = vst [vmem:[%s85 + $0x5b8] sm:%s77] %v818
      %v820 = vld [vmem:[%s84 + $0x5bc] sm:%s77]
      %821 = vst [vmem:[%s85 + $0x5bc] sm:%s77] %v820
      %v822 = vld [vmem:[%s84 + $0x5c0] sm:%s77]
      %823 = vst [vmem:[%s85 + $0x5c0] sm:%s77] %v822
      %v824 = vld [vmem:[%s84 + $0x5c8] sm:%s77]
      %825 = vst [vmem:[%s85 + $0x5c4] sm:%s77] %v824
      %v826 = vld [vmem:[%s84 + $0x5c4] sm:%s77]
      %827 = vst [vmem:[%s85 + $0x5c8] sm:%s77] %v826
      %v828 = vld [vmem:[%s84 + $0x5cc] sm:%s77]
      %829 = vst [vmem:[%s85 + $0x5cc] sm:%s77] %v828
      %v830 = vld [vmem:[%s84 + $0x5d0] sm:%s77]
      %831 = vst [vmem:[%s85 + $0x5d0] sm:%s77] %v830
      %v832 = vld [vmem:[%s84 + $0x5d8] sm:%s77]
      %833 = vst [vmem:[%s85 + $0x5d4] sm:%s77] %v832
      %v834 = vld [vmem:[%s84 + $0x5d4] sm:%s77]
      %835 = vst [vmem:[%s85 + $0x5d8] sm:%s77] %v834
      %v836 = vld [vmem:[%s84 + $0x5dc] sm:%s77]
      %837 = vst [vmem:[%s85 + $0x5dc] sm:%s77] %v836
      %v838 = vld [vmem:[%s84 + $0x5e0] sm:%s77]
      %839 = vst [vmem:[%s85 + $0x5e0] sm:%s77] %v838
      %v840 = vld [vmem:[%s84 + $0x5e8] sm:%s77]
      %841 = vst [vmem:[%s85 + $0x5e4] sm:%s77] %v840
      %v842 = vld [vmem:[%s84 + $0x5e4] sm:%s77]
      %843 = vst [vmem:[%s85 + $0x5e8] sm:%s77] %v842
      %v844 = vld [vmem:[%s84 + $0x5ec] sm:%s77]
      %845 = vst [vmem:[%s85 + $0x5ec] sm:%s77] %v844
      %v846 = vld [vmem:[%s84 + $0x5f0] sm:%s77]
      %847 = vst [vmem:[%s85 + $0x5f0] sm:%s77] %v846
      %v848 = vld [vmem:[%s84 + $0x5f8] sm:%s77]
      %849 = vst [vmem:[%s85 + $0x5f4] sm:%s77] %v848
      %v850 = vld [vmem:[%s84 + $0x5f4] sm:%s77]
      %851 = vst [vmem:[%s85 + $0x5f8] sm:%s77] %v850
      %v852 = vld [vmem:[%s84 + $0x5fc] sm:%s77]
      %853 = vst [vmem:[%s85 + $0x5fc] sm:%s77] %v852
      %v854 = vld [vmem:[%s84 + $0x600] sm:%s77]
      %855 = vst [vmem:[%s85 + $0x600] sm:%s77] %v854
      %v856 = vld [vmem:[%s84 + $0x608] sm:%s77]
      %857 = vst [vmem:[%s85 + $0x604] sm:%s77] %v856
      %v858 = vld [vmem:[%s84 + $0x604] sm:%s77]
      %859 = vst [vmem:[%s85 + $0x608] sm:%s77] %v858
      %v860 = vld [vmem:[%s84 + $0x60c] sm:%s77]
      %861 = vst [vmem:[%s85 + $0x60c] sm:%s77] %v860
      %v862 = vld [vmem:[%s84 + $0x610] sm:%s77]
      %863 = vst [vmem:[%s85 + $0x610] sm:%s77] %v862
      %v864 = vld [vmem:[%s84 + $0x618] sm:%s77]
      %865 = vst [vmem:[%s85 + $0x614] sm:%s77] %v864
      %v866 = vld [vmem:[%s84 + $0x614] sm:%s77]
      %867 = vst [vmem:[%s85 + $0x618] sm:%s77] %v866
      %v868 = vld [vmem:[%s84 + $0x61c] sm:%s77]
      %869 = vst [vmem:[%s85 + $0x61c] sm:%s77] %v868
      %v870 = vld [vmem:[%s84 + $0x620] sm:%s77]
      %871 = vst [vmem:[%s85 + $0x620] sm:%s77] %v870
      %v872 = vld [vmem:[%s84 + $0x628] sm:%s77]
      %873 = vst [vmem:[%s85 + $0x624] sm:%s77] %v872
      %v874 = vld [vmem:[%s84 + $0x624] sm:%s77]
      %875 = vst [vmem:[%s85 + $0x628] sm:%s77] %v874
      %v876 = vld [vmem:[%s84 + $0x62c] sm:%s77]
      %877 = vst [vmem:[%s85 + $0x62c] sm:%s77] %v876
      %v878 = vld [vmem:[%s84 + $0x630] sm:%s77]
      %879 = vst [vmem:[%s85 + $0x630] sm:%s77] %v878
      %v880 = vld [vmem:[%s84 + $0x638] sm:%s77]
      %881 = vst [vmem:[%s85 + $0x634] sm:%s77] %v880
      %v882 = vld [vmem:[%s84 + $0x634] sm:%s77]
      %883 = vst [vmem:[%s85 + $0x638] sm:%s77] %v882
      %v884 = vld [vmem:[%s84 + $0x63c] sm:%s77]
      %885 = vst [vmem:[%s85 + $0x63c] sm:%s77] %v884
      %v886 = vld [vmem:[%s84 + $0x640] sm:%s77]
      %887 = vst [vmem:[%s85 + $0x640] sm:%s77] %v886
      %v888 = vld [vmem:[%s84 + $0x648] sm:%s77]
      %889 = vst [vmem:[%s85 + $0x644] sm:%s77] %v888
      %v890 = vld [vmem:[%s84 + $0x644] sm:%s77]
      %891 = vst [vmem:[%s85 + $0x648] sm:%s77] %v890
      %v892 = vld [vmem:[%s84 + $0x64c] sm:%s77]
      %893 = vst [vmem:[%s85 + $0x64c] sm:%s77] %v892
      %v894 = vld [vmem:[%s84 + $0x650] sm:%s77]
      %895 = vst [vmem:[%s85 + $0x650] sm:%s77] %v894
      %v896 = vld [vmem:[%s84 + $0x658] sm:%s77]
      %897 = vst [vmem:[%s85 + $0x654] sm:%s77] %v896
      %v898 = vld [vmem:[%s84 + $0x654] sm:%s77]
      %899 = vst [vmem:[%s85 + $0x658] sm:%s77] %v898
      %v900 = vld [vmem:[%s84 + $0x65c] sm:%s77]
      %901 = vst [vmem:[%s85 + $0x65c] sm:%s77] %v900
      %v902 = vld [vmem:[%s84 + $0x660] sm:%s77]
      %903 = vst [vmem:[%s85 + $0x660] sm:%s77] %v902
      %v904 = vld [vmem:[%s84 + $0x668] sm:%s77]
      %905 = vst [vmem:[%s85 + $0x664] sm:%s77] %v904
      %v906 = vld [vmem:[%s84 + $0x664] sm:%s77]
      %907 = vst [vmem:[%s85 + $0x668] sm:%s77] %v906
      %v908 = vld [vmem:[%s84 + $0x66c] sm:%s77]
      %909 = vst [vmem:[%s85 + $0x66c] sm:%s77] %v908
      %v910 = vld [vmem:[%s84 + $0x670] sm:%s77]
      %911 = vst [vmem:[%s85 + $0x670] sm:%s77] %v910
      %v912 = vld [vmem:[%s84 + $0x678] sm:%s77]
      %913 = vst [vmem:[%s85 + $0x674] sm:%s77] %v912
      %v914 = vld [vmem:[%s84 + $0x674] sm:%s77]
      %915 = vst [vmem:[%s85 + $0x678] sm:%s77] %v914
      %v916 = vld [vmem:[%s84 + $0x67c] sm:%s77]
      %917 = vst [vmem:[%s85 + $0x67c] sm:%s77] %v916
      %v918 = vld [vmem:[%s84 + $0x680] sm:%s77]
      %919 = vst [vmem:[%s85 + $0x680] sm:%s77] %v918
      %v920 = vld [vmem:[%s84 + $0x688] sm:%s77]
      %921 = vst [vmem:[%s85 + $0x684] sm:%s77] %v920
      %v922 = vld [vmem:[%s84 + $0x684] sm:%s77]
      %923 = vst [vmem:[%s85 + $0x688] sm:%s77] %v922
      %v924 = vld [vmem:[%s84 + $0x68c] sm:%s77]
      %925 = vst [vmem:[%s85 + $0x68c] sm:%s77] %v924
      %v926 = vld [vmem:[%s84 + $0x690] sm:%s77]
      %927 = vst [vmem:[%s85 + $0x690] sm:%s77] %v926
      %v928 = vld [vmem:[%s84 + $0x698] sm:%s77]
      %929 = vst [vmem:[%s85 + $0x694] sm:%s77] %v928
      %v930 = vld [vmem:[%s84 + $0x694] sm:%s77]
      %931 = vst [vmem:[%s85 + $0x698] sm:%s77] %v930
      %v932 = vld [vmem:[%s84 + $0x69c] sm:%s77]
      %933 = vst [vmem:[%s85 + $0x69c] sm:%s77] %v932
      %v934 = vld [vmem:[%s84 + $0x6a0] sm:%s77]
      %935 = vst [vmem:[%s85 + $0x6a0] sm:%s77] %v934
      %v936 = vld [vmem:[%s84 + $0x6a8] sm:%s77]
      %937 = vst [vmem:[%s85 + $0x6a4] sm:%s77] %v936
      %v938 = vld [vmem:[%s84 + $0x6a4] sm:%s77]
      %939 = vst [vmem:[%s85 + $0x6a8] sm:%s77] %v938
      %v940 = vld [vmem:[%s84 + $0x6ac] sm:%s77]
      %941 = vst [vmem:[%s85 + $0x6ac] sm:%s77] %v940
      %v942 = vld [vmem:[%s84 + $0x6b0] sm:%s77]
      %943 = vst [vmem:[%s85 + $0x6b0] sm:%s77] %v942
      %v944 = vld [vmem:[%s84 + $0x6b8] sm:%s77]
      %945 = vst [vmem:[%s85 + $0x6b4] sm:%s77] %v944
      %v946 = vld [vmem:[%s84 + $0x6b4] sm:%s77]
      %947 = vst [vmem:[%s85 + $0x6b8] sm:%s77] %v946
      %v948 = vld [vmem:[%s84 + $0x6bc] sm:%s77]
      %949 = vst [vmem:[%s85 + $0x6bc] sm:%s77] %v948
      %v950 = vld [vmem:[%s84 + $0x6c0] sm:%s77]
      %951 = vst [vmem:[%s85 + $0x6c0] sm:%s77] %v950
      %v952 = vld [vmem:[%s84 + $0x6c8] sm:%s77]
      %953 = vst [vmem:[%s85 + $0x6c4] sm:%s77] %v952
      %v954 = vld [vmem:[%s84 + $0x6c4] sm:%s77]
      %955 = vst [vmem:[%s85 + $0x6c8] sm:%s77] %v954
      %v956 = vld [vmem:[%s84 + $0x6cc] sm:%s77]
      %957 = vst [vmem:[%s85 + $0x6cc] sm:%s77] %v956
      %v958 = vld [vmem:[%s84 + $0x6d0] sm:%s77]
      %959 = vst [vmem:[%s85 + $0x6d0] sm:%s77] %v958
      %v960 = vld [vmem:[%s84 + $0x6d8] sm:%s77]
      %961 = vst [vmem:[%s85 + $0x6d4] sm:%s77] %v960
      %v962 = vld [vmem:[%s84 + $0x6d4] sm:%s77]
      %963 = vst [vmem:[%s85 + $0x6d8] sm:%s77] %v962
      %v964 = vld [vmem:[%s84 + $0x6dc] sm:%s77]
      %965 = vst [vmem:[%s85 + $0x6dc] sm:%s77] %v964
      %v966 = vld [vmem:[%s84 + $0x6e0] sm:%s77]
      %967 = vst [vmem:[%s85 + $0x6e0] sm:%s77] %v966
      %v968 = vld [vmem:[%s84 + $0x6e8] sm:%s77]
      %969 = vst [vmem:[%s85 + $0x6e4] sm:%s77] %v968
      %v970 = vld [vmem:[%s84 + $0x6e4] sm:%s77]
      %971 = vst [vmem:[%s85 + $0x6e8] sm:%s77] %v970
      %v972 = vld [vmem:[%s84 + $0x6ec] sm:%s77]
      %973 = vst [vmem:[%s85 + $0x6ec] sm:%s77] %v972
      %v974 = vld [vmem:[%s84 + $0x6f0] sm:%s77]
      %975 = vst [vmem:[%s85 + $0x6f0] sm:%s77] %v974
      %v976 = vld [vmem:[%s84 + $0x6f8] sm:%s77]
      %977 = vst [vmem:[%s85 + $0x6f4] sm:%s77] %v976
      %v978 = vld [vmem:[%s84 + $0x6f4] sm:%s77]
      %979 = vst [vmem:[%s85 + $0x6f8] sm:%s77] %v978
      %v980 = vld [vmem:[%s84 + $0x6fc] sm:%s77]
      %981 = vst [vmem:[%s85 + $0x6fc] sm:%s77] %v980
      %v982 = vld [vmem:[%s84 + $0x700] sm:%s77]
      %983 = vst [vmem:[%s85 + $0x700] sm:%s77] %v982
      %v984 = vld [vmem:[%s84 + $0x708] sm:%s77]
      %985 = vst [vmem:[%s85 + $0x704] sm:%s77] %v984
      %v986 = vld [vmem:[%s84 + $0x704] sm:%s77]
      %987 = vst [vmem:[%s85 + $0x708] sm:%s77] %v986
      %v988 = vld [vmem:[%s84 + $0x70c] sm:%s77]
      %989 = vst [vmem:[%s85 + $0x70c] sm:%s77] %v988
      %v990 = vld [vmem:[%s84 + $0x710] sm:%s77]
      %991 = vst [vmem:[%s85 + $0x710] sm:%s77] %v990
      %v992 = vld [vmem:[%s84 + $0x718] sm:%s77]
      %993 = vst [vmem:[%s85 + $0x714] sm:%s77] %v992
      %v994 = vld [vmem:[%s84 + $0x714] sm:%s77]
      %995 = vst [vmem:[%s85 + $0x718] sm:%s77] %v994
      %v996 = vld [vmem:[%s84 + $0x71c] sm:%s77]
      %997 = vst [vmem:[%s85 + $0x71c] sm:%s77] %v996
      %v998 = vld [vmem:[%s84 + $0x720] sm:%s77]
      %999 = vst [vmem:[%s85 + $0x720] sm:%s77] %v998
      %v1000 = vld [vmem:[%s84 + $0x728] sm:%s77]
      %1001 = vst [vmem:[%s85 + $0x724] sm:%s77] %v1000
      %v1002 = vld [vmem:[%s84 + $0x724] sm:%s77]
      %1003 = vst [vmem:[%s85 + $0x728] sm:%s77] %v1002
      %v1004 = vld [vmem:[%s84 + $0x72c] sm:%s77]
      %1005 = vst [vmem:[%s85 + $0x72c] sm:%s77] %v1004
      %v1006 = vld [vmem:[%s84 + $0x730] sm:%s77]
      %1007 = vst [vmem:[%s85 + $0x730] sm:%s77] %v1006
      %v1008 = vld [vmem:[%s84 + $0x738] sm:%s77]
      %1009 = vst [vmem:[%s85 + $0x734] sm:%s77] %v1008
      %v1010 = vld [vmem:[%s84 + $0x734] sm:%s77]
      %1011 = vst [vmem:[%s85 + $0x738] sm:%s77] %v1010
      %v1012 = vld [vmem:[%s84 + $0x73c] sm:%s77]
      %1013 = vst [vmem:[%s85 + $0x73c] sm:%s77] %v1012
      %v1014 = vld [vmem:[%s84 + $0x740] sm:%s77]
      %1015 = vst [vmem:[%s85 + $0x740] sm:%s77] %v1014
      %v1016 = vld [vmem:[%s84 + $0x748] sm:%s77]
      %1017 = vst [vmem:[%s85 + $0x744] sm:%s77] %v1016
      %v1018 = vld [vmem:[%s84 + $0x744] sm:%s77]
      %1019 = vst [vmem:[%s85 + $0x748] sm:%s77] %v1018
      %v1020 = vld [vmem:[%s84 + $0x74c] sm:%s77]
      %1021 = vst [vmem:[%s85 + $0x74c] sm:%s77] %v1020
      %v1022 = vld [vmem:[%s84 + $0x750] sm:%s77]
      %1023 = vst [vmem:[%s85 + $0x750] sm:%s77] %v1022
      %v1024 = vld [vmem:[%s84 + $0x758] sm:%s77]
      %1025 = vst [vmem:[%s85 + $0x754] sm:%s77] %v1024
      %v1026 = vld [vmem:[%s84 + $0x754] sm:%s77]
      %1027 = vst [vmem:[%s85 + $0x758] sm:%s77] %v1026
      %v1028 = vld [vmem:[%s84 + $0x75c] sm:%s77]
      %1029 = vst [vmem:[%s85 + $0x75c] sm:%s77] %v1028
      %v1030 = vld [vmem:[%s84 + $0x760] sm:%s77]
      %1031 = vst [vmem:[%s85 + $0x760] sm:%s77] %v1030
      %v1032 = vld [vmem:[%s84 + $0x768] sm:%s77]
      %1033 = vst [vmem:[%s85 + $0x764] sm:%s77] %v1032
      %v1034 = vld [vmem:[%s84 + $0x764] sm:%s77]
      %1035 = vst [vmem:[%s85 + $0x768] sm:%s77] %v1034
      %v1036 = vld [vmem:[%s84 + $0x76c] sm:%s77]
      %1037 = vst [vmem:[%s85 + $0x76c] sm:%s77] %v1036
      %v1038 = vld [vmem:[%s84 + $0x770] sm:%s77]
      %1039 = vst [vmem:[%s85 + $0x770] sm:%s77] %v1038
      %v1040 = vld [vmem:[%s84 + $0x778] sm:%s77]
      %1041 = vst [vmem:[%s85 + $0x774] sm:%s77] %v1040
      %v1042 = vld [vmem:[%s84 + $0x774] sm:%s77]
      %1043 = vst [vmem:[%s85 + $0x778] sm:%s77] %v1042
      %v1044 = vld [vmem:[%s84 + $0x77c] sm:%s77]
      %1045 = vst [vmem:[%s85 + $0x77c] sm:%s77] %v1044
      %v1046 = vld [vmem:[%s84 + $0x780] sm:%s77]
      %1047 = vst [vmem:[%s85 + $0x780] sm:%s77] %v1046
      %v1048 = vld [vmem:[%s84 + $0x788] sm:%s77]
      %1049 = vst [vmem:[%s85 + $0x784] sm:%s77] %v1048
      %v1050 = vld [vmem:[%s84 + $0x784] sm:%s77]
      %1051 = vst [vmem:[%s85 + $0x788] sm:%s77] %v1050
      %v1052 = vld [vmem:[%s84 + $0x78c] sm:%s77]
      %1053 = vst [vmem:[%s85 + $0x78c] sm:%s77] %v1052
      %v1054 = vld [vmem:[%s84 + $0x790] sm:%s77]
      %1055 = vst [vmem:[%s85 + $0x790] sm:%s77] %v1054
      %v1056 = vld [vmem:[%s84 + $0x798] sm:%s77]
      %1057 = vst [vmem:[%s85 + $0x794] sm:%s77] %v1056
      %v1058 = vld [vmem:[%s84 + $0x794] sm:%s77]
      %1059 = vst [vmem:[%s85 + $0x798] sm:%s77] %v1058
      %v1060 = vld [vmem:[%s84 + $0x79c] sm:%s77]
      %1061 = vst [vmem:[%s85 + $0x79c] sm:%s77] %v1060
      %v1062 = vld [vmem:[%s84 + $0x7a0] sm:%s77]
      %1063 = vst [vmem:[%s85 + $0x7a0] sm:%s77] %v1062
      %v1064 = vld [vmem:[%s84 + $0x7a8] sm:%s77]
      %1065 = vst [vmem:[%s85 + $0x7a4] sm:%s77] %v1064
      %v1066 = vld [vmem:[%s84 + $0x7a4] sm:%s77]
      %1067 = vst [vmem:[%s85 + $0x7a8] sm:%s77] %v1066
      %v1068 = vld [vmem:[%s84 + $0x7ac] sm:%s77]
      %1069 = vst [vmem:[%s85 + $0x7ac] sm:%s77] %v1068
      %v1070 = vld [vmem:[%s84 + $0x7b0] sm:%s77]
      %1071 = vst [vmem:[%s85 + $0x7b0] sm:%s77] %v1070
      %v1072 = vld [vmem:[%s84 + $0x7b8] sm:%s77]
      %1073 = vst [vmem:[%s85 + $0x7b4] sm:%s77] %v1072
      %v1074 = vld [vmem:[%s84 + $0x7b4] sm:%s77]
      %1075 = vst [vmem:[%s85 + $0x7b8] sm:%s77] %v1074
      %v1076 = vld [vmem:[%s84 + $0x7bc] sm:%s77]
      %1077 = vst [vmem:[%s85 + $0x7bc] sm:%s77] %v1076
      %v1078 = vld [vmem:[%s84 + $0x7c0] sm:%s77]
      %1079 = vst [vmem:[%s85 + $0x7c0] sm:%s77] %v1078
      %v1080 = vld [vmem:[%s84 + $0x7c8] sm:%s77]
      %1081 = vst [vmem:[%s85 + $0x7c4] sm:%s77] %v1080
      %v1082 = vld [vmem:[%s84 + $0x7c4] sm:%s77]
      %1083 = vst [vmem:[%s85 + $0x7c8] sm:%s77] %v1082
      %v1084 = vld [vmem:[%s84 + $0x7cc] sm:%s77]
      %1085 = vst [vmem:[%s85 + $0x7cc] sm:%s77] %v1084
      %v1086 = vld [vmem:[%s84 + $0x7d0] sm:%s77]
      %1087 = vst [vmem:[%s85 + $0x7d0] sm:%s77] %v1086
      %v1088 = vld [vmem:[%s84 + $0x7d8] sm:%s77]
      %1089 = vst [vmem:[%s85 + $0x7d4] sm:%s77] %v1088
      %v1090 = vld [vmem:[%s84 + $0x7d4] sm:%s77]
      %1091 = vst [vmem:[%s85 + $0x7d8] sm:%s77] %v1090
      %v1092 = vld [vmem:[%s84 + $0x7dc] sm:%s77]
      %1093 = vst [vmem:[%s85 + $0x7dc] sm:%s77] %v1092
      %v1094 = vld [vmem:[%s84 + $0x7e0] sm:%s77]
      %1095 = vst [vmem:[%s85 + $0x7e0] sm:%s77] %v1094
      %v1096 = vld [vmem:[%s84 + $0x7e8] sm:%s77]
      %1097 = vst [vmem:[%s85 + $0x7e4] sm:%s77] %v1096
      %v1098 = vld [vmem:[%s84 + $0x7e4] sm:%s77]
      %1099 = vst [vmem:[%s85 + $0x7e8] sm:%s77] %v1098
      %v1100 = vld [vmem:[%s84 + $0x7ec] sm:%s77]
      %1101 = vst [vmem:[%s85 + $0x7ec] sm:%s77] %v1100
      %v1102 = vld [vmem:[%s84 + $0x7f0] sm:%s77]
      %1103 = vst [vmem:[%s85 + $0x7f0] sm:%s77] %v1102
      %v1104 = vld [vmem:[%s84 + $0x7f8] sm:%s77]
      %1105 = vst [vmem:[%s85 + $0x7f4] sm:%s77] %v1104
      %v1106 = vld [vmem:[%s84 + $0x7f4] sm:%s77]
      %1107 = vst [vmem:[%s85 + $0x7f8] sm:%s77] %v1106
      %v1108 = vld [vmem:[%s84 + $0x7fc] sm:%s77]
      %1109 = vst [vmem:[%s85 + $0x7fc] sm:%s77] %v1108
      %v1110 = vld [vmem:[%s84 + $0x800] sm:%s77]
      %1111 = vst [vmem:[%s85 + $0x800] sm:%s77] %v1110
      %v1112 = vld [vmem:[%s84 + $0x808] sm:%s77]
      %1113 = vst [vmem:[%s85 + $0x804] sm:%s77] %v1112
      %v1114 = vld [vmem:[%s84 + $0x804] sm:%s77]
      %1115 = vst [vmem:[%s85 + $0x808] sm:%s77] %v1114
      %v1116 = vld [vmem:[%s84 + $0x80c] sm:%s77]
      %1117 = vst [vmem:[%s85 + $0x80c] sm:%s77] %v1116
      %v1118 = vld [vmem:[%s84 + $0x810] sm:%s77]
      %1119 = vst [vmem:[%s85 + $0x810] sm:%s77] %v1118
      %v1120 = vld [vmem:[%s84 + $0x818] sm:%s77]
      %1121 = vst [vmem:[%s85 + $0x814] sm:%s77] %v1120
      %v1122 = vld [vmem:[%s84 + $0x814] sm:%s77]
      %1123 = vst [vmem:[%s85 + $0x818] sm:%s77] %v1122
      %v1124 = vld [vmem:[%s84 + $0x81c] sm:%s77]
      %1125 = vst [vmem:[%s85 + $0x81c] sm:%s77] %v1124
      %v1126 = vld [vmem:[%s84 + $0x820] sm:%s77]
      %1127 = vst [vmem:[%s85 + $0x820] sm:%s77] %v1126
      %v1128 = vld [vmem:[%s84 + $0x828] sm:%s77]
      %1129 = vst [vmem:[%s85 + $0x824] sm:%s77] %v1128
      %v1130 = vld [vmem:[%s84 + $0x824] sm:%s77]
      %1131 = vst [vmem:[%s85 + $0x828] sm:%s77] %v1130
      %v1132 = vld [vmem:[%s84 + $0x82c] sm:%s77]
      %1133 = vst [vmem:[%s85 + $0x82c] sm:%s77] %v1132
      %v1134 = vld [vmem:[%s84 + $0x830] sm:%s77]
      %1135 = vst [vmem:[%s85 + $0x830] sm:%s77] %v1134
      %v1136 = vld [vmem:[%s84 + $0x838] sm:%s77]
      %1137 = vst [vmem:[%s85 + $0x834] sm:%s77] %v1136
      %v1138 = vld [vmem:[%s84 + $0x834] sm:%s77]
      %1139 = vst [vmem:[%s85 + $0x838] sm:%s77] %v1138
      %v1140 = vld [vmem:[%s84 + $0x83c] sm:%s77]
      %1141 = vst [vmem:[%s85 + $0x83c] sm:%s77] %v1140
      %v1142 = vld [vmem:[%s84 + $0x840] sm:%s77]
      %1143 = vst [vmem:[%s85 + $0x840] sm:%s77] %v1142
      %v1144 = vld [vmem:[%s84 + $0x848] sm:%s77]
      %1145 = vst [vmem:[%s85 + $0x844] sm:%s77] %v1144
      %v1146 = vld [vmem:[%s84 + $0x844] sm:%s77]
      %1147 = vst [vmem:[%s85 + $0x848] sm:%s77] %v1146
      %v1148 = vld [vmem:[%s84 + $0x84c] sm:%s77]
      %1149 = vst [vmem:[%s85 + $0x84c] sm:%s77] %v1148
      %v1150 = vld [vmem:[%s84 + $0x850] sm:%s77]
      %1151 = vst [vmem:[%s85 + $0x850] sm:%s77] %v1150
      %v1152 = vld [vmem:[%s84 + $0x858] sm:%s77]
      %1153 = vst [vmem:[%s85 + $0x854] sm:%s77] %v1152
      %v1154 = vld [vmem:[%s84 + $0x854] sm:%s77]
      %1155 = vst [vmem:[%s85 + $0x858] sm:%s77] %v1154
      %v1156 = vld [vmem:[%s84 + $0x85c] sm:%s77]
      %1157 = vst [vmem:[%s85 + $0x85c] sm:%s77] %v1156
      %v1158 = vld [vmem:[%s84 + $0x860] sm:%s77]
      %1159 = vst [vmem:[%s85 + $0x860] sm:%s77] %v1158
      %v1160 = vld [vmem:[%s84 + $0x868] sm:%s77]
      %1161 = vst [vmem:[%s85 + $0x864] sm:%s77] %v1160
      %v1162 = vld [vmem:[%s84 + $0x864] sm:%s77]
      %1163 = vst [vmem:[%s85 + $0x868] sm:%s77] %v1162
      %v1164 = vld [vmem:[%s84 + $0x86c] sm:%s77]
      %1165 = vst [vmem:[%s85 + $0x86c] sm:%s77] %v1164
      %v1166 = vld [vmem:[%s84 + $0x870] sm:%s77]
      %1167 = vst [vmem:[%s85 + $0x870] sm:%s77] %v1166
      %v1168 = vld [vmem:[%s84 + $0x878] sm:%s77]
      %1169 = vst [vmem:[%s85 + $0x874] sm:%s77] %v1168
      %v1170 = vld [vmem:[%s84 + $0x874] sm:%s77]
      %1171 = vst [vmem:[%s85 + $0x878] sm:%s77] %v1170
      %v1172 = vld [vmem:[%s84 + $0x87c] sm:%s77]
      %1173 = vst [vmem:[%s85 + $0x87c] sm:%s77] %v1172
      %v1174 = vld [vmem:[%s84 + $0x880] sm:%s77]
      %1175 = vst [vmem:[%s85 + $0x880] sm:%s77] %v1174
      %v1176 = vld [vmem:[%s84 + $0x888] sm:%s77]
      %1177 = vst [vmem:[%s85 + $0x884] sm:%s77] %v1176
      %v1178 = vld [vmem:[%s84 + $0x884] sm:%s77]
      %1179 = vst [vmem:[%s85 + $0x888] sm:%s77] %v1178
      %v1180 = vld [vmem:[%s84 + $0x88c] sm:%s77]
      %1181 = vst [vmem:[%s85 + $0x88c] sm:%s77] %v1180
      %v1182 = vld [vmem:[%s84 + $0x890] sm:%s77]
      %1183 = vst [vmem:[%s85 + $0x890] sm:%s77] %v1182
      %v1184 = vld [vmem:[%s84 + $0x898] sm:%s77]
      %1185 = vst [vmem:[%s85 + $0x894] sm:%s77] %v1184
      %v1186 = vld [vmem:[%s84 + $0x894] sm:%s77]
      %1187 = vst [vmem:[%s85 + $0x898] sm:%s77] %v1186
      %v1188 = vld [vmem:[%s84 + $0x89c] sm:%s77]
      %1189 = vst [vmem:[%s85 + $0x89c] sm:%s77] %v1188
      %v1190 = vld [vmem:[%s84 + $0x8a0] sm:%s77]
      %1191 = vst [vmem:[%s85 + $0x8a0] sm:%s77] %v1190
      %v1192 = vld [vmem:[%s84 + $0x8a8] sm:%s77]
      %1193 = vst [vmem:[%s85 + $0x8a4] sm:%s77] %v1192
      %v1194 = vld [vmem:[%s84 + $0x8a4] sm:%s77]
      %1195 = vst [vmem:[%s85 + $0x8a8] sm:%s77] %v1194
      %v1196 = vld [vmem:[%s84 + $0x8ac] sm:%s77]
      %1197 = vst [vmem:[%s85 + $0x8ac] sm:%s77] %v1196
      %v1198 = vld [vmem:[%s84 + $0x8b0] sm:%s77]
      %1199 = vst [vmem:[%s85 + $0x8b0] sm:%s77] %v1198
      %v1200 = vld [vmem:[%s84 + $0x8b8] sm:%s77]
      %1201 = vst [vmem:[%s85 + $0x8b4] sm:%s77] %v1200
      %v1202 = vld [vmem:[%s84 + $0x8b4] sm:%s77]
      %1203 = vst [vmem:[%s85 + $0x8b8] sm:%s77] %v1202
      %v1204 = vld [vmem:[%s84 + $0x8bc] sm:%s77]
      %1205 = vst [vmem:[%s85 + $0x8bc] sm:%s77] %v1204
      %v1206 = vld [vmem:[%s84 + $0x8c0] sm:%s77]
      %1207 = vst [vmem:[%s85 + $0x8c0] sm:%s77] %v1206
      %v1208 = vld [vmem:[%s84 + $0x8c8] sm:%s77]
      %1209 = vst [vmem:[%s85 + $0x8c4] sm:%s77] %v1208
      %v1210 = vld [vmem:[%s84 + $0x8c4] sm:%s77]
      %1211 = vst [vmem:[%s85 + $0x8c8] sm:%s77] %v1210
      %v1212 = vld [vmem:[%s84 + $0x8cc] sm:%s77]
      %1213 = vst [vmem:[%s85 + $0x8cc] sm:%s77] %v1212
      %v1214 = vld [vmem:[%s84 + $0x8d0] sm:%s77]
      %1215 = vst [vmem:[%s85 + $0x8d0] sm:%s77] %v1214
      %v1216 = vld [vmem:[%s84 + $0x8d8] sm:%s77]
      %1217 = vst [vmem:[%s85 + $0x8d4] sm:%s77] %v1216
      %v1218 = vld [vmem:[%s84 + $0x8d4] sm:%s77]
      %1219 = vst [vmem:[%s85 + $0x8d8] sm:%s77] %v1218
      %v1220 = vld [vmem:[%s84 + $0x8dc] sm:%s77]
      %1221 = vst [vmem:[%s85 + $0x8dc] sm:%s77] %v1220
      %v1222 = vld [vmem:[%s84 + $0x8e0] sm:%s77]
      %1223 = vst [vmem:[%s85 + $0x8e0] sm:%s77] %v1222
      %v1224 = vld [vmem:[%s84 + $0x8e8] sm:%s77]
      %1225 = vst [vmem:[%s85 + $0x8e4] sm:%s77] %v1224
      %v1226 = vld [vmem:[%s84 + $0x8e4] sm:%s77]
      %1227 = vst [vmem:[%s85 + $0x8e8] sm:%s77] %v1226
      %v1228 = vld [vmem:[%s84 + $0x8ec] sm:%s77]
      %1229 = vst [vmem:[%s85 + $0x8ec] sm:%s77] %v1228
      %v1230 = vld [vmem:[%s84 + $0x8f0] sm:%s77]
      %1231 = vst [vmem:[%s85 + $0x8f0] sm:%s77] %v1230
      %v1232 = vld [vmem:[%s84 + $0x8f8] sm:%s77]
      %1233 = vst [vmem:[%s85 + $0x8f4] sm:%s77] %v1232
      %v1234 = vld [vmem:[%s84 + $0x8f4] sm:%s77]
      %1235 = vst [vmem:[%s85 + $0x8f8] sm:%s77] %v1234
      %v1236 = vld [vmem:[%s84 + $0x8fc] sm:%s77]
      %1237 = vst [vmem:[%s85 + $0x8fc] sm:%s77] %v1236
    $region94: #{learnloss_mix_forward.1} parent=88 // loop_footer
      %s83 = sadd.s32 1, %s79
    $region95: #{learnloss_mix_forward.1} parent=88 // loop_footer_branch
      %78 = sbr.rel target = $region91
    $region96: #{learnloss_mix_forward.1} parent=88 // loop_exit
      _
  $region89: #{learnloss_mix_forward.1} parent=0 // pred_fallthru
    _
  // Predicated region
  $region126: #{learnloss_mix_forward.1} parent=0 // pred_check
    _
  $region127: #{learnloss_mix_forward.1} parent=0 // pred_check_branch
    %4756 = sbr.rel (0) target = $region129
  $region128: #{learnloss_mix_forward.1} parent=0 // pred_region
    %4757 = vsyncadd [#allocation5], 36864
  $region129: #{learnloss_mix_forward.1} parent=0 // pred_fallthru
    _
  %v4758 = vld [vmem:[%s0] sm:$0xff]
  %v4759 = vld [vmem:[%s0 + $0x8] sm:$0xff]
  %v4760 = vld [vmem:[%s0 + $0x10] sm:$0xff]
  %v4761 = vld [vmem:[%s0 + $0x18] sm:$0xff]
  %v4762 = vld [vmem:[%s0 + $0x20] sm:$0xff]
  %v4763 = vld [vmem:[%s0 + $0x28] sm:$0xff]
  %v4764 = vld [vmem:[%s0 + $0x30] sm:$0xff]
  %v4765 = vld [vmem:[%s0 + $0x38] sm:$0xff]
  %v4766 = vld [vmem:[%s0 + $0x40] sm:$0xff]
  %v4767 = vld [vmem:[%s0 + $0x48] sm:$0xff]
  %v4768 = vld [vmem:[%s0 + $0x50] sm:$0xff]
  %v4769 = vld [vmem:[%s0 + $0x58] sm:$0xff]
  %v4770 = vld [vmem:[%s0 + $0x60] sm:$0xff]
  %v4771 = vld [vmem:[%s0 + $0x68] sm:$0xff]
  %v4772 = vld [vmem:[%s0 + $0x70] sm:$0xff]
  %v4773 = vld [vmem:[%s0 + $0x78] sm:$0xff]
  %v4774 = vld [vmem:[%s0 + $0x80] sm:$0xff]
  %v4775 = vld [vmem:[%s0 + $0x88] sm:$0xff]
  %v4776 = vld [vmem:[%s0 + $0x90] sm:$0xff]
  %v4777 = vld [vmem:[%s0 + $0x98] sm:$0xff]
  %v4778 = vld [vmem:[%s0 + $0xa0] sm:$0xff]
  %v4779 = vld [vmem:[%s0 + $0xa8] sm:$0xff]
  %v4780 = vld [vmem:[%s0 + $0xb0] sm:$0xff]
  %v4781 = vld [vmem:[%s0 + $0xb8] sm:$0xff]
  %v4782 = vld [vmem:[%s0 + $0xc0] sm:$0xff]
  %v4783 = vld [vmem:[%s0 + $0xc8] sm:$0xff]
  %v4784 = vld [vmem:[%s0 + $0xd0] sm:$0xff]
  %v4785 = vld [vmem:[%s0 + $0xd8] sm:$0xff]
  %v4786 = vld [vmem:[%s0 + $0xe0] sm:$0xff]
  %v4787 = vld [vmem:[%s0 + $0xe8] sm:$0xff]
  %v4788 = vld [vmem:[%s0 + $0xf0] sm:$0xff]
  %v4789 = vld [vmem:[%s0 + $0xf8] sm:$0xff]
  %v4790 = vld [vmem:[%s5] sm:$0xf]
  %v4791 = vld [vmem:[%s5 + $0x4] sm:$0xf]
  %v4792 = vld [vmem:[%s5 + $0x8] sm:$0xf]
  %v4793 = vld [vmem:[%s5 + $0xc] sm:$0xf]
  %v4794 = vld [vmem:[%s5 + $0x10] sm:$0xf]
  %v4795 = vld [vmem:[%s5 + $0x14] sm:$0xf]
  %v4796 = vld [vmem:[%s5 + $0x18] sm:$0xf]
  %v4797 = vld [vmem:[%s5 + $0x1c] sm:$0xf]
  %v4798 = vld [vmem:[%s5 + $0x20] sm:$0xf]
  %v4799 = vld [vmem:[%s5 + $0x24] sm:$0xf]
  %v4800 = vld [vmem:[%s5 + $0x28] sm:$0xf]
  %v4801 = vld [vmem:[%s5 + $0x2c] sm:$0xf]
  %v4802 = vld [vmem:[%s5 + $0x30] sm:$0xf]
  %v4803 = vld [vmem:[%s5 + $0x34] sm:$0xf]
  %v4804 = vld [vmem:[%s5 + $0x38] sm:$0xf]
  %v4805 = vld [vmem:[%s5 + $0x3c] sm:$0xf]
  %v4806 = vld [vmem:[%s5 + $0x40] sm:$0xf]
  %v4807 = vld [vmem:[%s5 + $0x44] sm:$0xf]
  %v4808 = vld [vmem:[%s5 + $0x48] sm:$0xf]
  %v4809 = vld [vmem:[%s5 + $0x4c] sm:$0xf]
  %v4810 = vld [vmem:[%s5 + $0x50] sm:$0xf]
  %v4811 = vld [vmem:[%s5 + $0x54] sm:$0xf]
  %v4812 = vld [vmem:[%s5 + $0x58] sm:$0xf]
  %v4813 = vld [vmem:[%s5 + $0x5c] sm:$0xf]
  %v4814 = vld [vmem:[%s5 + $0x60] sm:$0xf]
  %v4815 = vld [vmem:[%s5 + $0x64] sm:$0xf]
  %v4816 = vld [vmem:[%s5 + $0x68] sm:$0xf]
  %v4817 = vld [vmem:[%s5 + $0x6c] sm:$0xf]
  %v4818 = vld [vmem:[%s5 + $0x70] sm:$0xf]
  %v4819 = vld [vmem:[%s5 + $0x74] sm:$0xf]
  %v4820 = vld [vmem:[%s5 + $0x78] sm:$0xf]
  %v4821 = vld [vmem:[%s5 + $0x7c] sm:$0xf]
  %v4822 = vld [vmem:[%s5 + $0x80] sm:$0xf]
  %v4823 = vld [vmem:[%s5 + $0x84] sm:$0xf]
  %v4824 = vld [vmem:[%s5 + $0x88] sm:$0xf]
  %v4825 = vld [vmem:[%s5 + $0x8c] sm:$0xf]
  %v4826 = vld [vmem:[%s5 + $0x90] sm:$0xf]
  %v4827 = vld [vmem:[%s5 + $0x94] sm:$0xf]
  %v4828 = vld [vmem:[%s5 + $0x98] sm:$0xf]
  %v4829 = vld [vmem:[%s5 + $0x9c] sm:$0xf]
  %v4830 = vld [vmem:[%s5 + $0xa0] sm:$0xf]
  %v4831 = vld [vmem:[%s5 + $0xa4] sm:$0xf]
  %v4832 = vld [vmem:[%s5 + $0xa8] sm:$0xf]
  %v4833 = vld [vmem:[%s5 + $0xac] sm:$0xf]
  %v4834 = vld [vmem:[%s5 + $0xb0] sm:$0xf]
  %v4835 = vld [vmem:[%s5 + $0xb4] sm:$0xf]
  %v4836 = vld [vmem:[%s5 + $0xb8] sm:$0xf]
  %v4837 = vld [vmem:[%s5 + $0xbc] sm:$0xf]
  %v4838 = vld [vmem:[%s5 + $0xc0] sm:$0xf]
  %v4839 = vld [vmem:[%s5 + $0xc4] sm:$0xf]
  %v4840 = vld [vmem:[%s5 + $0xc8] sm:$0xf]
  %v4841 = vld [vmem:[%s5 + $0xcc] sm:$0xf]
  %v4842 = vld [vmem:[%s5 + $0xd0] sm:$0xf]
  %v4843 = vld [vmem:[%s5 + $0xd4] sm:$0xf]
  %v4844 = vld [vmem:[%s5 + $0xd8] sm:$0xf]
  %v4845 = vld [vmem:[%s5 + $0xdc] sm:$0xf]
  %v4846 = vld [vmem:[%s5 + $0xe0] sm:$0xf]
  %v4847 = vld [vmem:[%s5 + $0xe4] sm:$0xf]
  %v4848 = vld [vmem:[%s5 + $0xe8] sm:$0xf]
  %v4849 = vld [vmem:[%s5 + $0xec] sm:$0xf]
  %v4850 = vld [vmem:[%s5 + $0xf0] sm:$0xf]
  %v4851 = vld [vmem:[%s5 + $0xf4] sm:$0xf]
  %v4852 = vld [vmem:[%s5 + $0xf8] sm:$0xf]
  %v4853 = vld [vmem:[%s5 + $0xfc] sm:$0xf]
  %v4854 = vld [vmem:[%s10] sm:$0x1]
  %v4856 = vlaneseq
  %v4857 = vshrl.u32 %v4856, 7
  %v4858 = vsub.s32 0, %v4857
  %v4859 = vrot.slane %v4854, %v4858
  %v4893 = vunpack.c.l.b16 %v4758
  %v4894 = vunpack.c.h.b16 %v4758
  %v4895 = vunpack.c.l.b16 %v4759
  %v4896 = vunpack.c.h.b16 %v4759
  %v4897 = vunpack.c.l.b16 %v4760
  %v4898 = vunpack.c.h.b16 %v4760
  %v4899 = vunpack.c.l.b16 %v4761
  %v4900 = vunpack.c.h.b16 %v4761
  %v4901 = vunpack.c.l.b16 %v4762
  %v4902 = vunpack.c.h.b16 %v4762
  %v4903 = vunpack.c.l.b16 %v4763
  %v4904 = vunpack.c.h.b16 %v4763
  %v4905 = vunpack.c.l.b16 %v4764
  %v4906 = vunpack.c.h.b16 %v4764
  %v4907 = vunpack.c.l.b16 %v4765
  %v4908 = vunpack.c.h.b16 %v4765
  %v4909 = vunpack.c.l.b16 %v4766
  %v4910 = vunpack.c.h.b16 %v4766
  %v4911 = vunpack.c.l.b16 %v4767
  %v4912 = vunpack.c.h.b16 %v4767
  %v4913 = vunpack.c.l.b16 %v4768
  %v4914 = vunpack.c.h.b16 %v4768
  %v4915 = vunpack.c.l.b16 %v4769
  %v4916 = vunpack.c.h.b16 %v4769
  %v4917 = vunpack.c.l.b16 %v4770
  %v4918 = vunpack.c.h.b16 %v4770
  %v4919 = vunpack.c.l.b16 %v4771
  %v4920 = vunpack.c.h.b16 %v4771
  %v4921 = vunpack.c.l.b16 %v4772
  %v4922 = vunpack.c.h.b16 %v4772
  %v4923 = vunpack.c.l.b16 %v4773
  %v4924 = vunpack.c.h.b16 %v4773
  %v4925 = vunpack.c.l.b16 %v4774
  %v4926 = vunpack.c.h.b16 %v4774
  %v4927 = vunpack.c.l.b16 %v4775
  %v4928 = vunpack.c.h.b16 %v4775
  %v4929 = vunpack.c.l.b16 %v4776
  %v4930 = vunpack.c.h.b16 %v4776
  %v4931 = vunpack.c.l.b16 %v4777
  %v4932 = vunpack.c.h.b16 %v4777
  %v4933 = vunpack.c.l.b16 %v4778
  %v4934 = vunpack.c.h.b16 %v4778
  %v4935 = vunpack.c.l.b16 %v4779
  %v4936 = vunpack.c.h.b16 %v4779
  %v4937 = vunpack.c.l.b16 %v4780
  %v4938 = vunpack.c.h.b16 %v4780
  %v4939 = vunpack.c.l.b16 %v4781
  %v4940 = vunpack.c.h.b16 %v4781
  %v4941 = vunpack.c.l.b16 %v4782
  %v4942 = vunpack.c.h.b16 %v4782
  %v4943 = vunpack.c.l.b16 %v4783
  %v4944 = vunpack.c.h.b16 %v4783
  %v4945 = vunpack.c.l.b16 %v4784
  %v4946 = vunpack.c.h.b16 %v4784
  %v4947 = vunpack.c.l.b16 %v4785
  %v4948 = vunpack.c.h.b16 %v4785
  %v4949 = vunpack.c.l.b16 %v4786
  %v4950 = vunpack.c.h.b16 %v4786
  %v4951 = vunpack.c.l.b16 %v4787
  %v4952 = vunpack.c.h.b16 %v4787
  %v4953 = vunpack.c.l.b16 %v4788
  %v4954 = vunpack.c.h.b16 %v4788
  %v4955 = vunpack.c.l.b16 %v4789
  %v4956 = vunpack.c.h.b16 %v4789
  %v4957 = vpack.c.b16 %v4897, %v4893
  %v4958 = vpack.c.b16 %v4898, %v4894
  %v4959 = vpack.c.b16 %v4899, %v4895
  %v4960 = vpack.c.b16 %v4900, %v4896
  %v4961 = vpack.c.b16 %v4905, %v4901
  %v4962 = vpack.c.b16 %v4906, %v4902
  %v4963 = vpack.c.b16 %v4907, %v4903
  %v4964 = vpack.c.b16 %v4908, %v4904
  %v4965 = vpack.c.b16 %v4913, %v4909
  %v4966 = vpack.c.b16 %v4914, %v4910
  %v4967 = vpack.c.b16 %v4915, %v4911
  %v4968 = vpack.c.b16 %v4916, %v4912
  %v4969 = vpack.c.b16 %v4921, %v4917
  %v4970 = vpack.c.b16 %v4922, %v4918
  %v4971 = vpack.c.b16 %v4923, %v4919
  %v4972 = vpack.c.b16 %v4924, %v4920
  %v4973 = vpack.c.b16 %v4929, %v4925
  %v4974 = vpack.c.b16 %v4930, %v4926
  %v4975 = vpack.c.b16 %v4931, %v4927
  %v4976 = vpack.c.b16 %v4932, %v4928
  %v4977 = vpack.c.b16 %v4937, %v4933
  %v4978 = vpack.c.b16 %v4938, %v4934
  %v4979 = vpack.c.b16 %v4939, %v4935
  %v4980 = vpack.c.b16 %v4940, %v4936
  %v4981 = vpack.c.b16 %v4945, %v4941
  %v4982 = vpack.c.b16 %v4946, %v4942
  %v4983 = vpack.c.b16 %v4947, %v4943
  %v4984 = vpack.c.b16 %v4948, %v4944
  %v4985 = vpack.c.b16 %v4953, %v4949
  %v4986 = vpack.c.b16 %v4954, %v4950
  %v4987 = vpack.c.b16 %v4955, %v4951
  %v4988 = vpack.c.b16 %v4956, %v4952
  %v5085 = vunpack.c.l.b16 %v4790
  %v5086 = vunpack.c.l.b16 %v4791
  %v5087 = vunpack.c.l.b16 %v4792
  %v5088 = vunpack.c.l.b16 %v4793
  %v5089 = vunpack.c.l.b16 %v4794
  %v5090 = vunpack.c.l.b16 %v4795
  %v5091 = vunpack.c.l.b16 %v4796
  %v5092 = vunpack.c.l.b16 %v4797
  %v5093 = vunpack.c.l.b16 %v4798
  %v5094 = vunpack.c.l.b16 %v4799
  %v5095 = vunpack.c.l.b16 %v4800
  %v5096 = vunpack.c.l.b16 %v4801
  %v5097 = vunpack.c.l.b16 %v4802
  %v5098 = vunpack.c.l.b16 %v4803
  %v5099 = vunpack.c.l.b16 %v4804
  %v5100 = vunpack.c.l.b16 %v4805
  %v5101 = vunpack.c.l.b16 %v4806
  %v5102 = vunpack.c.l.b16 %v4807
  %v5103 = vunpack.c.l.b16 %v4808
  %v5104 = vunpack.c.l.b16 %v4809
  %v5105 = vunpack.c.l.b16 %v4810
  %v5106 = vunpack.c.l.b16 %v4811
  %v5107 = vunpack.c.l.b16 %v4812
  %v5108 = vunpack.c.l.b16 %v4813
  %v5109 = vunpack.c.l.b16 %v4814
  %v5110 = vunpack.c.l.b16 %v4815
  %v5111 = vunpack.c.l.b16 %v4816
  %v5112 = vunpack.c.l.b16 %v4817
  %v5113 = vunpack.c.l.b16 %v4818
  %v5114 = vunpack.c.l.b16 %v4819
  %v5115 = vunpack.c.l.b16 %v4820
  %v5116 = vunpack.c.l.b16 %v4821
  %v5117 = vunpack.c.l.b16 %v4822
  %v5118 = vunpack.c.l.b16 %v4823
  %v5119 = vunpack.c.l.b16 %v4824
  %v5120 = vunpack.c.l.b16 %v4825
  %v5121 = vunpack.c.l.b16 %v4826
  %v5122 = vunpack.c.l.b16 %v4827
  %v5123 = vunpack.c.l.b16 %v4828
  %v5124 = vunpack.c.l.b16 %v4829
  %v5125 = vunpack.c.l.b16 %v4830
  %v5126 = vunpack.c.l.b16 %v4831
  %v5127 = vunpack.c.l.b16 %v4832
  %v5128 = vunpack.c.l.b16 %v4833
  %v5129 = vunpack.c.l.b16 %v4834
  %v5130 = vunpack.c.l.b16 %v4835
  %v5131 = vunpack.c.l.b16 %v4836
  %v5132 = vunpack.c.l.b16 %v4837
  %v5133 = vunpack.c.l.b16 %v4838
  %v5134 = vunpack.c.l.b16 %v4839
  %v5135 = vunpack.c.l.b16 %v4840
  %v5136 = vunpack.c.l.b16 %v4841
  %v5137 = vunpack.c.l.b16 %v4842
  %v5138 = vunpack.c.l.b16 %v4843
  %v5139 = vunpack.c.l.b16 %v4844
  %v5140 = vunpack.c.l.b16 %v4845
  %v5141 = vunpack.c.l.b16 %v4846
  %v5142 = vunpack.c.l.b16 %v4847
  %v5143 = vunpack.c.l.b16 %v4848
  %v5144 = vunpack.c.l.b16 %v4849
  %v5145 = vunpack.c.l.b16 %v4850
  %v5146 = vunpack.c.l.b16 %v4851
  %v5147 = vunpack.c.l.b16 %v4852
  %v5148 = vunpack.c.l.b16 %v4853
  %v5149 = vpack.c.b16 %v5086, %v5085
  %v5150 = vpack.c.b16 %v5088, %v5087
  %v5151 = vpack.c.b16 %v5090, %v5089
  %v5152 = vpack.c.b16 %v5092, %v5091
  %v5153 = vpack.c.b16 %v5094, %v5093
  %v5154 = vpack.c.b16 %v5096, %v5095
  %v5155 = vpack.c.b16 %v5098, %v5097
  %v5156 = vpack.c.b16 %v5100, %v5099
  %v5157 = vpack.c.b16 %v5102, %v5101
  %v5158 = vpack.c.b16 %v5104, %v5103
  %v5159 = vpack.c.b16 %v5106, %v5105
  %v5160 = vpack.c.b16 %v5108, %v5107
  %v5161 = vpack.c.b16 %v5110, %v5109
  %v5162 = vpack.c.b16 %v5112, %v5111
  %v5163 = vpack.c.b16 %v5114, %v5113
  %v5164 = vpack.c.b16 %v5116, %v5115
  %v5165 = vpack.c.b16 %v5118, %v5117
  %v5166 = vpack.c.b16 %v5120, %v5119
  %v5167 = vpack.c.b16 %v5122, %v5121
  %v5168 = vpack.c.b16 %v5124, %v5123
  %v5169 = vpack.c.b16 %v5126, %v5125
  %v5170 = vpack.c.b16 %v5128, %v5127
  %v5171 = vpack.c.b16 %v5130, %v5129
  %v5172 = vpack.c.b16 %v5132, %v5131
  %v5173 = vpack.c.b16 %v5134, %v5133
  %v5174 = vpack.c.b16 %v5136, %v5135
  %v5175 = vpack.c.b16 %v5138, %v5137
  %v5176 = vpack.c.b16 %v5140, %v5139
  %v5177 = vpack.c.b16 %v5142, %v5141
  %v5178 = vpack.c.b16 %v5144, %v5143
  %v5179 = vpack.c.b16 %v5146, %v5145
  %v5180 = vpack.c.b16 %v5148, %v5147
  %5213 = vmatprep.subr.bf16.mxu0 0
  %5214 = vmatpush1.bf16.msra.mxu0 %v5149
  %5215 = vmatprep.subr.bf16.mxu0 0
  %5216 = vmatpush1.bf16.msra.mxu0 %v5150
  %5217 = vmatprep.subr.bf16.mxu0 0
  %5218 = vmatpush1.bf16.msra.mxu0 %v5151
  %5219 = vmatprep.subr.bf16.mxu0 0
  %5220 = vmatpush1.bf16.msra.mxu0 %v5152
  %5221 = vmatprep.subr.bf16.mxu0 0
  %5222 = vmatpush1.bf16.msra.mxu0 %v5153
  %5223 = vmatprep.subr.bf16.mxu0 0
  %5224 = vmatpush1.bf16.msra.mxu0 %v5154
  %5225 = vmatprep.subr.bf16.mxu0 0
  %5226 = vmatpush1.bf16.msra.mxu0 %v5155
  %5227 = vmatprep.subr.bf16.mxu0 0
  %5228 = vmatpush1.bf16.msra.mxu0 %v5156
  %5229 = vmatprep.subr.bf16.mxu0 0
  %5230 = vmatpush1.bf16.msra.mxu0 %v5157
  %5231 = vmatprep.subr.bf16.mxu0 0
  %5232 = vmatpush1.bf16.msra.mxu0 %v5158
  %5233 = vmatprep.subr.bf16.mxu0 0
  %5234 = vmatpush1.bf16.msra.mxu0 %v5159
  %5235 = vmatprep.subr.bf16.mxu0 0
  %5236 = vmatpush1.bf16.msra.mxu0 %v5160
  %5237 = vmatprep.subr.bf16.mxu0 0
  %5238 = vmatpush1.bf16.msra.mxu0 %v5161
  %5239 = vmatprep.subr.bf16.mxu0 0
  %5240 = vmatpush1.bf16.msra.mxu0 %v5162
  %5241 = vmatprep.subr.bf16.mxu0 0
  %5242 = vmatpush1.bf16.msra.mxu0 %v5163
  %5243 = vmatprep.subr.bf16.mxu0 0
  %5244 = vmatpush1.bf16.msra.mxu0 %v5164
  %5245 = vmatprep.mubr.bf16.mxu0 %v4958
  %5246 = vmatmul.mubr.bf16.gmra.mrb[0].mxu0 %v4957
  %v5247 = vpop.f32.mrb[0].mxu0
  %v5248 = vadd.f32 %v4859, %v5247
  %v5249 = vpop.f32.mrb[0].mxu0
  %v5250 = vpop.f32.mrb[0].mxu0
  %v5251 = vadd.f32 %v4859, %v5250
  %v5252 = vpop.f32.mrb[0].mxu0
  %5253 = vmatprep.mubr.bf16.mxu0 %v4962
  %5254 = vmatmul.mubr.bf16.gmra.mrb[0].mxu0 %v4961
  %v5255 = vpop.f32.mrb[0].mxu0
  %v5256 = vadd.f32 %v4859, %v5255
  %v5257 = vpop.f32.mrb[0].mxu0
  %v5258 = vpop.f32.mrb[0].mxu0
  %v5259 = vadd.f32 %v4859, %v5258
  %v5260 = vpop.f32.mrb[0].mxu0
  %5261 = vmatprep.mubr.bf16.mxu0 %v4966
  %5262 = vmatmul.mubr.bf16.gmra.mrb[0].mxu0 %v4965
  %v5263 = vpop.f32.mrb[0].mxu0
  %v5264 = vadd.f32 %v4859, %v5263
  %v5265 = vpop.f32.mrb[0].mxu0
  %v5266 = vpop.f32.mrb[0].mxu0
  %v5267 = vadd.f32 %v4859, %v5266
  %v5268 = vpop.f32.mrb[0].mxu0
  %5269 = vmatprep.mubr.bf16.mxu0 %v4970
  %5270 = vmatmul.mubr.bf16.gmra.mrb[0].mxu0 %v4969
  %v5271 = vpop.f32.mrb[0].mxu0
  %v5272 = vadd.f32 %v4859, %v5271
  %v5273 = vpop.f32.mrb[0].mxu0
  %v5274 = vpop.f32.mrb[0].mxu0
  %v5275 = vadd.f32 %v4859, %v5274
  %v5276 = vpop.f32.mrb[0].mxu0
  %5277 = vmatprep.mubr.bf16.mxu0 %v4974
  %5278 = vmatmul.mubr.bf16.gmra.mrb[0].mxu0 %v4973
  %v5279 = vpop.f32.mrb[0].mxu0
  %v5280 = vadd.f32 %v4859, %v5279
  %v5281 = vpop.f32.mrb[0].mxu0
  %v5282 = vpop.f32.mrb[0].mxu0
  %v5283 = vadd.f32 %v4859, %v5282
  %v5284 = vpop.f32.mrb[0].mxu0
  %5285 = vmatprep.mubr.bf16.mxu0 %v4978
  %5286 = vmatmul.mubr.bf16.gmra.mrb[0].mxu0 %v4977
  %v5287 = vpop.f32.mrb[0].mxu0
  %v5288 = vadd.f32 %v4859, %v5287
  %v5289 = vpop.f32.mrb[0].mxu0
  %v5290 = vpop.f32.mrb[0].mxu0
  %v5291 = vadd.f32 %v4859, %v5290
  %v5292 = vpop.f32.mrb[0].mxu0
  %5293 = vmatprep.mubr.bf16.mxu0 %v4982
  %5294 = vmatmul.mubr.bf16.gmra.mrb[0].mxu0 %v4981
  %v5295 = vpop.f32.mrb[0].mxu0
  %v5296 = vadd.f32 %v4859, %v5295
  %v5297 = vpop.f32.mrb[0].mxu0
  %v5298 = vpop.f32.mrb[0].mxu0
  %v5299 = vadd.f32 %v4859, %v5298
  %v5300 = vpop.f32.mrb[0].mxu0
  %5301 = vmatprep.mubr.bf16.mxu0 %v4986
  %5302 = vmatmul.mubr.bf16.gmra.mrb[0].mxu0 %v4985
  %v5303 = vpop.f32.mrb[0].mxu0
  %v5304 = vadd.f32 %v4859, %v5303
  %v5305 = vpop.f32.mrb[0].mxu0
  %v5306 = vpop.f32.mrb[0].mxu0
  %v5307 = vadd.f32 %v4859, %v5306
  %v5308 = vpop.f32.mrb[0].mxu0
  %5309 = vdwg.mxu0
  %5310 = vmatprep.subr.bf16.mxu0 0
  %5311 = vmatpush1.bf16.msra.mxu0 %v5165
  %5312 = vmatprep.subr.bf16.mxu0 0
  %5313 = vmatpush1.bf16.msra.mxu0 %v5166
  %5314 = vmatprep.subr.bf16.mxu0 0
  %5315 = vmatpush1.bf16.msra.mxu0 %v5167
  %5316 = vmatprep.subr.bf16.mxu0 0
  %5317 = vmatpush1.bf16.msra.mxu0 %v5168
  %5318 = vmatprep.subr.bf16.mxu0 0
  %5319 = vmatpush1.bf16.msra.mxu0 %v5169
  %5320 = vmatprep.subr.bf16.mxu0 0
  %5321 = vmatpush1.bf16.msra.mxu0 %v5170
  %5322 = vmatprep.subr.bf16.mxu0 0
  %5323 = vmatpush1.bf16.msra.mxu0 %v5171
  %5324 = vmatprep.subr.bf16.mxu0 0
  %5325 = vmatpush1.bf16.msra.mxu0 %v5172
  %5326 = vmatprep.subr.bf16.mxu0 0
  %5327 = vmatpush1.bf16.msra.mxu0 %v5173
  %5328 = vmatprep.subr.bf16.mxu0 0
  %5329 = vmatpush1.bf16.msra.mxu0 %v5174
  %5330 = vmatprep.subr.bf16.mxu0 0
  %5331 = vmatpush1.bf16.msra.mxu0 %v5175
  %5332 = vmatprep.subr.bf16.mxu0 0
  %5333 = vmatpush1.bf16.msra.mxu0 %v5176
  %5334 = vmatprep.subr.bf16.mxu0 0
  %5335 = vmatpush1.bf16.msra.mxu0 %v5177
  %5336 = vmatprep.subr.bf16.mxu0 0
  %5337 = vmatpush1.bf16.msra.mxu0 %v5178
  %5338 = vmatprep.subr.bf16.mxu0 0
  %5339 = vmatpush1.bf16.msra.mxu0 %v5179
  %5340 = vmatprep.subr.bf16.mxu0 0
  %5341 = vmatpush1.bf16.msra.mxu0 %v5180
  %5342 = vmatprep.mubr.bf16.mxu0 %v4960
  %5343 = vmatmul.mubr.bf16.gmra.mrb[0].mxu0 %v4959
  %v5344 = vpop.f32.mrb[0].mxu0
  %v5345 = vadd.f32 %v5248, %v5344
  %v5346 = vpop.f32.mrb[0].mxu0
  %v5347 = vpop.f32.mrb[0].mxu0
  %v5348 = vadd.f32 %v5251, %v5347
  %v5349 = vpop.f32.mrb[0].mxu0
  %5350 = vmatprep.mubr.bf16.mxu0 %v4964
  %5351 = vmatmul.mubr.bf16.gmra.mrb[0].mxu0 %v4963
  %v5352 = vpop.f32.mrb[0].mxu0
  %v5353 = vadd.f32 %v5256, %v5352
  %v5354 = vpop.f32.mrb[0].mxu0
  %v5355 = vpop.f32.mrb[0].mxu0
  %v5356 = vadd.f32 %v5259, %v5355
  %v5357 = vpop.f32.mrb[0].mxu0
  %5358 = vmatprep.mubr.bf16.mxu0 %v4968
  %5359 = vmatmul.mubr.bf16.gmra.mrb[0].mxu0 %v4967
  %v5360 = vpop.f32.mrb[0].mxu0
  %v5361 = vadd.f32 %v5264, %v5360
  %v5362 = vpop.f32.mrb[0].mxu0
  %v5363 = vpop.f32.mrb[0].mxu0
  %v5364 = vadd.f32 %v5267, %v5363
  %v5365 = vpop.f32.mrb[0].mxu0
  %5366 = vmatprep.mubr.bf16.mxu0 %v4972
  %5367 = vmatmul.mubr.bf16.gmra.mrb[0].mxu0 %v4971
  %v5368 = vpop.f32.mrb[0].mxu0
  %v5369 = vadd.f32 %v5272, %v5368
  %v5370 = vpop.f32.mrb[0].mxu0
  %v5371 = vpop.f32.mrb[0].mxu0
  %v5372 = vadd.f32 %v5275, %v5371
  %v5373 = vpop.f32.mrb[0].mxu0
  %5374 = vmatprep.mubr.bf16.mxu0 %v4976
  %5375 = vmatmul.mubr.bf16.gmra.mrb[0].mxu0 %v4975
  %v5376 = vpop.f32.mrb[0].mxu0
  %v5377 = vadd.f32 %v5280, %v5376
  %v5378 = vpop.f32.mrb[0].mxu0
  %v5379 = vpop.f32.mrb[0].mxu0
  %v5380 = vadd.f32 %v5283, %v5379
  %v5381 = vpop.f32.mrb[0].mxu0
  %5382 = vmatprep.mubr.bf16.mxu0 %v4980
  %5383 = vmatmul.mubr.bf16.gmra.mrb[0].mxu0 %v4979
  %v5384 = vpop.f32.mrb[0].mxu0
  %v5385 = vadd.f32 %v5288, %v5384
  %v5386 = vpop.f32.mrb[0].mxu0
  %v5387 = vpop.f32.mrb[0].mxu0
  %v5388 = vadd.f32 %v5291, %v5387
  %v5389 = vpop.f32.mrb[0].mxu0
  %5390 = vmatprep.mubr.bf16.mxu0 %v4984
  %5391 = vmatmul.mubr.bf16.gmra.mrb[0].mxu0 %v4983
  %v5392 = vpop.f32.mrb[0].mxu0
  %v5393 = vadd.f32 %v5296, %v5392
  %v5394 = vpop.f32.mrb[0].mxu0
  %v5395 = vpop.f32.mrb[0].mxu0
  %v5396 = vadd.f32 %v5299, %v5395
  %v5397 = vpop.f32.mrb[0].mxu0
  %5398 = vmatprep.mubr.bf16.mxu0 %v4988
  %5399 = vmatmul.mubr.bf16.gmra.mrb[0].mxu0 %v4987
  %v5400 = vpop.f32.mrb[0].mxu0
  %v5401 = vadd.f32 %v5304, %v5400
  %v5402 = vpop.f32.mrb[0].mxu0
  %v5403 = vpop.f32.mrb[0].mxu0
  %v5404 = vadd.f32 %v5307, %v5403
  %v5405 = vpop.f32.mrb[0].mxu0
  %5406 = vdwg.mxu0
  %v5407 = vmax.f32 %v5345, 0.0
  %v5408 = vmax.f32 %v5348, 0.0
  %v5409 = vmax.f32 %v5353, 0.0
  %v5410 = vmax.f32 %v5356, 0.0
  %v5411 = vmax.f32 %v5361, 0.0
  %v5412 = vmax.f32 %v5364, 0.0
  %v5413 = vmax.f32 %v5369, 0.0
  %v5414 = vmax.f32 %v5372, 0.0
  %v5415 = vmax.f32 %v5377, 0.0
  %v5416 = vmax.f32 %v5380, 0.0
  %v5417 = vmax.f32 %v5385, 0.0
  %v5418 = vmax.f32 %v5388, 0.0
  %v5419 = vmax.f32 %v5393, 0.0
  %v5420 = vmax.f32 %v5396, 0.0
  %v5421 = vmax.f32 %v5401, 0.0
  %v5422 = vmax.f32 %v5404, 0.0
  %v5423 = vld [vmem:[%s1] sm:$0xff]
  %v5424 = vld [vmem:[%s1 + $0x8] sm:$0xff]
  %v5425 = vld [vmem:[%s1 + $0x10] sm:$0xff]
  %v5426 = vld [vmem:[%s1 + $0x18] sm:$0xff]
  %v5427 = vld [vmem:[%s1 + $0x20] sm:$0xff]
  %v5428 = vld [vmem:[%s1 + $0x28] sm:$0xff]
  %v5429 = vld [vmem:[%s1 + $0x30] sm:$0xff]
  %v5430 = vld [vmem:[%s1 + $0x38] sm:$0xff]
  %v5431 = vld [vmem:[%s1 + $0x40] sm:$0xff]
  %v5432 = vld [vmem:[%s1 + $0x48] sm:$0xff]
  %v5433 = vld [vmem:[%s1 + $0x50] sm:$0xff]
  %v5434 = vld [vmem:[%s1 + $0x58] sm:$0xff]
  %v5435 = vld [vmem:[%s1 + $0x60] sm:$0xff]
  %v5436 = vld [vmem:[%s1 + $0x68] sm:$0xff]
  %v5437 = vld [vmem:[%s1 + $0x70] sm:$0xff]
  %v5438 = vld [vmem:[%s1 + $0x78] sm:$0xff]
  %v5439 = vadd.f32 %v5407, %v5423
  %v5440 = vadd.f32 %v5408, %v5424
  %v5441 = vadd.f32 %v5409, %v5425
  %v5442 = vadd.f32 %v5410, %v5426
  %v5443 = vadd.f32 %v5411, %v5427
  %v5444 = vadd.f32 %v5412, %v5428
  %v5445 = vadd.f32 %v5413, %v5429
  %v5446 = vadd.f32 %v5414, %v5430
  %v5447 = vadd.f32 %v5415, %v5431
  %v5448 = vadd.f32 %v5416, %v5432
  %v5449 = vadd.f32 %v5417, %v5433
  %v5450 = vadd.f32 %v5418, %v5434
  %v5451 = vadd.f32 %v5419, %v5435
  %v5452 = vadd.f32 %v5420, %v5436
  %v5453 = vadd.f32 %v5421, %v5437
  %v5454 = vadd.f32 %v5422, %v5438
  %v5455 = vpack.c.bf16 %v5440, %v5439
  %v5456 = vpack.c.bf16 %v5442, %v5441
  %v5457 = vpack.c.bf16 %v5444, %v5443
  %v5458 = vpack.c.bf16 %v5446, %v5445
  %v5459 = vpack.c.bf16 %v5448, %v5447
  %v5460 = vpack.c.bf16 %v5450, %v5449
  %v5461 = vpack.c.bf16 %v5452, %v5451
  %v5462 = vpack.c.bf16 %v5454, %v5453
  %v5463 = vld [vmem:[%s6] sm:$0xf]
  %v5464 = vld [vmem:[%s6 + $0x4] sm:$0xf]
  %v5465 = vld [vmem:[%s6 + $0x8] sm:$0xf]
  %v5466 = vld [vmem:[%s6 + $0xc] sm:$0xf]
  %v5467 = vld [vmem:[%s6 + $0x10] sm:$0xf]
  %v5468 = vld [vmem:[%s6 + $0x14] sm:$0xf]
  %v5469 = vld [vmem:[%s6 + $0x18] sm:$0xf]
  %v5470 = vld [vmem:[%s6 + $0x1c] sm:$0xf]
  %v5471 = vld [vmem:[%s6 + $0x20] sm:$0xf]
  %v5472 = vld [vmem:[%s6 + $0x24] sm:$0xf]
  %v5473 = vld [vmem:[%s6 + $0x28] sm:$0xf]
  %v5474 = vld [vmem:[%s6 + $0x2c] sm:$0xf]
  %v5475 = vld [vmem:[%s6 + $0x30] sm:$0xf]
  %v5476 = vld [vmem:[%s6 + $0x34] sm:$0xf]
  %v5477 = vld [vmem:[%s6 + $0x38] sm:$0xf]
  %v5478 = vld [vmem:[%s6 + $0x3c] sm:$0xf]
  %v5479 = vld [vmem:[%s11] sm:$0x1]
  %v5481 = vlaneseq
  %v5482 = vshrl.u32 %v5481, 7
  %v5483 = vsub.s32 0, %v5482
  %v5484 = vrot.slane %v5479, %v5483
  %v5502 = vunpack.c.l.b16 %v5463
  %v5503 = vunpack.c.l.b16 %v5464
  %v5504 = vunpack.c.l.b16 %v5465
  %v5505 = vunpack.c.l.b16 %v5466
  %v5506 = vunpack.c.l.b16 %v5467
  %v5507 = vunpack.c.l.b16 %v5468
  %v5508 = vunpack.c.l.b16 %v5469
  %v5509 = vunpack.c.l.b16 %v5470
  %v5510 = vunpack.c.l.b16 %v5471
  %v5511 = vunpack.c.l.b16 %v5472
  %v5512 = vunpack.c.l.b16 %v5473
  %v5513 = vunpack.c.l.b16 %v5474
  %v5514 = vunpack.c.l.b16 %v5475
  %v5515 = vunpack.c.l.b16 %v5476
  %v5516 = vunpack.c.l.b16 %v5477
  %v5517 = vunpack.c.l.b16 %v5478
  %v5518 = vpack.c.b16 %v5503, %v5502
  %v5519 = vpack.c.b16 %v5505, %v5504
  %v5520 = vpack.c.b16 %v5507, %v5506
  %v5521 = vpack.c.b16 %v5509, %v5508
  %v5522 = vpack.c.b16 %v5511, %v5510
  %v5523 = vpack.c.b16 %v5513, %v5512
  %v5524 = vpack.c.b16 %v5515, %v5514
  %v5525 = vpack.c.b16 %v5517, %v5516
  %5534 = vmatprep.subr.bf16.mxu0 0
  %5535 = vmatpush1.bf16.msra.mxu0 %v5518
  %5536 = vmatprep.subr.bf16.mxu0 0
  %5537 = vmatpush1.bf16.msra.mxu0 %v5519
  %5538 = vmatprep.subr.bf16.mxu0 0
  %5539 = vmatpush1.bf16.msra.mxu0 %v5520
  %5540 = vmatprep.subr.bf16.mxu0 0
  %5541 = vmatpush1.bf16.msra.mxu0 %v5521
  %5542 = vmatprep.subr.bf16.mxu0 0
  %5543 = vmatpush1.bf16.msra.mxu0 %v5522
  %5544 = vmatprep.subr.bf16.mxu0 0
  %5545 = vmatpush1.bf16.msra.mxu0 %v5523
  %5546 = vmatprep.subr.bf16.mxu0 0
  %5547 = vmatpush1.bf16.msra.mxu0 %v5524
  %5548 = vmatprep.subr.bf16.mxu0 0
  %5549 = vmatpush1.bf16.msra.mxu0 %v5525
  %5550 = vmatprep.subr.bf16.mxu0 0
  %5551 = vmatpush1.bf16.msra.mxu0 0
  %5552 = vmatprep.subr.bf16.mxu0 0
  %5553 = vmatpush1.bf16.msra.mxu0 0
  %5554 = vmatprep.subr.bf16.mxu0 0
  %5555 = vmatpush1.bf16.msra.mxu0 0
  %5556 = vmatprep.subr.bf16.mxu0 0
  %5557 = vmatpush1.bf16.msra.mxu0 0
  %5558 = vmatprep.subr.bf16.mxu0 0
  %5559 = vmatpush1.bf16.msra.mxu0 0
  %5560 = vmatprep.subr.bf16.mxu0 0
  %5561 = vmatpush1.bf16.msra.mxu0 0
  %5562 = vmatprep.subr.bf16.mxu0 0
  %5563 = vmatpush1.bf16.msra.mxu0 0
  %5564 = vmatprep.subr.bf16.mxu0 0
  %5565 = vmatpush1.bf16.msra.mxu0 0
  %5566 = vmatprep.mubr.bf16.mxu0 0
  %5567 = vmatmul.mubr.bf16.gmra.mrb[0].mxu0 %v5455
  %v5568 = vpop.f32.mrb[0].mxu0
  %v5569 = vadd.f32 %v5484, %v5568
  %v5570 = vpop.f32.mrb[0].mxu0
  %v5571 = vpop.f32.mrb[0].mxu0
  %v5572 = vadd.f32 %v5484, %v5571
  %v5573 = vpop.f32.mrb[0].mxu0
  %5574 = vmatprep.mubr.bf16.mxu0 0
  %5575 = vmatmul.mubr.bf16.gmra.mrb[0].mxu0 %v5456
  %v5576 = vpop.f32.mrb[0].mxu0
  %v5577 = vadd.f32 %v5484, %v5576
  %v5578 = vpop.f32.mrb[0].mxu0
  %v5579 = vpop.f32.mrb[0].mxu0
  %v5580 = vadd.f32 %v5484, %v5579
  %v5581 = vpop.f32.mrb[0].mxu0
  %5582 = vmatprep.mubr.bf16.mxu0 0
  %5583 = vmatmul.mubr.bf16.gmra.mrb[0].mxu0 %v5457
  %v5584 = vpop.f32.mrb[0].mxu0
  %v5585 = vadd.f32 %v5484, %v5584
  %v5586 = vpop.f32.mrb[0].mxu0
  %v5587 = vpop.f32.mrb[0].mxu0
  %v5588 = vadd.f32 %v5484, %v5587
  %v5589 = vpop.f32.mrb[0].mxu0
  %5590 = vmatprep.mubr.bf16.mxu0 0
  %5591 = vmatmul.mubr.bf16.gmra.mrb[0].mxu0 %v5458
  %v5592 = vpop.f32.mrb[0].mxu0
  %v5593 = vadd.f32 %v5484, %v5592
  %v5594 = vpop.f32.mrb[0].mxu0
  %v5595 = vpop.f32.mrb[0].mxu0
  %v5596 = vadd.f32 %v5484, %v5595
  %v5597 = vpop.f32.mrb[0].mxu0
  %5598 = vmatprep.mubr.bf16.mxu0 0
  %5599 = vmatmul.mubr.bf16.gmra.mrb[0].mxu0 %v5459
  %v5600 = vpop.f32.mrb[0].mxu0
  %v5601 = vadd.f32 %v5484, %v5600
  %v5602 = vpop.f32.mrb[0].mxu0
  %v5603 = vpop.f32.mrb[0].mxu0
  %v5604 = vadd.f32 %v5484, %v5603
  %v5605 = vpop.f32.mrb[0].mxu0
  %5606 = vmatprep.mubr.bf16.mxu0 0
  %5607 = vmatmul.mubr.bf16.gmra.mrb[0].mxu0 %v5460
  %v5608 = vpop.f32.mrb[0].mxu0
  %v5609 = vadd.f32 %v5484, %v5608
  %v5610 = vpop.f32.mrb[0].mxu0
  %v5611 = vpop.f32.mrb[0].mxu0
  %v5612 = vadd.f32 %v5484, %v5611
  %v5613 = vpop.f32.mrb[0].mxu0
  %5614 = vmatprep.mubr.bf16.mxu0 0
  %5615 = vmatmul.mubr.bf16.gmra.mrb[0].mxu0 %v5461
  %v5616 = vpop.f32.mrb[0].mxu0
  %v5617 = vadd.f32 %v5484, %v5616
  %v5618 = vpop.f32.mrb[0].mxu0
  %v5619 = vpop.f32.mrb[0].mxu0
  %v5620 = vadd.f32 %v5484, %v5619
  %v5621 = vpop.f32.mrb[0].mxu0
  %5622 = vmatprep.mubr.bf16.mxu0 0
  %5623 = vmatmul.mubr.bf16.gmra.mrb[0].mxu0 %v5462
  %v5624 = vpop.f32.mrb[0].mxu0
  %v5625 = vadd.f32 %v5484, %v5624
  %v5626 = vpop.f32.mrb[0].mxu0
  %v5627 = vpop.f32.mrb[0].mxu0
  %v5628 = vadd.f32 %v5484, %v5627
  %v5629 = vpop.f32.mrb[0].mxu0
  %5630 = vdwg.mxu0
  %v5631 = vmax.f32 %v5569, 0.0
  %v5632 = vmax.f32 %v5572, 0.0
  %v5633 = vmax.f32 %v5577, 0.0
  %v5634 = vmax.f32 %v5580, 0.0
  %v5635 = vmax.f32 %v5585, 0.0
  %v5636 = vmax.f32 %v5588, 0.0
  %v5637 = vmax.f32 %v5593, 0.0
  %v5638 = vmax.f32 %v5596, 0.0
  %v5639 = vmax.f32 %v5601, 0.0
  %v5640 = vmax.f32 %v5604, 0.0
  %v5641 = vmax.f32 %v5609, 0.0
  %v5642 = vmax.f32 %v5612, 0.0
  %v5643 = vmax.f32 %v5617, 0.0
  %v5644 = vmax.f32 %v5620, 0.0
  %v5645 = vmax.f32 %v5625, 0.0
  %v5646 = vmax.f32 %v5628, 0.0
  %v5647 = vld [vmem:[%s2] sm:$0xff]
  %v5648 = vld [vmem:[%s2 + $0x8] sm:$0xff]
  %v5649 = vld [vmem:[%s2 + $0x10] sm:$0xff]
  %v5650 = vld [vmem:[%s2 + $0x18] sm:$0xff]
  %v5651 = vld [vmem:[%s2 + $0x20] sm:$0xff]
  %v5652 = vld [vmem:[%s2 + $0x28] sm:$0xff]
  %v5653 = vld [vmem:[%s2 + $0x30] sm:$0xff]
  %v5654 = vld [vmem:[%s2 + $0x38] sm:$0xff]
  %v5655 = vld [vmem:[%s2 + $0x40] sm:$0xff]
  %v5656 = vld [vmem:[%s2 + $0x48] sm:$0xff]
  %v5657 = vld [vmem:[%s2 + $0x50] sm:$0xff]
  %v5658 = vld [vmem:[%s2 + $0x58] sm:$0xff]
  %v5659 = vld [vmem:[%s2 + $0x60] sm:$0xff]
  %v5660 = vld [vmem:[%s2 + $0x68] sm:$0xff]
  %v5661 = vld [vmem:[%s2 + $0x70] sm:$0xff]
  %v5662 = vld [vmem:[%s2 + $0x78] sm:$0xff]
  %v5663 = vadd.f32 %v5631, %v5647
  %v5664 = vadd.f32 %v5632, %v5648
  %v5665 = vadd.f32 %v5633, %v5649
  %v5666 = vadd.f32 %v5634, %v5650
  %v5667 = vadd.f32 %v5635, %v5651
  %v5668 = vadd.f32 %v5636, %v5652
  %v5669 = vadd.f32 %v5637, %v5653
  %v5670 = vadd.f32 %v5638, %v5654
  %v5671 = vadd.f32 %v5639, %v5655
  %v5672 = vadd.f32 %v5640, %v5656
  %v5673 = vadd.f32 %v5641, %v5657
  %v5674 = vadd.f32 %v5642, %v5658
  %v5675 = vadd.f32 %v5643, %v5659
  %v5676 = vadd.f32 %v5644, %v5660
  %v5677 = vadd.f32 %v5645, %v5661
  %v5678 = vadd.f32 %v5646, %v5662
  %v5679 = vpack.c.bf16 %v5664, %v5663
  %v5680 = vpack.c.bf16 %v5666, %v5665
  %v5681 = vpack.c.bf16 %v5668, %v5667
  %v5682 = vpack.c.bf16 %v5670, %v5669
  %v5683 = vpack.c.bf16 %v5672, %v5671
  %v5684 = vpack.c.bf16 %v5674, %v5673
  %v5685 = vpack.c.bf16 %v5676, %v5675
  %v5686 = vpack.c.bf16 %v5678, %v5677
  %v5687 = vld [vmem:[%s7] sm:$0xf]
  %v5688 = vld [vmem:[%s7 + $0x4] sm:$0xf]
  %v5689 = vld [vmem:[%s7 + $0x8] sm:$0xf]
  %v5690 = vld [vmem:[%s7 + $0xc] sm:$0xf]
  %v5691 = vld [vmem:[%s12] sm:$0x1]
  %v5693 = vlaneseq
  %v5694 = vshrl.u32 %v5693, 7
  %v5695 = vsub.s32 0, %v5694
  %v5696 = vrot.slane %v5691, %v5695
  %v5702 = vunpack.c.l.b16 %v5687
  %v5703 = vunpack.c.l.b16 %v5688
  %v5704 = vunpack.c.l.b16 %v5689
  %v5705 = vunpack.c.l.b16 %v5690
  %v5706 = vpack.c.b16 %v5703, %v5702
  %v5707 = vpack.c.b16 %v5705, %v5704
  %vm5710 = vcmask 261120
  %v5712 = vsel %vm5710, %v5679, 0
  %v5715 = vsel %vm5710, %v5680, 0
  %v5718 = vsel %vm5710, %v5681, 0
  %v5721 = vsel %vm5710, %v5682, 0
  %v5724 = vsel %vm5710, %v5683, 0
  %v5727 = vsel %vm5710, %v5684, 0
  %v5730 = vsel %vm5710, %v5685, 0
  %v5733 = vsel %vm5710, %v5686, 0
  %5735 = vmatprep.subr.bf16.mxu0 0
  %5736 = vmatpush1.bf16.msra.mxu0 %v5706
  %5737 = vmatprep.subr.bf16.mxu0 0
  %5738 = vmatpush1.bf16.msra.mxu0 %v5707
  %5739 = vmatprep.subr.bf16.mxu0 0
  %5740 = vmatpush1.bf16.msra.mxu0 0
  %5741 = vmatprep.subr.bf16.mxu0 0
  %5742 = vmatpush1.bf16.msra.mxu0 0
  %5743 = vmatprep.subr.bf16.mxu0 0
  %5744 = vmatpush1.bf16.msra.mxu0 0
  %5745 = vmatprep.subr.bf16.mxu0 0
  %5746 = vmatpush1.bf16.msra.mxu0 0
  %5747 = vmatprep.subr.bf16.mxu0 0
  %5748 = vmatpush1.bf16.msra.mxu0 0
  %5749 = vmatprep.subr.bf16.mxu0 0
  %5750 = vmatpush1.bf16.msra.mxu0 0
  %5751 = vmatprep.subr.bf16.mxu0 0
  %5752 = vmatpush1.bf16.msra.mxu0 0
  %5753 = vmatprep.subr.bf16.mxu0 0
  %5754 = vmatpush1.bf16.msra.mxu0 0
  %5755 = vmatprep.subr.bf16.mxu0 0
  %5756 = vmatpush1.bf16.msra.mxu0 0
  %5757 = vmatprep.subr.bf16.mxu0 0
  %5758 = vmatpush1.bf16.msra.mxu0 0
  %5759 = vmatprep.subr.bf16.mxu0 0
  %5760 = vmatpush1.bf16.msra.mxu0 0
  %5761 = vmatprep.subr.bf16.mxu0 0
  %5762 = vmatpush1.bf16.msra.mxu0 0
  %5763 = vmatprep.subr.bf16.mxu0 0
  %5764 = vmatpush1.bf16.msra.mxu0 0
  %5765 = vmatprep.subr.bf16.mxu0 0
  %5766 = vmatpush1.bf16.msra.mxu0 0
  %5767 = vmatprep.mubr.bf16.mxu0 0
  %5768 = vmatmul.mubr.bf16.gmra.mrb[0].mxu0 %v5712
  %v5769 = vpop.f32.mrb[0].mxu0
  %v5770 = vadd.f32 %v5696, %v5769
  %v5771 = vpop.f32.mrb[0].mxu0
  %v5772 = vpop.f32.mrb[0].mxu0
  %v5773 = vadd.f32 %v5696, %v5772
  %v5774 = vpop.f32.mrb[0].mxu0
  %5775 = vmatprep.mubr.bf16.mxu0 0
  %5776 = vmatmul.mubr.bf16.gmra.mrb[0].mxu0 %v5715
  %v5777 = vpop.f32.mrb[0].mxu0
  %v5778 = vadd.f32 %v5696, %v5777
  %v5779 = vpop.f32.mrb[0].mxu0
  %v5780 = vpop.f32.mrb[0].mxu0
  %v5781 = vadd.f32 %v5696, %v5780
  %v5782 = vpop.f32.mrb[0].mxu0
  %5783 = vmatprep.mubr.bf16.mxu0 0
  %5784 = vmatmul.mubr.bf16.gmra.mrb[0].mxu0 %v5718
  %v5785 = vpop.f32.mrb[0].mxu0
  %v5786 = vadd.f32 %v5696, %v5785
  %v5787 = vpop.f32.mrb[0].mxu0
  %v5788 = vpop.f32.mrb[0].mxu0
  %v5789 = vadd.f32 %v5696, %v5788
  %v5790 = vpop.f32.mrb[0].mxu0
  %5791 = vmatprep.mubr.bf16.mxu0 0
  %5792 = vmatmul.mubr.bf16.gmra.mrb[0].mxu0 %v5721
  %v5793 = vpop.f32.mrb[0].mxu0
  %v5794 = vadd.f32 %v5696, %v5793
  %v5795 = vpop.f32.mrb[0].mxu0
  %v5796 = vpop.f32.mrb[0].mxu0
  %v5797 = vadd.f32 %v5696, %v5796
  %v5798 = vpop.f32.mrb[0].mxu0
  %5799 = vmatprep.mubr.bf16.mxu0 0
  %5800 = vmatmul.mubr.bf16.gmra.mrb[0].mxu0 %v5724
  %v5801 = vpop.f32.mrb[0].mxu0
  %v5802 = vadd.f32 %v5696, %v5801
  %v5803 = vpop.f32.mrb[0].mxu0
  %v5804 = vpop.f32.mrb[0].mxu0
  %v5805 = vadd.f32 %v5696, %v5804
  %v5806 = vpop.f32.mrb[0].mxu0
  %5807 = vmatprep.mubr.bf16.mxu0 0
  %5808 = vmatmul.mubr.bf16.gmra.mrb[0].mxu0 %v5727
  %v5809 = vpop.f32.mrb[0].mxu0
  %v5810 = vadd.f32 %v5696, %v5809
  %v5811 = vpop.f32.mrb[0].mxu0
  %v5812 = vpop.f32.mrb[0].mxu0
  %v5813 = vadd.f32 %v5696, %v5812
  %v5814 = vpop.f32.mrb[0].mxu0
  %5815 = vmatprep.mubr.bf16.mxu0 0
  %5816 = vmatmul.mubr.bf16.gmra.mrb[0].mxu0 %v5730
  %v5817 = vpop.f32.mrb[0].mxu0
  %v5818 = vadd.f32 %v5696, %v5817
  %v5819 = vpop.f32.mrb[0].mxu0
  %v5820 = vpop.f32.mrb[0].mxu0
  %v5821 = vadd.f32 %v5696, %v5820
  %v5822 = vpop.f32.mrb[0].mxu0
  %5823 = vmatprep.mubr.bf16.mxu0 0
  %5824 = vmatmul.mubr.bf16.gmra.mrb[0].mxu0 %v5733
  %v5825 = vpop.f32.mrb[0].mxu0
  %v5826 = vadd.f32 %v5696, %v5825
  %v5827 = vpop.f32.mrb[0].mxu0
  %v5828 = vpop.f32.mrb[0].mxu0
  %v5829 = vadd.f32 %v5696, %v5828
  %v5830 = vpop.f32.mrb[0].mxu0
  %5831 = vdwg.mxu0
  %v5832 = vmax.f32 %v5770, 0.0
  %v5833 = vmax.f32 %v5773, 0.0
  %v5834 = vmax.f32 %v5778, 0.0
  %v5835 = vmax.f32 %v5781, 0.0
  %v5836 = vmax.f32 %v5786, 0.0
  %v5837 = vmax.f32 %v5789, 0.0
  %v5838 = vmax.f32 %v5794, 0.0
  %v5839 = vmax.f32 %v5797, 0.0
  %v5840 = vmax.f32 %v5802, 0.0
  %v5841 = vmax.f32 %v5805, 0.0
  %v5842 = vmax.f32 %v5810, 0.0
  %v5843 = vmax.f32 %v5813, 0.0
  %v5844 = vmax.f32 %v5818, 0.0
  %v5845 = vmax.f32 %v5821, 0.0
  %v5846 = vmax.f32 %v5826, 0.0
  %v5847 = vmax.f32 %v5829, 0.0
  %v5848 = vld [vmem:[%s3] sm:$0xff]
  %v5849 = vld [vmem:[%s3 + $0x8] sm:$0xff]
  %v5850 = vld [vmem:[%s3 + $0x10] sm:$0xff]
  %v5851 = vld [vmem:[%s3 + $0x18] sm:$0xff]
  %v5852 = vld [vmem:[%s3 + $0x20] sm:$0xff]
  %v5853 = vld [vmem:[%s3 + $0x28] sm:$0xff]
  %v5854 = vld [vmem:[%s3 + $0x30] sm:$0xff]
  %v5855 = vld [vmem:[%s3 + $0x38] sm:$0xff]
  %v5856 = vld [vmem:[%s3 + $0x40] sm:$0xff]
  %v5857 = vld [vmem:[%s3 + $0x48] sm:$0xff]
  %v5858 = vld [vmem:[%s3 + $0x50] sm:$0xff]
  %v5859 = vld [vmem:[%s3 + $0x58] sm:$0xff]
  %v5860 = vld [vmem:[%s3 + $0x60] sm:$0xff]
  %v5861 = vld [vmem:[%s3 + $0x68] sm:$0xff]
  %v5862 = vld [vmem:[%s3 + $0x70] sm:$0xff]
  %v5863 = vld [vmem:[%s3 + $0x78] sm:$0xff]
  %v5864 = vadd.f32 %v5832, %v5848
  %v5865 = vadd.f32 %v5833, %v5849
  %v5866 = vadd.f32 %v5834, %v5850
  %v5867 = vadd.f32 %v5835, %v5851
  %v5868 = vadd.f32 %v5836, %v5852
  %v5869 = vadd.f32 %v5837, %v5853
  %v5870 = vadd.f32 %v5838, %v5854
  %v5871 = vadd.f32 %v5839, %v5855
  %v5872 = vadd.f32 %v5840, %v5856
  %v5873 = vadd.f32 %v5841, %v5857
  %v5874 = vadd.f32 %v5842, %v5858
  %v5875 = vadd.f32 %v5843, %v5859
  %v5876 = vadd.f32 %v5844, %v5860
  %v5877 = vadd.f32 %v5845, %v5861
  %v5878 = vadd.f32 %v5846, %v5862
  %v5879 = vadd.f32 %v5847, %v5863
  %vm5880 = vcmask 64512
  %5881 = vst.msk [vmem:[#allocation3] sm:$0xff] %vm5880, %v5864
  %5882 = vst.msk [vmem:[#allocation3 + $0x8] sm:$0xff] %vm5880, %v5865
  %5883 = vst.msk [vmem:[#allocation3 + $0x10] sm:$0xff] %vm5880, %v5866
  %5884 = vst.msk [vmem:[#allocation3 + $0x18] sm:$0xff] %vm5880, %v5867
  %5885 = vst.msk [vmem:[#allocation3 + $0x20] sm:$0xff] %vm5880, %v5868
  %5886 = vst.msk [vmem:[#allocation3 + $0x28] sm:$0xff] %vm5880, %v5869
  %5887 = vst.msk [vmem:[#allocation3 + $0x30] sm:$0xff] %vm5880, %v5870
  %5888 = vst.msk [vmem:[#allocation3 + $0x38] sm:$0xff] %vm5880, %v5871
  %5889 = vst.msk [vmem:[#allocation3 + $0x40] sm:$0xff] %vm5880, %v5872
  %5890 = vst.msk [vmem:[#allocation3 + $0x48] sm:$0xff] %vm5880, %v5873
  %5891 = vst.msk [vmem:[#allocation3 + $0x50] sm:$0xff] %vm5880, %v5874
  %5892 = vst.msk [vmem:[#allocation3 + $0x58] sm:$0xff] %vm5880, %v5875
  %5893 = vst.msk [vmem:[#allocation3 + $0x60] sm:$0xff] %vm5880, %v5876
  %5894 = vst.msk [vmem:[#allocation3 + $0x68] sm:$0xff] %vm5880, %v5877
  %5895 = vst.msk [vmem:[#allocation3 + $0x70] sm:$0xff] %vm5880, %v5878
  %5896 = vst.msk [vmem:[#allocation3 + $0x78] sm:$0xff] %vm5880, %v5879
  %v5897 = vld [vmem:[#allocation3] ss:$4 sm:$0xff]
  %s5898 = scalar_lea.vmem [#allocation3], 32
  %v5899 = vld [vmem:[%s5898] ss:$4 sm:$0xff]
  %s5900 = scalar_lea.vmem [#allocation3], 64
  %v5901 = vld [vmem:[%s5900] ss:$4 sm:$0xff]
  %s5902 = scalar_lea.vmem [#allocation3], 96
  %v5903 = vld [vmem:[%s5902] ss:$4 sm:$0xff]
  %s5904 = scalar_lea.vmem [#allocation3], 1
  %v5905 = vld [vmem:[%s5904] ss:$4 sm:$0xff]
  %s5906 = scalar_lea.vmem [#allocation3], 33
  %v5907 = vld [vmem:[%s5906] ss:$4 sm:$0xff]
  %s5908 = scalar_lea.vmem [#allocation3], 65
  %v5909 = vld [vmem:[%s5908] ss:$4 sm:$0xff]
  %s5910 = scalar_lea.vmem [#allocation3], 97
  %v5911 = vld [vmem:[%s5910] ss:$4 sm:$0xff]
  %s5912 = scalar_lea.vmem [#allocation3], 2
  %v5913 = vld [vmem:[%s5912] ss:$4 sm:$0xff]
  %s5914 = scalar_lea.vmem [#allocation3], 34
  %v5915 = vld [vmem:[%s5914] ss:$4 sm:$0xff]
  %s5916 = scalar_lea.vmem [#allocation3], 66
  %v5917 = vld [vmem:[%s5916] ss:$4 sm:$0xff]
  %s5918 = scalar_lea.vmem [#allocation3], 98
  %v5919 = vld [vmem:[%s5918] ss:$4 sm:$0xff]
  %s5920 = scalar_lea.vmem [#allocation3], 3
  %v5921 = vld [vmem:[%s5920] ss:$4 sm:$0xff]
  %s5922 = scalar_lea.vmem [#allocation3], 35
  %v5923 = vld [vmem:[%s5922] ss:$4 sm:$0xff]
  %s5924 = scalar_lea.vmem [#allocation3], 67
  %v5925 = vld [vmem:[%s5924] ss:$4 sm:$0xff]
  %s5926 = scalar_lea.vmem [#allocation3], 99
  %v5927 = vld [vmem:[%s5926] ss:$4 sm:$0xff]
  %5932 = vrot.lane.b32.xlu0 %v5905, 8
  %v5933 = vpop.permute.xlu0 %5932
  %5934 = vrot.lane.b32.xlu0 %v5907, 8
  %v5935 = vpop.permute.xlu0 %5934
  %5936 = vrot.lane.b32.xlu0 %v5909, 8
  %v5937 = vpop.permute.xlu0 %5936
  %5938 = vrot.lane.b32.xlu0 %v5911, 8
  %v5939 = vpop.permute.xlu0 %5938
  %5948 = vrot.lane.b32.xlu0 %v5913, 16
  %v5949 = vpop.permute.xlu0 %5948
  %5950 = vrot.lane.b32.xlu0 %v5915, 16
  %v5951 = vpop.permute.xlu0 %5950
  %5952 = vrot.lane.b32.xlu0 %v5917, 16
  %v5953 = vpop.permute.xlu0 %5952
  %5954 = vrot.lane.b32.xlu0 %v5919, 16
  %v5955 = vpop.permute.xlu0 %5954
  %5964 = vrot.lane.b32.xlu0 %v5921, 24
  %v5965 = vpop.permute.xlu0 %5964
  %5966 = vrot.lane.b32.xlu0 %v5923, 24
  %v5967 = vpop.permute.xlu0 %5966
  %5968 = vrot.lane.b32.xlu0 %v5925, 24
  %v5969 = vpop.permute.xlu0 %5968
  %5970 = vrot.lane.b32.xlu0 %v5927, 24
  %v5971 = vpop.permute.xlu0 %5970
  %v5976 = vsel %vm5880, %v5897, %v5933
  %v5977 = vsel %vm5880, %v5899, %v5935
  %v5978 = vsel %vm5880, %v5901, %v5937
  %v5979 = vsel %vm5880, %v5903, %v5939
  %vm5980 = vcmask 130048
  %v5981 = vsel %vm5980, %v5976, %v5949
  %v5982 = vsel %vm5980, %v5977, %v5951
  %v5983 = vsel %vm5980, %v5978, %v5953
  %v5984 = vsel %vm5980, %v5979, %v5955
  %vm5985 = vcmask 195584
  %v5986 = vsel %vm5985, %v5981, %v5965
  %v5987 = vsel %vm5985, %v5982, %v5967
  %v5988 = vsel %vm5985, %v5983, %v5969
  %v5989 = vsel %vm5985, %v5984, %v5971
  %v5990 = vpack.c.bf16 %v5987, %v5986
  %v5991 = vpack.c.bf16 %v5989, %v5988
  %v5992 = vld [vmem:[%s8] sm:$0xf]
  %v5993 = vld [vmem:[%s8 + $0x4] sm:$0xf]
  %v5994 = vld [vmem:[%s8 + $0x8] sm:$0xf]
  %v5995 = vld [vmem:[%s8 + $0xc] sm:$0xf]
  %v5996 = vld [vmem:[%s13] sm:$0x1]
  %v5998 = vlaneseq
  %v5999 = vshrl.u32 %v5998, 7
  %v6000 = vsub.s32 0, %v5999
  %v6001 = vrot.slane %v5996, %v6000
  %v6007 = vunpack.c.l.b16 %v5992
  %v6008 = vunpack.c.l.b16 %v5993
  %v6009 = vunpack.c.l.b16 %v5994
  %v6010 = vunpack.c.l.b16 %v5995
  %v6011 = vpack.c.b16 %v6008, %v6007
  %v6012 = vpack.c.b16 %v6010, %v6009
  %v6016 = vsel %vm5710, %v5990, 0
  %v6019 = vsel %vm5710, %v5991, 0
  %6021 = vmatprep.subr.bf16.mxu0 0
  %6022 = vmatpush1.bf16.msra.mxu0 %v6011
  %6023 = vmatprep.subr.bf16.mxu0 0
  %6024 = vmatpush1.bf16.msra.mxu0 %v6012
  %6025 = vmatprep.subr.bf16.mxu0 0
  %6026 = vmatpush1.bf16.msra.mxu0 0
  %6027 = vmatprep.subr.bf16.mxu0 0
  %6028 = vmatpush1.bf16.msra.mxu0 0
  %6029 = vmatprep.subr.bf16.mxu0 0
  %6030 = vmatpush1.bf16.msra.mxu0 0
  %6031 = vmatprep.subr.bf16.mxu0 0
  %6032 = vmatpush1.bf16.msra.mxu0 0
  %6033 = vmatprep.subr.bf16.mxu0 0
  %6034 = vmatpush1.bf16.msra.mxu0 0
  %6035 = vmatprep.subr.bf16.mxu0 0
  %6036 = vmatpush1.bf16.msra.mxu0 0
  %6037 = vmatprep.subr.bf16.mxu0 0
  %6038 = vmatpush1.bf16.msra.mxu0 0
  %6039 = vmatprep.subr.bf16.mxu0 0
  %6040 = vmatpush1.bf16.msra.mxu0 0
  %6041 = vmatprep.subr.bf16.mxu0 0
  %6042 = vmatpush1.bf16.msra.mxu0 0
  %6043 = vmatprep.subr.bf16.mxu0 0
  %6044 = vmatpush1.bf16.msra.mxu0 0
  %6045 = vmatprep.subr.bf16.mxu0 0
  %6046 = vmatpush1.bf16.msra.mxu0 0
  %6047 = vmatprep.subr.bf16.mxu0 0
  %6048 = vmatpush1.bf16.msra.mxu0 0
  %6049 = vmatprep.subr.bf16.mxu0 0
  %6050 = vmatpush1.bf16.msra.mxu0 0
  %6051 = vmatprep.subr.bf16.mxu0 0
  %6052 = vmatpush1.bf16.msra.mxu0 0
  %6053 = vmatprep.mubr.bf16.mxu0 0
  %6054 = vmatmul.mubr.bf16.gmra.mrb[0].mxu0 %v6016
  %v6055 = vpop.f32.mrb[0].mxu0
  %v6056 = vadd.f32 %v6001, %v6055
  %v6057 = vpop.f32.mrb[0].mxu0
  %v6058 = vpop.f32.mrb[0].mxu0
  %v6059 = vadd.f32 %v6001, %v6058
  %v6060 = vpop.f32.mrb[0].mxu0
  %6061 = vmatprep.mubr.bf16.mxu0 0
  %6062 = vmatmul.mubr.bf16.gmra.mrb[0].mxu0 %v6019
  %v6063 = vpop.f32.mrb[0].mxu0
  %v6064 = vadd.f32 %v6001, %v6063
  %v6065 = vpop.f32.mrb[0].mxu0
  %v6066 = vpop.f32.mrb[0].mxu0
  %v6067 = vadd.f32 %v6001, %v6066
  %v6068 = vpop.f32.mrb[0].mxu0
  %6069 = vdwg.mxu0
  %v6070 = vmax.f32 %v6056, 0.0
  %v6071 = vmax.f32 %v6059, 0.0
  %v6072 = vmax.f32 %v6064, 0.0
  %v6073 = vmax.f32 %v6067, 0.0
  %v6074 = vld [vmem:[%s4] sm:$0xff]
  %v6075 = vld [vmem:[%s4 + $0x8] sm:$0xff]
  %v6076 = vld [vmem:[%s4 + $0x10] sm:$0xff]
  %v6077 = vld [vmem:[%s4 + $0x18] sm:$0xff]
  %v6078 = vadd.f32 %v6070, %v6074
  %v6079 = vadd.f32 %v6071, %v6075
  %v6080 = vadd.f32 %v6072, %v6076
  %v6081 = vadd.f32 %v6073, %v6077
  %6082 = vst.msk [vmem:[#allocation4] sm:$0xff] %vm5880, %v6078
  %6083 = vst.msk [vmem:[#allocation4 + $0x8] sm:$0xff] %vm5880, %v6079
  %6084 = vst.msk [vmem:[#allocation4 + $0x10] sm:$0xff] %vm5880, %v6080
  %6085 = vst.msk [vmem:[#allocation4 + $0x18] sm:$0xff] %vm5880, %v6081
  %v6086 = vld [vmem:[#allocation4] ss:$16 sm:$0x3]
  %s6087 = scalar_lea.vmem [#allocation4], 1
  %v6088 = vld [vmem:[%s6087] ss:$16 sm:$0x3]
  %s6089 = scalar_lea.vmem [#allocation4], 2
  %v6090 = vld [vmem:[%s6089] ss:$16 sm:$0x3]
  %s6091 = scalar_lea.vmem [#allocation4], 3
  %v6092 = vld [vmem:[%s6091] ss:$16 sm:$0x3]
  %s6093 = scalar_lea.vmem [#allocation4], 4
  %v6094 = vld [vmem:[%s6093] ss:$16 sm:$0x3]
  %s6095 = scalar_lea.vmem [#allocation4], 5
  %v6096 = vld [vmem:[%s6095] ss:$16 sm:$0x3]
  %s6097 = scalar_lea.vmem [#allocation4], 6
  %v6098 = vld [vmem:[%s6097] ss:$16 sm:$0x3]
  %s6099 = scalar_lea.vmem [#allocation4], 7
  %v6100 = vld [vmem:[%s6099] ss:$16 sm:$0x3]
  %s6101 = scalar_lea.vmem [#allocation4], 8
  %v6102 = vld [vmem:[%s6101] ss:$16 sm:$0x3]
  %s6103 = scalar_lea.vmem [#allocation4], 9
  %v6104 = vld [vmem:[%s6103] ss:$16 sm:$0x3]
  %s6105 = scalar_lea.vmem [#allocation4], 10
  %v6106 = vld [vmem:[%s6105] ss:$16 sm:$0x3]
  %s6107 = scalar_lea.vmem [#allocation4], 11
  %v6108 = vld [vmem:[%s6107] ss:$16 sm:$0x3]
  %s6109 = scalar_lea.vmem [#allocation4], 12
  %v6110 = vld [vmem:[%s6109] ss:$16 sm:$0x3]
  %s6111 = scalar_lea.vmem [#allocation4], 13
  %v6112 = vld [vmem:[%s6111] ss:$16 sm:$0x3]
  %s6113 = scalar_lea.vmem [#allocation4], 14
  %v6114 = vld [vmem:[%s6113] ss:$16 sm:$0x3]
  %s6115 = scalar_lea.vmem [#allocation4], 15
  %v6116 = vld [vmem:[%s6115] ss:$16 sm:$0x3]
  %6118 = vrot.lane.b32.xlu0 %v6088, 8
  %v6119 = vpop.permute.xlu0 %6118
  %6122 = vrot.lane.b32.xlu0 %v6090, 16
  %v6123 = vpop.permute.xlu0 %6122
  %6126 = vrot.lane.b32.xlu0 %v6092, 24
  %v6127 = vpop.permute.xlu0 %6126
  %6130 = vrot.lane.b32.xlu0 %v6094, 32
  %v6131 = vpop.permute.xlu0 %6130
  %6134 = vrot.lane.b32.xlu0 %v6096, 40
  %v6135 = vpop.permute.xlu0 %6134
  %6138 = vrot.lane.b32.xlu0 %v6098, 48
  %v6139 = vpop.permute.xlu0 %6138
  %6142 = vrot.lane.b32.xlu0 %v6100, 56
  %v6143 = vpop.permute.xlu0 %6142
  %6146 = vrot.lane.b32.xlu0 %v6102, 64
  %v6147 = vpop.permute.xlu0 %6146
  %6150 = vrot.lane.b32.xlu0 %v6104, 72
  %v6151 = vpop.permute.xlu0 %6150
  %6154 = vrot.lane.b32.xlu0 %v6106, 80
  %v6155 = vpop.permute.xlu0 %6154
  %6158 = vrot.lane.b32.xlu0 %v6108, 88
  %v6159 = vpop.permute.xlu0 %6158
  %6162 = vrot.lane.b32.xlu0 %v6110, 96
  %v6163 = vpop.permute.xlu0 %6162
  %6166 = vrot.lane.b32.xlu0 %v6112, 104
  %v6167 = vpop.permute.xlu0 %6166
  %6170 = vrot.lane.b32.xlu0 %v6114, 112
  %v6171 = vpop.permute.xlu0 %6170
  %6174 = vrot.lane.b32.xlu0 %v6116, 120
  %v6175 = vpop.permute.xlu0 %6174
  %v6177 = vsel %vm5880, %v6086, %v6119
  %v6178 = vsel %vm5980, %v6177, %v6123
  %v6179 = vsel %vm5985, %v6178, %v6127
  %v6180 = vsel %vm5710, %v6179, %v6131
  %vm6181 = vcmask 326656
  %v6182 = vsel %vm6181, %v6180, %v6135
  %vm6183 = vcmask 392192
  %v6184 = vsel %vm6183, %v6182, %v6139
  %vm6185 = vcmask 457728
  %v6186 = vsel %vm6185, %v6184, %v6143
  %vm6187 = vcmask 523264
  %v6188 = vsel %vm6187, %v6186, %v6147
  %vm6189 = vcmask 588800
  %v6190 = vsel %vm6189, %v6188, %v6151
  %vm6191 = vcmask 654336
  %v6192 = vsel %vm6191, %v6190, %v6155
  %vm6193 = vcmask 719872
  %v6194 = vsel %vm6193, %v6192, %v6159
  %vm6195 = vcmask 785408
  %v6196 = vsel %vm6195, %v6194, %v6163
  %vm6197 = vcmask 850944
  %v6198 = vsel %vm6197, %v6196, %v6167
  %vm6199 = vcmask 916480
  %v6200 = vsel %vm6199, %v6198, %v6171
  %vm6201 = vcmask 982016
  %v6202 = vsel %vm6201, %v6200, %v6175
  %v6203 = vpack.c.bf16 %v6202, %v6202
  %v6204 = vld [vmem:[%s9] sm:$0xf]
  %v6205 = vld [vmem:[%s9 + $0x4] sm:$0xf]
  %v6206 = vld [vmem:[%s9 + $0x8] sm:$0xf]
  %v6207 = vld [vmem:[%s9 + $0xc] sm:$0xf]
  %v6208 = vld [vmem:[%s9 + $0x10] sm:$0xf]
  %v6209 = vld [vmem:[%s9 + $0x14] sm:$0xf]
  %v6210 = vld [vmem:[%s9 + $0x18] sm:$0xf]
  %v6211 = vld [vmem:[%s9 + $0x1c] sm:$0xf]
  %v6212 = vld [vmem:[%s9 + $0x20] sm:$0xf]
  %v6213 = vld [vmem:[%s9 + $0x24] sm:$0xf]
  %v6214 = vld [vmem:[%s9 + $0x28] sm:$0xf]
  %v6215 = vld [vmem:[%s9 + $0x2c] sm:$0xf]
  %v6216 = vld [vmem:[%s9 + $0x30] sm:$0xf]
  %v6217 = vld [vmem:[%s9 + $0x34] sm:$0xf]
  %v6218 = vld [vmem:[%s9 + $0x38] sm:$0xf]
  %v6219 = vld [vmem:[%s9 + $0x3c] sm:$0xf]
  %v6220 = vld [vmem:[%s14] sm:$0x1]
  %v6222 = vlaneseq
  %v6223 = vshrl.u32 %v6222, 7
  %v6224 = vsub.s32 0, %v6223
  %v6225 = vrot.slane %v6220, %v6224
  %v6243 = vunpack.c.l.b16 %v6204
  %v6244 = vunpack.c.l.b16 %v6205
  %v6245 = vunpack.c.l.b16 %v6206
  %v6246 = vunpack.c.l.b16 %v6207
  %v6247 = vunpack.c.l.b16 %v6208
  %v6248 = vunpack.c.l.b16 %v6209
  %v6249 = vunpack.c.l.b16 %v6210
  %v6250 = vunpack.c.l.b16 %v6211
  %v6251 = vunpack.c.l.b16 %v6212
  %v6252 = vunpack.c.l.b16 %v6213
  %v6253 = vunpack.c.l.b16 %v6214
  %v6254 = vunpack.c.l.b16 %v6215
  %v6255 = vunpack.c.l.b16 %v6216
  %v6256 = vunpack.c.l.b16 %v6217
  %v6257 = vunpack.c.l.b16 %v6218
  %v6258 = vunpack.c.l.b16 %v6219
  %v6259 = vpack.c.b16 %v6244, %v6243
  %v6260 = vpack.c.b16 %v6246, %v6245
  %v6261 = vpack.c.b16 %v6248, %v6247
  %v6262 = vpack.c.b16 %v6250, %v6249
  %v6263 = vpack.c.b16 %v6252, %v6251
  %v6264 = vpack.c.b16 %v6254, %v6253
  %v6265 = vpack.c.b16 %v6256, %v6255
  %v6266 = vpack.c.b16 %v6258, %v6257
  %6275 = vmatprep.subr.bf16.mxu0 0
  %6276 = vmatpush1.bf16.msra.mxu0 %v6259
  %6277 = vmatprep.subr.bf16.mxu0 0
  %6278 = vmatpush1.bf16.msra.mxu0 %v6260
  %6279 = vmatprep.subr.bf16.mxu0 0
  %6280 = vmatpush1.bf16.msra.mxu0 %v6261
  %6281 = vmatprep.subr.bf16.mxu0 0
  %6282 = vmatpush1.bf16.msra.mxu0 %v6262
  %6283 = vmatprep.subr.bf16.mxu0 0
  %6284 = vmatpush1.bf16.msra.mxu0 %v6263
  %6285 = vmatprep.subr.bf16.mxu0 0
  %6286 = vmatpush1.bf16.msra.mxu0 %v6264
  %6287 = vmatprep.subr.bf16.mxu0 0
  %6288 = vmatpush1.bf16.msra.mxu0 %v6265
  %6289 = vmatprep.subr.bf16.mxu0 0
  %6290 = vmatpush1.bf16.msra.mxu0 %v6266
  %6291 = vmatprep.subr.bf16.mxu0 0
  %6292 = vmatpush1.bf16.msra.mxu0 0
  %6293 = vmatprep.subr.bf16.mxu0 0
  %6294 = vmatpush1.bf16.msra.mxu0 0
  %6295 = vmatprep.subr.bf16.mxu0 0
  %6296 = vmatpush1.bf16.msra.mxu0 0
  %6297 = vmatprep.subr.bf16.mxu0 0
  %6298 = vmatpush1.bf16.msra.mxu0 0
  %6299 = vmatprep.subr.bf16.mxu0 0
  %6300 = vmatpush1.bf16.msra.mxu0 0
  %6301 = vmatprep.subr.bf16.mxu0 0
  %6302 = vmatpush1.bf16.msra.mxu0 0
  %6303 = vmatprep.subr.bf16.mxu0 0
  %6304 = vmatpush1.bf16.msra.mxu0 0
  %6305 = vmatprep.subr.bf16.mxu0 0
  %6306 = vmatpush1.bf16.msra.mxu0 0
  %6307 = vmatprep.mubr.bf16.mxu0 0
  %6308 = vmatmul.mubr.bf16.gmra.mrb[0].mxu0 %v6203
  %v6309 = vpop.f32.mrb[0].mxu0
  %v6310 = vadd.f32 %v6225, %v6309
  %v6311 = vpop.f32.mrb[0].mxu0
  %v6312 = vpop.f32.mrb[0].mxu0
  %v6313 = vpop.f32.mrb[0].mxu0
  %6314 = vdwg.mxu0
  %v6315 = vmax.f32 %v6310, 0.0
  %v6316 = vpack.c.bf16 %v6315, %v6315
  %v6317 = vld [vmem:[%s16] sm:$0xff]
  %s6318 = smul.u32 4, 288
  %s6319 = smul.u32 %s6318, 2
  %s6320 = sshll.u32 %s6319, 4
  %6321 = dma.done [#allocation5], %s6320
  %v6322 = vld [vmem:[%s15] sm:$0xff]
  %v6323 = vld [vmem:[%s15 + $0x8] sm:$0xff]
  %v6324 = vld [vmem:[%s15 + $0x10] sm:$0x3]
  %v6325 = vld [vmem:[#allocation2] sm:$0xff]
  %v6326 = vld [vmem:[#allocation2 + $0x8] sm:$0xff]
  %v6327 = vld [vmem:[#allocation2 + $0x10] sm:$0xff]
  %v6328 = vld [vmem:[#allocation2 + $0x18] sm:$0xff]
  %v6329 = vld [vmem:[#allocation2 + $0x20] sm:$0xff]
  %v6330 = vld [vmem:[#allocation2 + $0x28] sm:$0xff]
  %v6331 = vld [vmem:[#allocation2 + $0x30] sm:$0xff]
  %v6332 = vld [vmem:[#allocation2 + $0x38] sm:$0xff]
  %v6333 = vld [vmem:[#allocation2 + $0x40] sm:$0xff]
  %v6334 = vld [vmem:[#allocation2 + $0x48] sm:$0xff]
  %v6335 = vld [vmem:[#allocation2 + $0x50] sm:$0xff]
  %v6336 = vld [vmem:[#allocation2 + $0x58] sm:$0xff]
  %v6337 = vld [vmem:[#allocation2 + $0x60] sm:$0xff]
  %v6338 = vld [vmem:[#allocation2 + $0x68] sm:$0xff]
  %v6339 = vld [vmem:[#allocation2 + $0x70] sm:$0xff]
  %v6340 = vld [vmem:[#allocation2 + $0x78] sm:$0xff]
  %v6341 = vld [vmem:[#allocation2 + $0x80] sm:$0xff]
  %v6342 = vld [vmem:[#allocation2 + $0x88] sm:$0xff]
  %v6343 = vld [vmem:[#allocation2 + $0x90] sm:$0xff]
  %v6344 = vld [vmem:[#allocation2 + $0x98] sm:$0xff]
  %v6345 = vld [vmem:[#allocation2 + $0xa0] sm:$0xff]
  %v6346 = vld [vmem:[#allocation2 + $0xa8] sm:$0xff]
  %v6347 = vld [vmem:[#allocation2 + $0xb0] sm:$0xff]
  %v6348 = vld [vmem:[#allocation2 + $0xb8] sm:$0xff]
  %v6349 = vld [vmem:[#allocation2 + $0xc0] sm:$0xff]
  %v6350 = vld [vmem:[#allocation2 + $0xc8] sm:$0xff]
  %v6351 = vld [vmem:[#allocation2 + $0xd0] sm:$0xff]
  %v6352 = vld [vmem:[#allocation2 + $0xd8] sm:$0xff]
  %v6353 = vld [vmem:[#allocation2 + $0xe0] sm:$0xff]
  %v6354 = vld [vmem:[#allocation2 + $0xe8] sm:$0xff]
  %v6355 = vld [vmem:[#allocation2 + $0xf0] sm:$0xff]
  %v6356 = vld [vmem:[#allocation2 + $0xf8] sm:$0xff]
  %v6357 = vld [vmem:[#allocation2 + $0x100] sm:$0xff]
  %v6358 = vld [vmem:[#allocation2 + $0x108] sm:$0xff]
  %v6359 = vld [vmem:[#allocation2 + $0x110] sm:$0xff]
  %v6360 = vld [vmem:[#allocation2 + $0x118] sm:$0xff]
  %v6361 = vld [vmem:[#allocation2 + $0x120] sm:$0xff]
  %v6362 = vld [vmem:[#allocation2 + $0x128] sm:$0xff]
  %v6363 = vld [vmem:[#allocation2 + $0x130] sm:$0xff]
  %v6364 = vld [vmem:[#allocation2 + $0x138] sm:$0xff]
  %v6365 = vld [vmem:[#allocation2 + $0x140] sm:$0xff]
  %v6366 = vld [vmem:[#allocation2 + $0x148] sm:$0xff]
  %v6367 = vld [vmem:[#allocation2 + $0x150] sm:$0xff]
  %v6368 = vld [vmem:[#allocation2 + $0x158] sm:$0xff]
  %v6369 = vld [vmem:[#allocation2 + $0x160] sm:$0xff]
  %v6370 = vld [vmem:[#allocation2 + $0x168] sm:$0xff]
  %v6371 = vld [vmem:[#allocation2 + $0x170] sm:$0xff]
  %v6372 = vld [vmem:[#allocation2 + $0x178] sm:$0xff]
  %v6373 = vld [vmem:[#allocation2 + $0x180] sm:$0xff]
  %v6374 = vld [vmem:[#allocation2 + $0x188] sm:$0xff]
  %v6375 = vld [vmem:[#allocation2 + $0x190] sm:$0xff]
  %v6376 = vld [vmem:[#allocation2 + $0x198] sm:$0xff]
  %v6377 = vld [vmem:[#allocation2 + $0x1a0] sm:$0xff]
  %v6378 = vld [vmem:[#allocation2 + $0x1a8] sm:$0xff]
  %v6379 = vld [vmem:[#allocation2 + $0x1b0] sm:$0xff]
  %v6380 = vld [vmem:[#allocation2 + $0x1b8] sm:$0xff]
  %v6381 = vld [vmem:[#allocation2 + $0x1c0] sm:$0xff]
  %v6382 = vld [vmem:[#allocation2 + $0x1c8] sm:$0xff]
  %v6383 = vld [vmem:[#allocation2 + $0x1d0] sm:$0xff]
  %v6384 = vld [vmem:[#allocation2 + $0x1d8] sm:$0xff]
  %v6385 = vld [vmem:[#allocation2 + $0x1e0] sm:$0xff]
  %v6386 = vld [vmem:[#allocation2 + $0x1e8] sm:$0xff]
  %v6387 = vld [vmem:[#allocation2 + $0x1f0] sm:$0xff]
  %v6388 = vld [vmem:[#allocation2 + $0x1f8] sm:$0xff]
  %v6389 = vld [vmem:[#allocation2 + $0x200] sm:$0xff]
  %v6390 = vld [vmem:[#allocation2 + $0x208] sm:$0xff]
  %v6391 = vld [vmem:[#allocation2 + $0x210] sm:$0xff]
  %v6392 = vld [vmem:[#allocation2 + $0x218] sm:$0xff]
  %v6393 = vld [vmem:[#allocation2 + $0x220] sm:$0xff]
  %v6394 = vld [vmem:[#allocation2 + $0x228] sm:$0xff]
  %v6395 = vld [vmem:[#allocation2 + $0x230] sm:$0xff]
  %v6396 = vld [vmem:[#allocation2 + $0x238] sm:$0xff]
  %v6397 = vld [vmem:[#allocation2 + $0x240] sm:$0xff]
  %v6398 = vld [vmem:[#allocation2 + $0x248] sm:$0xff]
  %v6399 = vld [vmem:[#allocation2 + $0x250] sm:$0xff]
  %v6400 = vld [vmem:[#allocation2 + $0x258] sm:$0xff]
  %v6401 = vld [vmem:[#allocation2 + $0x260] sm:$0xff]
  %v6402 = vld [vmem:[#allocation2 + $0x268] sm:$0xff]
  %v6403 = vld [vmem:[#allocation2 + $0x270] sm:$0xff]
  %v6404 = vld [vmem:[#allocation2 + $0x278] sm:$0xff]
  %v6405 = vld [vmem:[#allocation2 + $0x280] sm:$0xff]
  %v6406 = vld [vmem:[#allocation2 + $0x288] sm:$0xff]
  %v6407 = vld [vmem:[#allocation2 + $0x290] sm:$0xff]
  %v6408 = vld [vmem:[#allocation2 + $0x298] sm:$0xff]
  %v6409 = vld [vmem:[#allocation2 + $0x2a0] sm:$0xff]
  %v6410 = vld [vmem:[#allocation2 + $0x2a8] sm:$0xff]
  %v6411 = vld [vmem:[#allocation2 + $0x2b0] sm:$0xff]
  %v6412 = vld [vmem:[#allocation2 + $0x2b8] sm:$0xff]
  %v6413 = vld [vmem:[#allocation2 + $0x2c0] sm:$0xff]
  %v6414 = vld [vmem:[#allocation2 + $0x2c8] sm:$0xff]
  %v6415 = vld [vmem:[#allocation2 + $0x2d0] sm:$0xff]
  %v6416 = vld [vmem:[#allocation2 + $0x2d8] sm:$0xff]
  %v6417 = vld [vmem:[#allocation2 + $0x2e0] sm:$0xff]
  %v6418 = vld [vmem:[#allocation2 + $0x2e8] sm:$0xff]
  %v6419 = vld [vmem:[#allocation2 + $0x2f0] sm:$0xff]
  %v6420 = vld [vmem:[#allocation2 + $0x2f8] sm:$0xff]
  %v6421 = vld [vmem:[#allocation2 + $0x300] sm:$0xff]
  %v6422 = vld [vmem:[#allocation2 + $0x308] sm:$0xff]
  %v6423 = vld [vmem:[#allocation2 + $0x310] sm:$0xff]
  %v6424 = vld [vmem:[#allocation2 + $0x318] sm:$0xff]
  %v6425 = vld [vmem:[#allocation2 + $0x320] sm:$0xff]
  %v6426 = vld [vmem:[#allocation2 + $0x328] sm:$0xff]
  %v6427 = vld [vmem:[#allocation2 + $0x330] sm:$0xff]
  %v6428 = vld [vmem:[#allocation2 + $0x338] sm:$0xff]
  %v6429 = vld [vmem:[#allocation2 + $0x340] sm:$0xff]
  %v6430 = vld [vmem:[#allocation2 + $0x348] sm:$0xff]
  %v6431 = vld [vmem:[#allocation2 + $0x350] sm:$0xff]
  %v6432 = vld [vmem:[#allocation2 + $0x358] sm:$0xff]
  %v6433 = vld [vmem:[#allocation2 + $0x360] sm:$0xff]
  %v6434 = vld [vmem:[#allocation2 + $0x368] sm:$0xff]
  %v6435 = vld [vmem:[#allocation2 + $0x370] sm:$0xff]
  %v6436 = vld [vmem:[#allocation2 + $0x378] sm:$0xff]
  %v6437 = vld [vmem:[#allocation2 + $0x380] sm:$0xff]
  %v6438 = vld [vmem:[#allocation2 + $0x388] sm:$0xff]
  %v6439 = vld [vmem:[#allocation2 + $0x390] sm:$0xff]
  %v6440 = vld [vmem:[#allocation2 + $0x398] sm:$0xff]
  %v6441 = vld [vmem:[#allocation2 + $0x3a0] sm:$0xff]
  %v6442 = vld [vmem:[#allocation2 + $0x3a8] sm:$0xff]
  %v6443 = vld [vmem:[#allocation2 + $0x3b0] sm:$0xff]
  %v6444 = vld [vmem:[#allocation2 + $0x3b8] sm:$0xff]
  %v6445 = vld [vmem:[#allocation2 + $0x3c0] sm:$0xff]
  %v6446 = vld [vmem:[#allocation2 + $0x3c8] sm:$0xff]
  %v6447 = vld [vmem:[#allocation2 + $0x3d0] sm:$0xff]
  %v6448 = vld [vmem:[#allocation2 + $0x3d8] sm:$0xff]
  %v6449 = vld [vmem:[#allocation2 + $0x3e0] sm:$0xff]
  %v6450 = vld [vmem:[#allocation2 + $0x3e8] sm:$0xff]
  %v6451 = vld [vmem:[#allocation2 + $0x3f0] sm:$0xff]
  %v6452 = vld [vmem:[#allocation2 + $0x3f8] sm:$0xff]
  %v6453 = vld [vmem:[#allocation2 + $0x400] sm:$0xff]
  %v6454 = vld [vmem:[#allocation2 + $0x408] sm:$0xff]
  %v6455 = vld [vmem:[#allocation2 + $0x410] sm:$0xff]
  %v6456 = vld [vmem:[#allocation2 + $0x418] sm:$0xff]
  %v6457 = vld [vmem:[#allocation2 + $0x420] sm:$0xff]
  %v6458 = vld [vmem:[#allocation2 + $0x428] sm:$0xff]
  %v6459 = vld [vmem:[#allocation2 + $0x430] sm:$0xff]
  %v6460 = vld [vmem:[#allocation2 + $0x438] sm:$0xff]
  %v6461 = vld [vmem:[#allocation2 + $0x440] sm:$0xff]
  %v6462 = vld [vmem:[#allocation2 + $0x448] sm:$0xff]
  %v6463 = vld [vmem:[#allocation2 + $0x450] sm:$0xff]
  %v6464 = vld [vmem:[#allocation2 + $0x458] sm:$0xff]
  %v6465 = vld [vmem:[#allocation2 + $0x460] sm:$0xff]
  %v6466 = vld [vmem:[#allocation2 + $0x468] sm:$0xff]
  %v6467 = vld [vmem:[#allocation2 + $0x470] sm:$0xff]
  %v6468 = vld [vmem:[#allocation2 + $0x478] sm:$0xff]
  %v6469 = vld [vmem:[#allocation2 + $0x480] sm:$0xff]
  %v6470 = vld [vmem:[#allocation2 + $0x488] sm:$0xff]
  %v6471 = vld [vmem:[#allocation2 + $0x490] sm:$0xff]
  %v6472 = vld [vmem:[#allocation2 + $0x498] sm:$0xff]
  %v6473 = vld [vmem:[#allocation2 + $0x4a0] sm:$0xff]
  %v6474 = vld [vmem:[#allocation2 + $0x4a8] sm:$0xff]
  %v6475 = vld [vmem:[#allocation2 + $0x4b0] sm:$0xff]
  %v6476 = vld [vmem:[#allocation2 + $0x4b8] sm:$0xff]
  %v6477 = vld [vmem:[#allocation2 + $0x4c0] sm:$0xff]
  %v6478 = vld [vmem:[#allocation2 + $0x4c8] sm:$0xff]
  %v6479 = vld [vmem:[#allocation2 + $0x4d0] sm:$0xff]
  %v6480 = vld [vmem:[#allocation2 + $0x4d8] sm:$0xff]
  %v6481 = vld [vmem:[#allocation2 + $0x4e0] sm:$0xff]
  %v6482 = vld [vmem:[#allocation2 + $0x4e8] sm:$0xff]
  %v6483 = vld [vmem:[#allocation2 + $0x4f0] sm:$0xff]
  %v6484 = vld [vmem:[#allocation2 + $0x4f8] sm:$0xff]
  %v6485 = vld [vmem:[#allocation2 + $0x500] sm:$0xff]
  %v6486 = vld [vmem:[#allocation2 + $0x508] sm:$0xff]
  %v6487 = vld [vmem:[#allocation2 + $0x510] sm:$0xff]
  %v6488 = vld [vmem:[#allocation2 + $0x518] sm:$0xff]
  %v6489 = vld [vmem:[#allocation2 + $0x520] sm:$0xff]
  %v6490 = vld [vmem:[#allocation2 + $0x528] sm:$0xff]
  %v6491 = vld [vmem:[#allocation2 + $0x530] sm:$0xff]
  %v6492 = vld [vmem:[#allocation2 + $0x538] sm:$0xff]
  %v6493 = vld [vmem:[#allocation2 + $0x540] sm:$0xff]
  %v6494 = vld [vmem:[#allocation2 + $0x548] sm:$0xff]
  %v6495 = vld [vmem:[#allocation2 + $0x550] sm:$0xff]
  %v6496 = vld [vmem:[#allocation2 + $0x558] sm:$0xff]
  %v6497 = vld [vmem:[#allocation2 + $0x560] sm:$0xff]
  %v6498 = vld [vmem:[#allocation2 + $0x568] sm:$0xff]
  %v6499 = vld [vmem:[#allocation2 + $0x570] sm:$0xff]
  %v6500 = vld [vmem:[#allocation2 + $0x578] sm:$0xff]
  %v6501 = vld [vmem:[#allocation2 + $0x580] sm:$0xff]
  %v6502 = vld [vmem:[#allocation2 + $0x588] sm:$0xff]
  %v6503 = vld [vmem:[#allocation2 + $0x590] sm:$0xff]
  %v6504 = vld [vmem:[#allocation2 + $0x598] sm:$0xff]
  %v6505 = vld [vmem:[#allocation2 + $0x5a0] sm:$0xff]
  %v6506 = vld [vmem:[#allocation2 + $0x5a8] sm:$0xff]
  %v6507 = vld [vmem:[#allocation2 + $0x5b0] sm:$0xff]
  %v6508 = vld [vmem:[#allocation2 + $0x5b8] sm:$0xff]
  %v6509 = vld [vmem:[#allocation2 + $0x5c0] sm:$0xff]
  %v6510 = vld [vmem:[#allocation2 + $0x5c8] sm:$0xff]
  %v6511 = vld [vmem:[#allocation2 + $0x5d0] sm:$0xff]
  %v6512 = vld [vmem:[#allocation2 + $0x5d8] sm:$0xff]
  %v6513 = vld [vmem:[#allocation2 + $0x5e0] sm:$0xff]
  %v6514 = vld [vmem:[#allocation2 + $0x5e8] sm:$0xff]
  %v6515 = vld [vmem:[#allocation2 + $0x5f0] sm:$0xff]
  %v6516 = vld [vmem:[#allocation2 + $0x5f8] sm:$0xff]
  %v6517 = vld [vmem:[#allocation2 + $0x600] sm:$0xff]
  %v6518 = vld [vmem:[#allocation2 + $0x608] sm:$0xff]
  %v6519 = vld [vmem:[#allocation2 + $0x610] sm:$0xff]
  %v6520 = vld [vmem:[#allocation2 + $0x618] sm:$0xff]
  %v6521 = vld [vmem:[#allocation2 + $0x620] sm:$0xff]
  %v6522 = vld [vmem:[#allocation2 + $0x628] sm:$0xff]
  %v6523 = vld [vmem:[#allocation2 + $0x630] sm:$0xff]
  %v6524 = vld [vmem:[#allocation2 + $0x638] sm:$0xff]
  %v6525 = vld [vmem:[#allocation2 + $0x640] sm:$0xff]
  %v6526 = vld [vmem:[#allocation2 + $0x648] sm:$0xff]
  %v6527 = vld [vmem:[#allocation2 + $0x650] sm:$0xff]
  %v6528 = vld [vmem:[#allocation2 + $0x658] sm:$0xff]
  %v6529 = vld [vmem:[#allocation2 + $0x660] sm:$0xff]
  %v6530 = vld [vmem:[#allocation2 + $0x668] sm:$0xff]
  %v6531 = vld [vmem:[#allocation2 + $0x670] sm:$0xff]
  %v6532 = vld [vmem:[#allocation2 + $0x678] sm:$0xff]
  %v6533 = vld [vmem:[#allocation2 + $0x680] sm:$0xff]
  %v6534 = vld [vmem:[#allocation2 + $0x688] sm:$0xff]
  %v6535 = vld [vmem:[#allocation2 + $0x690] sm:$0xff]
  %v6536 = vld [vmem:[#allocation2 + $0x698] sm:$0xff]
  %v6537 = vld [vmem:[#allocation2 + $0x6a0] sm:$0xff]
  %v6538 = vld [vmem:[#allocation2 + $0x6a8] sm:$0xff]
  %v6539 = vld [vmem:[#allocation2 + $0x6b0] sm:$0xff]
  %v6540 = vld [vmem:[#allocation2 + $0x6b8] sm:$0xff]
  %v6541 = vld [vmem:[#allocation2 + $0x6c0] sm:$0xff]
  %v6542 = vld [vmem:[#allocation2 + $0x6c8] sm:$0xff]
  %v6543 = vld [vmem:[#allocation2 + $0x6d0] sm:$0xff]
  %v6544 = vld [vmem:[#allocation2 + $0x6d8] sm:$0xff]
  %v6545 = vld [vmem:[#allocation2 + $0x6e0] sm:$0xff]
  %v6546 = vld [vmem:[#allocation2 + $0x6e8] sm:$0xff]
  %v6547 = vld [vmem:[#allocation2 + $0x6f0] sm:$0xff]
  %v6548 = vld [vmem:[#allocation2 + $0x6f8] sm:$0xff]
  %v6549 = vld [vmem:[#allocation2 + $0x700] sm:$0xff]
  %v6550 = vld [vmem:[#allocation2 + $0x708] sm:$0xff]
  %v6551 = vld [vmem:[#allocation2 + $0x710] sm:$0xff]
  %v6552 = vld [vmem:[#allocation2 + $0x718] sm:$0xff]
  %v6553 = vld [vmem:[#allocation2 + $0x720] sm:$0xff]
  %v6554 = vld [vmem:[#allocation2 + $0x728] sm:$0xff]
  %v6555 = vld [vmem:[#allocation2 + $0x730] sm:$0xff]
  %v6556 = vld [vmem:[#allocation2 + $0x738] sm:$0xff]
  %v6557 = vld [vmem:[#allocation2 + $0x740] sm:$0xff]
  %v6558 = vld [vmem:[#allocation2 + $0x748] sm:$0xff]
  %v6559 = vld [vmem:[#allocation2 + $0x750] sm:$0xff]
  %v6560 = vld [vmem:[#allocation2 + $0x758] sm:$0xff]
  %v6561 = vld [vmem:[#allocation2 + $0x760] sm:$0xff]
  %v6562 = vld [vmem:[#allocation2 + $0x768] sm:$0xff]
  %v6563 = vld [vmem:[#allocation2 + $0x770] sm:$0xff]
  %v6564 = vld [vmem:[#allocation2 + $0x778] sm:$0xff]
  %v6565 = vld [vmem:[#allocation2 + $0x780] sm:$0xff]
  %v6566 = vld [vmem:[#allocation2 + $0x788] sm:$0xff]
  %v6567 = vld [vmem:[#allocation2 + $0x790] sm:$0xff]
  %v6568 = vld [vmem:[#allocation2 + $0x798] sm:$0xff]
  %v6569 = vld [vmem:[#allocation2 + $0x7a0] sm:$0xff]
  %v6570 = vld [vmem:[#allocation2 + $0x7a8] sm:$0xff]
  %v6571 = vld [vmem:[#allocation2 + $0x7b0] sm:$0xff]
  %v6572 = vld [vmem:[#allocation2 + $0x7b8] sm:$0xff]
  %v6573 = vld [vmem:[#allocation2 + $0x7c0] sm:$0xff]
  %v6574 = vld [vmem:[#allocation2 + $0x7c8] sm:$0xff]
  %v6575 = vld [vmem:[#allocation2 + $0x7d0] sm:$0xff]
  %v6576 = vld [vmem:[#allocation2 + $0x7d8] sm:$0xff]
  %v6577 = vld [vmem:[#allocation2 + $0x7e0] sm:$0xff]
  %v6578 = vld [vmem:[#allocation2 + $0x7e8] sm:$0xff]
  %v6579 = vld [vmem:[#allocation2 + $0x7f0] sm:$0xff]
  %v6580 = vld [vmem:[#allocation2 + $0x7f8] sm:$0xff]
  %v6581 = vld [vmem:[#allocation2 + $0x800] sm:$0xff]
  %v6582 = vld [vmem:[#allocation2 + $0x808] sm:$0xff]
  %v6583 = vld [vmem:[#allocation2 + $0x810] sm:$0xff]
  %v6584 = vld [vmem:[#allocation2 + $0x818] sm:$0xff]
  %v6585 = vld [vmem:[#allocation2 + $0x820] sm:$0xff]
  %v6586 = vld [vmem:[#allocation2 + $0x828] sm:$0xff]
  %v6587 = vld [vmem:[#allocation2 + $0x830] sm:$0xff]
  %v6588 = vld [vmem:[#allocation2 + $0x838] sm:$0xff]
  %v6589 = vld [vmem:[#allocation2 + $0x840] sm:$0xff]
  %v6590 = vld [vmem:[#allocation2 + $0x848] sm:$0xff]
  %v6591 = vld [vmem:[#allocation2 + $0x850] sm:$0xff]
  %v6592 = vld [vmem:[#allocation2 + $0x858] sm:$0xff]
  %v6593 = vld [vmem:[#allocation2 + $0x860] sm:$0xff]
  %v6594 = vld [vmem:[#allocation2 + $0x868] sm:$0xff]
  %v6595 = vld [vmem:[#allocation2 + $0x870] sm:$0xff]
  %v6596 = vld [vmem:[#allocation2 + $0x878] sm:$0xff]
  %v6597 = vld [vmem:[#allocation2 + $0x880] sm:$0xff]
  %v6598 = vld [vmem:[#allocation2 + $0x888] sm:$0xff]
  %v6599 = vld [vmem:[#allocation2 + $0x890] sm:$0xff]
  %v6600 = vld [vmem:[#allocation2 + $0x898] sm:$0xff]
  %v6601 = vld [vmem:[#allocation2 + $0x8a0] sm:$0xff]
  %v6602 = vld [vmem:[#allocation2 + $0x8a8] sm:$0xff]
  %v6603 = vld [vmem:[#allocation2 + $0x8b0] sm:$0xff]
  %v6604 = vld [vmem:[#allocation2 + $0x8b8] sm:$0xff]
  %v6605 = vld [vmem:[#allocation2 + $0x8c0] sm:$0xff]
  %v6606 = vld [vmem:[#allocation2 + $0x8c8] sm:$0xff]
  %v6607 = vld [vmem:[#allocation2 + $0x8d0] sm:$0xff]
  %v6608 = vld [vmem:[#allocation2 + $0x8d8] sm:$0xff]
  %v6609 = vld [vmem:[#allocation2 + $0x8e0] sm:$0xff]
  %v6610 = vld [vmem:[#allocation2 + $0x8e8] sm:$0xff]
  %v6611 = vld [vmem:[#allocation2 + $0x8f0] sm:$0xff]
  %v6612 = vld [vmem:[#allocation2 + $0x8f8] sm:$0xff]
  %v6616 = vcombine.high %v6322, %v6322
  %v6618 = vunpack.c.l.s4 1966171168
  %v6619 = vunpack.c.0.s8 %v6618
  %v6620 = vlaneseq
  %v6621 = vshrl.u32 %v6620, 7
  %v6622 = vsub.s32 %v6619, %v6621
  %v6623 = vrot.slane %v6322, %v6622
  %v6625 = vunpack.c.l.s4 1966171168
  %v6626 = vunpack.c.0.s8 %v6625
  %v6627 = vlaneseq
  %v6628 = vshrl.u32 %v6627, 7
  %v6629 = vsub.s32 %v6626, %v6628
  %v6630 = vrot.slane %v6616, %v6629
  %v6631 = vcombine.high %v6623, %v6623
  %v6632 = vcombine.high %v6630, %v6630
  %v6634 = vunpack.c.l.s4 1966171168
  %v6635 = vunpack.c.0.s8 %v6634
  %v6636 = vlaneseq
  %v6637 = vshrl.u32 %v6636, 7
  %v6638 = vsub.s32 %v6635, %v6637
  %v6639 = vrot.slane %v6623, %v6638
  %v6641 = vunpack.c.l.s4 1966171168
  %v6642 = vunpack.c.0.s8 %v6641
  %v6643 = vlaneseq
  %v6644 = vshrl.u32 %v6643, 7
  %v6645 = vsub.s32 %v6642, %v6644
  %v6646 = vrot.slane %v6630, %v6645
  %v6648 = vunpack.c.l.s4 1966171168
  %v6649 = vunpack.c.0.s8 %v6648
  %v6650 = vlaneseq
  %v6651 = vshrl.u32 %v6650, 7
  %v6652 = vsub.s32 %v6649, %v6651
  %v6653 = vrot.slane %v6631, %v6652
  %v6655 = vunpack.c.l.s4 1966171168
  %v6656 = vunpack.c.0.s8 %v6655
  %v6657 = vlaneseq
  %v6658 = vshrl.u32 %v6657, 7
  %v6659 = vsub.s32 %v6656, %v6658
  %v6660 = vrot.slane %v6632, %v6659
  %v6661 = vcombine.high %v6639, %v6639
  %v6662 = vcombine.high %v6646, %v6646
  %v6663 = vcombine.high %v6653, %v6653
  %v6664 = vcombine.high %v6660, %v6660
  %v6665 = vcombine.high %v6323, %v6323
  %v6667 = vunpack.c.l.s4 1966171168
  %v6668 = vunpack.c.0.s8 %v6667
  %v6669 = vlaneseq
  %v6670 = vshrl.u32 %v6669, 7
  %v6671 = vsub.s32 %v6668, %v6670
  %v6672 = vrot.slane %v6323, %v6671
  %v6674 = vunpack.c.l.s4 1966171168
  %v6675 = vunpack.c.0.s8 %v6674
  %v6676 = vlaneseq
  %v6677 = vshrl.u32 %v6676, 7
  %v6678 = vsub.s32 %v6675, %v6677
  %v6679 = vrot.slane %v6665, %v6678
  %v6680 = vcombine.high %v6672, %v6672
  %v6681 = vcombine.high %v6679, %v6679
  %v6683 = vunpack.c.l.s4 1966171168
  %v6684 = vunpack.c.0.s8 %v6683
  %v6685 = vlaneseq
  %v6686 = vshrl.u32 %v6685, 7
  %v6687 = vsub.s32 %v6684, %v6686
  %v6688 = vrot.slane %v6672, %v6687
  %v6690 = vunpack.c.l.s4 1966171168
  %v6691 = vunpack.c.0.s8 %v6690
  %v6692 = vlaneseq
  %v6693 = vshrl.u32 %v6692, 7
  %v6694 = vsub.s32 %v6691, %v6693
  %v6695 = vrot.slane %v6679, %v6694
  %v6697 = vunpack.c.l.s4 1966171168
  %v6698 = vunpack.c.0.s8 %v6697
  %v6699 = vlaneseq
  %v6700 = vshrl.u32 %v6699, 7
  %v6701 = vsub.s32 %v6698, %v6700
  %v6702 = vrot.slane %v6680, %v6701
  %v6704 = vunpack.c.l.s4 1966171168
  %v6705 = vunpack.c.0.s8 %v6704
  %v6706 = vlaneseq
  %v6707 = vshrl.u32 %v6706, 7
  %v6708 = vsub.s32 %v6705, %v6707
  %v6709 = vrot.slane %v6681, %v6708
  %v6710 = vcombine.high %v6688, %v6688
  %v6711 = vcombine.high %v6695, %v6695
  %v6712 = vcombine.high %v6702, %v6702
  %v6713 = vcombine.high %v6709, %v6709
  %v6715 = vunpack.c.l.s4 1966171168
  %v6716 = vunpack.c.0.s8 %v6715
  %v6717 = vlaneseq
  %v6718 = vshrl.u32 %v6717, 7
  %v6719 = vsub.s32 %v6716, %v6718
  %v6720 = vrot.slane %v6324, %v6719
  %v6721 = vcombine.high %v6720, %v6720
  %v6723 = vunpack.c.l.s4 1966171168
  %v6724 = vunpack.c.0.s8 %v6723
  %v6725 = vlaneseq
  %v6726 = vshrl.u32 %v6725, 7
  %v6727 = vsub.s32 %v6724, %v6726
  %v6728 = vrot.slane %v6720, %v6727
  %v6730 = vunpack.c.l.s4 1966171168
  %v6731 = vunpack.c.0.s8 %v6730
  %v6732 = vlaneseq
  %v6733 = vshrl.u32 %v6732, 7
  %v6734 = vsub.s32 %v6731, %v6733
  %v6735 = vrot.slane %v6721, %v6734
  %6754 = vmatprep.subr.bf16.mxu0 %v6326
  %6755 = vmatpush1.bf16.msra.mxu0 %v6325
  %6756 = vmatprep.subr.bf16.mxu0 %v6328
  %6757 = vmatpush1.bf16.msra.mxu0 %v6327
  %6758 = vmatprep.subr.bf16.mxu0 %v6330
  %6759 = vmatpush1.bf16.msra.mxu0 %v6329
  %6760 = vmatprep.subr.bf16.mxu0 %v6332
  %6761 = vmatpush1.bf16.msra.mxu0 %v6331
  %6762 = vmatprep.subr.bf16.mxu0 %v6334
  %6763 = vmatpush1.bf16.msra.mxu0 %v6333
  %6764 = vmatprep.subr.bf16.mxu0 %v6336
  %6765 = vmatpush1.bf16.msra.mxu0 %v6335
  %6766 = vmatprep.subr.bf16.mxu0 %v6338
  %6767 = vmatpush1.bf16.msra.mxu0 %v6337
  %6768 = vmatprep.subr.bf16.mxu0 %v6340
  %6769 = vmatpush1.bf16.msra.mxu0 %v6339
  %6770 = vmatprep.subr.bf16.mxu0 %v6342
  %6771 = vmatpush1.bf16.msra.mxu0 %v6341
  %6772 = vmatprep.subr.bf16.mxu0 %v6344
  %6773 = vmatpush1.bf16.msra.mxu0 %v6343
  %6774 = vmatprep.subr.bf16.mxu0 %v6346
  %6775 = vmatpush1.bf16.msra.mxu0 %v6345
  %6776 = vmatprep.subr.bf16.mxu0 %v6348
  %6777 = vmatpush1.bf16.msra.mxu0 %v6347
  %6778 = vmatprep.subr.bf16.mxu0 %v6350
  %6779 = vmatpush1.bf16.msra.mxu0 %v6349
  %6780 = vmatprep.subr.bf16.mxu0 %v6352
  %6781 = vmatpush1.bf16.msra.mxu0 %v6351
  %6782 = vmatprep.subr.bf16.mxu0 %v6354
  %6783 = vmatpush1.bf16.msra.mxu0 %v6353
  %6784 = vmatprep.subr.bf16.mxu0 %v6356
  %6785 = vmatpush1.bf16.msra.mxu0 %v6355
  %6786 = vmatprep.mubr.bf16.mxu0 %v6653
  %6787 = vmatmul.mubr.bf16.gmra.mrb[0].mxu0 %v6639
  %v6788 = vpop.f32.mrb[0].mxu0
  %v6789 = vadd.f32 0.0, %v6788
  %v6790 = vpop.f32.mrb[0].mxu0
  %v6791 = vadd.f32 0.0, %v6790
  %v6792 = vpop.f32.mrb[0].mxu0
  %v6793 = vpop.f32.mrb[0].mxu0
  %6794 = vdwg.mxu0
  %6795 = vmatprep.subr.bf16.mxu0 %v6358
  %6796 = vmatpush1.bf16.msra.mxu0 %v6357
  %6797 = vmatprep.subr.bf16.mxu0 %v6360
  %6798 = vmatpush1.bf16.msra.mxu0 %v6359
  %6799 = vmatprep.subr.bf16.mxu0 %v6362
  %6800 = vmatpush1.bf16.msra.mxu0 %v6361
  %6801 = vmatprep.subr.bf16.mxu0 %v6364
  %6802 = vmatpush1.bf16.msra.mxu0 %v6363
  %6803 = vmatprep.subr.bf16.mxu0 %v6366
  %6804 = vmatpush1.bf16.msra.mxu0 %v6365
  %6805 = vmatprep.subr.bf16.mxu0 %v6368
  %6806 = vmatpush1.bf16.msra.mxu0 %v6367
  %6807 = vmatprep.subr.bf16.mxu0 %v6370
  %6808 = vmatpush1.bf16.msra.mxu0 %v6369
  %6809 = vmatprep.subr.bf16.mxu0 %v6372
  %6810 = vmatpush1.bf16.msra.mxu0 %v6371
  %6811 = vmatprep.subr.bf16.mxu0 %v6374
  %6812 = vmatpush1.bf16.msra.mxu0 %v6373
  %6813 = vmatprep.subr.bf16.mxu0 %v6376
  %6814 = vmatpush1.bf16.msra.mxu0 %v6375
  %6815 = vmatprep.subr.bf16.mxu0 %v6378
  %6816 = vmatpush1.bf16.msra.mxu0 %v6377
  %6817 = vmatprep.subr.bf16.mxu0 %v6380
  %6818 = vmatpush1.bf16.msra.mxu0 %v6379
  %6819 = vmatprep.subr.bf16.mxu0 %v6382
  %6820 = vmatpush1.bf16.msra.mxu0 %v6381
  %6821 = vmatprep.subr.bf16.mxu0 %v6384
  %6822 = vmatpush1.bf16.msra.mxu0 %v6383
  %6823 = vmatprep.subr.bf16.mxu0 %v6386
  %6824 = vmatpush1.bf16.msra.mxu0 %v6385
  %6825 = vmatprep.subr.bf16.mxu0 %v6388
  %6826 = vmatpush1.bf16.msra.mxu0 %v6387
  %6827 = vmatprep.mubr.bf16.mxu0 %v6663
  %6828 = vmatmul.mubr.bf16.gmra.mrb[0].mxu0 %v6661
  %v6829 = vpop.f32.mrb[0].mxu0
  %v6830 = vadd.f32 %v6789, %v6829
  %v6831 = vpop.f32.mrb[0].mxu0
  %v6832 = vadd.f32 %v6791, %v6831
  %v6833 = vpop.f32.mrb[0].mxu0
  %v6834 = vpop.f32.mrb[0].mxu0
  %6835 = vdwg.mxu0
  %6836 = vmatprep.subr.bf16.mxu0 %v6390
  %6837 = vmatpush1.bf16.msra.mxu0 %v6389
  %6838 = vmatprep.subr.bf16.mxu0 %v6392
  %6839 = vmatpush1.bf16.msra.mxu0 %v6391
  %6840 = vmatprep.subr.bf16.mxu0 %v6394
  %6841 = vmatpush1.bf16.msra.mxu0 %v6393
  %6842 = vmatprep.subr.bf16.mxu0 %v6396
  %6843 = vmatpush1.bf16.msra.mxu0 %v6395
  %6844 = vmatprep.subr.bf16.mxu0 %v6398
  %6845 = vmatpush1.bf16.msra.mxu0 %v6397
  %6846 = vmatprep.subr.bf16.mxu0 %v6400
  %6847 = vmatpush1.bf16.msra.mxu0 %v6399
  %6848 = vmatprep.subr.bf16.mxu0 %v6402
  %6849 = vmatpush1.bf16.msra.mxu0 %v6401
  %6850 = vmatprep.subr.bf16.mxu0 %v6404
  %6851 = vmatpush1.bf16.msra.mxu0 %v6403
  %6852 = vmatprep.subr.bf16.mxu0 %v6406
  %6853 = vmatpush1.bf16.msra.mxu0 %v6405
  %6854 = vmatprep.subr.bf16.mxu0 %v6408
  %6855 = vmatpush1.bf16.msra.mxu0 %v6407
  %6856 = vmatprep.subr.bf16.mxu0 %v6410
  %6857 = vmatpush1.bf16.msra.mxu0 %v6409
  %6858 = vmatprep.subr.bf16.mxu0 %v6412
  %6859 = vmatpush1.bf16.msra.mxu0 %v6411
  %6860 = vmatprep.subr.bf16.mxu0 %v6414
  %6861 = vmatpush1.bf16.msra.mxu0 %v6413
  %6862 = vmatprep.subr.bf16.mxu0 %v6416
  %6863 = vmatpush1.bf16.msra.mxu0 %v6415
  %6864 = vmatprep.subr.bf16.mxu0 %v6418
  %6865 = vmatpush1.bf16.msra.mxu0 %v6417
  %6866 = vmatprep.subr.bf16.mxu0 %v6420
  %6867 = vmatpush1.bf16.msra.mxu0 %v6419
  %6868 = vmatprep.mubr.bf16.mxu0 %v6660
  %6869 = vmatmul.mubr.bf16.gmra.mrb[0].mxu0 %v6646
  %v6870 = vpop.f32.mrb[0].mxu0
  %v6871 = vadd.f32 %v6830, %v6870
  %v6872 = vpop.f32.mrb[0].mxu0
  %v6873 = vadd.f32 %v6832, %v6872
  %v6874 = vpop.f32.mrb[0].mxu0
  %v6875 = vpop.f32.mrb[0].mxu0
  %6876 = vdwg.mxu0
  %6877 = vmatprep.subr.bf16.mxu0 %v6422
  %6878 = vmatpush1.bf16.msra.mxu0 %v6421
  %6879 = vmatprep.subr.bf16.mxu0 %v6424
  %6880 = vmatpush1.bf16.msra.mxu0 %v6423
  %6881 = vmatprep.subr.bf16.mxu0 %v6426
  %6882 = vmatpush1.bf16.msra.mxu0 %v6425
  %6883 = vmatprep.subr.bf16.mxu0 %v6428
  %6884 = vmatpush1.bf16.msra.mxu0 %v6427
  %6885 = vmatprep.subr.bf16.mxu0 %v6430
  %6886 = vmatpush1.bf16.msra.mxu0 %v6429
  %6887 = vmatprep.subr.bf16.mxu0 %v6432
  %6888 = vmatpush1.bf16.msra.mxu0 %v6431
  %6889 = vmatprep.subr.bf16.mxu0 %v6434
  %6890 = vmatpush1.bf16.msra.mxu0 %v6433
  %6891 = vmatprep.subr.bf16.mxu0 %v6436
  %6892 = vmatpush1.bf16.msra.mxu0 %v6435
  %6893 = vmatprep.subr.bf16.mxu0 %v6438
  %6894 = vmatpush1.bf16.msra.mxu0 %v6437
  %6895 = vmatprep.subr.bf16.mxu0 %v6440
  %6896 = vmatpush1.bf16.msra.mxu0 %v6439
  %6897 = vmatprep.subr.bf16.mxu0 %v6442
  %6898 = vmatpush1.bf16.msra.mxu0 %v6441
  %6899 = vmatprep.subr.bf16.mxu0 %v6444
  %6900 = vmatpush1.bf16.msra.mxu0 %v6443
  %6901 = vmatprep.subr.bf16.mxu0 %v6446
  %6902 = vmatpush1.bf16.msra.mxu0 %v6445
  %6903 = vmatprep.subr.bf16.mxu0 %v6448
  %6904 = vmatpush1.bf16.msra.mxu0 %v6447
  %6905 = vmatprep.subr.bf16.mxu0 %v6450
  %6906 = vmatpush1.bf16.msra.mxu0 %v6449
  %6907 = vmatprep.subr.bf16.mxu0 %v6452
  %6908 = vmatpush1.bf16.msra.mxu0 %v6451
  %6909 = vmatprep.mubr.bf16.mxu0 %v6664
  %6910 = vmatmul.mubr.bf16.gmra.mrb[0].mxu0 %v6662
  %v6911 = vpop.f32.mrb[0].mxu0
  %v6912 = vadd.f32 %v6871, %v6911
  %v6913 = vpop.f32.mrb[0].mxu0
  %v6914 = vadd.f32 %v6873, %v6913
  %v6915 = vpop.f32.mrb[0].mxu0
  %v6916 = vpop.f32.mrb[0].mxu0
  %6917 = vdwg.mxu0
  %6918 = vmatprep.subr.bf16.mxu0 %v6454
  %6919 = vmatpush1.bf16.msra.mxu0 %v6453
  %6920 = vmatprep.subr.bf16.mxu0 %v6456
  %6921 = vmatpush1.bf16.msra.mxu0 %v6455
  %6922 = vmatprep.subr.bf16.mxu0 %v6458
  %6923 = vmatpush1.bf16.msra.mxu0 %v6457
  %6924 = vmatprep.subr.bf16.mxu0 %v6460
  %6925 = vmatpush1.bf16.msra.mxu0 %v6459
  %6926 = vmatprep.subr.bf16.mxu0 %v6462
  %6927 = vmatpush1.bf16.msra.mxu0 %v6461
  %6928 = vmatprep.subr.bf16.mxu0 %v6464
  %6929 = vmatpush1.bf16.msra.mxu0 %v6463
  %6930 = vmatprep.subr.bf16.mxu0 %v6466
  %6931 = vmatpush1.bf16.msra.mxu0 %v6465
  %6932 = vmatprep.subr.bf16.mxu0 %v6468
  %6933 = vmatpush1.bf16.msra.mxu0 %v6467
  %6934 = vmatprep.subr.bf16.mxu0 %v6470
  %6935 = vmatpush1.bf16.msra.mxu0 %v6469
  %6936 = vmatprep.subr.bf16.mxu0 %v6472
  %6937 = vmatpush1.bf16.msra.mxu0 %v6471
  %6938 = vmatprep.subr.bf16.mxu0 %v6474
  %6939 = vmatpush1.bf16.msra.mxu0 %v6473
  %6940 = vmatprep.subr.bf16.mxu0 %v6476
  %6941 = vmatpush1.bf16.msra.mxu0 %v6475
  %6942 = vmatprep.subr.bf16.mxu0 %v6478
  %6943 = vmatpush1.bf16.msra.mxu0 %v6477
  %6944 = vmatprep.subr.bf16.mxu0 %v6480
  %6945 = vmatpush1.bf16.msra.mxu0 %v6479
  %6946 = vmatprep.subr.bf16.mxu0 %v6482
  %6947 = vmatpush1.bf16.msra.mxu0 %v6481
  %6948 = vmatprep.subr.bf16.mxu0 %v6484
  %6949 = vmatpush1.bf16.msra.mxu0 %v6483
  %6950 = vmatprep.mubr.bf16.mxu0 %v6702
  %6951 = vmatmul.mubr.bf16.gmra.mrb[0].mxu0 %v6688
  %v6952 = vpop.f32.mrb[0].mxu0
  %v6953 = vadd.f32 %v6912, %v6952
  %v6954 = vpop.f32.mrb[0].mxu0
  %v6955 = vadd.f32 %v6914, %v6954
  %v6956 = vpop.f32.mrb[0].mxu0
  %v6957 = vpop.f32.mrb[0].mxu0
  %6958 = vdwg.mxu0
  %6959 = vmatprep.subr.bf16.mxu0 %v6486
  %6960 = vmatpush1.bf16.msra.mxu0 %v6485
  %6961 = vmatprep.subr.bf16.mxu0 %v6488
  %6962 = vmatpush1.bf16.msra.mxu0 %v6487
  %6963 = vmatprep.subr.bf16.mxu0 %v6490
  %6964 = vmatpush1.bf16.msra.mxu0 %v6489
  %6965 = vmatprep.subr.bf16.mxu0 %v6492
  %6966 = vmatpush1.bf16.msra.mxu0 %v6491
  %6967 = vmatprep.subr.bf16.mxu0 %v6494
  %6968 = vmatpush1.bf16.msra.mxu0 %v6493
  %6969 = vmatprep.subr.bf16.mxu0 %v6496
  %6970 = vmatpush1.bf16.msra.mxu0 %v6495
  %6971 = vmatprep.subr.bf16.mxu0 %v6498
  %6972 = vmatpush1.bf16.msra.mxu0 %v6497
  %6973 = vmatprep.subr.bf16.mxu0 %v6500
  %6974 = vmatpush1.bf16.msra.mxu0 %v6499
  %6975 = vmatprep.subr.bf16.mxu0 %v6502
  %6976 = vmatpush1.bf16.msra.mxu0 %v6501
  %6977 = vmatprep.subr.bf16.mxu0 %v6504
  %6978 = vmatpush1.bf16.msra.mxu0 %v6503
  %6979 = vmatprep.subr.bf16.mxu0 %v6506
  %6980 = vmatpush1.bf16.msra.mxu0 %v6505
  %6981 = vmatprep.subr.bf16.mxu0 %v6508
  %6982 = vmatpush1.bf16.msra.mxu0 %v6507
  %6983 = vmatprep.subr.bf16.mxu0 %v6510
  %6984 = vmatpush1.bf16.msra.mxu0 %v6509
  %6985 = vmatprep.subr.bf16.mxu0 %v6512
  %6986 = vmatpush1.bf16.msra.mxu0 %v6511
  %6987 = vmatprep.subr.bf16.mxu0 %v6514
  %6988 = vmatpush1.bf16.msra.mxu0 %v6513
  %6989 = vmatprep.subr.bf16.mxu0 %v6516
  %6990 = vmatpush1.bf16.msra.mxu0 %v6515
  %6991 = vmatprep.mubr.bf16.mxu0 %v6712
  %6992 = vmatmul.mubr.bf16.gmra.mrb[0].mxu0 %v6710
  %v6993 = vpop.f32.mrb[0].mxu0
  %v6994 = vadd.f32 %v6953, %v6993
  %v6995 = vpop.f32.mrb[0].mxu0
  %v6996 = vadd.f32 %v6955, %v6995
  %v6997 = vpop.f32.mrb[0].mxu0
  %v6998 = vpop.f32.mrb[0].mxu0
  %6999 = vdwg.mxu0
  %7000 = vmatprep.subr.bf16.mxu0 %v6518
  %7001 = vmatpush1.bf16.msra.mxu0 %v6517
  %7002 = vmatprep.subr.bf16.mxu0 %v6520
  %7003 = vmatpush1.bf16.msra.mxu0 %v6519
  %7004 = vmatprep.subr.bf16.mxu0 %v6522
  %7005 = vmatpush1.bf16.msra.mxu0 %v6521
  %7006 = vmatprep.subr.bf16.mxu0 %v6524
  %7007 = vmatpush1.bf16.msra.mxu0 %v6523
  %7008 = vmatprep.subr.bf16.mxu0 %v6526
  %7009 = vmatpush1.bf16.msra.mxu0 %v6525
  %7010 = vmatprep.subr.bf16.mxu0 %v6528
  %7011 = vmatpush1.bf16.msra.mxu0 %v6527
  %7012 = vmatprep.subr.bf16.mxu0 %v6530
  %7013 = vmatpush1.bf16.msra.mxu0 %v6529
  %7014 = vmatprep.subr.bf16.mxu0 %v6532
  %7015 = vmatpush1.bf16.msra.mxu0 %v6531
  %7016 = vmatprep.subr.bf16.mxu0 %v6534
  %7017 = vmatpush1.bf16.msra.mxu0 %v6533
  %7018 = vmatprep.subr.bf16.mxu0 %v6536
  %7019 = vmatpush1.bf16.msra.mxu0 %v6535
  %7020 = vmatprep.subr.bf16.mxu0 %v6538
  %7021 = vmatpush1.bf16.msra.mxu0 %v6537
  %7022 = vmatprep.subr.bf16.mxu0 %v6540
  %7023 = vmatpush1.bf16.msra.mxu0 %v6539
  %7024 = vmatprep.subr.bf16.mxu0 %v6542
  %7025 = vmatpush1.bf16.msra.mxu0 %v6541
  %7026 = vmatprep.subr.bf16.mxu0 %v6544
  %7027 = vmatpush1.bf16.msra.mxu0 %v6543
  %7028 = vmatprep.subr.bf16.mxu0 %v6546
  %7029 = vmatpush1.bf16.msra.mxu0 %v6545
  %7030 = vmatprep.subr.bf16.mxu0 %v6548
  %7031 = vmatpush1.bf16.msra.mxu0 %v6547
  %7032 = vmatprep.mubr.bf16.mxu0 %v6709
  %7033 = vmatmul.mubr.bf16.gmra.mrb[0].mxu0 %v6695
  %v7034 = vpop.f32.mrb[0].mxu0
  %v7035 = vadd.f32 %v6994, %v7034
  %v7036 = vpop.f32.mrb[0].mxu0
  %v7037 = vadd.f32 %v6996, %v7036
  %v7038 = vpop.f32.mrb[0].mxu0
  %v7039 = vpop.f32.mrb[0].mxu0
  %7040 = vdwg.mxu0
  %7041 = vmatprep.subr.bf16.mxu0 %v6550
  %7042 = vmatpush1.bf16.msra.mxu0 %v6549
  %7043 = vmatprep.subr.bf16.mxu0 %v6552
  %7044 = vmatpush1.bf16.msra.mxu0 %v6551
  %7045 = vmatprep.subr.bf16.mxu0 %v6554
  %7046 = vmatpush1.bf16.msra.mxu0 %v6553
  %7047 = vmatprep.subr.bf16.mxu0 %v6556
  %7048 = vmatpush1.bf16.msra.mxu0 %v6555
  %7049 = vmatprep.subr.bf16.mxu0 %v6558
  %7050 = vmatpush1.bf16.msra.mxu0 %v6557
  %7051 = vmatprep.subr.bf16.mxu0 %v6560
  %7052 = vmatpush1.bf16.msra.mxu0 %v6559
  %7053 = vmatprep.subr.bf16.mxu0 %v6562
  %7054 = vmatpush1.bf16.msra.mxu0 %v6561
  %7055 = vmatprep.subr.bf16.mxu0 %v6564
  %7056 = vmatpush1.bf16.msra.mxu0 %v6563
  %7057 = vmatprep.subr.bf16.mxu0 %v6566
  %7058 = vmatpush1.bf16.msra.mxu0 %v6565
  %7059 = vmatprep.subr.bf16.mxu0 %v6568
  %7060 = vmatpush1.bf16.msra.mxu0 %v6567
  %7061 = vmatprep.subr.bf16.mxu0 %v6570
  %7062 = vmatpush1.bf16.msra.mxu0 %v6569
  %7063 = vmatprep.subr.bf16.mxu0 %v6572
  %7064 = vmatpush1.bf16.msra.mxu0 %v6571
  %7065 = vmatprep.subr.bf16.mxu0 %v6574
  %7066 = vmatpush1.bf16.msra.mxu0 %v6573
  %7067 = vmatprep.subr.bf16.mxu0 %v6576
  %7068 = vmatpush1.bf16.msra.mxu0 %v6575
  %7069 = vmatprep.subr.bf16.mxu0 %v6578
  %7070 = vmatpush1.bf16.msra.mxu0 %v6577
  %7071 = vmatprep.subr.bf16.mxu0 %v6580
  %7072 = vmatpush1.bf16.msra.mxu0 %v6579
  %7073 = vmatprep.mubr.bf16.mxu0 %v6713
  %7074 = vmatmul.mubr.bf16.gmra.mrb[0].mxu0 %v6711
  %v7075 = vpop.f32.mrb[0].mxu0
  %v7076 = vadd.f32 %v7035, %v7075
  %v7077 = vpop.f32.mrb[0].mxu0
  %v7078 = vadd.f32 %v7037, %v7077
  %v7079 = vpop.f32.mrb[0].mxu0
  %v7080 = vpop.f32.mrb[0].mxu0
  %7081 = vdwg.mxu0
  %7082 = vmatprep.subr.bf16.mxu0 %v6582
  %7083 = vmatpush1.bf16.msra.mxu0 %v6581
  %7084 = vmatprep.subr.bf16.mxu0 %v6584
  %7085 = vmatpush1.bf16.msra.mxu0 %v6583
  %7086 = vmatprep.subr.bf16.mxu0 %v6586
  %7087 = vmatpush1.bf16.msra.mxu0 %v6585
  %7088 = vmatprep.subr.bf16.mxu0 %v6588
  %7089 = vmatpush1.bf16.msra.mxu0 %v6587
  %7090 = vmatprep.subr.bf16.mxu0 %v6590
  %7091 = vmatpush1.bf16.msra.mxu0 %v6589
  %7092 = vmatprep.subr.bf16.mxu0 %v6592
  %7093 = vmatpush1.bf16.msra.mxu0 %v6591
  %7094 = vmatprep.subr.bf16.mxu0 %v6594
  %7095 = vmatpush1.bf16.msra.mxu0 %v6593
  %7096 = vmatprep.subr.bf16.mxu0 %v6596
  %7097 = vmatpush1.bf16.msra.mxu0 %v6595
  %7098 = vmatprep.subr.bf16.mxu0 %v6598
  %7099 = vmatpush1.bf16.msra.mxu0 %v6597
  %7100 = vmatprep.subr.bf16.mxu0 %v6600
  %7101 = vmatpush1.bf16.msra.mxu0 %v6599
  %7102 = vmatprep.subr.bf16.mxu0 %v6602
  %7103 = vmatpush1.bf16.msra.mxu0 %v6601
  %7104 = vmatprep.subr.bf16.mxu0 %v6604
  %7105 = vmatpush1.bf16.msra.mxu0 %v6603
  %7106 = vmatprep.subr.bf16.mxu0 %v6606
  %7107 = vmatpush1.bf16.msra.mxu0 %v6605
  %7108 = vmatprep.subr.bf16.mxu0 %v6608
  %7109 = vmatpush1.bf16.msra.mxu0 %v6607
  %7110 = vmatprep.subr.bf16.mxu0 %v6610
  %7111 = vmatpush1.bf16.msra.mxu0 %v6609
  %7112 = vmatprep.subr.bf16.mxu0 %v6612
  %7113 = vmatpush1.bf16.msra.mxu0 %v6611
  %7114 = vmatprep.mubr.bf16.mxu0 %v6735
  %7115 = vmatmul.mubr.bf16.gmra.mrb[0].mxu0 %v6728
  %v7116 = vpop.f32.mrb[0].mxu0
  %v7117 = vadd.f32 %v7076, %v7116
  %v7118 = vpop.f32.mrb[0].mxu0
  %v7119 = vadd.f32 %v7078, %v7118
  %v7120 = vpop.f32.mrb[0].mxu0
  %v7121 = vpop.f32.mrb[0].mxu0
  %7122 = vdwg.mxu0
  %v7124 = vunpack.c.l.b16 %v6317
  %v7125 = vunpack.c.h.b16 %v6317
  %v7126 = vpack.c.b16 %v7124, %v7124
  %v7127 = vpack.c.b16 %v7125, %v7125
  %v7129 = vsel %vm5880, %v6316, 0
  %vm7131 = vcmask 1043456
  %v7133 = vsel %vm7131, %v7126, 0
  %v7136 = vsel %vm7131, %v7127, 0
  %7138 = vmatprep.subr.bf16.mxu0 %v7136
  %7139 = vmatpush1.bf16.msra.mxu0 %v7133
  %7140 = vmatprep.subr.bf16.mxu0 0
  %7141 = vmatpush1.bf16.msra.mxu0 0
  %7142 = vmatprep.subr.bf16.mxu0 0
  %7143 = vmatpush1.bf16.msra.mxu0 0
  %7144 = vmatprep.subr.bf16.mxu0 0
  %7145 = vmatpush1.bf16.msra.mxu0 0
  %7146 = vmatprep.subr.bf16.mxu0 0
  %7147 = vmatpush1.bf16.msra.mxu0 0
  %7148 = vmatprep.subr.bf16.mxu0 0
  %7149 = vmatpush1.bf16.msra.mxu0 0
  %7150 = vmatprep.subr.bf16.mxu0 0
  %7151 = vmatpush1.bf16.msra.mxu0 0
  %7152 = vmatprep.subr.bf16.mxu0 0
  %7153 = vmatpush1.bf16.msra.mxu0 0
  %7154 = vmatprep.subr.bf16.mxu0 0
  %7155 = vmatpush1.bf16.msra.mxu0 0
  %7156 = vmatprep.subr.bf16.mxu0 0
  %7157 = vmatpush1.bf16.msra.mxu0 0
  %7158 = vmatprep.subr.bf16.mxu0 0
  %7159 = vmatpush1.bf16.msra.mxu0 0
  %7160 = vmatprep.subr.bf16.mxu0 0
  %7161 = vmatpush1.bf16.msra.mxu0 0
  %7162 = vmatprep.subr.bf16.mxu0 0
  %7163 = vmatpush1.bf16.msra.mxu0 0
  %7164 = vmatprep.subr.bf16.mxu0 0
  %7165 = vmatpush1.bf16.msra.mxu0 0
  %7166 = vmatprep.subr.bf16.mxu0 0
  %7167 = vmatpush1.bf16.msra.mxu0 0
  %7168 = vmatprep.subr.bf16.mxu0 0
  %7169 = vmatpush1.bf16.msra.mxu0 0
  %7170 = vmatprep.mubr.bf16.mxu0 0
  %7171 = vmatmul.mubr.bf16.gmra.mrb[0].mxu0 %v7129
  %v7172 = vpop.f32.mrb[0].mxu0
  %v7173 = vadd.f32 %v7117, %v7172
  %v7174 = vpop.f32.mrb[0].mxu0
  %v7175 = vadd.f32 %v7119, %v7174
  %v7176 = vpop.f32.mrb[0].mxu0
  %v7177 = vpop.f32.mrb[0].mxu0
  %7178 = vdwg.mxu0
  %v7179 = vld [vmem:[%s17] sm:$0x3]
  %v7181 = vlaneseq
  %v7182 = vshrl.u32 %v7181, 7
  %v7183 = vsub.s32 0, %v7182
  %v7184 = vrot.slane %v7179, %v7183
  %v7185 = vlaneseq
  %v7186 = vshrl.u32 %v7185, 7
  %v7187 = vsub.s32 1, %v7186
  %v7188 = vrot.slane %v7179, %v7187
  %v7191 = vadd.f32 %v7173, %v7184
  %v7192 = vadd.f32 %v7175, %v7188
  %v7193 = vmax.f32 %v7191, 0.0
  %v7194 = vmax.f32 %v7192, 0.0
  %v7195 = vpack.c.bf16 %v7193, %v7193
  %v7196 = vpack.c.bf16 %v7194, %v7194
  %v7197 = vld [vmem:[%s18] sm:$0xf]
  %v7198 = vld [vmem:[%s18 + $0x4] sm:$0xf]
  %v7199 = vld [vmem:[%s18 + $0x8] sm:$0xf]
  %v7200 = vld [vmem:[%s18 + $0xc] sm:$0xf]
  %v7201 = vld [vmem:[%s18 + $0x10] sm:$0xf]
  %v7202 = vld [vmem:[%s18 + $0x14] sm:$0xf]
  %v7203 = vld [vmem:[%s18 + $0x18] sm:$0xf]
  %v7204 = vld [vmem:[%s18 + $0x1c] sm:$0xf]
  %v7205 = vld [vmem:[%s18 + $0x20] sm:$0xf]
  %v7206 = vld [vmem:[%s18 + $0x24] sm:$0xf]
  %v7207 = vld [vmem:[%s18 + $0x28] sm:$0xf]
  %v7208 = vld [vmem:[%s18 + $0x2c] sm:$0xf]
  %v7209 = vld [vmem:[%s18 + $0x30] sm:$0xf]
  %v7210 = vld [vmem:[%s18 + $0x34] sm:$0xf]
  %v7211 = vld [vmem:[%s18 + $0x38] sm:$0xf]
  %v7212 = vld [vmem:[%s18 + $0x3c] sm:$0xf]
  %v7213 = vld [vmem:[%s18 + $0x40] sm:$0xf]
  %v7214 = vld [vmem:[%s18 + $0x44] sm:$0xf]
  %v7215 = vld [vmem:[%s18 + $0x48] sm:$0xf]
  %v7216 = vld [vmem:[%s18 + $0x4c] sm:$0xf]
  %v7217 = vld [vmem:[%s18 + $0x50] sm:$0xf]
  %v7218 = vld [vmem:[%s18 + $0x54] sm:$0xf]
  %v7219 = vld [vmem:[%s18 + $0x58] sm:$0xf]
  %v7220 = vld [vmem:[%s18 + $0x5c] sm:$0xf]
  %v7221 = vld [vmem:[%s18 + $0x60] sm:$0xf]
  %v7222 = vld [vmem:[%s18 + $0x64] sm:$0xf]
  %v7223 = vld [vmem:[%s18 + $0x68] sm:$0xf]
  %v7224 = vld [vmem:[%s18 + $0x6c] sm:$0xf]
  %v7225 = vld [vmem:[%s18 + $0x70] sm:$0xf]
  %v7226 = vld [vmem:[%s18 + $0x74] sm:$0xf]
  %v7227 = vld [vmem:[%s18 + $0x78] sm:$0xf]
  %v7228 = vld [vmem:[%s18 + $0x7c] sm:$0xf]
  %v7229 = vld [vmem:[#allocation6] sm:$0x1]
  %v7231 = vlaneseq
  %v7232 = vshrl.u32 %v7231, 7
  %v7233 = vsub.s32 0, %v7232
  %v7234 = vrot.slane %v7229, %v7233
  %v7268 = vunpack.c.l.b16 %v7197
  %v7269 = vunpack.c.l.b16 %v7198
  %v7270 = vunpack.c.l.b16 %v7199
  %v7271 = vunpack.c.l.b16 %v7200
  %v7272 = vunpack.c.l.b16 %v7201
  %v7273 = vunpack.c.l.b16 %v7202
  %v7274 = vunpack.c.l.b16 %v7203
  %v7275 = vunpack.c.l.b16 %v7204
  %v7276 = vunpack.c.l.b16 %v7205
  %v7277 = vunpack.c.l.b16 %v7206
  %v7278 = vunpack.c.l.b16 %v7207
  %v7279 = vunpack.c.l.b16 %v7208
  %v7280 = vunpack.c.l.b16 %v7209
  %v7281 = vunpack.c.l.b16 %v7210
  %v7282 = vunpack.c.l.b16 %v7211
  %v7283 = vunpack.c.l.b16 %v7212
  %v7284 = vunpack.c.l.b16 %v7213
  %v7285 = vunpack.c.l.b16 %v7214
  %v7286 = vunpack.c.l.b16 %v7215
  %v7287 = vunpack.c.l.b16 %v7216
  %v7288 = vunpack.c.l.b16 %v7217
  %v7289 = vunpack.c.l.b16 %v7218
  %v7290 = vunpack.c.l.b16 %v7219
  %v7291 = vunpack.c.l.b16 %v7220
  %v7292 = vunpack.c.l.b16 %v7221
  %v7293 = vunpack.c.l.b16 %v7222
  %v7294 = vunpack.c.l.b16 %v7223
  %v7295 = vunpack.c.l.b16 %v7224
  %v7296 = vunpack.c.l.b16 %v7225
  %v7297 = vunpack.c.l.b16 %v7226
  %v7298 = vunpack.c.l.b16 %v7227
  %v7299 = vunpack.c.l.b16 %v7228
  %v7300 = vpack.c.b16 %v7269, %v7268
  %v7301 = vpack.c.b16 %v7271, %v7270
  %v7302 = vpack.c.b16 %v7273, %v7272
  %v7303 = vpack.c.b16 %v7275, %v7274
  %v7304 = vpack.c.b16 %v7277, %v7276
  %v7305 = vpack.c.b16 %v7279, %v7278
  %v7306 = vpack.c.b16 %v7281, %v7280
  %v7307 = vpack.c.b16 %v7283, %v7282
  %v7308 = vpack.c.b16 %v7285, %v7284
  %v7309 = vpack.c.b16 %v7287, %v7286
  %v7310 = vpack.c.b16 %v7289, %v7288
  %v7311 = vpack.c.b16 %v7291, %v7290
  %v7312 = vpack.c.b16 %v7293, %v7292
  %v7313 = vpack.c.b16 %v7295, %v7294
  %v7314 = vpack.c.b16 %v7297, %v7296
  %v7315 = vpack.c.b16 %v7299, %v7298
  %7332 = vmatprep.subr.bf16.mxu0 0
  %7333 = vmatpush1.bf16.msra.mxu0 %v7300
  %7334 = vmatprep.subr.bf16.mxu0 0
  %7335 = vmatpush1.bf16.msra.mxu0 %v7301
  %7336 = vmatprep.subr.bf16.mxu0 0
  %7337 = vmatpush1.bf16.msra.mxu0 %v7302
  %7338 = vmatprep.subr.bf16.mxu0 0
  %7339 = vmatpush1.bf16.msra.mxu0 %v7303
  %7340 = vmatprep.subr.bf16.mxu0 0
  %7341 = vmatpush1.bf16.msra.mxu0 %v7304
  %7342 = vmatprep.subr.bf16.mxu0 0
  %7343 = vmatpush1.bf16.msra.mxu0 %v7305
  %7344 = vmatprep.subr.bf16.mxu0 0
  %7345 = vmatpush1.bf16.msra.mxu0 %v7306
  %7346 = vmatprep.subr.bf16.mxu0 0
  %7347 = vmatpush1.bf16.msra.mxu0 %v7307
  %7348 = vmatprep.subr.bf16.mxu0 0
  %7349 = vmatpush1.bf16.msra.mxu0 %v7308
  %7350 = vmatprep.subr.bf16.mxu0 0
  %7351 = vmatpush1.bf16.msra.mxu0 %v7309
  %7352 = vmatprep.subr.bf16.mxu0 0
  %7353 = vmatpush1.bf16.msra.mxu0 %v7310
  %7354 = vmatprep.subr.bf16.mxu0 0
  %7355 = vmatpush1.bf16.msra.mxu0 %v7311
  %7356 = vmatprep.subr.bf16.mxu0 0
  %7357 = vmatpush1.bf16.msra.mxu0 %v7312
  %7358 = vmatprep.subr.bf16.mxu0 0
  %7359 = vmatpush1.bf16.msra.mxu0 %v7313
  %7360 = vmatprep.subr.bf16.mxu0 0
  %7361 = vmatpush1.bf16.msra.mxu0 %v7314
  %7362 = vmatprep.subr.bf16.mxu0 0
  %7363 = vmatpush1.bf16.msra.mxu0 %v7315
  %7364 = vmatprep.mubr.bf16.mxu0 %v7196
  %7365 = vmatmul.mubr.bf16.gmra.mrb[0].mxu0 %v7195
  %v7366 = vpop.f32.mrb[0].mxu0
  %v7367 = vadd.f32 %v7234, %v7366
  %v7368 = vpop.f32.mrb[0].mxu0
  %v7369 = vpop.f32.mrb[0].mxu0
  %v7370 = vpop.f32.mrb[0].mxu0
  %7371 = vdwg.mxu0
  %v7372 = vand.u32 2147483647, %v7367
  %v7373 = vsub.f32 0.0, %v7372
  %v7374 = vmul.f32 %v7373, 1.442695
  %v7375 = vpow.pop %v7374
  %vm7376 = vcmp.ge.f32.partialorder %v7367, 0.0
  %v7377 = vadd.f32 %v7375, 1.0
  %v7378 = vrcp.pop %v7377
  %v7379 = vmul.f32 1.0, %v7378
  %v7380 = vmul.f32 %v7375, %v7378
  %v7381 = vsel %vm7376, %v7379, %v7380
  %vm7382 = vcmask 1024
  %7383 = vst.msk [vmem:[%s21] sm:$0x3] %vm7382, %v7381
  // Predicated region
  $region130: #{learnloss_mix_forward.1} parent=0 // pred_check
    _
  $region131: #{learnloss_mix_forward.1} parent=0 // pred_check_branch
    %7385 = sbr.rel (0) target = $region133
  $region132: #{learnloss_mix_forward.1} parent=0 // pred_region
    _
  $region133: #{learnloss_mix_forward.1} parent=0 // pred_fallthru
    _
  // Predicated region
  $region134: #{learnloss_mix_forward.1} parent=0 // pred_check
    _
  $region135: #{learnloss_mix_forward.1} parent=0 // pred_check_branch
    %7387 = sbr.rel (0) target = $region137
  $region136: #{learnloss_mix_forward.1} parent=0 // pred_region
    _
  $region137: #{learnloss_mix_forward.1} parent=0 // pred_fallthru
    _
  %7388 = vsyncmov [#allocation5]
  %s7389 = vpop.sfrf %7388
  %p7390 = scmp.eq.s32.totalorder %s7389, 0
  %p7391 = pneg %p7390
  %7393 = shalt.err (%p7391)

</llo_original>
